<compile_context>
chip_gen: v7x
topology: tpu7x:2x2x1
jax: 0.10.0
libtpu: 0.0.40
codegen_flags: <defaults>
</compile_context>

<pallas_src>
import functools

import jax
import jax.numpy as jnp
from jax.experimental import pallas as pl
from jax.experimental.pallas import tpu as pltpu


# ----------------------------------------------------------------------------
# Per-generation sizing helpers
# ----------------------------------------------------------------------------
def _vmem_capacity_bytes():
    try:
        return int(pltpu.get_tpu_info().vmem_capacity_bytes)
    except Exception:
        return 64 * 1024 * 1024          # conservative (v7x per-TensorCore)


def _conv_step_vmem_bytes(TH, W, Cin, Cout):
    """Rough per-grid-step VMEM working-set estimate for the conv kernel."""
    Wp = W + 2
    main_in = 2 * TH * W * Cin * 2            # double-buffered bf16 input tile
    halo_in = 2 * 2 * W * Cin * 2             # two 1-row halo blocks, double-buffered
    out_y = 2 * TH * W * Cout * 2             # double-buffered bf16 output tile
    weights = 2 * 9 * Cin * Cout * 2          # resident taps (bf16)
    small = 2 * (2 * Cin + 3 * Cout) * 4      # scale/shift/bias/stats blocks
    scratch = ((TH + 2) * Wp + 2) * Cin * 2   # flat padded buffer (bf16)
    acc = 2 * TH * Wp * Cout * 4              # f32 accumulator + dot temp
    act = TH * W * Cin * 4                    # f32 activation temporaries
    return main_in + halo_in + out_y + weights + small + scratch + acc + act + (1 << 20)


def _pick_row_tile(H, W, Cin, Cout, budget_bytes):
    divisors = [d for d in range(1, H + 1) if H % d == 0]
    # Prefer >= 2 row-tiles per image so the software pipeline has steps to overlap.
    cap = H if H < 16 else max(8, H // 2)
    feasible = [d for d in divisors
                if d <= cap and _conv_step_vmem_bytes(d, W, Cin, Cout) <= budget_bytes]
    if not feasible:
        feasible = [d for d in divisors
                    if _conv_step_vmem_bytes(d, W, Cin, Cout) <= budget_bytes] or [1]
    return max(feasible)


# ----------------------------------------------------------------------------
# Kernel 1: fused [per-channel scale/shift (+ ReLU)] -> halo'd zero-pad ->
# nine contiguous-window K=Cin matmuls -> +bias, plus per-(image, row-tile)
# channel (sum, sumsq) partials for the *following* BatchNorm.
# ----------------------------------------------------------------------------
def _conv_bn_act_stats_kernel(x_ref, xt_ref, xb_ref, scale_ref, shift_ref,
                              w_ref, b_ref, y_ref, s_ref, ss_ref, xp_ref,
                              *, apply_act):
    # x_ref:     (1, TH, W, Cin)   bf16  main row-tile of the input
    # xt_ref:    (1, 1,  W, Cin)   bf16  row above the tile (clamped at image top)
    # xb_ref:    (1, 1,  W, Cin)   bf16  row below the tile (clamped at image bottom)
    # scale_ref: (1, Cin)          f32   previous-BN scale (1.0 for conv0)
    # shift_ref: (1, Cin)          f32   previous-BN shift (0.0 for conv0)
    # w_ref:     (9, Cin, Cout)    bf16  conv taps, t = ky*3 + kx
    # b_ref:     (1, Cout)         f32   conv bias
    # y_ref:     (1, TH, W, Cout)  bf16  raw conv output tile (pre-BN)
    # s_ref:     (1, 1, 1, Cout)   f32   per-(image, tile) channel sum partial
    # ss_ref:    (1, 1, 1, Cout)   f32   per-(image, tile) channel sum-of-squares
    # xp_ref:    ((TH+2)*(W+2)+2, Cin) bf16  flat zero-padded activated tile
    _, TH, W, Cin = x_ref.shape
    Cout = y_ref.shape[-1]
    Wp = W + 2
    L = TH * Wp

    th = pl.program_id(1)
    n_th = pl.num_programs(1)

    scale = scale_ref[...]                     # (1, Cin) f32
    shift = shift_ref[...]

    def activate(v):                           # previous layer's BN affine (+ReLU), f32 math
        a = v.astype(jnp.float32) * scale + shift
        if apply_act:
            a = jnp.maximum(a, 0.0)
        return a.astype(jnp.bfloat16)

    a_main = activate(x_ref[0])                # (TH, W, Cin)
    a_top = activate(xt_ref[0, 0])             # (W, Cin)
    a_bot = activate(xb_ref[0, 0])             # (W, Cin)
    # Zero padding applied AFTER the activation => halo is exactly 0 at image edges.
    a_top = jnp.where(th == 0, jnp.zeros_like(a_top), a_top)
    a_bot = jnp.where(th == n_th - 1, jnp.zeros_like(a_bot), a_bot)

    # Flat padded buffer: flat row p*(W+2)+q  <->  padded pixel (p, q).
    # Interior + halo rows are fully overwritten; only the thin column border and
    # the 2 overflow rows are zeroed -- per step, so it stays correct when the
    # grid is sharded across TensorCores.
    z1 = jnp.zeros((1, Cin), jnp.bfloat16)
    z2 = jnp.zeros((2, Cin), jnp.bfloat16)
    xp_ref[0:1, :] = z1                                        # (p=0, q=0) left border
    for p in range(TH + 2):
        if p == 0:
            row = a_top
        elif p == TH + 1:
            row = a_bot
        else:
            row = a_main[p - 1]
        base = p * Wp
        xp_ref[base + 1:base + 1 + W, :] = row                 # data cols q = 1..W
        xp_ref[base + W + 1:base + W + 3, :] = z2              # right border + next left border
    xp_ref[(TH + 2) * Wp + 1:(TH + 2) * Wp + 2, :] = z1        # final overflow row

    # Nine taps = nine contiguous sublane-offset windows of the flat buffer,
    # accumulated as K=Cin bf16 MXU matmuls into one f32 accumulator.
    acc = jnp.zeros((L, Cout), jnp.float32)
    for t in range(9):
        off = (t // 3) * Wp + (t % 3)
        acc = acc + jnp.dot(xp_ref[off:off + L, :], w_ref[t],
                            preferred_element_type=jnp.float32)

    # Extract the W valid columns of each output row, store bf16, and take the BN
    # partial statistics from the f32 accumulator before the cast.
    bias = b_ref[...]                                          # (1, Cout) f32
    s = jnp.zeros((1, Cout), jnp.float32)
    ss = jnp.zeros((1, Cout), jnp.float32)
    for r in range(TH):
        rowv = acc[r * Wp:r * Wp + W, :] + bias                # (W, Cout) f32
        y_ref[0, r] = rowv.astype(jnp.bfloat16)
        s = s + jnp.sum(rowv, axis=0, keepdims=True)
        ss = ss + jnp.sum(rowv * rowv, axis=0, keepdims=True)
    s_ref[...] = s.reshape(1, 1, 1, Cout)
    ss_ref[...] = ss.reshape(1, 1, 1, Cout)


def conv3x3_bn_act_stats(x_nhwc, w_hwio, bias, in_scale, in_shift, apply_act):
    """[fused BN+ReLU of previous layer] -> 3x3 conv (pad=1) -> +bias, plus BN partials.

    x_nhwc: (N,H,W,Cin) bf16, w_hwio: (3,3,Cin,Cout), bias: (Cout,)
    in_scale/in_shift: (Cin,) per-channel affine applied to x before the conv.
    Returns y: (N,H,W,Cout) bf16, sum: (Cout,) f32, sumsq: (Cout,) f32.
    """
    N, H, W, Cin = x_nhwc.shape
    Cout = w_hwio.shape[-1]

    cap = _vmem_capacity_bytes()
    TH = _pick_row_tile(H, W, Cin, Cout, int(0.40 * cap))
    NT = H // TH
    vmem_limit = min(int(0.75 * cap), 100 * 1024 * 1024)

    w9 = w_hwio.reshape(9, Cin, Cout).astype(jnp.bfloat16)
    b2 = bias.reshape(1, Cout).astype(jnp.float32)
    sc2 = in_scale.reshape(1, Cin).astype(jnp.float32)
    sh2 = in_shift.reshape(1, Cin).astype(jnp.float32)

    kern = functools.partial(_conv_bn_act_stats_kernel, apply_act=apply_act)
    flat_rows = (TH + 2) * (W + 2) + 2

    y, s, ss = pl.pallas_call(
        kern,
        out_shape=(
            jax.ShapeDtypeStruct((N, H, W, Cout), jnp.bfloat16),
            jax.ShapeDtypeStruct((N, NT, 1, Cout), jnp.float32),
            jax.ShapeDtypeStruct((N, NT, 1, Cout), jnp.float32),
        ),
        grid_spec=pltpu.PrefetchScalarGridSpec(
            num_scalar_prefetch=0,
            grid=(N, NT),
            in_specs=[
                pl.BlockSpec((1, TH, W, Cin), lambda n, t: (n, t, 0, 0)),
                # 1-row halos above/below the tile (block size 1 along H, so the
                # map returns a row index); clamped at image edges, zeroed in-kernel.
                pl.BlockSpec((1, 1, W, Cin),
                             lambda n, t: (n, jnp.maximum(t * TH - 1, 0), 0, 0)),
                pl.BlockSpec((1, 1, W, Cin),
                             lambda n, t: (n, jnp.minimum((t + 1) * TH, H - 1), 0, 0)),
                pl.BlockSpec((1, Cin), lambda n, t: (0, 0)),
                pl.BlockSpec((1, Cin), lambda n, t: (0, 0)),
                pl.BlockSpec((9, Cin, Cout), lambda n, t: (0, 0, 0)),   # resident weights
                pl.BlockSpec((1, Cout), lambda n, t: (0, 0)),
            ],
            out_specs=[
                pl.BlockSpec((1, TH, W, Cout), lambda n, t: (n, t, 0, 0)),
                pl.BlockSpec((1, 1, 1, Cout), lambda n, t: (n, t, 0, 0)),
                pl.BlockSpec((1, 1, 1, Cout), lambda n, t: (n, t, 0, 0)),
            ],
            scratch_shapes=[
                pltpu.VMEM((flat_rows, Cin), jnp.bfloat16),   # flat padded tile
            ],
        ),
        compiler_params=pltpu.CompilerParams(
            dimension_semantics=("parallel", "parallel"),
            vmem_limit_bytes=vmem_limit,
        ),
    )(x_nhwc, x_nhwc, x_nhwc, sc2, sh2, w9, b2)

    # Tiny XLA-side reduction of the per-(image, tile) partials (f32 throughout).
    return y, jnp.sum(s, axis=(0, 1, 2)), jnp.sum(ss, axis=(0, 1, 2))


# ----------------------------------------------------------------------------
# Kernel 2: standalone fused BatchNorm (precomputed scale/shift) + ReLU for the
# final block output, on a lane-dense flattened view.
# ----------------------------------------------------------------------------
def _bn_relu_kernel(y_ref, scale_ref, shift_ref, o_ref):
    o_ref[...] = jnp.maximum(
        y_ref[...].astype(jnp.float32) * scale_ref[...] + shift_ref[...], 0.0)


def _pick_flat_row_tile(rows):
    for d in range(min(1024, rows), 7, -1):
        if rows % d == 0 and d % 8 == 0:
            return d
    return rows   # TODO(synk): pad rows to a multiple of 8 instead of whole-array block.


def bn_relu_lane_dense(y_flat, scale, shift):
    """relu(y*scale + shift) on a flattened (R, C) bf16 view; f32 output.

    When C < 128 and 128 % C == 0, the problem is recast as a lane-dense
    (R*C/128, 128) view with tiled scale/shift so output stores are unmasked.
    """
    R, C = y_flat.shape
    if C < 128 and 128 % C == 0 and (R * C) % 128 == 0:
        reps = 128 // C
        y2 = y_flat.reshape((R * C) // 128, 128)
        sc = jnp.tile(scale, reps).reshape(1, 128).astype(jnp.float32)
        sh = jnp.tile(shift, reps).reshape(1, 128).astype(jnp.float32)
    else:
        y2 = y_flat
        sc = scale.reshape(1, C).astype(jnp.float32)
        sh = shift.reshape(1, C).astype(jnp.float32)
    R2, C2 = y2.shape
    TR = _pick_flat_row_tile(R2)

    out = pl.pallas_call(
        _bn_relu_kernel,
        out_shape=jax.ShapeDtypeStruct((R2, C2), jnp.float32),
        grid_spec=pltpu.PrefetchScalarGridSpec(
            num_scalar_prefetch=0,
            grid=(R2 // TR,),
            in_specs=[
                pl.BlockSpec((TR, C2), lambda i: (i, 0)),
                pl.BlockSpec((1, C2), lambda i: (0, 0)),
                pl.BlockSpec((1, C2), lambda i: (0, 0)),
            ],
            out_specs=pl.BlockSpec((TR, C2), lambda i: (i, 0)),
        ),
        compiler_params=pltpu.CompilerParams(
            dimension_semantics=("parallel",)),
    )(y2, sc, sh)
    return out.reshape(R, C)


# ----------------------------------------------------------------------------
# DoubleConv forward: relu(bn0(conv0(x))) -> relu(bn1(conv1(.)))
# BatchNorm uses training-mode batch statistics (biased variance), matching a
# freshly-constructed PyTorch module in its default training mode.
# ----------------------------------------------------------------------------
@jax.jit
def double_conv_forward(x_nchw, params):
    N, Cin, H, W = x_nchw.shape
    eps = 1e-5
    cnt = N * H * W

    # Boundary layout glue (interface stays NCHW like PyTorch); activations
    # travel through HBM as bf16, statistics and BN math stay f32.
    x = jnp.transpose(x_nchw, (0, 2, 3, 1)).astype(jnp.bfloat16)   # NHWC

    # --- block 0 conv: identity pre-affine, no activation -------------------
    y0, s0, ss0 = conv3x3_bn_act_stats(
        x, params["w0"], params["b0"],
        jnp.ones((Cin,), jnp.float32), jnp.zeros((Cin,), jnp.float32),
        apply_act=False)
    mean0 = s0 / cnt
    var0 = jnp.maximum(ss0 / cnt - mean0 * mean0, 0.0)     # biased var, clamped
    scale0 = params["g0"] * jax.lax.rsqrt(var0 + eps)
    shift0 = params["be0"] - mean0 * scale0

    # --- block 1 conv: bn0 + ReLU fused into the conv input path ------------
    y1, s1, ss1 = conv3x3_bn_act_stats(
        y0, params["w1"], params["b1"], scale0, shift0, apply_act=True)
    mean1 = s1 / cnt
    var1 = jnp.maximum(ss1 / cnt - mean1 * mean1, 0.0)
    scale1 = params["g1"] * jax.lax.rsqrt(var1 + eps)
    shift1 = params["be1"] - mean1 * scale1

    # --- final standalone bn1 + ReLU (needs full-batch stats of y1) ---------
    Cout = y1.shape[-1]
    a1 = bn_relu_lane_dense(y1.reshape(N * H * W, Cout), scale1, shift1)
    a1 = a1.reshape(N, H, W, Cout)
    return jnp.transpose(a1, (0, 3, 1, 2))                 # back to NCHW, f32


def init_params(key, in_channels, out_channels, decode=False):
    mid_channels = out_channels
    if decode:
        mid_channels = in_channels // 2
    ks = jax.random.split(key, 8)
    # PyTorch Conv2d weights are OIHW; store HWIO for the kernels.
    w0_oihw = 0.1 * jax.random.normal(ks[0], (mid_channels, in_channels, 3, 3), jnp.float32)
    w1_oihw = 0.1 * jax.random.normal(ks[1], (out_channels, mid_channels, 3, 3), jnp.float32)
    return {
        "w0": jnp.transpose(w0_oihw, (2, 3, 1, 0)),
        "b0": 0.1 * jax.random.normal(ks[2], (mid_channels,), jnp.float32),
        "g0": 1.0 + 0.1 * jax.random.normal(ks[3], (mid_channels,), jnp.float32),
        "be0": 0.1 * jax.random.normal(ks[4], (mid_channels,), jnp.float32),
        "w1": jnp.transpose(w1_oihw, (2, 3, 1, 0)),
        "b1": 0.1 * jax.random.normal(ks[5], (out_channels,), jnp.float32),
        "g1": 1.0 + 0.1 * jax.random.normal(ks[6], (out_channels,), jnp.float32),
        "be1": 0.1 * jax.random.normal(ks[7], (out_channels,), jnp.float32),
    }


if __name__ == "__main__":
    key = jax.random.PRNGKey(0)
    k_x, k_p = jax.random.split(key)

    in_channels, out_channels = 4, 8
    N, H, W = 2, 16, 16

    x = jax.random.normal(k_x, (N, in_channels, H, W), jnp.float32)  # NCHW
    params = init_params(k_p, in_channels, out_channels, decode=False)

    out = double_conv_forward(x, params)
    out = jax.block_until_ready(out)

    assert out.shape == (N, out_channels, H, W), out.shape
    assert out.dtype == jnp.float32
    assert bool(jnp.all(out >= 0.0))  # ReLU output
    print("KERNEL_OK")
</pallas_src>

<mosaic_0001>
module attributes {stable_mosaic.version = 11 : i64} {
  func.func @_conv_bn_act_stats_kernel(%arg0: i32, %arg1: i32, %arg2: memref<1x8x16x4xbf16, #tpu.memory_space<vmem>>, %arg3: memref<1x1x16x4xbf16, #tpu.memory_space<vmem>>, %arg4: memref<1x1x16x4xbf16, #tpu.memory_space<vmem>>, %arg5: memref<1x4xf32, #tpu.memory_space<vmem>>, %arg6: memref<1x4xf32, #tpu.memory_space<vmem>>, %arg7: memref<9x4x8xbf16, #tpu.memory_space<vmem>>, %arg8: memref<1x8xf32, #tpu.memory_space<vmem>>, %arg9: memref<1x8x16x8xbf16, #tpu.memory_space<vmem>>, %arg10: memref<1x1x1x8xf32, #tpu.memory_space<vmem>>, %arg11: memref<1x1x1x8xf32, #tpu.memory_space<vmem>>, %arg12: memref<182x4xbf16, #tpu.memory_space<vmem>>) attributes {dimension_semantics = [#tpu.dimension_semantics<parallel>, #tpu.dimension_semantics<parallel>], iteration_bounds = array<i64: 2, 2>, scalar_prefetch = 0 : i64, scratch_operands = 1 : i64, tpu.core_type = #tpu.core_type<tc>, window_params = [{transform_indices = @transform_0, window_bounds = array<i64: 1, 8, 16, 4>}, {transform_indices = @transform_1, window_bounds = array<i64: 1, 1, 16, 4>}, {transform_indices = @transform_2, window_bounds = array<i64: 1, 1, 16, 4>}, {pipeline_mode = #tpu.pipeline_mode<synchronous>, transform_indices = @transform_3, window_bounds = array<i64: 1, 4>}, {pipeline_mode = #tpu.pipeline_mode<synchronous>, transform_indices = @transform_4, window_bounds = array<i64: 1, 4>}, {pipeline_mode = #tpu.pipeline_mode<synchronous>, transform_indices = @transform_5, window_bounds = array<i64: 9, 4, 8>}, {pipeline_mode = #tpu.pipeline_mode<synchronous>, transform_indices = @transform_6, window_bounds = array<i64: 1, 8>}, {transform_indices = @transform_7, window_bounds = array<i64: 1, 8, 16, 8>}, {transform_indices = @transform_8, window_bounds = array<i64: 1, 1, 1, 8>}, {transform_indices = @transform_9, window_bounds = array<i64: 1, 1, 1, 8>}]} {
    %c0 = arith.constant 0 : index
    %c0_0 = arith.constant 0 : index
    %0 = vector.load %arg5[%c0, %c0_0] : memref<1x4xf32, #tpu.memory_space<vmem>>, vector<1x4xf32>
    %c0_1 = arith.constant 0 : index
    %c0_2 = arith.constant 0 : index
    %1 = vector.load %arg6[%c0_1, %c0_2] : memref<1x4xf32, #tpu.memory_space<vmem>>, vector<1x4xf32>
    %c0_3 = arith.constant 0 : index
    %c0_4 = arith.constant 0 : index
    %c0_5 = arith.constant 0 : index
    %c0_6 = arith.constant 0 : index
    %2 = vector.load %arg2[%c0_3, %c0_4, %c0_5, %c0_6] : memref<1x8x16x4xbf16, #tpu.memory_space<vmem>>, vector<1x8x16x4xbf16>
    %3 = vector.shape_cast %2 : vector<1x8x16x4xbf16> to vector<8x16x4xbf16>
    %4 = arith.extf %3 : vector<8x16x4xbf16> to vector<8x16x4xf32>
    %5 = vector.shape_cast %0 : vector<1x4xf32> to vector<1x1x4xf32>
    %6 = vector.broadcast %5 : vector<1x1x4xf32> to vector<8x16x4xf32>
    %7 = arith.mulf %4, %6 : vector<8x16x4xf32>
    %8 = vector.shape_cast %1 : vector<1x4xf32> to vector<1x1x4xf32>
    %9 = vector.broadcast %8 : vector<1x1x4xf32> to vector<8x16x4xf32>
    %10 = arith.addf %7, %9 : vector<8x16x4xf32>
    %11 = arith.truncf %10 : vector<8x16x4xf32> to vector<8x16x4xbf16>
    %c0_7 = arith.constant 0 : index
    %c0_8 = arith.constant 0 : index
    %c0_9 = arith.constant 0 : index
    %c0_10 = arith.constant 0 : index
    %12 = vector.load %arg3[%c0_7, %c0_8, %c0_9, %c0_10] : memref<1x1x16x4xbf16, #tpu.memory_space<vmem>>, vector<1x1x16x4xbf16>
    %13 = vector.shape_cast %12 : vector<1x1x16x4xbf16> to vector<16x4xbf16>
    %14 = arith.extf %13 : vector<16x4xbf16> to vector<16x4xf32>
    %15 = vector.broadcast %0 : vector<1x4xf32> to vector<16x4xf32>
    %16 = arith.mulf %14, %15 : vector<16x4xf32>
    %17 = vector.broadcast %1 : vector<1x4xf32> to vector<16x4xf32>
    %18 = arith.addf %16, %17 : vector<16x4xf32>
    %19 = arith.truncf %18 : vector<16x4xf32> to vector<16x4xbf16>
    %c0_11 = arith.constant 0 : index
    %c0_12 = arith.constant 0 : index
    %c0_13 = arith.constant 0 : index
    %c0_14 = arith.constant 0 : index
    %20 = vector.load %arg4[%c0_11, %c0_12, %c0_13, %c0_14] : memref<1x1x16x4xbf16, #tpu.memory_space<vmem>>, vector<1x1x16x4xbf16>
    %21 = vector.shape_cast %20 : vector<1x1x16x4xbf16> to vector<16x4xbf16>
    %22 = arith.extf %21 : vector<16x4xbf16> to vector<16x4xf32>
    %23 = vector.broadcast %0 : vector<1x4xf32> to vector<16x4xf32>
    %24 = arith.mulf %22, %23 : vector<16x4xf32>
    %25 = vector.broadcast %1 : vector<1x4xf32> to vector<16x4xf32>
    %26 = arith.addf %24, %25 : vector<16x4xf32>
    %27 = arith.truncf %26 : vector<16x4xf32> to vector<16x4xbf16>
    %c0_i32 = arith.constant 0 : i32
    %28 = arith.cmpi eq, %arg1, %c0_i32 : i32
    %cst = arith.constant 0.000000e+00 : bf16
    %29 = vector.broadcast %cst : bf16 to vector<16x4xbf16>
    %30 = arith.select %28, %29, %19 : vector<16x4xbf16>
    %c1_i32 = arith.constant 1 : i32
    %31 = arith.cmpi eq, %arg1, %c1_i32 : i32
    %cst_15 = arith.constant 0.000000e+00 : bf16
    %32 = vector.broadcast %cst_15 : bf16 to vector<16x4xbf16>
    %33 = arith.select %31, %32, %27 : vector<16x4xbf16>
    %cst_16 = arith.constant 0.000000e+00 : bf16
    %34 = vector.broadcast %cst_16 : bf16 to vector<1x4xbf16>
    %cst_17 = arith.constant 0.000000e+00 : bf16
    %35 = vector.broadcast %cst_17 : bf16 to vector<2x4xbf16>
    %c0_18 = arith.constant 0 : index
    %c0_19 = arith.constant 0 : index
    %36 = vector.load %arg12[%c0_18, %c0_19] : memref<182x4xbf16, #tpu.memory_space<vmem>>, vector<1x4xbf16>
    tpu.vector_store %arg12[%c0_18, %c0_19], %34 {strides = array<i32>} : memref<182x4xbf16, #tpu.memory_space<vmem>>, vector<1x4xbf16>,
    %c1 = arith.constant 1 : index
    %c0_20 = arith.constant 0 : index
    %37 = vector.load %arg12[%c1, %c0_20] : memref<182x4xbf16, #tpu.memory_space<vmem>>, vector<16x4xbf16>
    tpu.vector_store %arg12[%c1, %c0_20], %30 {strides = array<i32>} : memref<182x4xbf16, #tpu.memory_space<vmem>>, vector<16x4xbf16>,
    %c17 = arith.constant 17 : index
    %c0_21 = arith.constant 0 : index
    %38 = vector.load %arg12[%c17, %c0_21] : memref<182x4xbf16, #tpu.memory_space<vmem>>, vector<2x4xbf16>
    tpu.vector_store %arg12[%c17, %c0_21], %35 {strides = array<i32>} : memref<182x4xbf16, #tpu.memory_space<vmem>>, vector<2x4xbf16>,
    %39 = vector.extract_strided_slice %11 {offsets = [0, 0, 0], sizes = [1, 16, 4], strides = [1, 1, 1]} : vector<8x16x4xbf16> to vector<1x16x4xbf16>
    %40 = vector.shape_cast %39 : vector<1x16x4xbf16> to vector<16x4xbf16>
    %c19 = arith.constant 19 : index
    %c0_22 = arith.constant 0 : index
    %41 = vector.load %arg12[%c19, %c0_22] : memref<182x4xbf16, #tpu.memory_space<vmem>>, vector<16x4xbf16>
    tpu.vector_store %arg12[%c19, %c0_22], %40 {strides = array<i32>} : memref<182x4xbf16, #tpu.memory_space<vmem>>, vector<16x4xbf16>,
    %c35 = arith.constant 35 : index
    %c0_23 = arith.constant 0 : index
    %42 = vector.load %arg12[%c35, %c0_23] : memref<182x4xbf16, #tpu.memory_space<vmem>>, vector<2x4xbf16>
    tpu.vector_store %arg12[%c35, %c0_23], %35 {strides = array<i32>} : memref<182x4xbf16, #tpu.memory_space<vmem>>, vector<2x4xbf16>,
    %43 = vector.extract_strided_slice %11 {offsets = [1, 0, 0], sizes = [1, 16, 4], strides = [1, 1, 1]} : vector<8x16x4xbf16> to vector<1x16x4xbf16>
    %44 = vector.shape_cast %43 : vector<1x16x4xbf16> to vector<16x4xbf16>
    %c37 = arith.constant 37 : index
    %c0_24 = arith.constant 0 : index
    %45 = vector.load %arg12[%c37, %c0_24] : memref<182x4xbf16, #tpu.memory_space<vmem>>, vector<16x4xbf16>
    tpu.vector_store %arg12[%c37, %c0_24], %44 {strides = array<i32>} : memref<182x4xbf16, #tpu.memory_space<vmem>>, vector<16x4xbf16>,
    %c53 = arith.constant 53 : index
    %c0_25 = arith.constant 0 : index
    %46 = vector.load %arg12[%c53, %c0_25] : memref<182x4xbf16, #tpu.memory_space<vmem>>, vector<2x4xbf16>
    tpu.vector_store %arg12[%c53, %c0_25], %35 {strides = array<i32>} : memref<182x4xbf16, #tpu.memory_space<vmem>>, vector<2x4xbf16>,
    %47 = vector.extract_strided_slice %11 {offsets = [2, 0, 0], sizes = [1, 16, 4], strides = [1, 1, 1]} : vector<8x16x4xbf16> to vector<1x16x4xbf16>
    %48 = vector.shape_cast %47 : vector<1x16x4xbf16> to vector<16x4xbf16>
    %c55 = arith.constant 55 : index
    %c0_26 = arith.constant 0 : index
    %49 = vector.load %arg12[%c55, %c0_26] : memref<182x4xbf16, #tpu.memory_space<vmem>>, vector<16x4xbf16>
    tpu.vector_store %arg12[%c55, %c0_26], %48 {strides = array<i32>} : memref<182x4xbf16, #tpu.memory_space<vmem>>, vector<16x4xbf16>,
    %c71 = arith.constant 71 : index
    %c0_27 = arith.constant 0 : index
    %50 = vector.load %arg12[%c71, %c0_27] : memref<182x4xbf16, #tpu.memory_space<vmem>>, vector<2x4xbf16>
    tpu.vector_store %arg12[%c71, %c0_27], %35 {strides = array<i32>} : memref<182x4xbf16, #tpu.memory_space<vmem>>, vector<2x4xbf16>,
    %51 = vector.extract_strided_slice %11 {offsets = [3, 0, 0], sizes = [1, 16, 4], strides = [1, 1, 1]} : vector<8x16x4xbf16> to vector<1x16x4xbf16>
    %52 = vector.shape_cast %51 : vector<1x16x4xbf16> to vector<16x4xbf16>
    %c73 = arith.constant 73 : index
    %c0_28 = arith.constant 0 : index
    %53 = vector.load %arg12[%c73, %c0_28] : memref<182x4xbf16, #tpu.memory_space<vmem>>, vector<16x4xbf16>
    tpu.vector_store %arg12[%c73, %c0_28], %52 {strides = array<i32>} : memref<182x4xbf16, #tpu.memory_space<vmem>>, vector<16x4xbf16>,
    %c89 = arith.constant 89 : index
    %c0_29 = arith.constant 0 : index
    %54 = vector.load %arg12[%c89, %c0_29] : memref<182x4xbf16, #tpu.memory_space<vmem>>, vector<2x4xbf16>
    tpu.vector_store %arg12[%c89, %c0_29], %35 {strides = array<i32>} : memref<182x4xbf16, #tpu.memory_space<vmem>>, vector<2x4xbf16>,
    %55 = vector.extract_strided_slice %11 {offsets = [4, 0, 0], sizes = [1, 16, 4], strides = [1, 1, 1]} : vector<8x16x4xbf16> to vector<1x16x4xbf16>
    %56 = vector.shape_cast %55 : vector<1x16x4xbf16> to vector<16x4xbf16>
    %c91 = arith.constant 91 : index
    %c0_30 = arith.constant 0 : index
    %57 = vector.load %arg12[%c91, %c0_30] : memref<182x4xbf16, #tpu.memory_space<vmem>>, vector<16x4xbf16>
    tpu.vector_store %arg12[%c91, %c0_30], %56 {strides = array<i32>} : memref<182x4xbf16, #tpu.memory_space<vmem>>, vector<16x4xbf16>,
    %c107 = arith.constant 107 : index
    %c0_31 = arith.constant 0 : index
    %58 = vector.load %arg12[%c107, %c0_31] : memref<182x4xbf16, #tpu.memory_space<vmem>>, vector<2x4xbf16>
    tpu.vector_store %arg12[%c107, %c0_31], %35 {strides = array<i32>} : memref<182x4xbf16, #tpu.memory_space<vmem>>, vector<2x4xbf16>,
    %59 = vector.extract_strided_slice %11 {offsets = [5, 0, 0], sizes = [1, 16, 4], strides = [1, 1, 1]} : vector<8x16x4xbf16> to vector<1x16x4xbf16>
    %60 = vector.shape_cast %59 : vector<1x16x4xbf16> to vector<16x4xbf16>
    %c109 = arith.constant 109 : index
    %c0_32 = arith.constant 0 : index
    %61 = vector.load %arg12[%c109, %c0_32] : memref<182x4xbf16, #tpu.memory_space<vmem>>, vector<16x4xbf16>
    tpu.vector_store %arg12[%c109, %c0_32], %60 {strides = array<i32>} : memref<182x4xbf16, #tpu.memory_space<vmem>>, vector<16x4xbf16>,
    %c125 = arith.constant 125 : index
    %c0_33 = arith.constant 0 : index
    %62 = vector.load %arg12[%c125, %c0_33] : memref<182x4xbf16, #tpu.memory_space<vmem>>, vector<2x4xbf16>
    tpu.vector_store %arg12[%c125, %c0_33], %35 {strides = array<i32>} : memref<182x4xbf16, #tpu.memory_space<vmem>>, vector<2x4xbf16>,
    %63 = vector.extract_strided_slice %11 {offsets = [6, 0, 0], sizes = [1, 16, 4], strides = [1, 1, 1]} : vector<8x16x4xbf16> to vector<1x16x4xbf16>
    %64 = vector.shape_cast %63 : vector<1x16x4xbf16> to vector<16x4xbf16>
    %c127 = arith.constant 127 : index
    %c0_34 = arith.constant 0 : index
    %65 = vector.load %arg12[%c127, %c0_34] : memref<182x4xbf16, #tpu.memory_space<vmem>>, vector<16x4xbf16>
    tpu.vector_store %arg12[%c127, %c0_34], %64 {strides = array<i32>} : memref<182x4xbf16, #tpu.memory_space<vmem>>, vector<16x4xbf16>,
    %c143 = arith.constant 143 : index
    %c0_35 = arith.constant 0 : index
    %66 = vector.load %arg12[%c143, %c0_35] : memref<182x4xbf16, #tpu.memory_space<vmem>>, vector<2x4xbf16>
    tpu.vector_store %arg12[%c143, %c0_35], %35 {strides = array<i32>} : memref<182x4xbf16, #tpu.memory_space<vmem>>, vector<2x4xbf16>,
    %67 = vector.extract_strided_slice %11 {offsets = [7, 0, 0], sizes = [1, 16, 4], strides = [1, 1, 1]} : vector<8x16x4xbf16> to vector<1x16x4xbf16>
    %68 = vector.shape_cast %67 : vector<1x16x4xbf16> to vector<16x4xbf16>
    %c145 = arith.constant 145 : index
    %c0_36 = arith.constant 0 : index
    %69 = vector.load %arg12[%c145, %c0_36] : memref<182x4xbf16, #tpu.memory_space<vmem>>, vector<16x4xbf16>
    tpu.vector_store %arg12[%c145, %c0_36], %68 {strides = array<i32>} : memref<182x4xbf16, #tpu.memory_space<vmem>>, vector<16x4xbf16>,
    %c161 = arith.constant 161 : index
    %c0_37 = arith.constant 0 : index
    %70 = vector.load %arg12[%c161, %c0_37] : memref<182x4xbf16, #tpu.memory_space<vmem>>, vector<2x4xbf16>
    tpu.vector_store %arg12[%c161, %c0_37], %35 {strides = array<i32>} : memref<182x4xbf16, #tpu.memory_space<vmem>>, vector<2x4xbf16>,
    %c163 = arith.constant 163 : index
    %c0_38 = arith.constant 0 : index
    %71 = vector.load %arg12[%c163, %c0_38] : memref<182x4xbf16, #tpu.memory_space<vmem>>, vector<16x4xbf16>
    tpu.vector_store %arg12[%c163, %c0_38], %33 {strides = array<i32>} : memref<182x4xbf16, #tpu.memory_space<vmem>>, vector<16x4xbf16>,
    %c179 = arith.constant 179 : index
    %c0_39 = arith.constant 0 : index
    %72 = vector.load %arg12[%c179, %c0_39] : memref<182x4xbf16, #tpu.memory_space<vmem>>, vector<2x4xbf16>
    tpu.vector_store %arg12[%c179, %c0_39], %35 {strides = array<i32>} : memref<182x4xbf16, #tpu.memory_space<vmem>>, vector<2x4xbf16>,
    %c181 = arith.constant 181 : index
    %c0_40 = arith.constant 0 : index
    %73 = vector.load %arg12[%c181, %c0_40] : memref<182x4xbf16, #tpu.memory_space<vmem>>, vector<1x4xbf16>
    tpu.vector_store %arg12[%c181, %c0_40], %34 {strides = array<i32>} : memref<182x4xbf16, #tpu.memory_space<vmem>>, vector<1x4xbf16>,
    %cst_41 = arith.constant 0.000000e+00 : f32
    %74 = vector.broadcast %cst_41 : f32 to vector<144x8xf32>
    %c0_42 = arith.constant 0 : index
    %c0_43 = arith.constant 0 : index
    %75 = vector.load %arg12[%c0_42, %c0_43] : memref<182x4xbf16, #tpu.memory_space<vmem>>, vector<144x4xbf16>
    %c0_44 = arith.constant 0 : index
    %c0_45 = arith.constant 0 : index
    %c0_46 = arith.constant 0 : index
    %76 = vector.load %arg7[%c0_44, %c0_45, %c0_46] : memref<9x4x8xbf16, #tpu.memory_space<vmem>>, vector<1x4x8xbf16>
    %77 = vector.shape_cast %76 : vector<1x4x8xbf16> to vector<4x8xbf16>
    %cst_47 = arith.constant dense<0.000000e+00> : vector<144x8xf32>
    %78 = tpu.matmul %75, %77, %cst_47 {dimension_numbers = #tpu.dot_dimension_numbers<[1], [0], [0], [1], [0, 0, 1, 1], [], []>} : vector<144x4xbf16>, vector<4x8xbf16>, vector<144x8xf32> -> vector<144x8xf32>
    %79 = arith.addf %74, %78 : vector<144x8xf32>
    %c1_48 = arith.constant 1 : index
    %c0_49 = arith.constant 0 : index
    %80 = vector.load %arg12[%c1_48, %c0_49] : memref<182x4xbf16, #tpu.memory_space<vmem>>, vector<144x4xbf16>
    %c1_50 = arith.constant 1 : index
    %c0_51 = arith.constant 0 : index
    %c0_52 = arith.constant 0 : index
    %81 = vector.load %arg7[%c1_50, %c0_51, %c0_52] : memref<9x4x8xbf16, #tpu.memory_space<vmem>>, vector<1x4x8xbf16>
    %82 = vector.shape_cast %81 : vector<1x4x8xbf16> to vector<4x8xbf16>
    %cst_53 = arith.constant dense<0.000000e+00> : vector<144x8xf32>
    %83 = tpu.matmul %80, %82, %cst_53 {dimension_numbers = #tpu.dot_dimension_numbers<[1], [0], [0], [1], [0, 0, 1, 1], [], []>} : vector<144x4xbf16>, vector<4x8xbf16>, vector<144x8xf32> -> vector<144x8xf32>
    %84 = arith.addf %79, %83 : vector<144x8xf32>
    %c2 = arith.constant 2 : index
    %c0_54 = arith.constant 0 : index
    %85 = vector.load %arg12[%c2, %c0_54] : memref<182x4xbf16, #tpu.memory_space<vmem>>, vector<144x4xbf16>
    %c2_55 = arith.constant 2 : index
    %c0_56 = arith.constant 0 : index
    %c0_57 = arith.constant 0 : index
    %86 = vector.load %arg7[%c2_55, %c0_56, %c0_57] : memref<9x4x8xbf16, #tpu.memory_space<vmem>>, vector<1x4x8xbf16>
    %87 = vector.shape_cast %86 : vector<1x4x8xbf16> to vector<4x8xbf16>
    %cst_58 = arith.constant dense<0.000000e+00> : vector<144x8xf32>
    %88 = tpu.matmul %85, %87, %cst_58 {dimension_numbers = #tpu.dot_dimension_numbers<[1], [0], [0], [1], [0, 0, 1, 1], [], []>} : vector<144x4xbf16>, vector<4x8xbf16>, vector<144x8xf32> -> vector<144x8xf32>
    %89 = arith.addf %84, %88 : vector<144x8xf32>
    %c18 = arith.constant 18 : index
    %c0_59 = arith.constant 0 : index
    %90 = vector.load %arg12[%c18, %c0_59] : memref<182x4xbf16, #tpu.memory_space<vmem>>, vector<144x4xbf16>
    %c3 = arith.constant 3 : index
    %c0_60 = arith.constant 0 : index
    %c0_61 = arith.constant 0 : index
    %91 = vector.load %arg7[%c3, %c0_60, %c0_61] : memref<9x4x8xbf16, #tpu.memory_space<vmem>>, vector<1x4x8xbf16>
    %92 = vector.shape_cast %91 : vector<1x4x8xbf16> to vector<4x8xbf16>
    %cst_62 = arith.constant dense<0.000000e+00> : vector<144x8xf32>
    %93 = tpu.matmul %90, %92, %cst_62 {dimension_numbers = #tpu.dot_dimension_numbers<[1], [0], [0], [1], [0, 0, 1, 1], [], []>} : vector<144x4xbf16>, vector<4x8xbf16>, vector<144x8xf32> -> vector<144x8xf32>
    %94 = arith.addf %89, %93 : vector<144x8xf32>
    %c19_63 = arith.constant 19 : index
    %c0_64 = arith.constant 0 : index
    %95 = vector.load %arg12[%c19_63, %c0_64] : memref<182x4xbf16, #tpu.memory_space<vmem>>, vector<144x4xbf16>
    %c4 = arith.constant 4 : index
    %c0_65 = arith.constant 0 : index
    %c0_66 = arith.constant 0 : index
    %96 = vector.load %arg7[%c4, %c0_65, %c0_66] : memref<9x4x8xbf16, #tpu.memory_space<vmem>>, vector<1x4x8xbf16>
    %97 = vector.shape_cast %96 : vector<1x4x8xbf16> to vector<4x8xbf16>
    %cst_67 = arith.constant dense<0.000000e+00> : vector<144x8xf32>
    %98 = tpu.matmul %95, %97, %cst_67 {dimension_numbers = #tpu.dot_dimension_numbers<[1], [0], [0], [1], [0, 0, 1, 1], [], []>} : vector<144x4xbf16>, vector<4x8xbf16>, vector<144x8xf32> -> vector<144x8xf32>
    %99 = arith.addf %94, %98 : vector<144x8xf32>
    %c20 = arith.constant 20 : index
    %c0_68 = arith.constant 0 : index
    %100 = vector.load %arg12[%c20, %c0_68] : memref<182x4xbf16, #tpu.memory_space<vmem>>, vector<144x4xbf16>
    %c5 = arith.constant 5 : index
    %c0_69 = arith.constant 0 : index
    %c0_70 = arith.constant 0 : index
    %101 = vector.load %arg7[%c5, %c0_69, %c0_70] : memref<9x4x8xbf16, #tpu.memory_space<vmem>>, vector<1x4x8xbf16>
    %102 = vector.shape_cast %101 : vector<1x4x8xbf16> to vector<4x8xbf16>
    %cst_71 = arith.constant dense<0.000000e+00> : vector<144x8xf32>
    %103 = tpu.matmul %100, %102, %cst_71 {dimension_numbers = #tpu.dot_dimension_numbers<[1], [0], [0], [1], [0, 0, 1, 1], [], []>} : vector<144x4xbf16>, vector<4x8xbf16>, vector<144x8xf32> -> vector<144x8xf32>
    %104 = arith.addf %99, %103 : vector<144x8xf32>
    %c36 = arith.constant 36 : index
    %c0_72 = arith.constant 0 : index
    %105 = vector.load %arg12[%c36, %c0_72] : memref<182x4xbf16, #tpu.memory_space<vmem>>, vector<144x4xbf16>
    %c6 = arith.constant 6 : index
    %c0_73 = arith.constant 0 : index
    %c0_74 = arith.constant 0 : index
    %106 = vector.load %arg7[%c6, %c0_73, %c0_74] : memref<9x4x8xbf16, #tpu.memory_space<vmem>>, vector<1x4x8xbf16>
    %107 = vector.shape_cast %106 : vector<1x4x8xbf16> to vector<4x8xbf16>
    %cst_75 = arith.constant dense<0.000000e+00> : vector<144x8xf32>
    %108 = tpu.matmul %105, %107, %cst_75 {dimension_numbers = #tpu.dot_dimension_numbers<[1], [0], [0], [1], [0, 0, 1, 1], [], []>} : vector<144x4xbf16>, vector<4x8xbf16>, vector<144x8xf32> -> vector<144x8xf32>
    %109 = arith.addf %104, %108 : vector<144x8xf32>
    %c37_76 = arith.constant 37 : index
    %c0_77 = arith.constant 0 : index
    %110 = vector.load %arg12[%c37_76, %c0_77] : memref<182x4xbf16, #tpu.memory_space<vmem>>, vector<144x4xbf16>
    %c7 = arith.constant 7 : index
    %c0_78 = arith.constant 0 : index
    %c0_79 = arith.constant 0 : index
    %111 = vector.load %arg7[%c7, %c0_78, %c0_79] : memref<9x4x8xbf16, #tpu.memory_space<vmem>>, vector<1x4x8xbf16>
    %112 = vector.shape_cast %111 : vector<1x4x8xbf16> to vector<4x8xbf16>
    %cst_80 = arith.constant dense<0.000000e+00> : vector<144x8xf32>
    %113 = tpu.matmul %110, %112, %cst_80 {dimension_numbers = #tpu.dot_dimension_numbers<[1], [0], [0], [1], [0, 0, 1, 1], [], []>} : vector<144x4xbf16>, vector<4x8xbf16>, vector<144x8xf32> -> vector<144x8xf32>
    %114 = arith.addf %109, %113 : vector<144x8xf32>
    %c38 = arith.constant 38 : index
    %c0_81 = arith.constant 0 : index
    %115 = vector.load %arg12[%c38, %c0_81] : memref<182x4xbf16, #tpu.memory_space<vmem>>, vector<144x4xbf16>
    %c8 = arith.constant 8 : index
    %c0_82 = arith.constant 0 : index
    %c0_83 = arith.constant 0 : index
    %116 = vector.load %arg7[%c8, %c0_82, %c0_83] : memref<9x4x8xbf16, #tpu.memory_space<vmem>>, vector<1x4x8xbf16>
    %117 = vector.shape_cast %116 : vector<1x4x8xbf16> to vector<4x8xbf16>
    %cst_84 = arith.constant dense<0.000000e+00> : vector<144x8xf32>
    %118 = tpu.matmul %115, %117, %cst_84 {dimension_numbers = #tpu.dot_dimension_numbers<[1], [0], [0], [1], [0, 0, 1, 1], [], []>} : vector<144x4xbf16>, vector<4x8xbf16>, vector<144x8xf32> -> vector<144x8xf32>
    %119 = arith.addf %114, %118 : vector<144x8xf32>
    %c0_85 = arith.constant 0 : index
    %c0_86 = arith.constant 0 : index
    %120 = vector.load %arg8[%c0_85, %c0_86] : memref<1x8xf32, #tpu.memory_space<vmem>>, vector<1x8xf32>
    %cst_87 = arith.constant 0.000000e+00 : f32
    %121 = vector.broadcast %cst_87 : f32 to vector<1x8xf32>
    %cst_88 = arith.constant 0.000000e+00 : f32
    %122 = vector.broadcast %cst_88 : f32 to vector<1x8xf32>
    %123 = vector.extract_strided_slice %119 {offsets = [0, 0], sizes = [16, 8], strides = [1, 1]} : vector<144x8xf32> to vector<16x8xf32>
    %124 = vector.broadcast %120 : vector<1x8xf32> to vector<16x8xf32>
    %125 = arith.addf %123, %124 : vector<16x8xf32>
    %126 = arith.truncf %125 : vector<16x8xf32> to vector<16x8xbf16>
    %c0_89 = arith.constant 0 : index
    %c0_90 = arith.constant 0 : index
    %c0_91 = arith.constant 0 : index
    %c0_92 = arith.constant 0 : index
    %127 = vector.load %arg9[%c0_89, %c0_90, %c0_91, %c0_92] : memref<1x8x16x8xbf16, #tpu.memory_space<vmem>>, vector<1x1x16x8xbf16>
    %128 = vector.shape_cast %127 : vector<1x1x16x8xbf16> to vector<16x8xbf16>
    %129 = vector.shape_cast %126 : vector<16x8xbf16> to vector<1x1x16x8xbf16>
    tpu.vector_store %arg9[%c0_89, %c0_90, %c0_91, %c0_92], %129 {strides = array<i32>} : memref<1x8x16x8xbf16, #tpu.memory_space<vmem>>, vector<1x1x16x8xbf16>,
    %cst_93 = arith.constant dense<0.000000e+00> : vector<8xf32>
    %130 = vector.multi_reduction <add>, %125, %cst_93 [0] : vector<16x8xf32> to vector<8xf32>
    %131 = vector.shape_cast %130 : vector<8xf32> to vector<1x8xf32>
    %132 = arith.addf %121, %131 : vector<1x8xf32>
    %133 = arith.mulf %125, %125 : vector<16x8xf32>
    %cst_94 = arith.constant dense<0.000000e+00> : vector<8xf32>
    %134 = vector.multi_reduction <add>, %133, %cst_94 [0] : vector<16x8xf32> to vector<8xf32>
    %135 = vector.shape_cast %134 : vector<8xf32> to vector<1x8xf32>
    %136 = arith.addf %122, %135 : vector<1x8xf32>
    %137 = vector.extract_strided_slice %119 {offsets = [18, 0], sizes = [16, 8], strides = [1, 1]} : vector<144x8xf32> to vector<16x8xf32>
    %138 = vector.broadcast %120 : vector<1x8xf32> to vector<16x8xf32>
    %139 = arith.addf %137, %138 : vector<16x8xf32>
    %140 = arith.truncf %139 : vector<16x8xf32> to vector<16x8xbf16>
    %c0_95 = arith.constant 0 : index
    %c1_96 = arith.constant 1 : index
    %c0_97 = arith.constant 0 : index
    %c0_98 = arith.constant 0 : index
    %141 = vector.load %arg9[%c0_95, %c1_96, %c0_97, %c0_98] : memref<1x8x16x8xbf16, #tpu.memory_space<vmem>>, vector<1x1x16x8xbf16>
    %142 = vector.shape_cast %141 : vector<1x1x16x8xbf16> to vector<16x8xbf16>
    %143 = vector.shape_cast %140 : vector<16x8xbf16> to vector<1x1x16x8xbf16>
    tpu.vector_store %arg9[%c0_95, %c1_96, %c0_97, %c0_98], %143 {strides = array<i32>} : memref<1x8x16x8xbf16, #tpu.memory_space<vmem>>, vector<1x1x16x8xbf16>,
    %cst_99 = arith.constant dense<0.000000e+00> : vector<8xf32>
    %144 = vector.multi_reduction <add>, %139, %cst_99 [0] : vector<16x8xf32> to vector<8xf32>
    %145 = vector.shape_cast %144 : vector<8xf32> to vector<1x8xf32>
    %146 = arith.addf %132, %145 : vector<1x8xf32>
    %147 = arith.mulf %139, %139 : vector<16x8xf32>
    %cst_100 = arith.constant dense<0.000000e+00> : vector<8xf32>
    %148 = vector.multi_reduction <add>, %147, %cst_100 [0] : vector<16x8xf32> to vector<8xf32>
    %149 = vector.shape_cast %148 : vector<8xf32> to vector<1x8xf32>
    %150 = arith.addf %136, %149 : vector<1x8xf32>
    %151 = vector.extract_strided_slice %119 {offsets = [36, 0], sizes = [16, 8], strides = [1, 1]} : vector<144x8xf32> to vector<16x8xf32>
    %152 = vector.broadcast %120 : vector<1x8xf32> to vector<16x8xf32>
    %153 = arith.addf %151, %152 : vector<16x8xf32>
    %154 = arith.truncf %153 : vector<16x8xf32> to vector<16x8xbf16>
    %c0_101 = arith.constant 0 : index
    %c2_102 = arith.constant 2 : index
    %c0_103 = arith.constant 0 : index
    %c0_104 = arith.constant 0 : index
    %155 = vector.load %arg9[%c0_101, %c2_102, %c0_103, %c0_104] : memref<1x8x16x8xbf16, #tpu.memory_space<vmem>>, vector<1x1x16x8xbf16>
    %156 = vector.shape_cast %155 : vector<1x1x16x8xbf16> to vector<16x8xbf16>
    %157 = vector.shape_cast %154 : vector<16x8xbf16> to vector<1x1x16x8xbf16>
    tpu.vector_store %arg9[%c0_101, %c2_102, %c0_103, %c0_104], %157 {strides = array<i32>} : memref<1x8x16x8xbf16, #tpu.memory_space<vmem>>, vector<1x1x16x8xbf16>,
    %cst_105 = arith.constant dense<0.000000e+00> : vector<8xf32>
    %158 = vector.multi_reduction <add>, %153, %cst_105 [0] : vector<16x8xf32> to vector<8xf32>
    %159 = vector.shape_cast %158 : vector<8xf32> to vector<1x8xf32>
    %160 = arith.addf %146, %159 : vector<1x8xf32>
    %161 = arith.mulf %153, %153 : vector<16x8xf32>
    %cst_106 = arith.constant dense<0.000000e+00> : vector<8xf32>
    %162 = vector.multi_reduction <add>, %161, %cst_106 [0] : vector<16x8xf32> to vector<8xf32>
    %163 = vector.shape_cast %162 : vector<8xf32> to vector<1x8xf32>
    %164 = arith.addf %150, %163 : vector<1x8xf32>
    %165 = vector.extract_strided_slice %119 {offsets = [54, 0], sizes = [16, 8], strides = [1, 1]} : vector<144x8xf32> to vector<16x8xf32>
    %166 = vector.broadcast %120 : vector<1x8xf32> to vector<16x8xf32>
    %167 = arith.addf %165, %166 : vector<16x8xf32>
    %168 = arith.truncf %167 : vector<16x8xf32> to vector<16x8xbf16>
    %c0_107 = arith.constant 0 : index
    %c3_108 = arith.constant 3 : index
    %c0_109 = arith.constant 0 : index
    %c0_110 = arith.constant 0 : index
    %169 = vector.load %arg9[%c0_107, %c3_108, %c0_109, %c0_110] : memref<1x8x16x8xbf16, #tpu.memory_space<vmem>>, vector<1x1x16x8xbf16>
    %170 = vector.shape_cast %169 : vector<1x1x16x8xbf16> to vector<16x8xbf16>
    %171 = vector.shape_cast %168 : vector<16x8xbf16> to vector<1x1x16x8xbf16>
    tpu.vector_store %arg9[%c0_107, %c3_108, %c0_109, %c0_110], %171 {strides = array<i32>} : memref<1x8x16x8xbf16, #tpu.memory_space<vmem>>, vector<1x1x16x8xbf16>,
    %cst_111 = arith.constant dense<0.000000e+00> : vector<8xf32>
    %172 = vector.multi_reduction <add>, %167, %cst_111 [0] : vector<16x8xf32> to vector<8xf32>
    %173 = vector.shape_cast %172 : vector<8xf32> to vector<1x8xf32>
    %174 = arith.addf %160, %173 : vector<1x8xf32>
    %175 = arith.mulf %167, %167 : vector<16x8xf32>
    %cst_112 = arith.constant dense<0.000000e+00> : vector<8xf32>
    %176 = vector.multi_reduction <add>, %175, %cst_112 [0] : vector<16x8xf32> to vector<8xf32>
    %177 = vector.shape_cast %176 : vector<8xf32> to vector<1x8xf32>
    %178 = arith.addf %164, %177 : vector<1x8xf32>
    %179 = vector.extract_strided_slice %119 {offsets = [72, 0], sizes = [16, 8], strides = [1, 1]} : vector<144x8xf32> to vector<16x8xf32>
    %180 = vector.broadcast %120 : vector<1x8xf32> to vector<16x8xf32>
    %181 = arith.addf %179, %180 : vector<16x8xf32>
    %182 = arith.truncf %181 : vector<16x8xf32> to vector<16x8xbf16>
    %c0_113 = arith.constant 0 : index
    %c4_114 = arith.constant 4 : index
    %c0_115 = arith.constant 0 : index
    %c0_116 = arith.constant 0 : index
    %183 = vector.load %arg9[%c0_113, %c4_114, %c0_115, %c0_116] : memref<1x8x16x8xbf16, #tpu.memory_space<vmem>>, vector<1x1x16x8xbf16>
    %184 = vector.shape_cast %183 : vector<1x1x16x8xbf16> to vector<16x8xbf16>
    %185 = vector.shape_cast %182 : vector<16x8xbf16> to vector<1x1x16x8xbf16>
    tpu.vector_store %arg9[%c0_113, %c4_114, %c0_115, %c0_116], %185 {strides = array<i32>} : memref<1x8x16x8xbf16, #tpu.memory_space<vmem>>, vector<1x1x16x8xbf16>,
    %cst_117 = arith.constant dense<0.000000e+00> : vector<8xf32>
    %186 = vector.multi_reduction <add>, %181, %cst_117 [0] : vector<16x8xf32> to vector<8xf32>
    %187 = vector.shape_cast %186 : vector<8xf32> to vector<1x8xf32>
    %188 = arith.addf %174, %187 : vector<1x8xf32>
    %189 = arith.mulf %181, %181 : vector<16x8xf32>
    %cst_118 = arith.constant dense<0.000000e+00> : vector<8xf32>
    %190 = vector.multi_reduction <add>, %189, %cst_118 [0] : vector<16x8xf32> to vector<8xf32>
    %191 = vector.shape_cast %190 : vector<8xf32> to vector<1x8xf32>
    %192 = arith.addf %178, %191 : vector<1x8xf32>
    %193 = vector.extract_strided_slice %119 {offsets = [90, 0], sizes = [16, 8], strides = [1, 1]} : vector<144x8xf32> to vector<16x8xf32>
    %194 = vector.broadcast %120 : vector<1x8xf32> to vector<16x8xf32>
    %195 = arith.addf %193, %194 : vector<16x8xf32>
    %196 = arith.truncf %195 : vector<16x8xf32> to vector<16x8xbf16>
    %c0_119 = arith.constant 0 : index
    %c5_120 = arith.constant 5 : index
    %c0_121 = arith.constant 0 : index
    %c0_122 = arith.constant 0 : index
    %197 = vector.load %arg9[%c0_119, %c5_120, %c0_121, %c0_122] : memref<1x8x16x8xbf16, #tpu.memory_space<vmem>>, vector<1x1x16x8xbf16>
    %198 = vector.shape_cast %197 : vector<1x1x16x8xbf16> to vector<16x8xbf16>
    %199 = vector.shape_cast %196 : vector<16x8xbf16> to vector<1x1x16x8xbf16>
    tpu.vector_store %arg9[%c0_119, %c5_120, %c0_121, %c0_122], %199 {strides = array<i32>} : memref<1x8x16x8xbf16, #tpu.memory_space<vmem>>, vector<1x1x16x8xbf16>,
    %cst_123 = arith.constant dense<0.000000e+00> : vector<8xf32>
    %200 = vector.multi_reduction <add>, %195, %cst_123 [0] : vector<16x8xf32> to vector<8xf32>
    %201 = vector.shape_cast %200 : vector<8xf32> to vector<1x8xf32>
    %202 = arith.addf %188, %201 : vector<1x8xf32>
    %203 = arith.mulf %195, %195 : vector<16x8xf32>
    %cst_124 = arith.constant dense<0.000000e+00> : vector<8xf32>
    %204 = vector.multi_reduction <add>, %203, %cst_124 [0] : vector<16x8xf32> to vector<8xf32>
    %205 = vector.shape_cast %204 : vector<8xf32> to vector<1x8xf32>
    %206 = arith.addf %192, %205 : vector<1x8xf32>
    %207 = vector.extract_strided_slice %119 {offsets = [108, 0], sizes = [16, 8], strides = [1, 1]} : vector<144x8xf32> to vector<16x8xf32>
    %208 = vector.broadcast %120 : vector<1x8xf32> to vector<16x8xf32>
    %209 = arith.addf %207, %208 : vector<16x8xf32>
    %210 = arith.truncf %209 : vector<16x8xf32> to vector<16x8xbf16>
    %c0_125 = arith.constant 0 : index
    %c6_126 = arith.constant 6 : index
    %c0_127 = arith.constant 0 : index
    %c0_128 = arith.constant 0 : index
    %211 = vector.load %arg9[%c0_125, %c6_126, %c0_127, %c0_128] : memref<1x8x16x8xbf16, #tpu.memory_space<vmem>>, vector<1x1x16x8xbf16>
    %212 = vector.shape_cast %211 : vector<1x1x16x8xbf16> to vector<16x8xbf16>
    %213 = vector.shape_cast %210 : vector<16x8xbf16> to vector<1x1x16x8xbf16>
    tpu.vector_store %arg9[%c0_125, %c6_126, %c0_127, %c0_128], %213 {strides = array<i32>} : memref<1x8x16x8xbf16, #tpu.memory_space<vmem>>, vector<1x1x16x8xbf16>,
    %cst_129 = arith.constant dense<0.000000e+00> : vector<8xf32>
    %214 = vector.multi_reduction <add>, %209, %cst_129 [0] : vector<16x8xf32> to vector<8xf32>
    %215 = vector.shape_cast %214 : vector<8xf32> to vector<1x8xf32>
    %216 = arith.addf %202, %215 : vector<1x8xf32>
    %217 = arith.mulf %209, %209 : vector<16x8xf32>
    %cst_130 = arith.constant dense<0.000000e+00> : vector<8xf32>
    %218 = vector.multi_reduction <add>, %217, %cst_130 [0] : vector<16x8xf32> to vector<8xf32>
    %219 = vector.shape_cast %218 : vector<8xf32> to vector<1x8xf32>
    %220 = arith.addf %206, %219 : vector<1x8xf32>
    %221 = vector.extract_strided_slice %119 {offsets = [126, 0], sizes = [16, 8], strides = [1, 1]} : vector<144x8xf32> to vector<16x8xf32>
    %222 = vector.broadcast %120 : vector<1x8xf32> to vector<16x8xf32>
    %223 = arith.addf %221, %222 : vector<16x8xf32>
    %224 = arith.truncf %223 : vector<16x8xf32> to vector<16x8xbf16>
    %c0_131 = arith.constant 0 : index
    %c7_132 = arith.constant 7 : index
    %c0_133 = arith.constant 0 : index
    %c0_134 = arith.constant 0 : index
    %225 = vector.load %arg9[%c0_131, %c7_132, %c0_133, %c0_134] : memref<1x8x16x8xbf16, #tpu.memory_space<vmem>>, vector<1x1x16x8xbf16>
    %226 = vector.shape_cast %225 : vector<1x1x16x8xbf16> to vector<16x8xbf16>
    %227 = vector.shape_cast %224 : vector<16x8xbf16> to vector<1x1x16x8xbf16>
    tpu.vector_store %arg9[%c0_131, %c7_132, %c0_133, %c0_134], %227 {strides = array<i32>} : memref<1x8x16x8xbf16, #tpu.memory_space<vmem>>, vector<1x1x16x8xbf16>,
    %cst_135 = arith.constant dense<0.000000e+00> : vector<8xf32>
    %228 = vector.multi_reduction <add>, %223, %cst_135 [0] : vector<16x8xf32> to vector<8xf32>
    %229 = vector.shape_cast %228 : vector<8xf32> to vector<1x8xf32>
    %230 = arith.addf %216, %229 : vector<1x8xf32>
    %231 = arith.mulf %223, %223 : vector<16x8xf32>
    %cst_136 = arith.constant dense<0.000000e+00> : vector<8xf32>
    %232 = vector.multi_reduction <add>, %231, %cst_136 [0] : vector<16x8xf32> to vector<8xf32>
    %233 = vector.shape_cast %232 : vector<8xf32> to vector<1x8xf32>
    %234 = arith.addf %220, %233 : vector<1x8xf32>
    %235 = vector.shape_cast %230 : vector<1x8xf32> to vector<1x1x1x8xf32>
    %c0_137 = arith.constant 0 : index
    %c0_138 = arith.constant 0 : index
    %c0_139 = arith.constant 0 : index
    %c0_140 = arith.constant 0 : index
    %236 = vector.load %arg10[%c0_137, %c0_138, %c0_139, %c0_140] : memref<1x1x1x8xf32, #tpu.memory_space<vmem>>, vector<1x1x1x8xf32>
    tpu.vector_store %arg10[%c0_137, %c0_138, %c0_139, %c0_140], %235 {strides = array<i32>} : memref<1x1x1x8xf32, #tpu.memory_space<vmem>>, vector<1x1x1x8xf32>,
    %237 = vector.shape_cast %234 : vector<1x8xf32> to vector<1x1x1x8xf32>
    %c0_141 = arith.constant 0 : index
    %c0_142 = arith.constant 0 : index
    %c0_143 = arith.constant 0 : index
    %c0_144 = arith.constant 0 : index
    %238 = vector.load %arg11[%c0_141, %c0_142, %c0_143, %c0_144] : memref<1x1x1x8xf32, #tpu.memory_space<vmem>>, vector<1x1x1x8xf32>
    tpu.vector_store %arg11[%c0_141, %c0_142, %c0_143, %c0_144], %237 {strides = array<i32>} : memref<1x1x1x8xf32, #tpu.memory_space<vmem>>, vector<1x1x1x8xf32>,
    return
  }
  func.func @transform_0(%arg0: i32, %arg1: i32) -> (i32, i32, i32, i32) {
    %c0_i32 = arith.constant 0 : i32
    %c0_i32_0 = arith.constant 0 : i32
    %c0_i32_1 = arith.constant 0 : i32
    return %arg0, %arg1, %c0_i32, %c0_i32_0 : i32, i32, i32, i32
  }
  func.func @transform_1(%arg0: i32, %arg1: i32) -> (i32, i32, i32, i32) {
    %c8_i32 = arith.constant 8 : i32
    %0 = arith.muli %arg1, %c8_i32 : i32
    %c1_i32 = arith.constant 1 : i32
    %1 = arith.subi %0, %c1_i32 : i32
    %c0_i32 = arith.constant 0 : i32
    %2 = arith.maxsi %1, %c0_i32 : i32
    %c0_i32_0 = arith.constant 0 : i32
    %c0_i32_1 = arith.constant 0 : i32
    %c0_i32_2 = arith.constant 0 : i32
    return %arg0, %2, %c0_i32_0, %c0_i32_1 : i32, i32, i32, i32
  }
  func.func @transform_2(%arg0: i32, %arg1: i32) -> (i32, i32, i32, i32) {
    %c1_i32 = arith.constant 1 : i32
    %0 = arith.addi %arg1, %c1_i32 : i32
    %c8_i32 = arith.constant 8 : i32
    %1 = arith.muli %0, %c8_i32 : i32
    %c15_i32 = arith.constant 15 : i32
    %2 = arith.minsi %1, %c15_i32 : i32
    %c0_i32 = arith.constant 0 : i32
    %c0_i32_0 = arith.constant 0 : i32
    %c0_i32_1 = arith.constant 0 : i32
    return %arg0, %2, %c0_i32, %c0_i32_0 : i32, i32, i32, i32
  }
  func.func @transform_3(%arg0: i32, %arg1: i32) -> (i32, i32) {
    %c0_i32 = arith.constant 0 : i32
    %c0_i32_0 = arith.constant 0 : i32
    %c0_i32_1 = arith.constant 0 : i32
    return %c0_i32, %c0_i32_0 : i32, i32
  }
  func.func @transform_4(%arg0: i32, %arg1: i32) -> (i32, i32) {
    %c0_i32 = arith.constant 0 : i32
    %c0_i32_0 = arith.constant 0 : i32
    %c0_i32_1 = arith.constant 0 : i32
    return %c0_i32, %c0_i32_0 : i32, i32
  }
  func.func @transform_5(%arg0: i32, %arg1: i32) -> (i32, i32, i32) {
    %c0_i32 = arith.constant 0 : i32
    %c0_i32_0 = arith.constant 0 : i32
    %c0_i32_1 = arith.constant 0 : i32
    %c0_i32_2 = arith.constant 0 : i32
    return %c0_i32, %c0_i32_0, %c0_i32_1 : i32, i32, i32
  }
  func.func @transform_6(%arg0: i32, %arg1: i32) -> (i32, i32) {
    %c0_i32 = arith.constant 0 : i32
    %c0_i32_0 = arith.constant 0 : i32
    %c0_i32_1 = arith.constant 0 : i32
    return %c0_i32, %c0_i32_0 : i32, i32
  }
  func.func @transform_7(%arg0: i32, %arg1: i32) -> (i32, i32, i32, i32) {
    %c0_i32 = arith.constant 0 : i32
    %c0_i32_0 = arith.constant 0 : i32
    %c0_i32_1 = arith.constant 0 : i32
    return %arg0, %arg1, %c0_i32, %c0_i32_0 : i32, i32, i32, i32
  }
  func.func @transform_8(%arg0: i32, %arg1: i32) -> (i32, i32, i32, i32) {
    %c0_i32 = arith.constant 0 : i32
    %c0_i32_0 = arith.constant 0 : i32
    %c0_i32_1 = arith.constant 0 : i32
    return %arg0, %arg1, %c0_i32, %c0_i32_0 : i32, i32, i32, i32
  }
  func.func @transform_9(%arg0: i32, %arg1: i32) -> (i32, i32, i32, i32) {
    %c0_i32 = arith.constant 0 : i32
    %c0_i32_0 = arith.constant 0 : i32
    %c0_i32_1 = arith.constant 0 : i32
    return %arg0, %arg1, %c0_i32, %c0_i32_0 : i32, i32, i32, i32
  }
}

module attributes {stable_mosaic.version = 11 : i64} {
  func.func @_conv_bn_act_stats_kernel(%arg0: i32, %arg1: i32, %arg2: memref<1x8x16x8xbf16, #tpu.memory_space<vmem>>, %arg3: memref<1x1x16x8xbf16, #tpu.memory_space<vmem>>, %arg4: memref<1x1x16x8xbf16, #tpu.memory_space<vmem>>, %arg5: memref<1x8xf32, #tpu.memory_space<vmem>>, %arg6: memref<1x8xf32, #tpu.memory_space<vmem>>, %arg7: memref<9x8x8xbf16, #tpu.memory_space<vmem>>, %arg8: memref<1x8xf32, #tpu.memory_space<vmem>>, %arg9: memref<1x8x16x8xbf16, #tpu.memory_space<vmem>>, %arg10: memref<1x1x1x8xf32, #tpu.memory_space<vmem>>, %arg11: memref<1x1x1x8xf32, #tpu.memory_space<vmem>>, %arg12: memref<182x8xbf16, #tpu.memory_space<vmem>>) attributes {dimension_semantics = [#tpu.dimension_semantics<parallel>, #tpu.dimension_semantics<parallel>], iteration_bounds = array<i64: 2, 2>, scalar_prefetch = 0 : i64, scratch_operands = 1 : i64, tpu.core_type = #tpu.core_type<tc>, window_params = [{transform_indices = @transform_0, window_bounds = array<i64: 1, 8, 16, 8>}, {transform_indices = @transform_1, window_bounds = array<i64: 1, 1, 16, 8>}, {transform_indices = @transform_2, window_bounds = array<i64: 1, 1, 16, 8>}, {pipeline_mode = #tpu.pipeline_mode<synchronous>, transform_indices = @transform_3, window_bounds = array<i64: 1, 8>}, {pipeline_mode = #tpu.pipeline_mode<synchronous>, transform_indices = @transform_4, window_bounds = array<i64: 1, 8>}, {pipeline_mode = #tpu.pipeline_mode<synchronous>, transform_indices = @transform_5, window_bounds = array<i64: 9, 8, 8>}, {pipeline_mode = #tpu.pipeline_mode<synchronous>, transform_indices = @transform_6, window_bounds = array<i64: 1, 8>}, {transform_indices = @transform_7, window_bounds = array<i64: 1, 8, 16, 8>}, {transform_indices = @transform_8, window_bounds = array<i64: 1, 1, 1, 8>}, {transform_indices = @transform_9, window_bounds = array<i64: 1, 1, 1, 8>}]} {
    %c0 = arith.constant 0 : index
    %c0_0 = arith.constant 0 : index
    %0 = vector.load %arg5[%c0, %c0_0] : memref<1x8xf32, #tpu.memory_space<vmem>>, vector<1x8xf32>
    %c0_1 = arith.constant 0 : index
    %c0_2 = arith.constant 0 : index
    %1 = vector.load %arg6[%c0_1, %c0_2] : memref<1x8xf32, #tpu.memory_space<vmem>>, vector<1x8xf32>
    %c0_3 = arith.constant 0 : index
    %c0_4 = arith.constant 0 : index
    %c0_5 = arith.constant 0 : index
    %c0_6 = arith.constant 0 : index
    %2 = vector.load %arg2[%c0_3, %c0_4, %c0_5, %c0_6] : memref<1x8x16x8xbf16, #tpu.memory_space<vmem>>, vector<1x8x16x8xbf16>
    %3 = vector.shape_cast %2 : vector<1x8x16x8xbf16> to vector<8x16x8xbf16>
    %4 = arith.extf %3 : vector<8x16x8xbf16> to vector<8x16x8xf32>
    %5 = vector.shape_cast %0 : vector<1x8xf32> to vector<1x1x8xf32>
    %6 = vector.broadcast %5 : vector<1x1x8xf32> to vector<8x16x8xf32>
    %7 = arith.mulf %4, %6 : vector<8x16x8xf32>
    %8 = vector.shape_cast %1 : vector<1x8xf32> to vector<1x1x8xf32>
    %9 = vector.broadcast %8 : vector<1x1x8xf32> to vector<8x16x8xf32>
    %10 = arith.addf %7, %9 : vector<8x16x8xf32>
    %cst = arith.constant 0.000000e+00 : f32
    %11 = vector.broadcast %cst : f32 to vector<8x16x8xf32>
    %12 = arith.maximumf %10, %11 : vector<8x16x8xf32>
    %13 = arith.truncf %12 : vector<8x16x8xf32> to vector<8x16x8xbf16>
    %c0_7 = arith.constant 0 : index
    %c0_8 = arith.constant 0 : index
    %c0_9 = arith.constant 0 : index
    %c0_10 = arith.constant 0 : index
    %14 = vector.load %arg3[%c0_7, %c0_8, %c0_9, %c0_10] : memref<1x1x16x8xbf16, #tpu.memory_space<vmem>>, vector<1x1x16x8xbf16>
    %15 = vector.shape_cast %14 : vector<1x1x16x8xbf16> to vector<16x8xbf16>
    %16 = arith.extf %15 : vector<16x8xbf16> to vector<16x8xf32>
    %17 = vector.broadcast %0 : vector<1x8xf32> to vector<16x8xf32>
    %18 = arith.mulf %16, %17 : vector<16x8xf32>
    %19 = vector.broadcast %1 : vector<1x8xf32> to vector<16x8xf32>
    %20 = arith.addf %18, %19 : vector<16x8xf32>
    %cst_11 = arith.constant 0.000000e+00 : f32
    %21 = vector.broadcast %cst_11 : f32 to vector<16x8xf32>
    %22 = arith.maximumf %20, %21 : vector<16x8xf32>
    %23 = arith.truncf %22 : vector<16x8xf32> to vector<16x8xbf16>
    %c0_12 = arith.constant 0 : index
    %c0_13 = arith.constant 0 : index
    %c0_14 = arith.constant 0 : index
    %c0_15 = arith.constant 0 : index
    %24 = vector.load %arg4[%c0_12, %c0_13, %c0_14, %c0_15] : memref<1x1x16x8xbf16, #tpu.memory_space<vmem>>, vector<1x1x16x8xbf16>
    %25 = vector.shape_cast %24 : vector<1x1x16x8xbf16> to vector<16x8xbf16>
    %26 = arith.extf %25 : vector<16x8xbf16> to vector<16x8xf32>
    %27 = vector.broadcast %0 : vector<1x8xf32> to vector<16x8xf32>
    %28 = arith.mulf %26, %27 : vector<16x8xf32>
    %29 = vector.broadcast %1 : vector<1x8xf32> to vector<16x8xf32>
    %30 = arith.addf %28, %29 : vector<16x8xf32>
    %cst_16 = arith.constant 0.000000e+00 : f32
    %31 = vector.broadcast %cst_16 : f32 to vector<16x8xf32>
    %32 = arith.maximumf %30, %31 : vector<16x8xf32>
    %33 = arith.truncf %32 : vector<16x8xf32> to vector<16x8xbf16>
    %c0_i32 = arith.constant 0 : i32
    %34 = arith.cmpi eq, %arg1, %c0_i32 : i32
    %cst_17 = arith.constant 0.000000e+00 : bf16
    %35 = vector.broadcast %cst_17 : bf16 to vector<16x8xbf16>
    %36 = arith.select %34, %35, %23 : vector<16x8xbf16>
    %c1_i32 = arith.constant 1 : i32
    %37 = arith.cmpi eq, %arg1, %c1_i32 : i32
    %cst_18 = arith.constant 0.000000e+00 : bf16
    %38 = vector.broadcast %cst_18 : bf16 to vector<16x8xbf16>
    %39 = arith.select %37, %38, %33 : vector<16x8xbf16>
    %cst_19 = arith.constant 0.000000e+00 : bf16
    %40 = vector.broadcast %cst_19 : bf16 to vector<1x8xbf16>
    %cst_20 = arith.constant 0.000000e+00 : bf16
    %41 = vector.broadcast %cst_20 : bf16 to vector<2x8xbf16>
    %c0_21 = arith.constant 0 : index
    %c0_22 = arith.constant 0 : index
    %42 = vector.load %arg12[%c0_21, %c0_22] : memref<182x8xbf16, #tpu.memory_space<vmem>>, vector<1x8xbf16>
    tpu.vector_store %arg12[%c0_21, %c0_22], %40 {strides = array<i32>} : memref<182x8xbf16, #tpu.memory_space<vmem>>, vector<1x8xbf16>,
    %c1 = arith.constant 1 : index
    %c0_23 = arith.constant 0 : index
    %43 = vector.load %arg12[%c1, %c0_23] : memref<182x8xbf16, #tpu.memory_space<vmem>>, vector<16x8xbf16>
    tpu.vector_store %arg12[%c1, %c0_23], %36 {strides = array<i32>} : memref<182x8xbf16, #tpu.memory_space<vmem>>, vector<16x8xbf16>,
    %c17 = arith.constant 17 : index
    %c0_24 = arith.constant 0 : index
    %44 = vector.load %arg12[%c17, %c0_24] : memref<182x8xbf16, #tpu.memory_space<vmem>>, vector<2x8xbf16>
    tpu.vector_store %arg12[%c17, %c0_24], %41 {strides = array<i32>} : memref<182x8xbf16, #tpu.memory_space<vmem>>, vector<2x8xbf16>,
    %45 = vector.extract_strided_slice %13 {offsets = [0, 0, 0], sizes = [1, 16, 8], strides = [1, 1, 1]} : vector<8x16x8xbf16> to vector<1x16x8xbf16>
    %46 = vector.shape_cast %45 : vector<1x16x8xbf16> to vector<16x8xbf16>
    %c19 = arith.constant 19 : index
    %c0_25 = arith.constant 0 : index
    %47 = vector.load %arg12[%c19, %c0_25] : memref<182x8xbf16, #tpu.memory_space<vmem>>, vector<16x8xbf16>
    tpu.vector_store %arg12[%c19, %c0_25], %46 {strides = array<i32>} : memref<182x8xbf16, #tpu.memory_space<vmem>>, vector<16x8xbf16>,
    %c35 = arith.constant 35 : index
    %c0_26 = arith.constant 0 : index
    %48 = vector.load %arg12[%c35, %c0_26] : memref<182x8xbf16, #tpu.memory_space<vmem>>, vector<2x8xbf16>
    tpu.vector_store %arg12[%c35, %c0_26], %41 {strides = array<i32>} : memref<182x8xbf16, #tpu.memory_space<vmem>>, vector<2x8xbf16>,
    %49 = vector.extract_strided_slice %13 {offsets = [1, 0, 0], sizes = [1, 16, 8], strides = [1, 1, 1]} : vector<8x16x8xbf16> to vector<1x16x8xbf16>
    %50 = vector.shape_cast %49 : vector<1x16x8xbf16> to vector<16x8xbf16>
    %c37 = arith.constant 37 : index
    %c0_27 = arith.constant 0 : index
    %51 = vector.load %arg12[%c37, %c0_27] : memref<182x8xbf16, #tpu.memory_space<vmem>>, vector<16x8xbf16>
    tpu.vector_store %arg12[%c37, %c0_27], %50 {strides = array<i32>} : memref<182x8xbf16, #tpu.memory_space<vmem>>, vector<16x8xbf16>,
    %c53 = arith.constant 53 : index
    %c0_28 = arith.constant 0 : index
    %52 = vector.load %arg12[%c53, %c0_28] : memref<182x8xbf16, #tpu.memory_space<vmem>>, vector<2x8xbf16>
    tpu.vector_store %arg12[%c53, %c0_28], %41 {strides = array<i32>} : memref<182x8xbf16, #tpu.memory_space<vmem>>, vector<2x8xbf16>,
    %53 = vector.extract_strided_slice %13 {offsets = [2, 0, 0], sizes = [1, 16, 8], strides = [1, 1, 1]} : vector<8x16x8xbf16> to vector<1x16x8xbf16>
    %54 = vector.shape_cast %53 : vector<1x16x8xbf16> to vector<16x8xbf16>
    %c55 = arith.constant 55 : index
    %c0_29 = arith.constant 0 : index
    %55 = vector.load %arg12[%c55, %c0_29] : memref<182x8xbf16, #tpu.memory_space<vmem>>, vector<16x8xbf16>
    tpu.vector_store %arg12[%c55, %c0_29], %54 {strides = array<i32>} : memref<182x8xbf16, #tpu.memory_space<vmem>>, vector<16x8xbf16>,
    %c71 = arith.constant 71 : index
    %c0_30 = arith.constant 0 : index
    %56 = vector.load %arg12[%c71, %c0_30] : memref<182x8xbf16, #tpu.memory_space<vmem>>, vector<2x8xbf16>
    tpu.vector_store %arg12[%c71, %c0_30], %41 {strides = array<i32>} : memref<182x8xbf16, #tpu.memory_space<vmem>>, vector<2x8xbf16>,
    %57 = vector.extract_strided_slice %13 {offsets = [3, 0, 0], sizes = [1, 16, 8], strides = [1, 1, 1]} : vector<8x16x8xbf16> to vector<1x16x8xbf16>
    %58 = vector.shape_cast %57 : vector<1x16x8xbf16> to vector<16x8xbf16>
    %c73 = arith.constant 73 : index
    %c0_31 = arith.constant 0 : index
    %59 = vector.load %arg12[%c73, %c0_31] : memref<182x8xbf16, #tpu.memory_space<vmem>>, vector<16x8xbf16>
    tpu.vector_store %arg12[%c73, %c0_31], %58 {strides = array<i32>} : memref<182x8xbf16, #tpu.memory_space<vmem>>, vector<16x8xbf16>,
    %c89 = arith.constant 89 : index
    %c0_32 = arith.constant 0 : index
    %60 = vector.load %arg12[%c89, %c0_32] : memref<182x8xbf16, #tpu.memory_space<vmem>>, vector<2x8xbf16>
    tpu.vector_store %arg12[%c89, %c0_32], %41 {strides = array<i32>} : memref<182x8xbf16, #tpu.memory_space<vmem>>, vector<2x8xbf16>,
    %61 = vector.extract_strided_slice %13 {offsets = [4, 0, 0], sizes = [1, 16, 8], strides = [1, 1, 1]} : vector<8x16x8xbf16> to vector<1x16x8xbf16>
    %62 = vector.shape_cast %61 : vector<1x16x8xbf16> to vector<16x8xbf16>
    %c91 = arith.constant 91 : index
    %c0_33 = arith.constant 0 : index
    %63 = vector.load %arg12[%c91, %c0_33] : memref<182x8xbf16, #tpu.memory_space<vmem>>, vector<16x8xbf16>
    tpu.vector_store %arg12[%c91, %c0_33], %62 {strides = array<i32>} : memref<182x8xbf16, #tpu.memory_space<vmem>>, vector<16x8xbf16>,
    %c107 = arith.constant 107 : index
    %c0_34 = arith.constant 0 : index
    %64 = vector.load %arg12[%c107, %c0_34] : memref<182x8xbf16, #tpu.memory_space<vmem>>, vector<2x8xbf16>
    tpu.vector_store %arg12[%c107, %c0_34], %41 {strides = array<i32>} : memref<182x8xbf16, #tpu.memory_space<vmem>>, vector<2x8xbf16>,
    %65 = vector.extract_strided_slice %13 {offsets = [5, 0, 0], sizes = [1, 16, 8], strides = [1, 1, 1]} : vector<8x16x8xbf16> to vector<1x16x8xbf16>
    %66 = vector.shape_cast %65 : vector<1x16x8xbf16> to vector<16x8xbf16>
    %c109 = arith.constant 109 : index
    %c0_35 = arith.constant 0 : index
    %67 = vector.load %arg12[%c109, %c0_35] : memref<182x8xbf16, #tpu.memory_space<vmem>>, vector<16x8xbf16>
    tpu.vector_store %arg12[%c109, %c0_35], %66 {strides = array<i32>} : memref<182x8xbf16, #tpu.memory_space<vmem>>, vector<16x8xbf16>,
    %c125 = arith.constant 125 : index
    %c0_36 = arith.constant 0 : index
    %68 = vector.load %arg12[%c125, %c0_36] : memref<182x8xbf16, #tpu.memory_space<vmem>>, vector<2x8xbf16>
    tpu.vector_store %arg12[%c125, %c0_36], %41 {strides = array<i32>} : memref<182x8xbf16, #tpu.memory_space<vmem>>, vector<2x8xbf16>,
    %69 = vector.extract_strided_slice %13 {offsets = [6, 0, 0], sizes = [1, 16, 8], strides = [1, 1, 1]} : vector<8x16x8xbf16> to vector<1x16x8xbf16>
    %70 = vector.shape_cast %69 : vector<1x16x8xbf16> to vector<16x8xbf16>
    %c127 = arith.constant 127 : index
    %c0_37 = arith.constant 0 : index
    %71 = vector.load %arg12[%c127, %c0_37] : memref<182x8xbf16, #tpu.memory_space<vmem>>, vector<16x8xbf16>
    tpu.vector_store %arg12[%c127, %c0_37], %70 {strides = array<i32>} : memref<182x8xbf16, #tpu.memory_space<vmem>>, vector<16x8xbf16>,
    %c143 = arith.constant 143 : index
    %c0_38 = arith.constant 0 : index
    %72 = vector.load %arg12[%c143, %c0_38] : memref<182x8xbf16, #tpu.memory_space<vmem>>, vector<2x8xbf16>
    tpu.vector_store %arg12[%c143, %c0_38], %41 {strides = array<i32>} : memref<182x8xbf16, #tpu.memory_space<vmem>>, vector<2x8xbf16>,
    %73 = vector.extract_strided_slice %13 {offsets = [7, 0, 0], sizes = [1, 16, 8], strides = [1, 1, 1]} : vector<8x16x8xbf16> to vector<1x16x8xbf16>
    %74 = vector.shape_cast %73 : vector<1x16x8xbf16> to vector<16x8xbf16>
    %c145 = arith.constant 145 : index
    %c0_39 = arith.constant 0 : index
    %75 = vector.load %arg12[%c145, %c0_39] : memref<182x8xbf16, #tpu.memory_space<vmem>>, vector<16x8xbf16>
    tpu.vector_store %arg12[%c145, %c0_39], %74 {strides = array<i32>} : memref<182x8xbf16, #tpu.memory_space<vmem>>, vector<16x8xbf16>,
    %c161 = arith.constant 161 : index
    %c0_40 = arith.constant 0 : index
    %76 = vector.load %arg12[%c161, %c0_40] : memref<182x8xbf16, #tpu.memory_space<vmem>>, vector<2x8xbf16>
    tpu.vector_store %arg12[%c161, %c0_40], %41 {strides = array<i32>} : memref<182x8xbf16, #tpu.memory_space<vmem>>, vector<2x8xbf16>,
    %c163 = arith.constant 163 : index
    %c0_41 = arith.constant 0 : index
    %77 = vector.load %arg12[%c163, %c0_41] : memref<182x8xbf16, #tpu.memory_space<vmem>>, vector<16x8xbf16>
    tpu.vector_store %arg12[%c163, %c0_41], %39 {strides = array<i32>} : memref<182x8xbf16, #tpu.memory_space<vmem>>, vector<16x8xbf16>,
    %c179 = arith.constant 179 : index
    %c0_42 = arith.constant 0 : index
    %78 = vector.load %arg12[%c179, %c0_42] : memref<182x8xbf16, #tpu.memory_space<vmem>>, vector<2x8xbf16>
    tpu.vector_store %arg12[%c179, %c0_42], %41 {strides = array<i32>} : memref<182x8xbf16, #tpu.memory_space<vmem>>, vector<2x8xbf16>,
    %c181 = arith.constant 181 : index
    %c0_43 = arith.constant 0 : index
    %79 = vector.load %arg12[%c181, %c0_43] : memref<182x8xbf16, #tpu.memory_space<vmem>>, vector<1x8xbf16>
    tpu.vector_store %arg12[%c181, %c0_43], %40 {strides = array<i32>} : memref<182x8xbf16, #tpu.memory_space<vmem>>, vector<1x8xbf16>,
    %cst_44 = arith.constant 0.000000e+00 : f32
    %80 = vector.broadcast %cst_44 : f32 to vector<144x8xf32>
    %c0_45 = arith.constant 0 : index
    %c0_46 = arith.constant 0 : index
    %81 = vector.load %arg12[%c0_45, %c0_46] : memref<182x8xbf16, #tpu.memory_space<vmem>>, vector<144x8xbf16>
    %c0_47 = arith.constant 0 : index
    %c0_48 = arith.constant 0 : index
    %c0_49 = arith.constant 0 : index
    %82 = vector.load %arg7[%c0_47, %c0_48, %c0_49] : memref<9x8x8xbf16, #tpu.memory_space<vmem>>, vector<1x8x8xbf16>
    %83 = vector.shape_cast %82 : vector<1x8x8xbf16> to vector<8x8xbf16>
    %cst_50 = arith.constant dense<0.000000e+00> : vector<144x8xf32>
    %84 = tpu.matmul %81, %83, %cst_50 {dimension_numbers = #tpu.dot_dimension_numbers<[1], [0], [0], [1], [0, 0, 1, 1], [], []>} : vector<144x8xbf16>, vector<8x8xbf16>, vector<144x8xf32> -> vector<144x8xf32>
    %85 = arith.addf %80, %84 : vector<144x8xf32>
    %c1_51 = arith.constant 1 : index
    %c0_52 = arith.constant 0 : index
    %86 = vector.load %arg12[%c1_51, %c0_52] : memref<182x8xbf16, #tpu.memory_space<vmem>>, vector<144x8xbf16>
    %c1_53 = arith.constant 1 : index
    %c0_54 = arith.constant 0 : index
    %c0_55 = arith.constant 0 : index
    %87 = vector.load %arg7[%c1_53, %c0_54, %c0_55] : memref<9x8x8xbf16, #tpu.memory_space<vmem>>, vector<1x8x8xbf16>
    %88 = vector.shape_cast %87 : vector<1x8x8xbf16> to vector<8x8xbf16>
    %cst_56 = arith.constant dense<0.000000e+00> : vector<144x8xf32>
    %89 = tpu.matmul %86, %88, %cst_56 {dimension_numbers = #tpu.dot_dimension_numbers<[1], [0], [0], [1], [0, 0, 1, 1], [], []>} : vector<144x8xbf16>, vector<8x8xbf16>, vector<144x8xf32> -> vector<144x8xf32>
    %90 = arith.addf %85, %89 : vector<144x8xf32>
    %c2 = arith.constant 2 : index
    %c0_57 = arith.constant 0 : index
    %91 = vector.load %arg12[%c2, %c0_57] : memref<182x8xbf16, #tpu.memory_space<vmem>>, vector<144x8xbf16>
    %c2_58 = arith.constant 2 : index
    %c0_59 = arith.constant 0 : index
    %c0_60 = arith.constant 0 : index
    %92 = vector.load %arg7[%c2_58, %c0_59, %c0_60] : memref<9x8x8xbf16, #tpu.memory_space<vmem>>, vector<1x8x8xbf16>
    %93 = vector.shape_cast %92 : vector<1x8x8xbf16> to vector<8x8xbf16>
    %cst_61 = arith.constant dense<0.000000e+00> : vector<144x8xf32>
    %94 = tpu.matmul %91, %93, %cst_61 {dimension_numbers = #tpu.dot_dimension_numbers<[1], [0], [0], [1], [0, 0, 1, 1], [], []>} : vector<144x8xbf16>, vector<8x8xbf16>, vector<144x8xf32> -> vector<144x8xf32>
    %95 = arith.addf %90, %94 : vector<144x8xf32>
    %c18 = arith.constant 18 : index
    %c0_62 = arith.constant 0 : index
    %96 = vector.load %arg12[%c18, %c0_62] : memref<182x8xbf16, #tpu.memory_space<vmem>>, vector<144x8xbf16>
    %c3 = arith.constant 3 : index
    %c0_63 = arith.constant 0 : index
    %c0_64 = arith.constant 0 : index
    %97 = vector.load %arg7[%c3, %c0_63, %c0_64] : memref<9x8x8xbf16, #tpu.memory_space<vmem>>, vector<1x8x8xbf16>
    %98 = vector.shape_cast %97 : vector<1x8x8xbf16> to vector<8x8xbf16>
    %cst_65 = arith.constant dense<0.000000e+00> : vector<144x8xf32>
    %99 = tpu.matmul %96, %98, %cst_65 {dimension_numbers = #tpu.dot_dimension_numbers<[1], [0], [0], [1], [0, 0, 1, 1], [], []>} : vector<144x8xbf16>, vector<8x8xbf16>, vector<144x8xf32> -> vector<144x8xf32>
    %100 = arith.addf %95, %99 : vector<144x8xf32>
    %c19_66 = arith.constant 19 : index
    %c0_67 = arith.constant 0 : index
    %101 = vector.load %arg12[%c19_66, %c0_67] : memref<182x8xbf16, #tpu.memory_space<vmem>>, vector<144x8xbf16>
    %c4 = arith.constant 4 : index
    %c0_68 = arith.constant 0 : index
    %c0_69 = arith.constant 0 : index
    %102 = vector.load %arg7[%c4, %c0_68, %c0_69] : memref<9x8x8xbf16, #tpu.memory_space<vmem>>, vector<1x8x8xbf16>
    %103 = vector.shape_cast %102 : vector<1x8x8xbf16> to vector<8x8xbf16>
    %cst_70 = arith.constant dense<0.000000e+00> : vector<144x8xf32>
    %104 = tpu.matmul %101, %103, %cst_70 {dimension_numbers = #tpu.dot_dimension_numbers<[1], [0], [0], [1], [0, 0, 1, 1], [], []>} : vector<144x8xbf16>, vector<8x8xbf16>, vector<144x8xf32> -> vector<144x8xf32>
    %105 = arith.addf %100, %104 : vector<144x8xf32>
    %c20 = arith.constant 20 : index
    %c0_71 = arith.constant 0 : index
    %106 = vector.load %arg12[%c20, %c0_71] : memref<182x8xbf16, #tpu.memory_space<vmem>>, vector<144x8xbf16>
    %c5 = arith.constant 5 : index
    %c0_72 = arith.constant 0 : index
    %c0_73 = arith.constant 0 : index
    %107 = vector.load %arg7[%c5, %c0_72, %c0_73] : memref<9x8x8xbf16, #tpu.memory_space<vmem>>, vector<1x8x8xbf16>
    %108 = vector.shape_cast %107 : vector<1x8x8xbf16> to vector<8x8xbf16>
    %cst_74 = arith.constant dense<0.000000e+00> : vector<144x8xf32>
    %109 = tpu.matmul %106, %108, %cst_74 {dimension_numbers = #tpu.dot_dimension_numbers<[1], [0], [0], [1], [0, 0, 1, 1], [], []>} : vector<144x8xbf16>, vector<8x8xbf16>, vector<144x8xf32> -> vector<144x8xf32>
    %110 = arith.addf %105, %109 : vector<144x8xf32>
    %c36 = arith.constant 36 : index
    %c0_75 = arith.constant 0 : index
    %111 = vector.load %arg12[%c36, %c0_75] : memref<182x8xbf16, #tpu.memory_space<vmem>>, vector<144x8xbf16>
    %c6 = arith.constant 6 : index
    %c0_76 = arith.constant 0 : index
    %c0_77 = arith.constant 0 : index
    %112 = vector.load %arg7[%c6, %c0_76, %c0_77] : memref<9x8x8xbf16, #tpu.memory_space<vmem>>, vector<1x8x8xbf16>
    %113 = vector.shape_cast %112 : vector<1x8x8xbf16> to vector<8x8xbf16>
    %cst_78 = arith.constant dense<0.000000e+00> : vector<144x8xf32>
    %114 = tpu.matmul %111, %113, %cst_78 {dimension_numbers = #tpu.dot_dimension_numbers<[1], [0], [0], [1], [0, 0, 1, 1], [], []>} : vector<144x8xbf16>, vector<8x8xbf16>, vector<144x8xf32> -> vector<144x8xf32>
    %115 = arith.addf %110, %114 : vector<144x8xf32>
    %c37_79 = arith.constant 37 : index
    %c0_80 = arith.constant 0 : index
    %116 = vector.load %arg12[%c37_79, %c0_80] : memref<182x8xbf16, #tpu.memory_space<vmem>>, vector<144x8xbf16>
    %c7 = arith.constant 7 : index
    %c0_81 = arith.constant 0 : index
    %c0_82 = arith.constant 0 : index
    %117 = vector.load %arg7[%c7, %c0_81, %c0_82] : memref<9x8x8xbf16, #tpu.memory_space<vmem>>, vector<1x8x8xbf16>
    %118 = vector.shape_cast %117 : vector<1x8x8xbf16> to vector<8x8xbf16>
    %cst_83 = arith.constant dense<0.000000e+00> : vector<144x8xf32>
    %119 = tpu.matmul %116, %118, %cst_83 {dimension_numbers = #tpu.dot_dimension_numbers<[1], [0], [0], [1], [0, 0, 1, 1], [], []>} : vector<144x8xbf16>, vector<8x8xbf16>, vector<144x8xf32> -> vector<144x8xf32>
    %120 = arith.addf %115, %119 : vector<144x8xf32>
    %c38 = arith.constant 38 : index
    %c0_84 = arith.constant 0 : index
    %121 = vector.load %arg12[%c38, %c0_84] : memref<182x8xbf16, #tpu.memory_space<vmem>>, vector<144x8xbf16>
    %c8 = arith.constant 8 : index
    %c0_85 = arith.constant 0 : index
    %c0_86 = arith.constant 0 : index
    %122 = vector.load %arg7[%c8, %c0_85, %c0_86] : memref<9x8x8xbf16, #tpu.memory_space<vmem>>, vector<1x8x8xbf16>
    %123 = vector.shape_cast %122 : vector<1x8x8xbf16> to vector<8x8xbf16>
    %cst_87 = arith.constant dense<0.000000e+00> : vector<144x8xf32>
    %124 = tpu.matmul %121, %123, %cst_87 {dimension_numbers = #tpu.dot_dimension_numbers<[1], [0], [0], [1], [0, 0, 1, 1], [], []>} : vector<144x8xbf16>, vector<8x8xbf16>, vector<144x8xf32> -> vector<144x8xf32>
    %125 = arith.addf %120, %124 : vector<144x8xf32>
    %c0_88 = arith.constant 0 : index
    %c0_89 = arith.constant 0 : index
    %126 = vector.load %arg8[%c0_88, %c0_89] : memref<1x8xf32, #tpu.memory_space<vmem>>, vector<1x8xf32>
    %cst_90 = arith.constant 0.000000e+00 : f32
    %127 = vector.broadcast %cst_90 : f32 to vector<1x8xf32>
    %cst_91 = arith.constant 0.000000e+00 : f32
    %128 = vector.broadcast %cst_91 : f32 to vector<1x8xf32>
    %129 = vector.extract_strided_slice %125 {offsets = [0, 0], sizes = [16, 8], strides = [1, 1]} : vector<144x8xf32> to vector<16x8xf32>
    %130 = vector.broadcast %126 : vector<1x8xf32> to vector<16x8xf32>
    %131 = arith.addf %129, %130 : vector<16x8xf32>
    %132 = arith.truncf %131 : vector<16x8xf32> to vector<16x8xbf16>
    %c0_92 = arith.constant 0 : index
    %c0_93 = arith.constant 0 : index
    %c0_94 = arith.constant 0 : index
    %c0_95 = arith.constant 0 : index
    %133 = vector.load %arg9[%c0_92, %c0_93, %c0_94, %c0_95] : memref<1x8x16x8xbf16, #tpu.memory_space<vmem>>, vector<1x1x16x8xbf16>
    %134 = vector.shape_cast %133 : vector<1x1x16x8xbf16> to vector<16x8xbf16>
    %135 = vector.shape_cast %132 : vector<16x8xbf16> to vector<1x1x16x8xbf16>
    tpu.vector_store %arg9[%c0_92, %c0_93, %c0_94, %c0_95], %135 {strides = array<i32>} : memref<1x8x16x8xbf16, #tpu.memory_space<vmem>>, vector<1x1x16x8xbf16>,
    %cst_96 = arith.constant dense<0.000000e+00> : vector<8xf32>
    %136 = vector.multi_reduction <add>, %131, %cst_96 [0] : vector<16x8xf32> to vector<8xf32>
    %137 = vector.shape_cast %136 : vector<8xf32> to vector<1x8xf32>
    %138 = arith.addf %127, %137 : vector<1x8xf32>
    %139 = arith.mulf %131, %131 : vector<16x8xf32>
    %cst_97 = arith.constant dense<0.000000e+00> : vector<8xf32>
    %140 = vector.multi_reduction <add>, %139, %cst_97 [0] : vector<16x8xf32> to vector<8xf32>
    %141 = vector.shape_cast %140 : vector<8xf32> to vector<1x8xf32>
    %142 = arith.addf %128, %141 : vector<1x8xf32>
    %143 = vector.extract_strided_slice %125 {offsets = [18, 0], sizes = [16, 8], strides = [1, 1]} : vector<144x8xf32> to vector<16x8xf32>
    %144 = vector.broadcast %126 : vector<1x8xf32> to vector<16x8xf32>
    %145 = arith.addf %143, %144 : vector<16x8xf32>
    %146 = arith.truncf %145 : vector<16x8xf32> to vector<16x8xbf16>
    %c0_98 = arith.constant 0 : index
    %c1_99 = arith.constant 1 : index
    %c0_100 = arith.constant 0 : index
    %c0_101 = arith.constant 0 : index
    %147 = vector.load %arg9[%c0_98, %c1_99, %c0_100, %c0_101] : memref<1x8x16x8xbf16, #tpu.memory_space<vmem>>, vector<1x1x16x8xbf16>
    %148 = vector.shape_cast %147 : vector<1x1x16x8xbf16> to vector<16x8xbf16>
    %149 = vector.shape_cast %146 : vector<16x8xbf16> to vector<1x1x16x8xbf16>
    tpu.vector_store %arg9[%c0_98, %c1_99, %c0_100, %c0_101], %149 {strides = array<i32>} : memref<1x8x16x8xbf16, #tpu.memory_space<vmem>>, vector<1x1x16x8xbf16>,
    %cst_102 = arith.constant dense<0.000000e+00> : vector<8xf32>
    %150 = vector.multi_reduction <add>, %145, %cst_102 [0] : vector<16x8xf32> to vector<8xf32>
    %151 = vector.shape_cast %150 : vector<8xf32> to vector<1x8xf32>
    %152 = arith.addf %138, %151 : vector<1x8xf32>
    %153 = arith.mulf %145, %145 : vector<16x8xf32>
    %cst_103 = arith.constant dense<0.000000e+00> : vector<8xf32>
    %154 = vector.multi_reduction <add>, %153, %cst_103 [0] : vector<16x8xf32> to vector<8xf32>
    %155 = vector.shape_cast %154 : vector<8xf32> to vector<1x8xf32>
    %156 = arith.addf %142, %155 : vector<1x8xf32>
    %157 = vector.extract_strided_slice %125 {offsets = [36, 0], sizes = [16, 8], strides = [1, 1]} : vector<144x8xf32> to vector<16x8xf32>
    %158 = vector.broadcast %126 : vector<1x8xf32> to vector<16x8xf32>
    %159 = arith.addf %157, %158 : vector<16x8xf32>
    %160 = arith.truncf %159 : vector<16x8xf32> to vector<16x8xbf16>
    %c0_104 = arith.constant 0 : index
    %c2_105 = arith.constant 2 : index
    %c0_106 = arith.constant 0 : index
    %c0_107 = arith.constant 0 : index
    %161 = vector.load %arg9[%c0_104, %c2_105, %c0_106, %c0_107] : memref<1x8x16x8xbf16, #tpu.memory_space<vmem>>, vector<1x1x16x8xbf16>
    %162 = vector.shape_cast %161 : vector<1x1x16x8xbf16> to vector<16x8xbf16>
    %163 = vector.shape_cast %160 : vector<16x8xbf16> to vector<1x1x16x8xbf16>
    tpu.vector_store %arg9[%c0_104, %c2_105, %c0_106, %c0_107], %163 {strides = array<i32>} : memref<1x8x16x8xbf16, #tpu.memory_space<vmem>>, vector<1x1x16x8xbf16>,
    %cst_108 = arith.constant dense<0.000000e+00> : vector<8xf32>
    %164 = vector.multi_reduction <add>, %159, %cst_108 [0] : vector<16x8xf32> to vector<8xf32>
    %165 = vector.shape_cast %164 : vector<8xf32> to vector<1x8xf32>
    %166 = arith.addf %152, %165 : vector<1x8xf32>
    %167 = arith.mulf %159, %159 : vector<16x8xf32>
    %cst_109 = arith.constant dense<0.000000e+00> : vector<8xf32>
    %168 = vector.multi_reduction <add>, %167, %cst_109 [0] : vector<16x8xf32> to vector<8xf32>
    %169 = vector.shape_cast %168 : vector<8xf32> to vector<1x8xf32>
    %170 = arith.addf %156, %169 : vector<1x8xf32>
    %171 = vector.extract_strided_slice %125 {offsets = [54, 0], sizes = [16, 8], strides = [1, 1]} : vector<144x8xf32> to vector<16x8xf32>
    %172 = vector.broadcast %126 : vector<1x8xf32> to vector<16x8xf32>
    %173 = arith.addf %171, %172 : vector<16x8xf32>
    %174 = arith.truncf %173 : vector<16x8xf32> to vector<16x8xbf16>
    %c0_110 = arith.constant 0 : index
    %c3_111 = arith.constant 3 : index
    %c0_112 = arith.constant 0 : index
    %c0_113 = arith.constant 0 : index
    %175 = vector.load %arg9[%c0_110, %c3_111, %c0_112, %c0_113] : memref<1x8x16x8xbf16, #tpu.memory_space<vmem>>, vector<1x1x16x8xbf16>
    %176 = vector.shape_cast %175 : vector<1x1x16x8xbf16> to vector<16x8xbf16>
    %177 = vector.shape_cast %174 : vector<16x8xbf16> to vector<1x1x16x8xbf16>
    tpu.vector_store %arg9[%c0_110, %c3_111, %c0_112, %c0_113], %177 {strides = array<i32>} : memref<1x8x16x8xbf16, #tpu.memory_space<vmem>>, vector<1x1x16x8xbf16>,
    %cst_114 = arith.constant dense<0.000000e+00> : vector<8xf32>
    %178 = vector.multi_reduction <add>, %173, %cst_114 [0] : vector<16x8xf32> to vector<8xf32>
    %179 = vector.shape_cast %178 : vector<8xf32> to vector<1x8xf32>
    %180 = arith.addf %166, %179 : vector<1x8xf32>
    %181 = arith.mulf %173, %173 : vector<16x8xf32>
    %cst_115 = arith.constant dense<0.000000e+00> : vector<8xf32>
    %182 = vector.multi_reduction <add>, %181, %cst_115 [0] : vector<16x8xf32> to vector<8xf32>
    %183 = vector.shape_cast %182 : vector<8xf32> to vector<1x8xf32>
    %184 = arith.addf %170, %183 : vector<1x8xf32>
    %185 = vector.extract_strided_slice %125 {offsets = [72, 0], sizes = [16, 8], strides = [1, 1]} : vector<144x8xf32> to vector<16x8xf32>
    %186 = vector.broadcast %126 : vector<1x8xf32> to vector<16x8xf32>
    %187 = arith.addf %185, %186 : vector<16x8xf32>
    %188 = arith.truncf %187 : vector<16x8xf32> to vector<16x8xbf16>
    %c0_116 = arith.constant 0 : index
    %c4_117 = arith.constant 4 : index
    %c0_118 = arith.constant 0 : index
    %c0_119 = arith.constant 0 : index
    %189 = vector.load %arg9[%c0_116, %c4_117, %c0_118, %c0_119] : memref<1x8x16x8xbf16, #tpu.memory_space<vmem>>, vector<1x1x16x8xbf16>
    %190 = vector.shape_cast %189 : vector<1x1x16x8xbf16> to vector<16x8xbf16>
    %191 = vector.shape_cast %188 : vector<16x8xbf16> to vector<1x1x16x8xbf16>
    tpu.vector_store %arg9[%c0_116, %c4_117, %c0_118, %c0_119], %191 {strides = array<i32>} : memref<1x8x16x8xbf16, #tpu.memory_space<vmem>>, vector<1x1x16x8xbf16>,
    %cst_120 = arith.constant dense<0.000000e+00> : vector<8xf32>
    %192 = vector.multi_reduction <add>, %187, %cst_120 [0] : vector<16x8xf32> to vector<8xf32>
    %193 = vector.shape_cast %192 : vector<8xf32> to vector<1x8xf32>
    %194 = arith.addf %180, %193 : vector<1x8xf32>
    %195 = arith.mulf %187, %187 : vector<16x8xf32>
    %cst_121 = arith.constant dense<0.000000e+00> : vector<8xf32>
    %196 = vector.multi_reduction <add>, %195, %cst_121 [0] : vector<16x8xf32> to vector<8xf32>
    %197 = vector.shape_cast %196 : vector<8xf32> to vector<1x8xf32>
    %198 = arith.addf %184, %197 : vector<1x8xf32>
    %199 = vector.extract_strided_slice %125 {offsets = [90, 0], sizes = [16, 8], strides = [1, 1]} : vector<144x8xf32> to vector<16x8xf32>
    %200 = vector.broadcast %126 : vector<1x8xf32> to vector<16x8xf32>
    %201 = arith.addf %199, %200 : vector<16x8xf32>
    %202 = arith.truncf %201 : vector<16x8xf32> to vector<16x8xbf16>
    %c0_122 = arith.constant 0 : index
    %c5_123 = arith.constant 5 : index
    %c0_124 = arith.constant 0 : index
    %c0_125 = arith.constant 0 : index
    %203 = vector.load %arg9[%c0_122, %c5_123, %c0_124, %c0_125] : memref<1x8x16x8xbf16, #tpu.memory_space<vmem>>, vector<1x1x16x8xbf16>
    %204 = vector.shape_cast %203 : vector<1x1x16x8xbf16> to vector<16x8xbf16>
    %205 = vector.shape_cast %202 : vector<16x8xbf16> to vector<1x1x16x8xbf16>
    tpu.vector_store %arg9[%c0_122, %c5_123, %c0_124, %c0_125], %205 {strides = array<i32>} : memref<1x8x16x8xbf16, #tpu.memory_space<vmem>>, vector<1x1x16x8xbf16>,
    %cst_126 = arith.constant dense<0.000000e+00> : vector<8xf32>
    %206 = vector.multi_reduction <add>, %201, %cst_126 [0] : vector<16x8xf32> to vector<8xf32>
    %207 = vector.shape_cast %206 : vector<8xf32> to vector<1x8xf32>
    %208 = arith.addf %194, %207 : vector<1x8xf32>
    %209 = arith.mulf %201, %201 : vector<16x8xf32>
    %cst_127 = arith.constant dense<0.000000e+00> : vector<8xf32>
    %210 = vector.multi_reduction <add>, %209, %cst_127 [0] : vector<16x8xf32> to vector<8xf32>
    %211 = vector.shape_cast %210 : vector<8xf32> to vector<1x8xf32>
    %212 = arith.addf %198, %211 : vector<1x8xf32>
    %213 = vector.extract_strided_slice %125 {offsets = [108, 0], sizes = [16, 8], strides = [1, 1]} : vector<144x8xf32> to vector<16x8xf32>
    %214 = vector.broadcast %126 : vector<1x8xf32> to vector<16x8xf32>
    %215 = arith.addf %213, %214 : vector<16x8xf32>
    %216 = arith.truncf %215 : vector<16x8xf32> to vector<16x8xbf16>
    %c0_128 = arith.constant 0 : index
    %c6_129 = arith.constant 6 : index
    %c0_130 = arith.constant 0 : index
    %c0_131 = arith.constant 0 : index
    %217 = vector.load %arg9[%c0_128, %c6_129, %c0_130, %c0_131] : memref<1x8x16x8xbf16, #tpu.memory_space<vmem>>, vector<1x1x16x8xbf16>
    %218 = vector.shape_cast %217 : vector<1x1x16x8xbf16> to vector<16x8xbf16>
    %219 = vector.shape_cast %216 : vector<16x8xbf16> to vector<1x1x16x8xbf16>
    tpu.vector_store %arg9[%c0_128, %c6_129, %c0_130, %c0_131], %219 {strides = array<i32>} : memref<1x8x16x8xbf16, #tpu.memory_space<vmem>>, vector<1x1x16x8xbf16>,
    %cst_132 = arith.constant dense<0.000000e+00> : vector<8xf32>
    %220 = vector.multi_reduction <add>, %215, %cst_132 [0] : vector<16x8xf32> to vector<8xf32>
    %221 = vector.shape_cast %220 : vector<8xf32> to vector<1x8xf32>
    %222 = arith.addf %208, %221 : vector<1x8xf32>
    %223 = arith.mulf %215, %215 : vector<16x8xf32>
    %cst_133 = arith.constant dense<0.000000e+00> : vector<8xf32>
    %224 = vector.multi_reduction <add>, %223, %cst_133 [0] : vector<16x8xf32> to vector<8xf32>
    %225 = vector.shape_cast %224 : vector<8xf32> to vector<1x8xf32>
    %226 = arith.addf %212, %225 : vector<1x8xf32>
    %227 = vector.extract_strided_slice %125 {offsets = [126, 0], sizes = [16, 8], strides = [1, 1]} : vector<144x8xf32> to vector<16x8xf32>
    %228 = vector.broadcast %126 : vector<1x8xf32> to vector<16x8xf32>
    %229 = arith.addf %227, %228 : vector<16x8xf32>
    %230 = arith.truncf %229 : vector<16x8xf32> to vector<16x8xbf16>
    %c0_134 = arith.constant 0 : index
    %c7_135 = arith.constant 7 : index
    %c0_136 = arith.constant 0 : index
    %c0_137 = arith.constant 0 : index
    %231 = vector.load %arg9[%c0_134, %c7_135, %c0_136, %c0_137] : memref<1x8x16x8xbf16, #tpu.memory_space<vmem>>, vector<1x1x16x8xbf16>
    %232 = vector.shape_cast %231 : vector<1x1x16x8xbf16> to vector<16x8xbf16>
    %233 = vector.shape_cast %230 : vector<16x8xbf16> to vector<1x1x16x8xbf16>
    tpu.vector_store %arg9[%c0_134, %c7_135, %c0_136, %c0_137], %233 {strides = array<i32>} : memref<1x8x16x8xbf16, #tpu.memory_space<vmem>>, vector<1x1x16x8xbf16>,
    %cst_138 = arith.constant dense<0.000000e+00> : vector<8xf32>
    %234 = vector.multi_reduction <add>, %229, %cst_138 [0] : vector<16x8xf32> to vector<8xf32>
    %235 = vector.shape_cast %234 : vector<8xf32> to vector<1x8xf32>
    %236 = arith.addf %222, %235 : vector<1x8xf32>
    %237 = arith.mulf %229, %229 : vector<16x8xf32>
    %cst_139 = arith.constant dense<0.000000e+00> : vector<8xf32>
    %238 = vector.multi_reduction <add>, %237, %cst_139 [0] : vector<16x8xf32> to vector<8xf32>
    %239 = vector.shape_cast %238 : vector<8xf32> to vector<1x8xf32>
    %240 = arith.addf %226, %239 : vector<1x8xf32>
    %241 = vector.shape_cast %236 : vector<1x8xf32> to vector<1x1x1x8xf32>
    %c0_140 = arith.constant 0 : index
    %c0_141 = arith.constant 0 : index
    %c0_142 = arith.constant 0 : index
    %c0_143 = arith.constant 0 : index
    %242 = vector.load %arg10[%c0_140, %c0_141, %c0_142, %c0_143] : memref<1x1x1x8xf32, #tpu.memory_space<vmem>>, vector<1x1x1x8xf32>
    tpu.vector_store %arg10[%c0_140, %c0_141, %c0_142, %c0_143], %241 {strides = array<i32>} : memref<1x1x1x8xf32, #tpu.memory_space<vmem>>, vector<1x1x1x8xf32>,
    %243 = vector.shape_cast %240 : vector<1x8xf32> to vector<1x1x1x8xf32>
    %c0_144 = arith.constant 0 : index
    %c0_145 = arith.constant 0 : index
    %c0_146 = arith.constant 0 : index
    %c0_147 = arith.constant 0 : index
    %244 = vector.load %arg11[%c0_144, %c0_145, %c0_146, %c0_147] : memref<1x1x1x8xf32, #tpu.memory_space<vmem>>, vector<1x1x1x8xf32>
    tpu.vector_store %arg11[%c0_144, %c0_145, %c0_146, %c0_147], %243 {strides = array<i32>} : memref<1x1x1x8xf32, #tpu.memory_space<vmem>>, vector<1x1x1x8xf32>,
    return
  }
  func.func @transform_0(%arg0: i32, %arg1: i32) -> (i32, i32, i32, i32) {
    %c0_i32 = arith.constant 0 : i32
    %c0_i32_0 = arith.constant 0 : i32
    %c0_i32_1 = arith.constant 0 : i32
    return %arg0, %arg1, %c0_i32, %c0_i32_0 : i32, i32, i32, i32
  }
  func.func @transform_1(%arg0: i32, %arg1: i32) -> (i32, i32, i32, i32) {
    %c8_i32 = arith.constant 8 : i32
    %0 = arith.muli %arg1, %c8_i32 : i32
    %c1_i32 = arith.constant 1 : i32
    %1 = arith.subi %0, %c1_i32 : i32
    %c0_i32 = arith.constant 0 : i32
    %2 = arith.maxsi %1, %c0_i32 : i32
    %c0_i32_0 = arith.constant 0 : i32
    %c0_i32_1 = arith.constant 0 : i32
    %c0_i32_2 = arith.constant 0 : i32
    return %arg0, %2, %c0_i32_0, %c0_i32_1 : i32, i32, i32, i32
  }
  func.func @transform_2(%arg0: i32, %arg1: i32) -> (i32, i32, i32, i32) {
    %c1_i32 = arith.constant 1 : i32
    %0 = arith.addi %arg1, %c1_i32 : i32
    %c8_i32 = arith.constant 8 : i32
    %1 = arith.muli %0, %c8_i32 : i32
    %c15_i32 = arith.constant 15 : i32
    %2 = arith.minsi %1, %c15_i32 : i32
    %c0_i32 = arith.constant 0 : i32
    %c0_i32_0 = arith.constant 0 : i32
    %c0_i32_1 = arith.constant 0 : i32
    return %arg0, %2, %c0_i32, %c0_i32_0 : i32, i32, i32, i32
  }
  func.func @transform_3(%arg0: i32, %arg1: i32) -> (i32, i32) {
    %c0_i32 = arith.constant 0 : i32
    %c0_i32_0 = arith.constant 0 : i32
    %c0_i32_1 = arith.constant 0 : i32
    return %c0_i32, %c0_i32_0 : i32, i32
  }
  func.func @transform_4(%arg0: i32, %arg1: i32) -> (i32, i32) {
    %c0_i32 = arith.constant 0 : i32
    %c0_i32_0 = arith.constant 0 : i32
    %c0_i32_1 = arith.constant 0 : i32
    return %c0_i32, %c0_i32_0 : i32, i32
  }
  func.func @transform_5(%arg0: i32, %arg1: i32) -> (i32, i32, i32) {
    %c0_i32 = arith.constant 0 : i32
    %c0_i32_0 = arith.constant 0 : i32
    %c0_i32_1 = arith.constant 0 : i32
    %c0_i32_2 = arith.constant 0 : i32
    return %c0_i32, %c0_i32_0, %c0_i32_1 : i32, i32, i32
  }
  func.func @transform_6(%arg0: i32, %arg1: i32) -> (i32, i32) {
    %c0_i32 = arith.constant 0 : i32
    %c0_i32_0 = arith.constant 0 : i32
    %c0_i32_1 = arith.constant 0 : i32
    return %c0_i32, %c0_i32_0 : i32, i32
  }
  func.func @transform_7(%arg0: i32, %arg1: i32) -> (i32, i32, i32, i32) {
    %c0_i32 = arith.constant 0 : i32
    %c0_i32_0 = arith.constant 0 : i32
    %c0_i32_1 = arith.constant 0 : i32
    return %arg0, %arg1, %c0_i32, %c0_i32_0 : i32, i32, i32, i32
  }
  func.func @transform_8(%arg0: i32, %arg1: i32) -> (i32, i32, i32, i32) {
    %c0_i32 = arith.constant 0 : i32
    %c0_i32_0 = arith.constant 0 : i32
    %c0_i32_1 = arith.constant 0 : i32
    return %arg0, %arg1, %c0_i32, %c0_i32_0 : i32, i32, i32, i32
  }
  func.func @transform_9(%arg0: i32, %arg1: i32) -> (i32, i32, i32, i32) {
    %c0_i32 = arith.constant 0 : i32
    %c0_i32_0 = arith.constant 0 : i32
    %c0_i32_1 = arith.constant 0 : i32
    return %arg0, %arg1, %c0_i32, %c0_i32_0 : i32, i32, i32, i32
  }
}

module attributes {stable_mosaic.version = 11 : i64} {
  func.func @_bn_relu_kernel(%arg0: i32, %arg1: memref<32x128xbf16, #tpu.memory_space<vmem>>, %arg2: memref<1x128xf32, #tpu.memory_space<vmem>>, %arg3: memref<1x128xf32, #tpu.memory_space<vmem>>, %arg4: memref<32x128xf32, #tpu.memory_space<vmem>>) attributes {dimension_semantics = [#tpu.dimension_semantics<parallel>], iteration_bounds = array<i64: 1>, scalar_prefetch = 0 : i64, scratch_operands = 0 : i64, tpu.core_type = #tpu.core_type<tc>, window_params = [{transform_indices = @transform_0, window_bounds = array<i64: 32, 128>}, {pipeline_mode = #tpu.pipeline_mode<synchronous>, transform_indices = @transform_1, window_bounds = array<i64: 1, 128>}, {pipeline_mode = #tpu.pipeline_mode<synchronous>, transform_indices = @transform_2, window_bounds = array<i64: 1, 128>}, {transform_indices = @transform_3, window_bounds = array<i64: 32, 128>}]} {
    %c0 = arith.constant 0 : index
    %c0_0 = arith.constant 0 : index
    %0 = vector.load %arg1[%c0, %c0_0] : memref<32x128xbf16, #tpu.memory_space<vmem>>, vector<32x128xbf16>
    %1 = arith.extf %0 : vector<32x128xbf16> to vector<32x128xf32>
    %c0_1 = arith.constant 0 : index
    %c0_2 = arith.constant 0 : index
    %2 = vector.load %arg2[%c0_1, %c0_2] : memref<1x128xf32, #tpu.memory_space<vmem>>, vector<1x128xf32>
    %3 = vector.broadcast %2 : vector<1x128xf32> to vector<32x128xf32>
    %4 = arith.mulf %1, %3 : vector<32x128xf32>
    %c0_3 = arith.constant 0 : index
    %c0_4 = arith.constant 0 : index
    %5 = vector.load %arg3[%c0_3, %c0_4] : memref<1x128xf32, #tpu.memory_space<vmem>>, vector<1x128xf32>
    %6 = vector.broadcast %5 : vector<1x128xf32> to vector<32x128xf32>
    %7 = arith.addf %4, %6 : vector<32x128xf32>
    %cst = arith.constant 0.000000e+00 : f32
    %8 = vector.broadcast %cst : f32 to vector<32x128xf32>
    %9 = arith.maximumf %7, %8 : vector<32x128xf32>
    %c0_5 = arith.constant 0 : index
    %c0_6 = arith.constant 0 : index
    %10 = vector.load %arg4[%c0_5, %c0_6] : memref<32x128xf32, #tpu.memory_space<vmem>>, vector<32x128xf32>
    tpu.vector_store %arg4[%c0_5, %c0_6], %9 {strides = array<i32>} : memref<32x128xf32, #tpu.memory_space<vmem>>, vector<32x128xf32>,
    return
  }
  func.func @transform_0(%arg0: i32) -> (i32, i32) {
    %c0_i32 = arith.constant 0 : i32
    %c0_i32_0 = arith.constant 0 : i32
    return %arg0, %c0_i32 : i32, i32
  }
  func.func @transform_1(%arg0: i32) -> (i32, i32) {
    %c0_i32 = arith.constant 0 : i32
    %c0_i32_0 = arith.constant 0 : i32
    %c0_i32_1 = arith.constant 0 : i32
    return %c0_i32, %c0_i32_0 : i32, i32
  }
  func.func @transform_2(%arg0: i32) -> (i32, i32) {
    %c0_i32 = arith.constant 0 : i32
    %c0_i32_0 = arith.constant 0 : i32
    %c0_i32_1 = arith.constant 0 : i32
    return %c0_i32, %c0_i32_0 : i32, i32
  }
  func.func @transform_3(%arg0: i32) -> (i32, i32) {
    %c0_i32 = arith.constant 0 : i32
    %c0_i32_0 = arith.constant 0 : i32
    return %arg0, %c0_i32 : i32, i32
  }
}

</mosaic_0001>

<llo_original>
// kernel: tile.13
$region0: #{tile.13}
  #allocation0 [shape = 's32[1]{0}', space=sflag, size = 0x4, scoped, tag = 'scoped memory for tile.13']
  %s0 = inlined_call_operand.vmem [shape: f32[8], index: 0, kind: input, shape index: {}]
  %s1 = inlined_call_operand.vmem [shape: f32[16,8], index: 1, kind: output, shape index: {}]
  // Predicated region
  $region2: #{tile.13} parent=0 // pred_check
    _
  $region3: #{tile.13} parent=0 // pred_check_branch
    %3 = sbr.rel (0) target = $region5
  $region4: #{tile.13} parent=0 // pred_region
    _
  $region5: #{tile.13} parent=0 // pred_fallthru
    _
  %v4 = vld [vmem:[%s0] ss:$0 sm:$0xff]
  %5 = vst [vmem:[%s1] sm:$0xff] %v4
  %s6 = scalar_lea.vmem %s1, 8
  %7 = vst [vmem:[%s6] sm:$0xff] %v4

// kernel: tile.14
$region0: #{tile.14}
  %s0 = inlined_call_operand.vmem [shape: f32[16,8], index: 0, kind: input, shape index: {}]
  %s1 = inlined_call_operand.vmem [shape: f32[1,128], index: 1, kind: output, shape index: {}]
  $region1: #{tile.14} parent=0
    #allocation0 [shape = 'u8[4096]{0}', space=vmem, size = 0x1000, scoped, tag = 'scoped mem for output reshape']
    %v2 = vld [vmem:[%s0] sm:$0x1]
    %vm3 = vcmask 64512
    %4 = vst.msk [vmem:[#allocation0] sm:$0x1] %vm3, %v2
    %s5 = scalar_lea.vmem %s0, 15
    %v6 = vld [vmem:[%s5] sm:$0x1]
    %7 = vrot.lane.b32.xlu0 %v6, 120
    %v8 = vpop.permute.xlu0 %7
    %vm9 = vcmask 1048512
    %10 = vst.msk [vmem:[#allocation0] sm:$0x1] %vm9, %v8
    %s11 = scalar_lea.vmem %s0, 14
    %v12 = vld [vmem:[%s11] sm:$0x1]
    %13 = vrot.lane.b32.xlu0 %v12, 112
    %v14 = vpop.permute.xlu0 %13
    %vm15 = vcmask 982912
    %16 = vst.msk [vmem:[#allocation0] sm:$0x1] %vm15, %v14
    %s17 = scalar_lea.vmem %s0, 13
    %v18 = vld [vmem:[%s17] sm:$0x1]
    %19 = vrot.lane.b32.xlu0 %v18, 104
    %v20 = vpop.permute.xlu0 %19
    %vm21 = vcmask 917312
    %22 = vst.msk [vmem:[#allocation0] sm:$0x1] %vm21, %v20
    %s23 = scalar_lea.vmem %s0, 12
    %v24 = vld [vmem:[%s23] sm:$0x1]
    %25 = vrot.lane.b32.xlu0 %v24, 96
    %v26 = vpop.permute.xlu0 %25
    %vm27 = vcmask 851712
    %28 = vst.msk [vmem:[#allocation0] sm:$0x1] %vm27, %v26
    %s29 = scalar_lea.vmem %s0, 11
    %v30 = vld [vmem:[%s29] sm:$0x1]
    %31 = vrot.lane.b32.xlu0 %v30, 88
    %v32 = vpop.permute.xlu0 %31
    %vm33 = vcmask 786112
    %34 = vst.msk [vmem:[#allocation0] sm:$0x1] %vm33, %v32
    %s35 = scalar_lea.vmem %s0, 10
    %v36 = vld [vmem:[%s35] sm:$0x1]
    %37 = vrot.lane.b32.xlu0 %v36, 80
    %v38 = vpop.permute.xlu0 %37
    %vm39 = vcmask 720512
    %40 = vst.msk [vmem:[#allocation0] sm:$0x1] %vm39, %v38
    %s41 = scalar_lea.vmem %s0, 9
    %v42 = vld [vmem:[%s41] sm:$0x1]
    %43 = vrot.lane.b32.xlu0 %v42, 72
    %v44 = vpop.permute.xlu0 %43
    %vm45 = vcmask 654912
    %46 = vst.msk [vmem:[#allocation0] sm:$0x1] %vm45, %v44
    %s47 = scalar_lea.vmem %s0, 8
    %v48 = vld [vmem:[%s47] sm:$0x1]
    %49 = vrot.lane.b32.xlu0 %v48, 64
    %v50 = vpop.permute.xlu0 %49
    %vm51 = vcmask 589312
    %52 = vst.msk [vmem:[#allocation0] sm:$0x1] %vm51, %v50
    %s53 = scalar_lea.vmem %s0, 7
    %v54 = vld [vmem:[%s53] sm:$0x1]
    %55 = vrot.lane.b32.xlu0 %v54, 56
    %v56 = vpop.permute.xlu0 %55
    %vm57 = vcmask 523712
    %58 = vst.msk [vmem:[#allocation0] sm:$0x1] %vm57, %v56
    %s59 = scalar_lea.vmem %s0, 6
    %v60 = vld [vmem:[%s59] sm:$0x1]
    %61 = vrot.lane.b32.xlu0 %v60, 48
    %v62 = vpop.permute.xlu0 %61
    %vm63 = vcmask 458112
    %64 = vst.msk [vmem:[#allocation0] sm:$0x1] %vm63, %v62
    %s65 = scalar_lea.vmem %s0, 5
    %v66 = vld [vmem:[%s65] sm:$0x1]
    %67 = vrot.lane.b32.xlu0 %v66, 40
    %v68 = vpop.permute.xlu0 %67
    %vm69 = vcmask 392512
    %70 = vst.msk [vmem:[#allocation0] sm:$0x1] %vm69, %v68
    %s71 = scalar_lea.vmem %s0, 4
    %v72 = vld [vmem:[%s71] sm:$0x1]
    %73 = vrot.lane.b32.xlu0 %v72, 32
    %v74 = vpop.permute.xlu0 %73
    %vm75 = vcmask 326912
    %76 = vst.msk [vmem:[#allocation0] sm:$0x1] %vm75, %v74
    %s77 = scalar_lea.vmem %s0, 3
    %v78 = vld [vmem:[%s77] sm:$0x1]
    %79 = vrot.lane.b32.xlu0 %v78, 24
    %v80 = vpop.permute.xlu0 %79
    %vm81 = vcmask 261312
    %82 = vst.msk [vmem:[#allocation0] sm:$0x1] %vm81, %v80
    %s83 = scalar_lea.vmem %s0, 2
    %v84 = vld [vmem:[%s83] sm:$0x1]
    %85 = vrot.lane.b32.xlu0 %v84, 16
    %v86 = vpop.permute.xlu0 %85
    %vm87 = vcmask 195712
    %88 = vst.msk [vmem:[#allocation0] sm:$0x1] %vm87, %v86
    %s89 = scalar_lea.vmem %s0, 1
    %v90 = vld [vmem:[%s89] sm:$0x1]
    %91 = vrot.lane.b32.xlu0 %v90, 8
    %v92 = vpop.permute.xlu0 %91
    %vm93 = vcmask 130112
    %94 = vst.msk [vmem:[#allocation0] sm:$0x1] %vm93, %v92
    %s96 = sshllo.u32 0, 1
    %v98 = vld [vmem:[#allocation0] sm:%s96]
    %s99 = sshllo.u32 0, 1
    %100 = vst [vmem:[%s1] sm:%s99] %v98

// kernel: double_conv_forward.5
$region0: #{double_conv_forward.5}
  #allocation0 [shape = 'u32[]', space=smem, size = 0x4, offset = 0x4, fixed_abs, tag = 'smem constant byte address 0x4 - core index']
  #allocation1 [shape = 'u32[144,128]{1,0:T(1,128)}', space=vmem, size = 0x12000, scoped, tag = 'internal scratch']
  %s0 = inlined_call_operand.vmem [shape: bf16[32,128], index: 0, kind: input, shape index: {}]
  %s1 = inlined_call_operand.vmem [shape: f32[1,128], index: 1, kind: input, shape index: {}]
  %s2 = inlined_call_operand.vmem [shape: f32[1,128], index: 2, kind: input, shape index: {}]
  %s3 = inlined_call_operand.vmem [shape: f32[32,128], index: 3, kind: output, shape index: {}]
  %s4 = sld [smem:[#allocation0]]
  $region22: #{double_conv_forward.5} parent=0
    _
  %s6 = ssub.s32 1, %s4
  %s7 = scalar_select 0, %s6, %s4
  // Predicated region
  $region2: #{double_conv_forward.5} parent=0 // pred_check
    _
  $region3: #{double_conv_forward.5} parent=0 // pred_check_branch
    %9 = sbr.rel (0) target = $region5
  $region4: #{double_conv_forward.5} parent=0 // pred_region
    _
  $region5: #{double_conv_forward.5} parent=0 // pred_fallthru
    _
  // Predicated region
  $region6: #{double_conv_forward.5} parent=0 // pred_check
    _
  $region7: #{double_conv_forward.5} parent=0 // pred_check_branch
    %11 = sbr.rel (0) target = $region9
  $region8: #{double_conv_forward.5} parent=0 // pred_region
    _
  $region9: #{double_conv_forward.5} parent=0 // pred_fallthru
    _
  // Predicated region
  $region10: #{double_conv_forward.5} parent=0 // pred_check
    _
  $region11: #{double_conv_forward.5} parent=0 // pred_check_branch
    %13 = sbr.rel (0) target = $region13
  $region12: #{double_conv_forward.5} parent=0 // pred_region
    _
  $region13: #{double_conv_forward.5} parent=0 // pred_fallthru
    _
  %v14 = vld [vmem:[%s0] sm:$0xf]
  %v15 = vld [vmem:[%s0 + $0x4] sm:$0xf]
  %v16 = vld [vmem:[%s0 + $0x8] sm:$0xf]
  %v17 = vld [vmem:[%s0 + $0xc] sm:$0xf]
  %v18 = vunpack.c.l.bf16 %v14
  %v19 = vunpack.c.l.bf16 %v15
  %v20 = vunpack.c.l.bf16 %v16
  %v21 = vunpack.c.l.bf16 %v17
  %v22 = vld [vmem:[%s1] sm:$0x1]
  %v24 = vlaneseq
  %v25 = vshrl.u32 %v24, 7
  %v26 = vsub.s32 0, %v25
  %v27 = vrot.slane %v22, %v26
  %v29 = vmul.f32 %v18, %v27
  %v30 = vmul.f32 %v19, %v27
  %v31 = vmul.f32 %v20, %v27
  %v32 = vmul.f32 %v21, %v27
  %v33 = vld [vmem:[%s2] sm:$0x1]
  %v35 = vlaneseq
  %v36 = vshrl.u32 %v35, 7
  %v37 = vsub.s32 0, %v36
  %v38 = vrot.slane %v33, %v37
  %v40 = vadd.f32 %v29, %v38
  %v41 = vadd.f32 %v30, %v38
  %v42 = vadd.f32 %v31, %v38
  %v43 = vadd.f32 %v32, %v38
  %v44 = vmax.f32 %v40, 0.0
  %v45 = vmax.f32 %v41, 0.0
  %v46 = vmax.f32 %v42, 0.0
  %v47 = vmax.f32 %v43, 0.0
  %48 = vst [vmem:[%s3] sm:$0xff] %v44
  %49 = vst [vmem:[%s3 + $0x8] sm:$0xff] %v45
  %50 = vst [vmem:[%s3 + $0x10] sm:$0xff] %v46
  %51 = vst [vmem:[%s3 + $0x18] sm:$0xff] %v47
  // Predicated region
  $region14: #{double_conv_forward.5} parent=0 // pred_check
    _
  $region15: #{double_conv_forward.5} parent=0 // pred_check_branch
    %53 = sbr.rel (0) target = $region17
  $region16: #{double_conv_forward.5} parent=0 // pred_region
    _
  $region17: #{double_conv_forward.5} parent=0 // pred_fallthru
    _
  // Predicated region
  $region18: #{double_conv_forward.5} parent=0 // pred_check
    _
  $region19: #{double_conv_forward.5} parent=0 // pred_check_branch
    %55 = sbr.rel (0) target = $region21
  $region20: #{double_conv_forward.5} parent=0 // pred_region
    _
  $region21: #{double_conv_forward.5} parent=0 // pred_fallthru
    _

// kernel: double_conv_forward.3
$region0: #{double_conv_forward.3}
  #allocation0 [shape = 'u32[]', space=smem, size = 0x4, offset = 0x4, fixed_abs, tag = 'smem constant byte address 0x4 - core index']
  #allocation1 [shape = 'u32[144,128]{1,0:T(1,128)}', space=vmem, size = 0x12000, scoped, tag = 'internal scratch']
  #allocation2 [shape = 'bf16[182,4]{1,0:T(8,128)(2,1)}', space=vmem, size = 0xb800, scoped, tag = 'scratch operand']
  %s0 = inlined_call_operand.vmem [shape: bf16[2,16,16,4], index: 0, kind: input, shape index: {}, may-alias: {0,1,2}]
  %s1 = inlined_call_operand.vmem [shape: bf16[2,16,16,4], index: 1, kind: input, shape index: {}, may-alias: {0,1,2}]
  %s2 = inlined_call_operand.vmem [shape: bf16[2,16,16,4], index: 2, kind: input, shape index: {}, may-alias: {0,1,2}]
  %s3 = inlined_call_operand.vmem [shape: f32[1,4], index: 3, kind: input, shape index: {}]
  %s4 = inlined_call_operand.vmem [shape: f32[1,4], index: 4, kind: input, shape index: {}]
  %s5 = inlined_call_operand.vmem [shape: bf16[9,4,8], index: 5, kind: input, shape index: {}]
  %s6 = inlined_call_operand.vmem [shape: f32[1,8], index: 6, kind: input, shape index: {}]
  %s7 = inlined_call_operand.vmem [shape: bf16[2,16,16,8], index: 7, kind: output, shape index: {0}]
  %s8 = inlined_call_operand.vmem [shape: f32[2,2,1,8], index: 8, kind: output, shape index: {1}]
  %s9 = inlined_call_operand.vmem [shape: f32[2,2,1,8], index: 9, kind: output, shape index: {2}]
  %10 = xla_tuple %s7, %s8, %s9
  %s11 = sld [smem:[#allocation0]]
  $region77: #{double_conv_forward.3} parent=0
    _
  %s13 = ssub.s32 1, %s11
  %s14 = scalar_select 0, %s13, %s11
  loop: start=0, step=1, limit=6
  $region2: #{double_conv_forward.3} parent=0 // loop_pre_header
    _
  $region3: #{double_conv_forward.3} parent=0 // loop_header
    %s16 = sphi 0, %s20
    %p17 = scmp.ge.s32.totalorder %s16, 6
    %s23 = sphi 0, %s35
    %s24 = sphi 0, %s31
    %s25 = sphi 0, %s23
    %s26 = sphi 0, %s24
    %s27 = sphi 0, %s25
    %s28 = sphi 0, %s26
    %s40 = sphi 0, %s42
    %s43 = sphi 0, %s40
    %s44 = sphi 0, %s43
    %s60 = sphi 0, %s44
    %s76 = sphi 0, %s78
    %s79 = sphi 0, %s76
    %s80 = sphi 0, %s79
    %s96 = sphi 0, %s80
    %s112 = sphi 0, %s114
    %s115 = sphi 0, %s112
    %s116 = sphi 0, %s115
    %s132 = sphi 0, %s116
    %s136 = sphi 0, %s136
    %s138 = sphi 0, %s136
    %s139 = sphi 0, %s138
    %s153 = sphi 0, %s139
    %s157 = sphi 0, %s157
    %s159 = sphi 0, %s157
    %s160 = sphi 0, %s159
    %s174 = sphi 0, %s160
    %s178 = sphi 0, %s178
    %s180 = sphi 0, %s178
    %s181 = sphi 0, %s180
    %s195 = sphi 0, %s181
    %s199 = sphi 0, %s199
    %s201 = sphi 0, %s199
    %s202 = sphi 0, %s201
    %s216 = sphi 0, %s202
    %s224 = sphi 0, %s226
    %s227 = sphi 0, %s224
    %s228 = sphi 0, %s227
    %s244 = sphi 0, %s228
    %s252 = sphi 0, %s254
    %s255 = sphi 0, %s252
    %s256 = sphi 0, %s255
    %s272 = sphi 0, %s256
    %s280 = sphi 0, %s282
    %s283 = sphi 0, %s280
    %s284 = sphi 0, %s283
    %s300 = sphi 0, %s284
  $region4: #{double_conv_forward.3} parent=0 // loop_header_branch
    %19 = sbr.rel (%p17) target = $region8
  $region5: #{double_conv_forward.3} parent=0 // loop_body
    %s21 = ssub.s32 %s16, 1
    %s22 = ssub.s32 %s16, 2
    %s29 = sadd.s32 1, %s24
    %p30 = scmp.ge.s32.totalorder %s29, 2
    %s31 = scalar_select %p30, 0, %s29
    %s32 = sadd.s32 1, %s23
    %s33 = scalar_select %p30, %s32, %s23
    %p34 = scmp.ge.s32.totalorder %s33, 2
    %s35 = scalar_select %p34, 0, %s33
    %s36 = ssub.s32 %s23, %s35
    %s37 = ssub.s32 %s24, %s31
    %s38 = sor.u32 %s36, %s37
    %p39 = scmp.eq.s32.totalorder %s38, 0
    %s41 = sadd.s32 %s40, 1
    %s42 = scalar_select %p39, %s40, %s41
    %p45 = pneg %p39
    %p46 = scmp.eq.s32.totalorder %s16, 3
    %p47 = por %p45, %p46
    %p48 = scmp.ne.s32.totalorder %s40, %s43
    %p49 = scmp.eq.s32.totalorder %s16, 0
    %p50 = por %p48, %p49
    %p51 = scmp.ne.s32.totalorder %s40, %s43
    %p52 = scmp.eq.s32.totalorder %s21, 3
    %p53 = por %p51, %p52
    %p54 = scmp.ne.s32.totalorder %s43, %s44
    %p55 = scmp.eq.s32.totalorder %s21, 0
    %p56 = por %p54, %p55
    %p57 = scmp.ne.s32.totalorder %s43, %s44
    %p58 = scmp.eq.s32.totalorder %s22, 3
    %p59 = por %p57, %p58
    %p61 = scmp.ne.s32.totalorder %s44, %s60
    %p62 = scmp.eq.s32.totalorder %s22, 0
    %p63 = por %p61, %p62
    %s64 = smul.u32 %s24, 8
    %s65 = ssub.s32 %s64, 1
    %p66 = scmp.gt.s32.totalorder %s65, 0
    %s67 = scalar_select %p66, %s65, 0
    %s68 = smul.u32 %s31, 8
    %s69 = ssub.s32 %s68, 1
    %p70 = scmp.gt.s32.totalorder %s69, 0
    %s71 = scalar_select %p70, %s69, 0
    %s72 = ssub.s32 %s23, %s35
    %s73 = ssub.s32 %s67, %s71
    %s74 = sor.u32 %s72, %s73
    %p75 = scmp.eq.s32.totalorder %s74, 0
    %s77 = sadd.s32 %s76, 1
    %s78 = scalar_select %p75, %s76, %s77
    %p81 = pneg %p75
    %p82 = scmp.eq.s32.totalorder %s16, 3
    %p83 = por %p81, %p82
    %p84 = scmp.ne.s32.totalorder %s76, %s79
    %p85 = scmp.eq.s32.totalorder %s16, 0
    %p86 = por %p84, %p85
    %p87 = scmp.ne.s32.totalorder %s76, %s79
    %p88 = scmp.eq.s32.totalorder %s21, 3
    %p89 = por %p87, %p88
    %p90 = scmp.ne.s32.totalorder %s79, %s80
    %p91 = scmp.eq.s32.totalorder %s21, 0
    %p92 = por %p90, %p91
    %p93 = scmp.ne.s32.totalorder %s79, %s80
    %p94 = scmp.eq.s32.totalorder %s22, 3
    %p95 = por %p93, %p94
    %p97 = scmp.ne.s32.totalorder %s80, %s96
    %p98 = scmp.eq.s32.totalorder %s22, 0
    %p99 = por %p97, %p98
    %s100 = sadd.s32 %s24, 1
    %s101 = smul.u32 %s100, 8
    %p102 = scmp.lt.s32.totalorder %s101, 15
    %s103 = scalar_select %p102, %s101, 15
    %s104 = sadd.s32 %s31, 1
    %s105 = smul.u32 %s104, 8
    %p106 = scmp.lt.s32.totalorder %s105, 15
    %s107 = scalar_select %p106, %s105, 15
    %s108 = ssub.s32 %s23, %s35
    %s109 = ssub.s32 %s103, %s107
    %s110 = sor.u32 %s108, %s109
    %p111 = scmp.eq.s32.totalorder %s110, 0
    %s113 = sadd.s32 %s112, 1
    %s114 = scalar_select %p111, %s112, %s113
    %p117 = pneg %p111
    %p118 = scmp.eq.s32.totalorder %s16, 3
    %p119 = por %p117, %p118
    %p120 = scmp.ne.s32.totalorder %s112, %s115
    %p121 = scmp.eq.s32.totalorder %s16, 0
    %p122 = por %p120, %p121
    %p123 = scmp.ne.s32.totalorder %s112, %s115
    %p124 = scmp.eq.s32.totalorder %s21, 3
    %p125 = por %p123, %p124
    %p126 = scmp.ne.s32.totalorder %s115, %s116
    %p127 = scmp.eq.s32.totalorder %s21, 0
    %p128 = por %p126, %p127
    %p129 = scmp.ne.s32.totalorder %s115, %s116
    %p130 = scmp.eq.s32.totalorder %s22, 3
    %p131 = por %p129, %p130
    %p133 = scmp.ne.s32.totalorder %s116, %s132
    %p134 = scmp.eq.s32.totalorder %s22, 0
    %p135 = por %p133, %p134
    %s137 = sadd.s32 %s136, 1
    %p140 = scmp.eq.s32.totalorder %s16, 3
    %p141 = scmp.ne.s32.totalorder %s136, %s138
    %p142 = scmp.eq.s32.totalorder %s16, 0
    %p143 = por %p141, %p142
    %p144 = scmp.ne.s32.totalorder %s136, %s138
    %p145 = scmp.eq.s32.totalorder %s21, 3
    %p146 = por %p144, %p145
    %p147 = scmp.ne.s32.totalorder %s138, %s139
    %p148 = scmp.eq.s32.totalorder %s21, 0
    %p149 = por %p147, %p148
    %p150 = scmp.ne.s32.totalorder %s138, %s139
    %p151 = scmp.eq.s32.totalorder %s22, 3
    %p152 = por %p150, %p151
    %p154 = scmp.ne.s32.totalorder %s139, %s153
    %p155 = scmp.eq.s32.totalorder %s22, 0
    %p156 = por %p154, %p155
    %s158 = sadd.s32 %s157, 1
    %p161 = scmp.eq.s32.totalorder %s16, 3
    %p162 = scmp.ne.s32.totalorder %s157, %s159
    %p163 = scmp.eq.s32.totalorder %s16, 0
    %p164 = por %p162, %p163
    %p165 = scmp.ne.s32.totalorder %s157, %s159
    %p166 = scmp.eq.s32.totalorder %s21, 3
    %p167 = por %p165, %p166
    %p168 = scmp.ne.s32.totalorder %s159, %s160
    %p169 = scmp.eq.s32.totalorder %s21, 0
    %p170 = por %p168, %p169
    %p171 = scmp.ne.s32.totalorder %s159, %s160
    %p172 = scmp.eq.s32.totalorder %s22, 3
    %p173 = por %p171, %p172
    %p175 = scmp.ne.s32.totalorder %s160, %s174
    %p176 = scmp.eq.s32.totalorder %s22, 0
    %p177 = por %p175, %p176
    %s179 = sadd.s32 %s178, 1
    %p182 = scmp.eq.s32.totalorder %s16, 3
    %p183 = scmp.ne.s32.totalorder %s178, %s180
    %p184 = scmp.eq.s32.totalorder %s16, 0
    %p185 = por %p183, %p184
    %p186 = scmp.ne.s32.totalorder %s178, %s180
    %p187 = scmp.eq.s32.totalorder %s21, 3
    %p188 = por %p186, %p187
    %p189 = scmp.ne.s32.totalorder %s180, %s181
    %p190 = scmp.eq.s32.totalorder %s21, 0
    %p191 = por %p189, %p190
    %p192 = scmp.ne.s32.totalorder %s180, %s181
    %p193 = scmp.eq.s32.totalorder %s22, 3
    %p194 = por %p192, %p193
    %p196 = scmp.ne.s32.totalorder %s181, %s195
    %p197 = scmp.eq.s32.totalorder %s22, 0
    %p198 = por %p196, %p197
    %s200 = sadd.s32 %s199, 1
    %p203 = scmp.eq.s32.totalorder %s16, 3
    %p204 = scmp.ne.s32.totalorder %s199, %s201
    %p205 = scmp.eq.s32.totalorder %s16, 0
    %p206 = por %p204, %p205
    %p207 = scmp.ne.s32.totalorder %s199, %s201
    %p208 = scmp.eq.s32.totalorder %s21, 3
    %p209 = por %p207, %p208
    %p210 = scmp.ne.s32.totalorder %s201, %s202
    %p211 = scmp.eq.s32.totalorder %s21, 0
    %p212 = por %p210, %p211
    %p213 = scmp.ne.s32.totalorder %s201, %s202
    %p214 = scmp.eq.s32.totalorder %s22, 3
    %p215 = por %p213, %p214
    %p217 = scmp.ne.s32.totalorder %s202, %s216
    %p218 = scmp.eq.s32.totalorder %s22, 0
    %p219 = por %p217, %p218
    %s220 = ssub.s32 %s23, %s35
    %s221 = ssub.s32 %s24, %s31
    %s222 = sor.u32 %s220, %s221
    %p223 = scmp.eq.s32.totalorder %s222, 0
    %s225 = sadd.s32 %s224, 1
    %s226 = scalar_select %p223, %s224, %s225
    %p229 = pneg %p223
    %p230 = scmp.eq.s32.totalorder %s16, 3
    %p231 = por %p229, %p230
    %p232 = scmp.ne.s32.totalorder %s224, %s227
    %p233 = scmp.eq.s32.totalorder %s16, 0
    %p234 = por %p232, %p233
    %p235 = scmp.ne.s32.totalorder %s224, %s227
    %p236 = scmp.eq.s32.totalorder %s21, 3
    %p237 = por %p235, %p236
    %p238 = scmp.ne.s32.totalorder %s227, %s228
    %p239 = scmp.eq.s32.totalorder %s21, 0
    %p240 = por %p238, %p239
    %p241 = scmp.ne.s32.totalorder %s227, %s228
    %p242 = scmp.eq.s32.totalorder %s22, 3
    %p243 = por %p241, %p242
    %p245 = scmp.ne.s32.totalorder %s228, %s244
    %p246 = scmp.eq.s32.totalorder %s22, 0
    %p247 = por %p245, %p246
    %s248 = ssub.s32 %s23, %s35
    %s249 = ssub.s32 %s24, %s31
    %s250 = sor.u32 %s248, %s249
    %p251 = scmp.eq.s32.totalorder %s250, 0
    %s253 = sadd.s32 %s252, 1
    %s254 = scalar_select %p251, %s252, %s253
    %p257 = pneg %p251
    %p258 = scmp.eq.s32.totalorder %s16, 3
    %p259 = por %p257, %p258
    %p260 = scmp.ne.s32.totalorder %s252, %s255
    %p261 = scmp.eq.s32.totalorder %s16, 0
    %p262 = por %p260, %p261
    %p263 = scmp.ne.s32.totalorder %s252, %s255
    %p264 = scmp.eq.s32.totalorder %s21, 3
    %p265 = por %p263, %p264
    %p266 = scmp.ne.s32.totalorder %s255, %s256
    %p267 = scmp.eq.s32.totalorder %s21, 0
    %p268 = por %p266, %p267
    %p269 = scmp.ne.s32.totalorder %s255, %s256
    %p270 = scmp.eq.s32.totalorder %s22, 3
    %p271 = por %p269, %p270
    %p273 = scmp.ne.s32.totalorder %s256, %s272
    %p274 = scmp.eq.s32.totalorder %s22, 0
    %p275 = por %p273, %p274
    %s276 = ssub.s32 %s23, %s35
    %s277 = ssub.s32 %s24, %s31
    %s278 = sor.u32 %s276, %s277
    %p279 = scmp.eq.s32.totalorder %s278, 0
    %s281 = sadd.s32 %s280, 1
    %s282 = scalar_select %p279, %s280, %s281
    %p285 = pneg %p279
    %p286 = scmp.eq.s32.totalorder %s16, 3
    %p287 = por %p285, %p286
    %p288 = scmp.ne.s32.totalorder %s280, %s283
    %p289 = scmp.eq.s32.totalorder %s16, 0
    %p290 = por %p288, %p289
    %p291 = scmp.ne.s32.totalorder %s280, %s283
    %p292 = scmp.eq.s32.totalorder %s21, 3
    %p293 = por %p291, %p292
    %p294 = scmp.ne.s32.totalorder %s283, %s284
    %p295 = scmp.eq.s32.totalorder %s21, 0
    %p296 = por %p294, %p295
    %p297 = scmp.ne.s32.totalorder %s283, %s284
    %p298 = scmp.eq.s32.totalorder %s22, 3
    %p299 = por %p297, %p298
    %p301 = scmp.ne.s32.totalorder %s284, %s300
    %p302 = scmp.eq.s32.totalorder %s22, 0
    %p303 = por %p301, %p302
    %p304 = scmp.le.s32.totalorder 1, %s16
    %p305 = scmp.lt.s32.totalorder %s16, 5
    %p306 = pnand %p304, %p305
    %p307 = pneg %p306
    // Predicated region
    $region9: #{double_conv_forward.3} parent=5 // pred_check
      _
    $region10: #{double_conv_forward.3} parent=5 // pred_check_branch
      %309 = sbr.rel (%p306) target = $region12
    $region11: #{double_conv_forward.3} parent=5 // pred_region
      %s310 = ssub.s32 %s16, 1
      // Predicated region
      $region13: #{double_conv_forward.3} parent=11 // pred_check
        %p311 = pneg %p149
      $region14: #{double_conv_forward.3} parent=11 // pred_check_branch
        %313 = sbr.rel (%p311) target = $region16
      $region15: #{double_conv_forward.3} parent=11 // pred_region
        _
      $region16: #{double_conv_forward.3} parent=11 // pred_fallthru
        _
      // Predicated region
      $region17: #{double_conv_forward.3} parent=11 // pred_check
        %p314 = pneg %p170
      $region18: #{double_conv_forward.3} parent=11 // pred_check_branch
        %316 = sbr.rel (%p314) target = $region20
      $region19: #{double_conv_forward.3} parent=11 // pred_region
        _
      $region20: #{double_conv_forward.3} parent=11 // pred_fallthru
        _
      // Predicated region
      $region21: #{double_conv_forward.3} parent=11 // pred_check
        %p317 = pneg %p191
      $region22: #{double_conv_forward.3} parent=11 // pred_check_branch
        %319 = sbr.rel (%p317) target = $region24
      $region23: #{double_conv_forward.3} parent=11 // pred_region
        _
      $region24: #{double_conv_forward.3} parent=11 // pred_fallthru
        _
      // Predicated region
      $region25: #{double_conv_forward.3} parent=11 // pred_check
        %p320 = pneg %p212
      $region26: #{double_conv_forward.3} parent=11 // pred_check_branch
        %322 = sbr.rel (%p320) target = $region28
      $region27: #{double_conv_forward.3} parent=11 // pred_region
        _
      $region28: #{double_conv_forward.3} parent=11 // pred_fallthru
        _
    $region12: #{double_conv_forward.3} parent=5 // pred_fallthru
      _
    %p323 = scmp.lt.s32.totalorder %s16, 4
    // Predicated region
    $region29: #{double_conv_forward.3} parent=5 // pred_check
      %p324 = pneg %p323
    $region30: #{double_conv_forward.3} parent=5 // pred_check_branch
      %326 = sbr.rel (%p324) target = $region32
    $region31: #{double_conv_forward.3} parent=5 // pred_region
      // Predicated region
      $region33: #{double_conv_forward.3} parent=31 // pred_check
        %p327 = pneg %p50
      $region34: #{double_conv_forward.3} parent=31 // pred_check_branch
        %329 = sbr.rel (%p327) target = $region36
      $region35: #{double_conv_forward.3} parent=31 // pred_region
        %s330 = smul.u32 8, %s24
        %p331 = scmp.lt.s32.totalorder %s23, 1
        %s332 = scalar_select %p331, %s23, 1
        %p333 = scmp.lt.s32.totalorder %s330, 15
        %s334 = scalar_select %p333, %s330, 15
        %s335 = smul.addr %s334, 2
        %s336 = smul.addr %s332, 32
        %s337 = sadd.s32 %s335, %s336
        %s338 = smul.addr %s337, 4
        %s339 = scalar_lea.vmem %s0, %s338
        %s340 = smul.u32 8, %s24
      $region36: #{double_conv_forward.3} parent=31 // pred_fallthru
        _
      // Predicated region
      $region37: #{double_conv_forward.3} parent=31 // pred_check
        %p341 = pneg %p86
      $region38: #{double_conv_forward.3} parent=31 // pred_check_branch
        %343 = sbr.rel (%p341) target = $region40
      $region39: #{double_conv_forward.3} parent=31 // pred_region
        %s344 = smul.u32 %s24, 8
        %s345 = ssub.s32 %s344, 1
        %p346 = scmp.gt.s32.totalorder %s345, 0
        %s347 = scalar_select %p346, %s345, 0
        %p348 = scmp.lt.s32.totalorder %s23, 1
        %s349 = scalar_select %p348, %s23, 1
        %p350 = scmp.lt.s32.totalorder %s347, 15
        %s351 = scalar_select %p350, %s347, 15
        %s352 = smul.addr %s351, 2
        %s353 = smul.addr %s349, 32
        %s354 = sadd.s32 %s352, %s353
        %s355 = smul.addr %s354, 4
        %s356 = scalar_lea.vmem %s1, %s355
        %s357 = smul.u32 %s24, 8
        %s358 = ssub.s32 %s357, 1
        %p359 = scmp.gt.s32.totalorder %s358, 0
        %s360 = scalar_select %p359, %s358, 0
      $region40: #{double_conv_forward.3} parent=31 // pred_fallthru
        _
      // Predicated region
      $region41: #{double_conv_forward.3} parent=31 // pred_check
        %p361 = pneg %p122
      $region42: #{double_conv_forward.3} parent=31 // pred_check_branch
        %363 = sbr.rel (%p361) target = $region44
      $region43: #{double_conv_forward.3} parent=31 // pred_region
        %s364 = sadd.s32 %s24, 1
        %s365 = smul.u32 %s364, 8
        %p366 = scmp.lt.s32.totalorder %s365, 15
        %s367 = scalar_select %p366, %s365, 15
        %p368 = scmp.lt.s32.totalorder %s23, 1
        %s369 = scalar_select %p368, %s23, 1
        %p370 = scmp.lt.s32.totalorder %s367, 15
        %s371 = scalar_select %p370, %s367, 15
        %s372 = smul.addr %s371, 2
        %s373 = smul.addr %s369, 32
        %s374 = sadd.s32 %s372, %s373
        %s375 = smul.addr %s374, 4
        %s376 = scalar_lea.vmem %s2, %s375
        %s377 = sadd.s32 %s24, 1
        %s378 = smul.u32 %s377, 8
        %p379 = scmp.lt.s32.totalorder %s378, 15
        %s380 = scalar_select %p379, %s378, 15
      $region44: #{double_conv_forward.3} parent=31 // pred_fallthru
        _
    $region32: #{double_conv_forward.3} parent=5 // pred_fallthru
      _
    %p381 = scmp.le.s32.totalorder 1, %s16
    %p382 = scmp.lt.s32.totalorder %s16, 5
    %p383 = pnand %p381, %p382
    %p384 = pneg %p383
    // Predicated region
    $region45: #{double_conv_forward.3} parent=5 // pred_check
      _
    $region46: #{double_conv_forward.3} parent=5 // pred_check_branch
      %386 = sbr.rel (%p383) target = $region48
    $region47: #{double_conv_forward.3} parent=5 // pred_region
      %s387 = ssub.s32 %s16, 1
      %s388 = smul.u32 8, %s26
      %p389 = scmp.lt.s32.totalorder %s25, 1
      %s390 = scalar_select %p389, %s25, 1
      %p391 = scmp.lt.s32.totalorder %s388, 15
      %s392 = scalar_select %p391, %s388, 15
      %s393 = smul.addr %s392, 2
      %s394 = smul.addr %s390, 32
      %s395 = sadd.s32 %s393, %s394
      %s396 = smul.addr %s395, 4
      %s397 = scalar_lea.vmem %s0, %s396
      %p398 = pneg %p56
      %p399 = pneg %p53
      %s400 = smul.u32 %s26, 8
      %s401 = ssub.s32 %s400, 1
      %p402 = scmp.gt.s32.totalorder %s401, 0
      %s403 = scalar_select %p402, %s401, 0
      %p404 = scmp.lt.s32.totalorder %s25, 1
      %s405 = scalar_select %p404, %s25, 1
      %p406 = scmp.lt.s32.totalorder %s403, 15
      %s407 = scalar_select %p406, %s403, 15
      %s408 = smul.addr %s407, 2
      %s409 = smul.addr %s405, 32
      %s410 = sadd.s32 %s408, %s409
      %s411 = smul.addr %s410, 4
      %s412 = scalar_lea.vmem %s1, %s411
      %p413 = pneg %p92
      %p414 = pneg %p89
      %s415 = sadd.s32 %s26, 1
      %s416 = smul.u32 %s415, 8
      %p417 = scmp.lt.s32.totalorder %s416, 15
      %s418 = scalar_select %p417, %s416, 15
      %p419 = scmp.lt.s32.totalorder %s25, 1
      %s420 = scalar_select %p419, %s25, 1
      %p421 = scmp.lt.s32.totalorder %s418, 15
      %s422 = scalar_select %p421, %s418, 15
      %s423 = smul.addr %s422, 2
      %s424 = smul.addr %s420, 32
      %s425 = sadd.s32 %s423, %s424
      %s426 = smul.addr %s425, 4
      %s427 = scalar_lea.vmem %s2, %s426
      %p428 = pneg %p128
      %p429 = pneg %p125
      %p430 = pneg %p149
      %p431 = pneg %p146
      %p432 = pneg %p170
      %p433 = pneg %p167
      %p434 = pneg %p191
      %p435 = pneg %p188
      %p436 = pneg %p212
      %p437 = pneg %p209
      %p438 = pneg %p240
      %p439 = pneg %p237
      %s440 = smul.u32 8, %s26
      %p441 = scmp.lt.s32.totalorder %s25, 1
      %s442 = scalar_select %p441, %s25, 1
      %p443 = scmp.lt.s32.totalorder %s440, 15
      %s444 = scalar_select %p443, %s440, 15
      %s445 = smul.addr %s444, 2
      %s446 = smul.addr %s442, 32
      %s447 = sadd.s32 %s445, %s446
      %s448 = smul.addr %s447, 4
      %s449 = scalar_lea.vmem %s7, %s448
      %p450 = pneg %p268
      %p451 = pneg %p265
      %p452 = scmp.lt.s32.totalorder %s25, 1
      %s453 = scalar_select %p452, %s25, 1
      %p454 = scmp.lt.s32.totalorder %s26, 1
      %s455 = scalar_select %p454, %s26, 1
      %s456 = smul.addr %s453, 2
      %s457 = sadd.s32 %s455, %s456
      %s458 = scalar_lea.vmem %s8, %s457
      %p459 = pneg %p296
      %p460 = pneg %p293
      %p461 = scmp.lt.s32.totalorder %s25, 1
      %s462 = scalar_select %p461, %s25, 1
      %p463 = scmp.lt.s32.totalorder %s26, 1
      %s464 = scalar_select %p463, %s26, 1
      %s465 = smul.addr %s462, 2
      %s466 = sadd.s32 %s464, %s465
      %s467 = scalar_lea.vmem %s9, %s466
      %s468 = smul.u32 8, %s26
      %p469 = scmp.lt.s32.totalorder %s25, 1
      %s470 = scalar_select %p469, %s25, 1
      %p471 = scmp.lt.s32.totalorder %s468, 15
      %s472 = scalar_select %p471, %s468, 15
      %s473 = smul.addr %s472, 2
      %s474 = smul.addr %s470, 32
      %s475 = sadd.s32 %s473, %s474
      %s476 = smul.addr %s475, 4
      %s477 = scalar_lea.vmem %s0, %s476
      %s478 = smul.u32 8, %s26
      %s479 = smul.u32 %s26, 8
      %s480 = ssub.s32 %s479, 1
      %p481 = scmp.gt.s32.totalorder %s480, 0
      %s482 = scalar_select %p481, %s480, 0
      %p483 = scmp.lt.s32.totalorder %s25, 1
      %s484 = scalar_select %p483, %s25, 1
      %p485 = scmp.lt.s32.totalorder %s482, 15
      %s486 = scalar_select %p485, %s482, 15
      %s487 = smul.addr %s486, 2
      %s488 = smul.addr %s484, 32
      %s489 = sadd.s32 %s487, %s488
      %s490 = smul.addr %s489, 4
      %s491 = scalar_lea.vmem %s1, %s490
      %s492 = smul.u32 %s26, 8
      %s493 = ssub.s32 %s492, 1
      %p494 = scmp.gt.s32.totalorder %s493, 0
      %s495 = scalar_select %p494, %s493, 0
      %s496 = sadd.s32 %s26, 1
      %s497 = smul.u32 %s496, 8
      %p498 = scmp.lt.s32.totalorder %s497, 15
      %s499 = scalar_select %p498, %s497, 15
      %p500 = scmp.lt.s32.totalorder %s25, 1
      %s501 = scalar_select %p500, %s25, 1
      %p502 = scmp.lt.s32.totalorder %s499, 15
      %s503 = scalar_select %p502, %s499, 15
      %s504 = smul.addr %s503, 2
      %s505 = smul.addr %s501, 32
      %s506 = sadd.s32 %s504, %s505
      %s507 = smul.addr %s506, 4
      %s508 = scalar_lea.vmem %s2, %s507
      %s509 = sadd.s32 %s26, 1
      %s510 = smul.u32 %s509, 8
      %p511 = scmp.lt.s32.totalorder %s510, 15
      %s512 = scalar_select %p511, %s510, 15
      %s513 = smul.u32 8, %s26
      %p514 = scmp.lt.s32.totalorder %s25, 1
      %s515 = scalar_select %p514, %s25, 1
      %p516 = scmp.lt.s32.totalorder %s513, 15
      %s517 = scalar_select %p516, %s513, 15
      %s518 = smul.addr %s517, 2
      %s519 = smul.addr %s515, 32
      %s520 = sadd.s32 %s518, %s519
      %s521 = smul.addr %s520, 4
      %s522 = scalar_lea.vmem %s7, %s521
      %s523 = smul.u32 8, %s26
      %p524 = scmp.lt.s32.totalorder %s25, 1
      %s525 = scalar_select %p524, %s25, 1
      %p526 = scmp.lt.s32.totalorder %s26, 1
      %s527 = scalar_select %p526, %s26, 1
      %s528 = smul.addr %s525, 2
      %s529 = sadd.s32 %s527, %s528
      %s530 = scalar_lea.vmem %s8, %s529
      %p531 = scmp.lt.s32.totalorder %s25, 1
      %s532 = scalar_select %p531, %s25, 1
      %p533 = scmp.lt.s32.totalorder %s26, 1
      %s534 = scalar_select %p533, %s26, 1
      %s535 = smul.addr %s532, 2
      %s536 = sadd.s32 %s534, %s535
      %s537 = scalar_lea.vmem %s9, %s536
      %v539 = vld [vmem:[%s3] sm:$0x1]
      %v540 = vld [vmem:[%s4] sm:$0x1]
      %v541 = vld [vmem:[%s477] sm:$0xf]
      %v542 = vld [vmem:[%s477 + $0x4] sm:$0xf]
      %v543 = vld [vmem:[%s477 + $0x8] sm:$0xf]
      %v544 = vld [vmem:[%s477 + $0xc] sm:$0xf]
      %v545 = vld [vmem:[%s477 + $0x10] sm:$0xf]
      %v546 = vld [vmem:[%s477 + $0x14] sm:$0xf]
      %v547 = vld [vmem:[%s477 + $0x18] sm:$0xf]
      %v548 = vld [vmem:[%s477 + $0x1c] sm:$0xf]
      %v549 = vld [vmem:[%s477 + $0x20] sm:$0xf]
      %v550 = vld [vmem:[%s477 + $0x24] sm:$0xf]
      %v551 = vld [vmem:[%s477 + $0x28] sm:$0xf]
      %v552 = vld [vmem:[%s477 + $0x2c] sm:$0xf]
      %v553 = vld [vmem:[%s477 + $0x30] sm:$0xf]
      %v554 = vld [vmem:[%s477 + $0x34] sm:$0xf]
      %v555 = vld [vmem:[%s477 + $0x38] sm:$0xf]
      %v556 = vld [vmem:[%s477 + $0x3c] sm:$0xf]
      %v557 = vunpack.c.l.bf16 %v541
      %v558 = vunpack.c.l.bf16 %v542
      %v559 = vunpack.c.l.bf16 %v543
      %v560 = vunpack.c.l.bf16 %v544
      %v561 = vunpack.c.l.bf16 %v545
      %v562 = vunpack.c.l.bf16 %v546
      %v563 = vunpack.c.l.bf16 %v547
      %v564 = vunpack.c.l.bf16 %v548
      %v565 = vunpack.c.l.bf16 %v549
      %v566 = vunpack.c.l.bf16 %v550
      %v567 = vunpack.c.l.bf16 %v551
      %v568 = vunpack.c.l.bf16 %v552
      %v569 = vunpack.c.l.bf16 %v553
      %v570 = vunpack.c.l.bf16 %v554
      %v571 = vunpack.c.l.bf16 %v555
      %v572 = vunpack.c.l.bf16 %v556
      %v574 = vlaneseq
      %v575 = vshrl.u32 %v574, 7
      %v576 = vsub.s32 0, %v575
      %v577 = vrot.slane %v539, %v576
      %v579 = vmul.f32 %v557, %v577
      %v580 = vmul.f32 %v558, %v577
      %v581 = vmul.f32 %v559, %v577
      %v582 = vmul.f32 %v560, %v577
      %v583 = vmul.f32 %v561, %v577
      %v584 = vmul.f32 %v562, %v577
      %v585 = vmul.f32 %v563, %v577
      %v586 = vmul.f32 %v564, %v577
      %v587 = vmul.f32 %v565, %v577
      %v588 = vmul.f32 %v566, %v577
      %v589 = vmul.f32 %v567, %v577
      %v590 = vmul.f32 %v568, %v577
      %v591 = vmul.f32 %v569, %v577
      %v592 = vmul.f32 %v570, %v577
      %v593 = vmul.f32 %v571, %v577
      %v594 = vmul.f32 %v572, %v577
      %v596 = vlaneseq
      %v597 = vshrl.u32 %v596, 7
      %v598 = vsub.s32 0, %v597
      %v599 = vrot.slane %v540, %v598
      %v601 = vadd.f32 %v579, %v599
      %v602 = vadd.f32 %v580, %v599
      %v603 = vadd.f32 %v581, %v599
      %v604 = vadd.f32 %v582, %v599
      %v605 = vadd.f32 %v583, %v599
      %v606 = vadd.f32 %v584, %v599
      %v607 = vadd.f32 %v585, %v599
      %v608 = vadd.f32 %v586, %v599
      %v609 = vadd.f32 %v587, %v599
      %v610 = vadd.f32 %v588, %v599
      %v611 = vadd.f32 %v589, %v599
      %v612 = vadd.f32 %v590, %v599
      %v613 = vadd.f32 %v591, %v599
      %v614 = vadd.f32 %v592, %v599
      %v615 = vadd.f32 %v593, %v599
      %v616 = vadd.f32 %v594, %v599
      %v617 = vpack.c.bf16 %v602, %v601
      %v618 = vpack.c.bf16 %v604, %v603
      %v619 = vpack.c.bf16 %v606, %v605
      %v620 = vpack.c.bf16 %v608, %v607
      %v621 = vpack.c.bf16 %v610, %v609
      %v622 = vpack.c.bf16 %v612, %v611
      %v623 = vpack.c.bf16 %v614, %v613
      %v624 = vpack.c.bf16 %v616, %v615
      %v625 = vld [vmem:[%s491] sm:$0xf]
      %v626 = vld [vmem:[%s491 + $0x4] sm:$0xf]
      %v627 = vunpack.c.l.bf16 %v625
      %v628 = vunpack.c.l.bf16 %v626
      %v629 = vmul.f32 %v627, %v577
      %v630 = vmul.f32 %v628, %v577
      %v631 = vadd.f32 %v629, %v599
      %v632 = vadd.f32 %v630, %v599
      %v633 = vpack.c.bf16 %v632, %v631
      %v634 = vld [vmem:[%s508] sm:$0xf]
      %v635 = vld [vmem:[%s508 + $0x4] sm:$0xf]
      %v636 = vunpack.c.l.bf16 %v634
      %v637 = vunpack.c.l.bf16 %v635
      %v638 = vmul.f32 %v636, %v577
      %v639 = vmul.f32 %v637, %v577
      %v640 = vadd.f32 %v638, %v599
      %v641 = vadd.f32 %v639, %v599
      %v642 = vpack.c.bf16 %v641, %v640
      %p643 = scmp.eq.s32.totalorder %s26, 0
      %s644 = scalar_select %p643, 1, 0
      %v645 = vstv %s644
      %vm646 = vcmp.eq.s32.totalorder %v645, 1
      %v647 = vsel %vm646, 0, %v633
      %p648 = scmp.eq.s32.totalorder %s26, 1
      %s649 = scalar_select %p648, 1, 0
      %v650 = vstv %s649
      %vm651 = vcmp.eq.s32.totalorder %v650, 1
      %v652 = vsel %vm651, 0, %v642
      %vm653 = vcmask 24576
      %vm654 = vsmask.f32 256
      %vm655 = vmand %vm653, %vm654
      %v656 = vld [vmem:[#allocation2] sm:$0x1]
      %v657 = vsel %vm655, 0, %v656
      %658 = vst [vmem:[#allocation2] sm:$0x1] %v657
      %v660 = vunpack.c.l.b16 %v647
      %v661 = vunpack.c.h.b16 %v647
      %v662 = vpack.c.b16 %v660, %v660
      %v663 = vpack.c.b16 %v661, %v661
      %vm664 = vsmask.f32 4368
      %vm665 = vmor %vm654, %vm664
      %v667 = vshrl.u32 %v662, 16
      %v669 = vrot.slane %v667, 7
      %v670 = vshll.u32 %v662, 16
      %v672 = vor.u32 %v669, %v670
      %v673 = vrot.slane %v669, 4
      %v675 = vshrl.u32 %v663, 16
      %v677 = vrot.slane %v675, 7
      %v678 = vshll.u32 %v663, 16
      %v680 = vor.u32 %v677, %v678
      %v681 = vsel %vm665, %v673, %v680
      %v682 = vrot.slane %v677, 4
      %vm686 = vcmask 27648
      %vm687 = vsmask.f32 7938
      %vm688 = vmand %vm686, %vm687
      %v689 = vld [vmem:[#allocation2] sm:$0xf]
      %v690 = vsel %vm688, %v672, %v689
      %691 = vst [vmem:[#allocation2] sm:$0xf] %v690
      %vm692 = vcmask 27648
      %693 = vst.msk [vmem:[#allocation2 + $0x4] sm:$0xf] %vm692, %v681
      %v694 = vld [vmem:[#allocation2 + $0x8] sm:$0x1]
      %v695 = vsel %vm655, %v682, %v694
      %696 = vst [vmem:[#allocation2 + $0x8] sm:$0x1] %v695
      %vm697 = vcmask 25600
      %vm698 = vsmask.f32 1282
      %vm699 = vmand %vm697, %vm698
      %v700 = vld [vmem:[#allocation2 + $0x8] sm:$0x3]
      %v701 = vsel %vm699, 0, %v700
      %702 = vst [vmem:[#allocation2 + $0x8] sm:$0x3] %v701
      %v704 = vunpack.c.l.b16 %v617
      %v705 = vunpack.c.h.b16 %v617
      %v706 = vpack.c.b16 %v704, %v704
      %v707 = vpack.c.b16 %v705, %v705
      %vm708 = vsmask.f32 1280
      %vm709 = vsmask.f32 5392
      %vm710 = vmor %vm708, %vm709
      %v712 = vshrl.u32 %v706, 16
      %v714 = vrot.slane %v712, 6
      %v715 = vshll.u32 %v706, 16
      %v717 = vrot.slane %v715, 7
      %v718 = vor.u32 %v714, %v717
      %v719 = vrot.slane %v718, 4
      %v721 = vshrl.u32 %v707, 16
      %v723 = vrot.slane %v721, 6
      %v724 = vshll.u32 %v707, 16
      %v726 = vrot.slane %v724, 7
      %v727 = vor.u32 %v723, %v726
      %v728 = vsel %vm710, %v719, %v727
      %v729 = vrot.slane %v727, 4
      %vm733 = vcmask 27649
      %vm734 = vsmask.f32 7942
      %vm735 = vmand %vm733, %vm734
      %v736 = vld [vmem:[#allocation2 + $0x8] sm:$0xe]
      %v737 = vsel %vm735, %v718, %v736
      %738 = vst [vmem:[#allocation2 + $0x8] sm:$0xe] %v737
      %739 = vst.msk [vmem:[#allocation2 + $0xc] sm:$0xf] %vm692, %v728
      %vm740 = vmand %vm697, %vm708
      %v741 = vld [vmem:[#allocation2 + $0x10] sm:$0x3]
      %v742 = vsel %vm740, %v729, %v741
      %743 = vst [vmem:[#allocation2 + $0x10] sm:$0x3] %v742
      %vm744 = vcmask 26625
      %vm745 = vsmask.f32 2310
      %vm746 = vmand %vm744, %vm745
      %v747 = vld [vmem:[#allocation2 + $0x10] sm:$0x6]
      %v748 = vsel %vm746, 0, %v747
      %749 = vst [vmem:[#allocation2 + $0x10] sm:$0x6] %v748
      %v751 = vunpack.c.l.b16 %v618
      %v752 = vunpack.c.h.b16 %v618
      %v753 = vpack.c.b16 %v751, %v751
      %v754 = vpack.c.b16 %v752, %v752
      %vm755 = vsmask.f32 2304
      %vm756 = vsmask.f32 6416
      %vm757 = vmor %vm755, %vm756
      %v759 = vshrl.u32 %v753, 16
      %v761 = vrot.slane %v759, 5
      %v762 = vshll.u32 %v753, 16
      %v764 = vrot.slane %v762, 6
      %v765 = vor.u32 %v761, %v764
      %v766 = vrot.slane %v765, 4
      %v768 = vshrl.u32 %v754, 16
      %v770 = vrot.slane %v768, 5
      %v771 = vshll.u32 %v754, 16
      %v773 = vrot.slane %v771, 6
      %v774 = vor.u32 %v770, %v773
      %v775 = vsel %vm757, %v766, %v774
      %v776 = vrot.slane %v774, 4
      %vm780 = vcmask 27650
      %vm781 = vsmask.f32 7946
      %vm782 = vmand %vm780, %vm781
      %v783 = vld [vmem:[#allocation2 + $0x10] sm:$0xc]
      %v784 = vsel %vm782, %v765, %v783
      %785 = vst [vmem:[#allocation2 + $0x10] sm:$0xc] %v784
      %786 = vst.msk [vmem:[#allocation2 + $0x14] sm:$0xf] %vm692, %v775
      %vm787 = vcmask 26624
      %vm788 = vmand %vm787, %vm755
      %v789 = vld [vmem:[#allocation2 + $0x18] sm:$0x7]
      %v790 = vsel %vm788, %v776, %v789
      %791 = vst [vmem:[#allocation2 + $0x18] sm:$0x7] %v790
      %vm792 = vsmask.f32 3338
      %vm793 = vmand %vm780, %vm792
      %v794 = vld [vmem:[#allocation2 + $0x18] sm:$0xc]
      %v795 = vsel %vm793, 0, %v794
      %796 = vst [vmem:[#allocation2 + $0x18] sm:$0xc] %v795
      %v798 = vunpack.c.l.b16 %v619
      %v799 = vunpack.c.h.b16 %v619
      %v800 = vpack.c.b16 %v798, %v798
      %v801 = vpack.c.b16 %v799, %v799
      %vm802 = vsmask.f32 3328
      %vm803 = vsmask.f32 7440
      %vm804 = vmor %vm802, %vm803
      %v806 = vshll.u32 %v800, 16
      %v808 = vrot.slane %v806, 5
      %v809 = vshrl.u32 %v800, 16
      %v811 = vrot.slane %v809, 4
      %v812 = vor.u32 %v811, %v808
      %v813 = vrot.slane %v812, 4
      %v815 = vshll.u32 %v801, 16
      %v817 = vrot.slane %v815, 5
      %v818 = vsel %vm804, %v813, %v817
      %v819 = vshrl.u32 %v801, 16
      %v821 = vrot.slane %v819, 4
      %v822 = vor.u32 %v821, %v817
      %v823 = vrot.slane %v822, 4
      %vm827 = vcmask 27651
      %vm828 = vsmask.f32 7950
      %vm829 = vmand %vm827, %vm828
      %v830 = vld [vmem:[#allocation2 + $0x18] sm:$0x8]
      %v831 = vsel %vm829, %v808, %v830
      %832 = vst [vmem:[#allocation2 + $0x18] sm:$0x8] %v831
      %833 = vst.msk [vmem:[#allocation2 + $0x1c] sm:$0xf] %vm692, %v818
      %vm834 = vmand %vm686, %vm802
      %v835 = vld [vmem:[#allocation2 + $0x20] sm:$0xf]
      %v836 = vsel %vm834, %v823, %v835
      %837 = vst [vmem:[#allocation2 + $0x20] sm:$0xf] %v836
      %v838 = vld [vmem:[#allocation2 + $0x20] sm:$0x8]
      %v839 = vsel %vm829, 0, %v838
      %840 = vst [vmem:[#allocation2 + $0x20] sm:$0x8] %v839
      %v841 = vld [vmem:[#allocation2 + $0x24] sm:$0x1]
      %v842 = vsel %vm655, 0, %v841
      %843 = vst [vmem:[#allocation2 + $0x24] sm:$0x1] %v842
      %v845 = vunpack.c.l.b16 %v620
      %v846 = vunpack.c.h.b16 %v620
      %v847 = vpack.c.b16 %v845, %v845
      %v848 = vpack.c.b16 %v846, %v846
      %v850 = vshrl.u32 %v847, 16
      %v852 = vrot.slane %v850, 7
      %v853 = vshll.u32 %v847, 16
      %v855 = vor.u32 %v852, %v853
      %v856 = vrot.slane %v852, 4
      %v858 = vshrl.u32 %v848, 16
      %v860 = vrot.slane %v858, 7
      %v861 = vshll.u32 %v848, 16
      %v863 = vor.u32 %v860, %v861
      %v864 = vsel %vm665, %v856, %v863
      %v865 = vrot.slane %v860, 4
      %v869 = vld [vmem:[#allocation2 + $0x24] sm:$0xf]
      %v870 = vsel %vm688, %v855, %v869
      %871 = vst [vmem:[#allocation2 + $0x24] sm:$0xf] %v870
      %872 = vst.msk [vmem:[#allocation2 + $0x28] sm:$0xf] %vm692, %v864
      %v873 = vld [vmem:[#allocation2 + $0x2c] sm:$0x1]
      %v874 = vsel %vm655, %v865, %v873
      %875 = vst [vmem:[#allocation2 + $0x2c] sm:$0x1] %v874
      %v876 = vld [vmem:[#allocation2 + $0x2c] sm:$0x3]
      %v877 = vsel %vm699, 0, %v876
      %878 = vst [vmem:[#allocation2 + $0x2c] sm:$0x3] %v877
      %v880 = vunpack.c.l.b16 %v621
      %v881 = vunpack.c.h.b16 %v621
      %v882 = vpack.c.b16 %v880, %v880
      %v883 = vpack.c.b16 %v881, %v881
      %v885 = vshrl.u32 %v882, 16
      %v887 = vrot.slane %v885, 6
      %v888 = vshll.u32 %v882, 16
      %v890 = vrot.slane %v888, 7
      %v891 = vor.u32 %v887, %v890
      %v892 = vrot.slane %v891, 4
      %v894 = vshrl.u32 %v883, 16
      %v896 = vrot.slane %v894, 6
      %v897 = vshll.u32 %v883, 16
      %v899 = vrot.slane %v897, 7
      %v900 = vor.u32 %v896, %v899
      %v901 = vsel %vm710, %v892, %v900
      %v902 = vrot.slane %v900, 4
      %v906 = vld [vmem:[#allocation2 + $0x2c] sm:$0xe]
      %v907 = vsel %vm735, %v891, %v906
      %908 = vst [vmem:[#allocation2 + $0x2c] sm:$0xe] %v907
      %909 = vst.msk [vmem:[#allocation2 + $0x30] sm:$0xf] %vm692, %v901
      %v910 = vld [vmem:[#allocation2 + $0x34] sm:$0x3]
      %v911 = vsel %vm740, %v902, %v910
      %912 = vst [vmem:[#allocation2 + $0x34] sm:$0x3] %v911
      %v913 = vld [vmem:[#allocation2 + $0x34] sm:$0x6]
      %v914 = vsel %vm746, 0, %v913
      %915 = vst [vmem:[#allocation2 + $0x34] sm:$0x6] %v914
      %v917 = vunpack.c.l.b16 %v622
      %v918 = vunpack.c.h.b16 %v622
      %v919 = vpack.c.b16 %v917, %v917
      %v920 = vpack.c.b16 %v918, %v918
      %v922 = vshrl.u32 %v919, 16
      %v924 = vrot.slane %v922, 5
      %v925 = vshll.u32 %v919, 16
      %v927 = vrot.slane %v925, 6
      %v928 = vor.u32 %v924, %v927
      %v929 = vrot.slane %v928, 4
      %v931 = vshrl.u32 %v920, 16
      %v933 = vrot.slane %v931, 5
      %v934 = vshll.u32 %v920, 16
      %v936 = vrot.slane %v934, 6
      %v937 = vor.u32 %v933, %v936
      %v938 = vsel %vm757, %v929, %v937
      %v939 = vrot.slane %v937, 4
      %v943 = vld [vmem:[#allocation2 + $0x34] sm:$0xc]
      %v944 = vsel %vm782, %v928, %v943
      %945 = vst [vmem:[#allocation2 + $0x34] sm:$0xc] %v944
      %946 = vst.msk [vmem:[#allocation2 + $0x38] sm:$0xf] %vm692, %v938
      %v947 = vld [vmem:[#allocation2 + $0x3c] sm:$0x7]
      %v948 = vsel %vm788, %v939, %v947
      %949 = vst [vmem:[#allocation2 + $0x3c] sm:$0x7] %v948
      %v950 = vld [vmem:[#allocation2 + $0x3c] sm:$0xc]
      %v951 = vsel %vm793, 0, %v950
      %952 = vst [vmem:[#allocation2 + $0x3c] sm:$0xc] %v951
      %v954 = vunpack.c.l.b16 %v623
      %v955 = vunpack.c.h.b16 %v623
      %v956 = vpack.c.b16 %v954, %v954
      %v957 = vpack.c.b16 %v955, %v955
      %v959 = vshll.u32 %v956, 16
      %v961 = vrot.slane %v959, 5
      %v962 = vshrl.u32 %v956, 16
      %v964 = vrot.slane %v962, 4
      %v965 = vor.u32 %v964, %v961
      %v966 = vrot.slane %v965, 4
      %v968 = vshll.u32 %v957, 16
      %v970 = vrot.slane %v968, 5
      %v971 = vsel %vm804, %v966, %v970
      %v972 = vshrl.u32 %v957, 16
      %v974 = vrot.slane %v972, 4
      %v975 = vor.u32 %v974, %v970
      %v976 = vrot.slane %v975, 4
      %v980 = vld [vmem:[#allocation2 + $0x3c] sm:$0x8]
      %v981 = vsel %vm829, %v961, %v980
      %982 = vst [vmem:[#allocation2 + $0x3c] sm:$0x8] %v981
      %983 = vst.msk [vmem:[#allocation2 + $0x40] sm:$0xf] %vm692, %v971
      %v984 = vld [vmem:[#allocation2 + $0x44] sm:$0xf]
      %v985 = vsel %vm834, %v976, %v984
      %986 = vst [vmem:[#allocation2 + $0x44] sm:$0xf] %v985
      %v987 = vld [vmem:[#allocation2 + $0x44] sm:$0x8]
      %v988 = vsel %vm829, 0, %v987
      %989 = vst [vmem:[#allocation2 + $0x44] sm:$0x8] %v988
      %v990 = vld [vmem:[#allocation2 + $0x48] sm:$0x1]
      %v991 = vsel %vm655, 0, %v990
      %992 = vst [vmem:[#allocation2 + $0x48] sm:$0x1] %v991
      %v994 = vunpack.c.l.b16 %v624
      %v995 = vunpack.c.h.b16 %v624
      %v996 = vpack.c.b16 %v994, %v994
      %v997 = vpack.c.b16 %v995, %v995
      %v999 = vshrl.u32 %v996, 16
      %v1001 = vrot.slane %v999, 7
      %v1002 = vshll.u32 %v996, 16
      %v1004 = vor.u32 %v1001, %v1002
      %v1005 = vrot.slane %v1001, 4
      %v1007 = vshrl.u32 %v997, 16
      %v1009 = vrot.slane %v1007, 7
      %v1010 = vshll.u32 %v997, 16
      %v1012 = vor.u32 %v1009, %v1010
      %v1013 = vsel %vm665, %v1005, %v1012
      %v1014 = vrot.slane %v1009, 4
      %v1018 = vld [vmem:[#allocation2 + $0x48] sm:$0xf]
      %v1019 = vsel %vm688, %v1004, %v1018
      %1020 = vst [vmem:[#allocation2 + $0x48] sm:$0xf] %v1019
      %1021 = vst.msk [vmem:[#allocation2 + $0x4c] sm:$0xf] %vm692, %v1013
      %v1022 = vld [vmem:[#allocation2 + $0x50] sm:$0x1]
      %v1023 = vsel %vm655, %v1014, %v1022
      %1024 = vst [vmem:[#allocation2 + $0x50] sm:$0x1] %v1023
      %v1025 = vld [vmem:[#allocation2 + $0x50] sm:$0x3]
      %v1026 = vsel %vm699, 0, %v1025
      %1027 = vst [vmem:[#allocation2 + $0x50] sm:$0x3] %v1026
      %v1029 = vunpack.c.l.b16 %v652
      %v1030 = vunpack.c.h.b16 %v652
      %v1031 = vpack.c.b16 %v1029, %v1029
      %v1032 = vpack.c.b16 %v1030, %v1030
      %v1034 = vshrl.u32 %v1031, 16
      %v1036 = vrot.slane %v1034, 6
      %v1037 = vshll.u32 %v1031, 16
      %v1039 = vrot.slane %v1037, 7
      %v1040 = vor.u32 %v1036, %v1039
      %v1041 = vrot.slane %v1040, 4
      %v1043 = vshrl.u32 %v1032, 16
      %v1045 = vrot.slane %v1043, 6
      %v1046 = vshll.u32 %v1032, 16
      %v1048 = vrot.slane %v1046, 7
      %v1049 = vor.u32 %v1045, %v1048
      %v1050 = vsel %vm710, %v1041, %v1049
      %v1051 = vrot.slane %v1049, 4
      %v1055 = vld [vmem:[#allocation2 + $0x50] sm:$0xe]
      %v1056 = vsel %vm735, %v1040, %v1055
      %1057 = vst [vmem:[#allocation2 + $0x50] sm:$0xe] %v1056
      %1058 = vst.msk [vmem:[#allocation2 + $0x54] sm:$0xf] %vm692, %v1050
      %v1059 = vld [vmem:[#allocation2 + $0x58] sm:$0x3]
      %v1060 = vsel %vm740, %v1051, %v1059
      %1061 = vst [vmem:[#allocation2 + $0x58] sm:$0x3] %v1060
      %v1062 = vld [vmem:[#allocation2 + $0x58] sm:$0x6]
      %v1063 = vsel %vm746, 0, %v1062
      %1064 = vst [vmem:[#allocation2 + $0x58] sm:$0x6] %v1063
      %vm1065 = vcmask 26626
      %vm1066 = vmand %vm1065, %vm781
      %v1067 = vld [vmem:[#allocation2 + $0x58] sm:$0x4]
      %v1068 = vsel %vm1066, 0, %v1067
      %1069 = vst [vmem:[#allocation2 + $0x58] sm:$0x4] %v1068
      %v1070 = vld [vmem:[#allocation2] sm:$0xf]
      %v1071 = vld [vmem:[#allocation2 + $0x4] sm:$0xf]
      %v1072 = vld [vmem:[#allocation2 + $0x8] sm:$0xf]
      %v1073 = vld [vmem:[#allocation2 + $0xc] sm:$0xf]
      %v1074 = vld [vmem:[#allocation2 + $0x10] sm:$0xf]
      %v1075 = vld [vmem:[#allocation2 + $0x14] sm:$0xf]
      %v1076 = vld [vmem:[#allocation2 + $0x18] sm:$0xf]
      %v1077 = vld [vmem:[#allocation2 + $0x1c] sm:$0xf]
      %v1078 = vld [vmem:[#allocation2 + $0x20] sm:$0xf]
      %v1079 = vld [vmem:[#allocation2 + $0x24] sm:$0xf]
      %v1080 = vld [vmem:[#allocation2 + $0x28] sm:$0xf]
      %v1081 = vld [vmem:[#allocation2 + $0x2c] sm:$0xf]
      %v1082 = vld [vmem:[#allocation2 + $0x30] sm:$0xf]
      %v1083 = vld [vmem:[#allocation2 + $0x34] sm:$0xf]
      %v1084 = vld [vmem:[#allocation2 + $0x38] sm:$0xf]
      %v1085 = vld [vmem:[#allocation2 + $0x3c] sm:$0xf]
      %v1086 = vld [vmem:[#allocation2 + $0x40] sm:$0xf]
      %v1087 = vld [vmem:[#allocation2 + $0x44] sm:$0xf]
      %v1088 = vld [vmem:[%s5] sm:$0x3]
      %v1089 = vld [vmem:[#allocation2 + $0x48] sm:$0x1]
      %s1090 = scalar_lea.vmem %s5, 2
      %v1091 = vld [vmem:[%s1090] sm:$0x3]
      %v1111 = vunpack.c.l.b16 %v1070
      %v1112 = vunpack.c.l.b16 %v1071
      %v1113 = vunpack.c.l.b16 %v1072
      %v1114 = vunpack.c.l.b16 %v1073
      %v1115 = vunpack.c.l.b16 %v1074
      %v1116 = vunpack.c.l.b16 %v1075
      %v1117 = vunpack.c.l.b16 %v1076
      %v1118 = vunpack.c.l.b16 %v1077
      %v1119 = vunpack.c.l.b16 %v1078
      %v1120 = vunpack.c.l.b16 %v1079
      %v1121 = vunpack.c.l.b16 %v1080
      %v1122 = vunpack.c.l.b16 %v1081
      %v1123 = vunpack.c.l.b16 %v1082
      %v1124 = vunpack.c.l.b16 %v1083
      %v1125 = vunpack.c.l.b16 %v1084
      %v1126 = vunpack.c.l.b16 %v1085
      %v1127 = vunpack.c.l.b16 %v1086
      %v1128 = vunpack.c.l.b16 %v1087
      %v1129 = vunpack.c.l.b16 %v1089
      %v1130 = vpack.c.b16 %v1112, %v1111
      %v1131 = vpack.c.b16 %v1114, %v1113
      %v1132 = vpack.c.b16 %v1116, %v1115
      %v1133 = vpack.c.b16 %v1118, %v1117
      %v1134 = vpack.c.b16 %v1120, %v1119
      %v1135 = vpack.c.b16 %v1122, %v1121
      %v1136 = vpack.c.b16 %v1124, %v1123
      %v1137 = vpack.c.b16 %v1126, %v1125
      %v1138 = vpack.c.b16 %v1128, %v1127
      %v1139 = vpack.c.b16 %v1129, %v1129
      %vm1140 = vsmask.f32 7424
      %v1142 = vshrl.u32 %v1130, 16
      %v1144 = vshll.u32 %v1130, 16
      %v1146 = vrot.slane %v1144, 1
      %v1147 = vor.u32 %v1142, %v1146
      %v1149 = vshll.u32 %v1131, 16
      %v1151 = vrot.slane %v1149, 1
      %v1152 = vsel %vm1140, %v1147, %v1151
      %v1153 = vshrl.u32 %v1131, 16
      %v1155 = vor.u32 %v1153, %v1151
      %v1157 = vshll.u32 %v1132, 16
      %v1159 = vrot.slane %v1157, 1
      %v1160 = vsel %vm1140, %v1155, %v1159
      %v1161 = vshrl.u32 %v1132, 16
      %v1163 = vor.u32 %v1161, %v1159
      %v1165 = vshll.u32 %v1133, 16
      %v1167 = vrot.slane %v1165, 1
      %v1168 = vsel %vm1140, %v1163, %v1167
      %v1169 = vshrl.u32 %v1133, 16
      %v1171 = vor.u32 %v1169, %v1167
      %v1173 = vshll.u32 %v1134, 16
      %v1175 = vrot.slane %v1173, 1
      %v1176 = vsel %vm1140, %v1171, %v1175
      %v1177 = vshrl.u32 %v1134, 16
      %v1179 = vor.u32 %v1177, %v1175
      %v1181 = vshll.u32 %v1135, 16
      %v1183 = vrot.slane %v1181, 1
      %v1184 = vsel %vm1140, %v1179, %v1183
      %v1185 = vshrl.u32 %v1135, 16
      %v1187 = vor.u32 %v1185, %v1183
      %v1189 = vshll.u32 %v1136, 16
      %v1191 = vrot.slane %v1189, 1
      %v1192 = vsel %vm1140, %v1187, %v1191
      %v1193 = vshrl.u32 %v1136, 16
      %v1195 = vor.u32 %v1193, %v1191
      %v1197 = vshll.u32 %v1137, 16
      %v1199 = vrot.slane %v1197, 1
      %v1200 = vsel %vm1140, %v1195, %v1199
      %v1201 = vshrl.u32 %v1137, 16
      %v1203 = vor.u32 %v1201, %v1199
      %v1205 = vshll.u32 %v1138, 16
      %v1207 = vrot.slane %v1205, 1
      %v1208 = vsel %vm1140, %v1203, %v1207
      %v1209 = vshrl.u32 %v1138, 16
      %v1211 = vor.u32 %v1209, %v1207
      %v1213 = vshll.u32 %v1139, 16
      %v1215 = vrot.slane %v1213, 1
      %v1216 = vsel %vm1140, %v1211, %v1215
      %vm1217 = vcmask 31744
      %v1219 = vsel %vm1217, %v1152, 0
      %v1222 = vsel %vm1217, %v1160, 0
      %v1225 = vsel %vm1217, %v1168, 0
      %v1228 = vsel %vm1217, %v1176, 0
      %v1231 = vsel %vm1217, %v1184, 0
      %v1234 = vsel %vm1217, %v1192, 0
      %v1237 = vsel %vm1217, %v1200, 0
      %v1240 = vsel %vm1217, %v1208, 0
      %v1243 = vsel %vm1217, %v1216, 0
      %vm1245 = vcmask 1041408
      %v1247 = vsel %vm1245, %v1091, 0
      %1249 = vmatprep.subr.bf16.mxu0 0
      %1250 = vmatpush1.bf16.msra.mxu0 %v1247
      %1251 = vmatprep.subr.bf16.mxu0 0
      %1252 = vmatpush1.bf16.msra.mxu0 0
      %1253 = vmatprep.subr.bf16.mxu0 0
      %1254 = vmatpush1.bf16.msra.mxu0 0
      %1255 = vmatprep.subr.bf16.mxu0 0
      %1256 = vmatpush1.bf16.msra.mxu0 0
      %1257 = vmatprep.subr.bf16.mxu0 0
      %1258 = vmatpush1.bf16.msra.mxu0 0
      %1259 = vmatprep.subr.bf16.mxu0 0
      %1260 = vmatpush1.bf16.msra.mxu0 0
      %1261 = vmatprep.subr.bf16.mxu0 0
      %1262 = vmatpush1.bf16.msra.mxu0 0
      %1263 = vmatprep.subr.bf16.mxu0 0
      %1264 = vmatpush1.bf16.msra.mxu0 0
      %1265 = vmatprep.subr.bf16.mxu0 0
      %1266 = vmatpush1.bf16.msra.mxu0 0
      %1267 = vmatprep.subr.bf16.mxu0 0
      %1268 = vmatpush1.bf16.msra.mxu0 0
      %1269 = vmatprep.subr.bf16.mxu0 0
      %1270 = vmatpush1.bf16.msra.mxu0 0
      %1271 = vmatprep.subr.bf16.mxu0 0
      %1272 = vmatpush1.bf16.msra.mxu0 0
      %1273 = vmatprep.subr.bf16.mxu0 0
      %1274 = vmatpush1.bf16.msra.mxu0 0
      %1275 = vmatprep.subr.bf16.mxu0 0
      %1276 = vmatpush1.bf16.msra.mxu0 0
      %1277 = vmatprep.subr.bf16.mxu0 0
      %1278 = vmatpush1.bf16.msra.mxu0 0
      %1279 = vmatprep.subr.bf16.mxu0 0
      %1280 = vmatpush1.bf16.msra.mxu0 0
      %1281 = vmatprep.mubr.bf16.mxu0 0
      %1282 = vmatmul.mubr.bf16.gmra.mrb[0].mxu0 %v1219
      %v1283 = vpop.f32.mrb[0].mxu0
      %v1284 = vadd.f32 0.0, %v1283
      %v1285 = vpop.f32.mrb[0].mxu0
      %v1286 = vpop.f32.mrb[0].mxu0
      %v1287 = vadd.f32 0.0, %v1286
      %v1288 = vpop.f32.mrb[0].mxu0
      %1289 = vmatprep.mubr.bf16.mxu0 0
      %1290 = vmatmul.mubr.bf16.gmra.mrb[0].mxu0 %v1222
      %v1291 = vpop.f32.mrb[0].mxu0
      %v1292 = vadd.f32 0.0, %v1291
      %v1293 = vpop.f32.mrb[0].mxu0
      %v1294 = vpop.f32.mrb[0].mxu0
      %v1295 = vadd.f32 0.0, %v1294
      %v1296 = vpop.f32.mrb[0].mxu0
      %1297 = vmatprep.mubr.bf16.mxu0 0
      %1298 = vmatmul.mubr.bf16.gmra.mrb[0].mxu0 %v1225
      %v1299 = vpop.f32.mrb[0].mxu0
      %v1300 = vadd.f32 0.0, %v1299
      %v1301 = vpop.f32.mrb[0].mxu0
      %v1302 = vpop.f32.mrb[0].mxu0
      %v1303 = vadd.f32 0.0, %v1302
      %v1304 = vpop.f32.mrb[0].mxu0
      %1305 = vmatprep.mubr.bf16.mxu0 0
      %1306 = vmatmul.mubr.bf16.gmra.mrb[0].mxu0 %v1228
      %v1307 = vpop.f32.mrb[0].mxu0
      %v1308 = vadd.f32 0.0, %v1307
      %v1309 = vpop.f32.mrb[0].mxu0
      %v1310 = vpop.f32.mrb[0].mxu0
      %v1311 = vadd.f32 0.0, %v1310
      %v1312 = vpop.f32.mrb[0].mxu0
      %1313 = vmatprep.mubr.bf16.mxu0 0
      %1314 = vmatmul.mubr.bf16.gmra.mrb[0].mxu0 %v1231
      %v1315 = vpop.f32.mrb[0].mxu0
      %v1316 = vadd.f32 0.0, %v1315
      %v1317 = vpop.f32.mrb[0].mxu0
      %v1318 = vpop.f32.mrb[0].mxu0
      %v1319 = vadd.f32 0.0, %v1318
      %v1320 = vpop.f32.mrb[0].mxu0
      %1321 = vmatprep.mubr.bf16.mxu0 0
      %1322 = vmatmul.mubr.bf16.gmra.mrb[0].mxu0 %v1234
      %v1323 = vpop.f32.mrb[0].mxu0
      %v1324 = vadd.f32 0.0, %v1323
      %v1325 = vpop.f32.mrb[0].mxu0
      %v1326 = vpop.f32.mrb[0].mxu0
      %v1327 = vadd.f32 0.0, %v1326
      %v1328 = vpop.f32.mrb[0].mxu0
      %1329 = vmatprep.mubr.bf16.mxu0 0
      %1330 = vmatmul.mubr.bf16.gmra.mrb[0].mxu0 %v1237
      %v1331 = vpop.f32.mrb[0].mxu0
      %v1332 = vadd.f32 0.0, %v1331
      %v1333 = vpop.f32.mrb[0].mxu0
      %v1334 = vpop.f32.mrb[0].mxu0
      %v1335 = vadd.f32 0.0, %v1334
      %v1336 = vpop.f32.mrb[0].mxu0
      %1337 = vmatprep.mubr.bf16.mxu0 0
      %1338 = vmatmul.mubr.bf16.gmra.mrb[0].mxu0 %v1240
      %v1339 = vpop.f32.mrb[0].mxu0
      %v1340 = vadd.f32 0.0, %v1339
      %v1341 = vpop.f32.mrb[0].mxu0
      %v1342 = vpop.f32.mrb[0].mxu0
      %v1343 = vadd.f32 0.0, %v1342
      %v1344 = vpop.f32.mrb[0].mxu0
      %1345 = vmatprep.mubr.bf16.mxu0 0
      %1346 = vmatmul.mubr.bf16.gmra.mrb[0].mxu0 %v1243
      %v1347 = vpop.f32.mrb[0].mxu0
      %v1348 = vadd.f32 0.0, %v1347
      %v1349 = vpop.f32.mrb[0].mxu0
      %v1350 = vpop.f32.mrb[0].mxu0
      %v1351 = vadd.f32 0.0, %v1350
      %v1352 = vpop.f32.mrb[0].mxu0
      %1353 = vdwg.mxu0
      %v1354 = vsel %vm1217, %v1130, 0
      %v1356 = vsel %vm1217, %v1131, 0
      %v1358 = vsel %vm1217, %v1132, 0
      %v1360 = vsel %vm1217, %v1133, 0
      %v1362 = vsel %vm1217, %v1134, 0
      %v1364 = vsel %vm1217, %v1135, 0
      %v1366 = vsel %vm1217, %v1136, 0
      %v1368 = vsel %vm1217, %v1137, 0
      %v1370 = vsel %vm1217, %v1138, 0
      %v1373 = vsel %vm1245, %v1088, 0
      %1375 = vmatprep.subr.bf16.mxu0 0
      %1376 = vmatpush1.bf16.msra.mxu0 %v1373
      %1377 = vmatprep.subr.bf16.mxu0 0
      %1378 = vmatpush1.bf16.msra.mxu0 0
      %1379 = vmatprep.subr.bf16.mxu0 0
      %1380 = vmatpush1.bf16.msra.mxu0 0
      %1381 = vmatprep.subr.bf16.mxu0 0
      %1382 = vmatpush1.bf16.msra.mxu0 0
      %1383 = vmatprep.subr.bf16.mxu0 0
      %1384 = vmatpush1.bf16.msra.mxu0 0
      %1385 = vmatprep.subr.bf16.mxu0 0
      %1386 = vmatpush1.bf16.msra.mxu0 0
      %1387 = vmatprep.subr.bf16.mxu0 0
      %1388 = vmatpush1.bf16.msra.mxu0 0
      %1389 = vmatprep.subr.bf16.mxu0 0
      %1390 = vmatpush1.bf16.msra.mxu0 0
      %1391 = vmatprep.subr.bf16.mxu0 0
      %1392 = vmatpush1.bf16.msra.mxu0 0
      %1393 = vmatprep.subr.bf16.mxu0 0
      %1394 = vmatpush1.bf16.msra.mxu0 0
      %1395 = vmatprep.subr.bf16.mxu0 0
      %1396 = vmatpush1.bf16.msra.mxu0 0
      %1397 = vmatprep.subr.bf16.mxu0 0
      %1398 = vmatpush1.bf16.msra.mxu0 0
      %1399 = vmatprep.subr.bf16.mxu0 0
      %1400 = vmatpush1.bf16.msra.mxu0 0
      %1401 = vmatprep.subr.bf16.mxu0 0
      %1402 = vmatpush1.bf16.msra.mxu0 0
      %1403 = vmatprep.subr.bf16.mxu0 0
      %1404 = vmatpush1.bf16.msra.mxu0 0
      %1405 = vmatprep.subr.bf16.mxu0 0
      %1406 = vmatpush1.bf16.msra.mxu0 0
      %1407 = vmatprep.mubr.bf16.mxu0 0
      %1408 = vmatmul.mubr.bf16.gmra.mrb[0].mxu0 %v1354
      %v1409 = vpop.f32.mrb[0].mxu0
      %v1410 = vadd.f32 %v1284, %v1409
      %v1411 = vpop.f32.mrb[0].mxu0
      %v1412 = vpop.f32.mrb[0].mxu0
      %v1413 = vadd.f32 %v1287, %v1412
      %v1414 = vpop.f32.mrb[0].mxu0
      %1415 = vmatprep.mubr.bf16.mxu0 0
      %1416 = vmatmul.mubr.bf16.gmra.mrb[0].mxu0 %v1356
      %v1417 = vpop.f32.mrb[0].mxu0
      %v1418 = vadd.f32 %v1292, %v1417
      %v1419 = vpop.f32.mrb[0].mxu0
      %v1420 = vpop.f32.mrb[0].mxu0
      %v1421 = vadd.f32 %v1295, %v1420
      %v1422 = vpop.f32.mrb[0].mxu0
      %1423 = vmatprep.mubr.bf16.mxu0 0
      %1424 = vmatmul.mubr.bf16.gmra.mrb[0].mxu0 %v1358
      %v1425 = vpop.f32.mrb[0].mxu0
      %v1426 = vadd.f32 %v1300, %v1425
      %v1427 = vpop.f32.mrb[0].mxu0
      %v1428 = vpop.f32.mrb[0].mxu0
      %v1429 = vadd.f32 %v1303, %v1428
      %v1430 = vpop.f32.mrb[0].mxu0
      %1431 = vmatprep.mubr.bf16.mxu0 0
      %1432 = vmatmul.mubr.bf16.gmra.mrb[0].mxu0 %v1360
      %v1433 = vpop.f32.mrb[0].mxu0
      %v1434 = vadd.f32 %v1308, %v1433
      %v1435 = vpop.f32.mrb[0].mxu0
      %v1436 = vpop.f32.mrb[0].mxu0
      %v1437 = vadd.f32 %v1311, %v1436
      %v1438 = vpop.f32.mrb[0].mxu0
      %1439 = vmatprep.mubr.bf16.mxu0 0
      %1440 = vmatmul.mubr.bf16.gmra.mrb[0].mxu0 %v1362
      %v1441 = vpop.f32.mrb[0].mxu0
      %v1442 = vadd.f32 %v1316, %v1441
      %v1443 = vpop.f32.mrb[0].mxu0
      %v1444 = vpop.f32.mrb[0].mxu0
      %v1445 = vadd.f32 %v1319, %v1444
      %v1446 = vpop.f32.mrb[0].mxu0
      %1447 = vmatprep.mubr.bf16.mxu0 0
      %1448 = vmatmul.mubr.bf16.gmra.mrb[0].mxu0 %v1364
      %v1449 = vpop.f32.mrb[0].mxu0
      %v1450 = vadd.f32 %v1324, %v1449
      %v1451 = vpop.f32.mrb[0].mxu0
      %v1452 = vpop.f32.mrb[0].mxu0
      %v1453 = vadd.f32 %v1327, %v1452
      %v1454 = vpop.f32.mrb[0].mxu0
      %1455 = vmatprep.mubr.bf16.mxu0 0
      %1456 = vmatmul.mubr.bf16.gmra.mrb[0].mxu0 %v1366
      %v1457 = vpop.f32.mrb[0].mxu0
      %v1458 = vadd.f32 %v1332, %v1457
      %v1459 = vpop.f32.mrb[0].mxu0
      %v1460 = vpop.f32.mrb[0].mxu0
      %v1461 = vadd.f32 %v1335, %v1460
      %v1462 = vpop.f32.mrb[0].mxu0
      %1463 = vmatprep.mubr.bf16.mxu0 0
      %1464 = vmatmul.mubr.bf16.gmra.mrb[0].mxu0 %v1368
      %v1465 = vpop.f32.mrb[0].mxu0
      %v1466 = vadd.f32 %v1340, %v1465
      %v1467 = vpop.f32.mrb[0].mxu0
      %v1468 = vpop.f32.mrb[0].mxu0
      %v1469 = vadd.f32 %v1343, %v1468
      %v1470 = vpop.f32.mrb[0].mxu0
      %1471 = vmatprep.mubr.bf16.mxu0 0
      %1472 = vmatmul.mubr.bf16.gmra.mrb[0].mxu0 %v1370
      %v1473 = vpop.f32.mrb[0].mxu0
      %v1474 = vadd.f32 %v1348, %v1473
      %v1475 = vpop.f32.mrb[0].mxu0
      %v1476 = vpop.f32.mrb[0].mxu0
      %v1477 = vadd.f32 %v1351, %v1476
      %v1478 = vpop.f32.mrb[0].mxu0
      %1479 = vdwg.mxu0
      %v1480 = vld [vmem:[#allocation2] sm:$0xe]
      %s1481 = scalar_lea.vmem %s5, 4
      %v1482 = vld [vmem:[%s1481] sm:$0x3]
      %v1484 = vunpack.c.l.b16 %v1480
      %v1485 = vpack.c.b16 %v1112, %v1484
      %vm1486 = vcmask 1046528
      %v1487 = vrot.slane %v1485, 1
      %v1488 = vrot.slane %v1131, 1
      %v1489 = vsel %vm1486, %v1487, %v1488
      %v1490 = vrot.slane %v1132, 1
      %v1491 = vsel %vm1486, %v1488, %v1490
      %v1492 = vrot.slane %v1133, 1
      %v1493 = vsel %vm1486, %v1490, %v1492
      %v1494 = vrot.slane %v1134, 1
      %v1495 = vsel %vm1486, %v1492, %v1494
      %v1496 = vrot.slane %v1135, 1
      %v1497 = vsel %vm1486, %v1494, %v1496
      %v1498 = vrot.slane %v1136, 1
      %v1499 = vsel %vm1486, %v1496, %v1498
      %v1500 = vrot.slane %v1137, 1
      %v1501 = vsel %vm1486, %v1498, %v1500
      %v1502 = vrot.slane %v1138, 1
      %v1503 = vsel %vm1486, %v1500, %v1502
      %v1504 = vrot.slane %v1139, 1
      %v1505 = vsel %vm1486, %v1502, %v1504
      %v1507 = vsel %vm1217, %v1489, 0
      %v1510 = vsel %vm1217, %v1491, 0
      %v1513 = vsel %vm1217, %v1493, 0
      %v1516 = vsel %vm1217, %v1495, 0
      %v1519 = vsel %vm1217, %v1497, 0
      %v1522 = vsel %vm1217, %v1499, 0
      %v1525 = vsel %vm1217, %v1501, 0
      %v1528 = vsel %vm1217, %v1503, 0
      %v1531 = vsel %vm1217, %v1505, 0
      %v1534 = vsel %vm1245, %v1482, 0
      %1536 = vmatprep.subr.bf16.mxu0 0
      %1537 = vmatpush1.bf16.msra.mxu0 %v1534
      %1538 = vmatprep.subr.bf16.mxu0 0
      %1539 = vmatpush1.bf16.msra.mxu0 0
      %1540 = vmatprep.subr.bf16.mxu0 0
      %1541 = vmatpush1.bf16.msra.mxu0 0
      %1542 = vmatprep.subr.bf16.mxu0 0
      %1543 = vmatpush1.bf16.msra.mxu0 0
      %1544 = vmatprep.subr.bf16.mxu0 0
      %1545 = vmatpush1.bf16.msra.mxu0 0
      %1546 = vmatprep.subr.bf16.mxu0 0
      %1547 = vmatpush1.bf16.msra.mxu0 0
      %1548 = vmatprep.subr.bf16.mxu0 0
      %1549 = vmatpush1.bf16.msra.mxu0 0
      %1550 = vmatprep.subr.bf16.mxu0 0
      %1551 = vmatpush1.bf16.msra.mxu0 0
      %1552 = vmatprep.subr.bf16.mxu0 0
      %1553 = vmatpush1.bf16.msra.mxu0 0
      %1554 = vmatprep.subr.bf16.mxu0 0
      %1555 = vmatpush1.bf16.msra.mxu0 0
      %1556 = vmatprep.subr.bf16.mxu0 0
      %1557 = vmatpush1.bf16.msra.mxu0 0
      %1558 = vmatprep.subr.bf16.mxu0 0
      %1559 = vmatpush1.bf16.msra.mxu0 0
      %1560 = vmatprep.subr.bf16.mxu0 0
      %1561 = vmatpush1.bf16.msra.mxu0 0
      %1562 = vmatprep.subr.bf16.mxu0 0
      %1563 = vmatpush1.bf16.msra.mxu0 0
      %1564 = vmatprep.subr.bf16.mxu0 0
      %1565 = vmatpush1.bf16.msra.mxu0 0
      %1566 = vmatprep.subr.bf16.mxu0 0
      %1567 = vmatpush1.bf16.msra.mxu0 0
      %1568 = vmatprep.mubr.bf16.mxu0 0
      %1569 = vmatmul.mubr.bf16.gmra.mrb[0].mxu0 %v1507
      %v1570 = vpop.f32.mrb[0].mxu0
      %v1571 = vadd.f32 0.0, %v1570
      %v1572 = vpop.f32.mrb[0].mxu0
      %v1573 = vpop.f32.mrb[0].mxu0
      %v1574 = vadd.f32 0.0, %v1573
      %v1575 = vpop.f32.mrb[0].mxu0
      %1576 = vmatprep.mubr.bf16.mxu0 0
      %1577 = vmatmul.mubr.bf16.gmra.mrb[0].mxu0 %v1510
      %v1578 = vpop.f32.mrb[0].mxu0
      %v1579 = vadd.f32 0.0, %v1578
      %v1580 = vpop.f32.mrb[0].mxu0
      %v1581 = vpop.f32.mrb[0].mxu0
      %v1582 = vadd.f32 0.0, %v1581
      %v1583 = vpop.f32.mrb[0].mxu0
      %1584 = vmatprep.mubr.bf16.mxu0 0
      %1585 = vmatmul.mubr.bf16.gmra.mrb[0].mxu0 %v1513
      %v1586 = vpop.f32.mrb[0].mxu0
      %v1587 = vadd.f32 0.0, %v1586
      %v1588 = vpop.f32.mrb[0].mxu0
      %v1589 = vpop.f32.mrb[0].mxu0
      %v1590 = vadd.f32 0.0, %v1589
      %v1591 = vpop.f32.mrb[0].mxu0
      %1592 = vmatprep.mubr.bf16.mxu0 0
      %1593 = vmatmul.mubr.bf16.gmra.mrb[0].mxu0 %v1516
      %v1594 = vpop.f32.mrb[0].mxu0
      %v1595 = vadd.f32 0.0, %v1594
      %v1596 = vpop.f32.mrb[0].mxu0
      %v1597 = vpop.f32.mrb[0].mxu0
      %v1598 = vadd.f32 0.0, %v1597
      %v1599 = vpop.f32.mrb[0].mxu0
      %1600 = vmatprep.mubr.bf16.mxu0 0
      %1601 = vmatmul.mubr.bf16.gmra.mrb[0].mxu0 %v1519
      %v1602 = vpop.f32.mrb[0].mxu0
      %v1603 = vadd.f32 0.0, %v1602
      %v1604 = vpop.f32.mrb[0].mxu0
      %v1605 = vpop.f32.mrb[0].mxu0
      %v1606 = vadd.f32 0.0, %v1605
      %v1607 = vpop.f32.mrb[0].mxu0
      %1608 = vmatprep.mubr.bf16.mxu0 0
      %1609 = vmatmul.mubr.bf16.gmra.mrb[0].mxu0 %v1522
      %v1610 = vpop.f32.mrb[0].mxu0
      %v1611 = vadd.f32 0.0, %v1610
      %v1612 = vpop.f32.mrb[0].mxu0
      %v1613 = vpop.f32.mrb[0].mxu0
      %v1614 = vadd.f32 0.0, %v1613
      %v1615 = vpop.f32.mrb[0].mxu0
      %1616 = vmatprep.mubr.bf16.mxu0 0
      %1617 = vmatmul.mubr.bf16.gmra.mrb[0].mxu0 %v1525
      %v1618 = vpop.f32.mrb[0].mxu0
      %v1619 = vadd.f32 0.0, %v1618
      %v1620 = vpop.f32.mrb[0].mxu0
      %v1621 = vpop.f32.mrb[0].mxu0
      %v1622 = vadd.f32 0.0, %v1621
      %v1623 = vpop.f32.mrb[0].mxu0
      %1624 = vmatprep.mubr.bf16.mxu0 0
      %1625 = vmatmul.mubr.bf16.gmra.mrb[0].mxu0 %v1528
      %v1626 = vpop.f32.mrb[0].mxu0
      %v1627 = vadd.f32 0.0, %v1626
      %v1628 = vpop.f32.mrb[0].mxu0
      %v1629 = vpop.f32.mrb[0].mxu0
      %v1630 = vadd.f32 0.0, %v1629
      %v1631 = vpop.f32.mrb[0].mxu0
      %1632 = vmatprep.mubr.bf16.mxu0 0
      %1633 = vmatmul.mubr.bf16.gmra.mrb[0].mxu0 %v1531
      %v1634 = vpop.f32.mrb[0].mxu0
      %v1635 = vadd.f32 0.0, %v1634
      %v1636 = vpop.f32.mrb[0].mxu0
      %v1637 = vpop.f32.mrb[0].mxu0
      %v1638 = vadd.f32 0.0, %v1637
      %v1639 = vpop.f32.mrb[0].mxu0
      %1640 = vdwg.mxu0
      %v1641 = vadd.f32 %v1410, %v1571
      %v1642 = vadd.f32 %v1413, %v1574
      %v1643 = vadd.f32 %v1418, %v1579
      %v1644 = vadd.f32 %v1421, %v1582
      %v1645 = vadd.f32 %v1426, %v1587
      %v1646 = vadd.f32 %v1429, %v1590
      %v1647 = vadd.f32 %v1434, %v1595
      %v1648 = vadd.f32 %v1437, %v1598
      %v1649 = vadd.f32 %v1442, %v1603
      %v1650 = vadd.f32 %v1445, %v1606
      %v1651 = vadd.f32 %v1450, %v1611
      %v1652 = vadd.f32 %v1453, %v1614
      %v1653 = vadd.f32 %v1458, %v1619
      %v1654 = vadd.f32 %v1461, %v1622
      %v1655 = vadd.f32 %v1466, %v1627
      %v1656 = vadd.f32 %v1469, %v1630
      %v1657 = vadd.f32 %v1474, %v1635
      %v1658 = vadd.f32 %v1477, %v1638
      %v1659 = vld [vmem:[#allocation2 + $0x8] sm:$0xe]
      %v1660 = vld [vmem:[#allocation2 + $0xc] sm:$0xf]
      %v1661 = vld [vmem:[#allocation2 + $0x10] sm:$0xf]
      %v1662 = vld [vmem:[#allocation2 + $0x14] sm:$0xf]
      %v1663 = vld [vmem:[#allocation2 + $0x18] sm:$0xf]
      %v1664 = vld [vmem:[#allocation2 + $0x1c] sm:$0xf]
      %v1665 = vld [vmem:[#allocation2 + $0x20] sm:$0xf]
      %v1666 = vld [vmem:[#allocation2 + $0x24] sm:$0xf]
      %v1667 = vld [vmem:[#allocation2 + $0x28] sm:$0xf]
      %v1668 = vld [vmem:[#allocation2 + $0x2c] sm:$0xf]
      %v1669 = vld [vmem:[#allocation2 + $0x30] sm:$0xf]
      %v1670 = vld [vmem:[#allocation2 + $0x34] sm:$0xf]
      %v1671 = vld [vmem:[#allocation2 + $0x38] sm:$0xf]
      %v1672 = vld [vmem:[#allocation2 + $0x3c] sm:$0xf]
      %v1673 = vld [vmem:[#allocation2 + $0x40] sm:$0xf]
      %v1674 = vld [vmem:[#allocation2 + $0x44] sm:$0xf]
      %v1675 = vld [vmem:[#allocation2 + $0x48] sm:$0xf]
      %v1676 = vld [vmem:[#allocation2 + $0x4c] sm:$0xf]
      %v1677 = vld [vmem:[#allocation2 + $0x50] sm:$0x1]
      %s1678 = scalar_lea.vmem %s5, 6
      %v1679 = vld [vmem:[%s1678] sm:$0x3]
      %v1699 = vunpack.c.l.b16 %v1659
      %v1700 = vunpack.c.l.b16 %v1660
      %v1701 = vunpack.c.l.b16 %v1661
      %v1702 = vunpack.c.l.b16 %v1662
      %v1703 = vunpack.c.l.b16 %v1663
      %v1704 = vunpack.c.l.b16 %v1664
      %v1705 = vunpack.c.l.b16 %v1665
      %v1706 = vunpack.c.l.b16 %v1666
      %v1707 = vunpack.c.l.b16 %v1667
      %v1708 = vunpack.c.l.b16 %v1668
      %v1709 = vunpack.c.l.b16 %v1669
      %v1710 = vunpack.c.l.b16 %v1670
      %v1711 = vunpack.c.l.b16 %v1671
      %v1712 = vunpack.c.l.b16 %v1672
      %v1713 = vunpack.c.l.b16 %v1673
      %v1714 = vunpack.c.l.b16 %v1674
      %v1715 = vunpack.c.l.b16 %v1675
      %v1716 = vunpack.c.l.b16 %v1676
      %v1717 = vunpack.c.l.b16 %v1677
      %v1718 = vpack.c.b16 %v1700, %v1699
      %v1719 = vpack.c.b16 %v1702, %v1701
      %v1720 = vpack.c.b16 %v1704, %v1703
      %v1721 = vpack.c.b16 %v1706, %v1705
      %v1722 = vpack.c.b16 %v1708, %v1707
      %v1723 = vpack.c.b16 %v1710, %v1709
      %v1724 = vpack.c.b16 %v1712, %v1711
      %v1725 = vpack.c.b16 %v1714, %v1713
      %v1726 = vpack.c.b16 %v1716, %v1715
      %v1727 = vpack.c.b16 %v1717, %v1717
      %v1728 = vrot.slane %v1718, 1
      %v1729 = vrot.slane %v1719, 1
      %v1730 = vsel %vm1486, %v1728, %v1729
      %v1731 = vrot.slane %v1720, 1
      %v1732 = vsel %vm1486, %v1729, %v1731
      %v1733 = vrot.slane %v1721, 1
      %v1734 = vsel %vm1486, %v1731, %v1733
      %v1735 = vrot.slane %v1722, 1
      %v1736 = vsel %vm1486, %v1733, %v1735
      %v1737 = vrot.slane %v1723, 1
      %v1738 = vsel %vm1486, %v1735, %v1737
      %v1739 = vrot.slane %v1724, 1
      %v1740 = vsel %vm1486, %v1737, %v1739
      %v1741 = vrot.slane %v1725, 1
      %v1742 = vsel %vm1486, %v1739, %v1741
      %v1743 = vrot.slane %v1726, 1
      %v1744 = vsel %vm1486, %v1741, %v1743
      %v1745 = vrot.slane %v1727, 1
      %v1746 = vsel %vm1486, %v1743, %v1745
      %v1748 = vsel %vm1217, %v1730, 0
      %v1751 = vsel %vm1217, %v1732, 0
      %v1754 = vsel %vm1217, %v1734, 0
      %v1757 = vsel %vm1217, %v1736, 0
      %v1760 = vsel %vm1217, %v1738, 0
      %v1763 = vsel %vm1217, %v1740, 0
      %v1766 = vsel %vm1217, %v1742, 0
      %v1769 = vsel %vm1217, %v1744, 0
      %v1772 = vsel %vm1217, %v1746, 0
      %v1775 = vsel %vm1245, %v1679, 0
      %1777 = vmatprep.subr.bf16.mxu0 0
      %1778 = vmatpush1.bf16.msra.mxu0 %v1775
      %1779 = vmatprep.subr.bf16.mxu0 0
      %1780 = vmatpush1.bf16.msra.mxu0 0
      %1781 = vmatprep.subr.bf16.mxu0 0
      %1782 = vmatpush1.bf16.msra.mxu0 0
      %1783 = vmatprep.subr.bf16.mxu0 0
      %1784 = vmatpush1.bf16.msra.mxu0 0
      %1785 = vmatprep.subr.bf16.mxu0 0
      %1786 = vmatpush1.bf16.msra.mxu0 0
      %1787 = vmatprep.subr.bf16.mxu0 0
      %1788 = vmatpush1.bf16.msra.mxu0 0
      %1789 = vmatprep.subr.bf16.mxu0 0
      %1790 = vmatpush1.bf16.msra.mxu0 0
      %1791 = vmatprep.subr.bf16.mxu0 0
      %1792 = vmatpush1.bf16.msra.mxu0 0
      %1793 = vmatprep.subr.bf16.mxu0 0
      %1794 = vmatpush1.bf16.msra.mxu0 0
      %1795 = vmatprep.subr.bf16.mxu0 0
      %1796 = vmatpush1.bf16.msra.mxu0 0
      %1797 = vmatprep.subr.bf16.mxu0 0
      %1798 = vmatpush1.bf16.msra.mxu0 0
      %1799 = vmatprep.subr.bf16.mxu0 0
      %1800 = vmatpush1.bf16.msra.mxu0 0
      %1801 = vmatprep.subr.bf16.mxu0 0
      %1802 = vmatpush1.bf16.msra.mxu0 0
      %1803 = vmatprep.subr.bf16.mxu0 0
      %1804 = vmatpush1.bf16.msra.mxu0 0
      %1805 = vmatprep.subr.bf16.mxu0 0
      %1806 = vmatpush1.bf16.msra.mxu0 0
      %1807 = vmatprep.subr.bf16.mxu0 0
      %1808 = vmatpush1.bf16.msra.mxu0 0
      %1809 = vmatprep.mubr.bf16.mxu0 0
      %1810 = vmatmul.mubr.bf16.gmra.mrb[0].mxu0 %v1748
      %v1811 = vpop.f32.mrb[0].mxu0
      %v1812 = vadd.f32 0.0, %v1811
      %v1813 = vpop.f32.mrb[0].mxu0
      %v1814 = vpop.f32.mrb[0].mxu0
      %v1815 = vadd.f32 0.0, %v1814
      %v1816 = vpop.f32.mrb[0].mxu0
      %1817 = vmatprep.mubr.bf16.mxu0 0
      %1818 = vmatmul.mubr.bf16.gmra.mrb[0].mxu0 %v1751
      %v1819 = vpop.f32.mrb[0].mxu0
      %v1820 = vadd.f32 0.0, %v1819
      %v1821 = vpop.f32.mrb[0].mxu0
      %v1822 = vpop.f32.mrb[0].mxu0
      %v1823 = vadd.f32 0.0, %v1822
      %v1824 = vpop.f32.mrb[0].mxu0
      %1825 = vmatprep.mubr.bf16.mxu0 0
      %1826 = vmatmul.mubr.bf16.gmra.mrb[0].mxu0 %v1754
      %v1827 = vpop.f32.mrb[0].mxu0
      %v1828 = vadd.f32 0.0, %v1827
      %v1829 = vpop.f32.mrb[0].mxu0
      %v1830 = vpop.f32.mrb[0].mxu0
      %v1831 = vadd.f32 0.0, %v1830
      %v1832 = vpop.f32.mrb[0].mxu0
      %1833 = vmatprep.mubr.bf16.mxu0 0
      %1834 = vmatmul.mubr.bf16.gmra.mrb[0].mxu0 %v1757
      %v1835 = vpop.f32.mrb[0].mxu0
      %v1836 = vadd.f32 0.0, %v1835
      %v1837 = vpop.f32.mrb[0].mxu0
      %v1838 = vpop.f32.mrb[0].mxu0
      %v1839 = vadd.f32 0.0, %v1838
      %v1840 = vpop.f32.mrb[0].mxu0
      %1841 = vmatprep.mubr.bf16.mxu0 0
      %1842 = vmatmul.mubr.bf16.gmra.mrb[0].mxu0 %v1760
      %v1843 = vpop.f32.mrb[0].mxu0
      %v1844 = vadd.f32 0.0, %v1843
      %v1845 = vpop.f32.mrb[0].mxu0
      %v1846 = vpop.f32.mrb[0].mxu0
      %v1847 = vadd.f32 0.0, %v1846
      %v1848 = vpop.f32.mrb[0].mxu0
      %1849 = vmatprep.mubr.bf16.mxu0 0
      %1850 = vmatmul.mubr.bf16.gmra.mrb[0].mxu0 %v1763
      %v1851 = vpop.f32.mrb[0].mxu0
      %v1852 = vadd.f32 0.0, %v1851
      %v1853 = vpop.f32.mrb[0].mxu0
      %v1854 = vpop.f32.mrb[0].mxu0
      %v1855 = vadd.f32 0.0, %v1854
      %v1856 = vpop.f32.mrb[0].mxu0
      %1857 = vmatprep.mubr.bf16.mxu0 0
      %1858 = vmatmul.mubr.bf16.gmra.mrb[0].mxu0 %v1766
      %v1859 = vpop.f32.mrb[0].mxu0
      %v1860 = vadd.f32 0.0, %v1859
      %v1861 = vpop.f32.mrb[0].mxu0
      %v1862 = vpop.f32.mrb[0].mxu0
      %v1863 = vadd.f32 0.0, %v1862
      %v1864 = vpop.f32.mrb[0].mxu0
      %1865 = vmatprep.mubr.bf16.mxu0 0
      %1866 = vmatmul.mubr.bf16.gmra.mrb[0].mxu0 %v1769
      %v1867 = vpop.f32.mrb[0].mxu0
      %v1868 = vadd.f32 0.0, %v1867
      %v1869 = vpop.f32.mrb[0].mxu0
      %v1870 = vpop.f32.mrb[0].mxu0
      %v1871 = vadd.f32 0.0, %v1870
      %v1872 = vpop.f32.mrb[0].mxu0
      %1873 = vmatprep.mubr.bf16.mxu0 0
      %1874 = vmatmul.mubr.bf16.gmra.mrb[0].mxu0 %v1772
      %v1875 = vpop.f32.mrb[0].mxu0
      %v1876 = vadd.f32 0.0, %v1875
      %v1877 = vpop.f32.mrb[0].mxu0
      %v1878 = vpop.f32.mrb[0].mxu0
      %v1879 = vadd.f32 0.0, %v1878
      %v1880 = vpop.f32.mrb[0].mxu0
      %1881 = vdwg.mxu0
      %v1882 = vadd.f32 %v1641, %v1812
      %v1883 = vadd.f32 %v1642, %v1815
      %v1884 = vadd.f32 %v1643, %v1820
      %v1885 = vadd.f32 %v1644, %v1823
      %v1886 = vadd.f32 %v1645, %v1828
      %v1887 = vadd.f32 %v1646, %v1831
      %v1888 = vadd.f32 %v1647, %v1836
      %v1889 = vadd.f32 %v1648, %v1839
      %v1890 = vadd.f32 %v1649, %v1844
      %v1891 = vadd.f32 %v1650, %v1847
      %v1892 = vadd.f32 %v1651, %v1852
      %v1893 = vadd.f32 %v1652, %v1855
      %v1894 = vadd.f32 %v1653, %v1860
      %v1895 = vadd.f32 %v1654, %v1863
      %v1896 = vadd.f32 %v1655, %v1868
      %v1897 = vadd.f32 %v1656, %v1871
      %v1898 = vadd.f32 %v1657, %v1876
      %v1899 = vadd.f32 %v1658, %v1879
      %v1900 = vld [vmem:[#allocation2 + $0x50] sm:$0x3]
      %s1901 = scalar_lea.vmem %s5, 8
      %v1902 = vld [vmem:[%s1901] sm:$0x3]
      %v1904 = vunpack.c.l.b16 %v1900
      %v1905 = vpack.c.b16 %v1904, %v1904
      %vm1906 = vsmask.f32 6400
      %v1908 = vshrl.u32 %v1718, 16
      %v1910 = vrot.slane %v1908, 1
      %v1911 = vshll.u32 %v1718, 16
      %v1913 = vrot.slane %v1911, 2
      %v1914 = vor.u32 %v1910, %v1913
      %v1916 = vshrl.u32 %v1719, 16
      %v1918 = vrot.slane %v1916, 1
      %v1919 = vshll.u32 %v1719, 16
      %v1921 = vrot.slane %v1919, 2
      %v1922 = vor.u32 %v1918, %v1921
      %v1923 = vsel %vm1906, %v1914, %v1922
      %v1925 = vshrl.u32 %v1720, 16
      %v1927 = vrot.slane %v1925, 1
      %v1928 = vshll.u32 %v1720, 16
      %v1930 = vrot.slane %v1928, 2
      %v1931 = vor.u32 %v1927, %v1930
      %v1932 = vsel %vm1906, %v1922, %v1931
      %v1934 = vshrl.u32 %v1721, 16
      %v1936 = vrot.slane %v1934, 1
      %v1937 = vshll.u32 %v1721, 16
      %v1939 = vrot.slane %v1937, 2
      %v1940 = vor.u32 %v1936, %v1939
      %v1941 = vsel %vm1906, %v1931, %v1940
      %v1943 = vshrl.u32 %v1722, 16
      %v1945 = vrot.slane %v1943, 1
      %v1946 = vshll.u32 %v1722, 16
      %v1948 = vrot.slane %v1946, 2
      %v1949 = vor.u32 %v1945, %v1948
      %v1950 = vsel %vm1906, %v1940, %v1949
      %v1952 = vshrl.u32 %v1723, 16
      %v1954 = vrot.slane %v1952, 1
      %v1955 = vshll.u32 %v1723, 16
      %v1957 = vrot.slane %v1955, 2
      %v1958 = vor.u32 %v1954, %v1957
      %v1959 = vsel %vm1906, %v1949, %v1958
      %v1961 = vshrl.u32 %v1724, 16
      %v1963 = vrot.slane %v1961, 1
      %v1964 = vshll.u32 %v1724, 16
      %v1966 = vrot.slane %v1964, 2
      %v1967 = vor.u32 %v1963, %v1966
      %v1968 = vsel %vm1906, %v1958, %v1967
      %v1970 = vshrl.u32 %v1725, 16
      %v1972 = vrot.slane %v1970, 1
      %v1973 = vshll.u32 %v1725, 16
      %v1975 = vrot.slane %v1973, 2
      %v1976 = vor.u32 %v1972, %v1975
      %v1977 = vsel %vm1906, %v1967, %v1976
      %v1979 = vshrl.u32 %v1726, 16
      %v1981 = vrot.slane %v1979, 1
      %v1982 = vshll.u32 %v1726, 16
      %v1984 = vrot.slane %v1982, 2
      %v1985 = vor.u32 %v1981, %v1984
      %v1986 = vsel %vm1906, %v1976, %v1985
      %v1988 = vshrl.u32 %v1905, 16
      %v1990 = vrot.slane %v1988, 1
      %v1991 = vshll.u32 %v1905, 16
      %v1993 = vrot.slane %v1991, 2
      %v1994 = vor.u32 %v1990, %v1993
      %v1995 = vsel %vm1906, %v1985, %v1994
      %v1997 = vsel %vm1217, %v1923, 0
      %v2000 = vsel %vm1217, %v1932, 0
      %v2003 = vsel %vm1217, %v1941, 0
      %v2006 = vsel %vm1217, %v1950, 0
      %v2009 = vsel %vm1217, %v1959, 0
      %v2012 = vsel %vm1217, %v1968, 0
      %v2015 = vsel %vm1217, %v1977, 0
      %v2018 = vsel %vm1217, %v1986, 0
      %v2021 = vsel %vm1217, %v1995, 0
      %v2024 = vsel %vm1245, %v1902, 0
      %2026 = vmatprep.subr.bf16.mxu0 0
      %2027 = vmatpush1.bf16.msra.mxu0 %v2024
      %2028 = vmatprep.subr.bf16.mxu0 0
      %2029 = vmatpush1.bf16.msra.mxu0 0
      %2030 = vmatprep.subr.bf16.mxu0 0
      %2031 = vmatpush1.bf16.msra.mxu0 0
      %2032 = vmatprep.subr.bf16.mxu0 0
      %2033 = vmatpush1.bf16.msra.mxu0 0
      %2034 = vmatprep.subr.bf16.mxu0 0
      %2035 = vmatpush1.bf16.msra.mxu0 0
      %2036 = vmatprep.subr.bf16.mxu0 0
      %2037 = vmatpush1.bf16.msra.mxu0 0
      %2038 = vmatprep.subr.bf16.mxu0 0
      %2039 = vmatpush1.bf16.msra.mxu0 0
      %2040 = vmatprep.subr.bf16.mxu0 0
      %2041 = vmatpush1.bf16.msra.mxu0 0
      %2042 = vmatprep.subr.bf16.mxu0 0
      %2043 = vmatpush1.bf16.msra.mxu0 0
      %2044 = vmatprep.subr.bf16.mxu0 0
      %2045 = vmatpush1.bf16.msra.mxu0 0
      %2046 = vmatprep.subr.bf16.mxu0 0
      %2047 = vmatpush1.bf16.msra.mxu0 0
      %2048 = vmatprep.subr.bf16.mxu0 0
      %2049 = vmatpush1.bf16.msra.mxu0 0
      %2050 = vmatprep.subr.bf16.mxu0 0
      %2051 = vmatpush1.bf16.msra.mxu0 0
      %2052 = vmatprep.subr.bf16.mxu0 0
      %2053 = vmatpush1.bf16.msra.mxu0 0
      %2054 = vmatprep.subr.bf16.mxu0 0
      %2055 = vmatpush1.bf16.msra.mxu0 0
      %2056 = vmatprep.subr.bf16.mxu0 0
      %2057 = vmatpush1.bf16.msra.mxu0 0
      %2058 = vmatprep.mubr.bf16.mxu0 0
      %2059 = vmatmul.mubr.bf16.gmra.mrb[0].mxu0 %v1997
      %v2060 = vpop.f32.mrb[0].mxu0
      %v2061 = vadd.f32 0.0, %v2060
      %v2062 = vpop.f32.mrb[0].mxu0
      %v2063 = vpop.f32.mrb[0].mxu0
      %v2064 = vadd.f32 0.0, %v2063
      %v2065 = vpop.f32.mrb[0].mxu0
      %2066 = vmatprep.mubr.bf16.mxu0 0
      %2067 = vmatmul.mubr.bf16.gmra.mrb[0].mxu0 %v2000
      %v2068 = vpop.f32.mrb[0].mxu0
      %v2069 = vadd.f32 0.0, %v2068
      %v2070 = vpop.f32.mrb[0].mxu0
      %v2071 = vpop.f32.mrb[0].mxu0
      %v2072 = vadd.f32 0.0, %v2071
      %v2073 = vpop.f32.mrb[0].mxu0
      %2074 = vmatprep.mubr.bf16.mxu0 0
      %2075 = vmatmul.mubr.bf16.gmra.mrb[0].mxu0 %v2003
      %v2076 = vpop.f32.mrb[0].mxu0
      %v2077 = vadd.f32 0.0, %v2076
      %v2078 = vpop.f32.mrb[0].mxu0
      %v2079 = vpop.f32.mrb[0].mxu0
      %v2080 = vadd.f32 0.0, %v2079
      %v2081 = vpop.f32.mrb[0].mxu0
      %2082 = vmatprep.mubr.bf16.mxu0 0
      %2083 = vmatmul.mubr.bf16.gmra.mrb[0].mxu0 %v2006
      %v2084 = vpop.f32.mrb[0].mxu0
      %v2085 = vadd.f32 0.0, %v2084
      %v2086 = vpop.f32.mrb[0].mxu0
      %v2087 = vpop.f32.mrb[0].mxu0
      %v2088 = vadd.f32 0.0, %v2087
      %v2089 = vpop.f32.mrb[0].mxu0
      %2090 = vmatprep.mubr.bf16.mxu0 0
      %2091 = vmatmul.mubr.bf16.gmra.mrb[0].mxu0 %v2009
      %v2092 = vpop.f32.mrb[0].mxu0
      %v2093 = vadd.f32 0.0, %v2092
      %v2094 = vpop.f32.mrb[0].mxu0
      %v2095 = vpop.f32.mrb[0].mxu0
      %v2096 = vadd.f32 0.0, %v2095
      %v2097 = vpop.f32.mrb[0].mxu0
      %2098 = vmatprep.mubr.bf16.mxu0 0
      %2099 = vmatmul.mubr.bf16.gmra.mrb[0].mxu0 %v2012
      %v2100 = vpop.f32.mrb[0].mxu0
      %v2101 = vadd.f32 0.0, %v2100
      %v2102 = vpop.f32.mrb[0].mxu0
      %v2103 = vpop.f32.mrb[0].mxu0
      %v2104 = vadd.f32 0.0, %v2103
      %v2105 = vpop.f32.mrb[0].mxu0
      %2106 = vmatprep.mubr.bf16.mxu0 0
      %2107 = vmatmul.mubr.bf16.gmra.mrb[0].mxu0 %v2015
      %v2108 = vpop.f32.mrb[0].mxu0
      %v2109 = vadd.f32 0.0, %v2108
      %v2110 = vpop.f32.mrb[0].mxu0
      %v2111 = vpop.f32.mrb[0].mxu0
      %v2112 = vadd.f32 0.0, %v2111
      %v2113 = vpop.f32.mrb[0].mxu0
      %2114 = vmatprep.mubr.bf16.mxu0 0
      %2115 = vmatmul.mubr.bf16.gmra.mrb[0].mxu0 %v2018
      %v2116 = vpop.f32.mrb[0].mxu0
      %v2117 = vadd.f32 0.0, %v2116
      %v2118 = vpop.f32.mrb[0].mxu0
      %v2119 = vpop.f32.mrb[0].mxu0
      %v2120 = vadd.f32 0.0, %v2119
      %v2121 = vpop.f32.mrb[0].mxu0
      %2122 = vmatprep.mubr.bf16.mxu0 0
      %2123 = vmatmul.mubr.bf16.gmra.mrb[0].mxu0 %v2021
      %v2124 = vpop.f32.mrb[0].mxu0
      %v2125 = vadd.f32 0.0, %v2124
      %v2126 = vpop.f32.mrb[0].mxu0
      %v2127 = vpop.f32.mrb[0].mxu0
      %v2128 = vadd.f32 0.0, %v2127
      %v2129 = vpop.f32.mrb[0].mxu0
      %2130 = vdwg.mxu0
      %v2131 = vadd.f32 %v1882, %v2061
      %v2132 = vadd.f32 %v1883, %v2064
      %v2133 = vadd.f32 %v1884, %v2069
      %v2134 = vadd.f32 %v1885, %v2072
      %v2135 = vadd.f32 %v1886, %v2077
      %v2136 = vadd.f32 %v1887, %v2080
      %v2137 = vadd.f32 %v1888, %v2085
      %v2138 = vadd.f32 %v1889, %v2088
      %v2139 = vadd.f32 %v1890, %v2093
      %v2140 = vadd.f32 %v1891, %v2096
      %v2141 = vadd.f32 %v1892, %v2101
      %v2142 = vadd.f32 %v1893, %v2104
      %v2143 = vadd.f32 %v1894, %v2109
      %v2144 = vadd.f32 %v1895, %v2112
      %v2145 = vadd.f32 %v1896, %v2117
      %v2146 = vadd.f32 %v1897, %v2120
      %v2147 = vadd.f32 %v1898, %v2125
      %v2148 = vadd.f32 %v1899, %v2128
      %v2149 = vld [vmem:[#allocation2 + $0x8] sm:$0xc]
      %s2150 = scalar_lea.vmem %s5, 10
      %v2151 = vld [vmem:[%s2150] sm:$0x3]
      %v2153 = vunpack.c.l.b16 %v2149
      %v2154 = vpack.c.b16 %v1700, %v2153
      %vm2155 = vcmask 1045504
      %v2156 = vrot.slane %v2154, 2
      %v2157 = vrot.slane %v1719, 2
      %v2158 = vsel %vm2155, %v2156, %v2157
      %v2159 = vrot.slane %v1720, 2
      %v2160 = vsel %vm2155, %v2157, %v2159
      %v2161 = vrot.slane %v1721, 2
      %v2162 = vsel %vm2155, %v2159, %v2161
      %v2163 = vrot.slane %v1722, 2
      %v2164 = vsel %vm2155, %v2161, %v2163
      %v2165 = vrot.slane %v1723, 2
      %v2166 = vsel %vm2155, %v2163, %v2165
      %v2167 = vrot.slane %v1724, 2
      %v2168 = vsel %vm2155, %v2165, %v2167
      %v2169 = vrot.slane %v1725, 2
      %v2170 = vsel %vm2155, %v2167, %v2169
      %v2171 = vrot.slane %v1726, 2
      %v2172 = vsel %vm2155, %v2169, %v2171
      %v2173 = vrot.slane %v1905, 2
      %v2174 = vsel %vm2155, %v2171, %v2173
      %v2176 = vsel %vm1217, %v2158, 0
      %v2179 = vsel %vm1217, %v2160, 0
      %v2182 = vsel %vm1217, %v2162, 0
      %v2185 = vsel %vm1217, %v2164, 0
      %v2188 = vsel %vm1217, %v2166, 0
      %v2191 = vsel %vm1217, %v2168, 0
      %v2194 = vsel %vm1217, %v2170, 0
      %v2197 = vsel %vm1217, %v2172, 0
      %v2200 = vsel %vm1217, %v2174, 0
      %v2203 = vsel %vm1245, %v2151, 0
      %2205 = vmatprep.subr.bf16.mxu0 0
      %2206 = vmatpush1.bf16.msra.mxu0 %v2203
      %2207 = vmatprep.subr.bf16.mxu0 0
      %2208 = vmatpush1.bf16.msra.mxu0 0
      %2209 = vmatprep.subr.bf16.mxu0 0
      %2210 = vmatpush1.bf16.msra.mxu0 0
      %2211 = vmatprep.subr.bf16.mxu0 0
      %2212 = vmatpush1.bf16.msra.mxu0 0
      %2213 = vmatprep.subr.bf16.mxu0 0
      %2214 = vmatpush1.bf16.msra.mxu0 0
      %2215 = vmatprep.subr.bf16.mxu0 0
      %2216 = vmatpush1.bf16.msra.mxu0 0
      %2217 = vmatprep.subr.bf16.mxu0 0
      %2218 = vmatpush1.bf16.msra.mxu0 0
      %2219 = vmatprep.subr.bf16.mxu0 0
      %2220 = vmatpush1.bf16.msra.mxu0 0
      %2221 = vmatprep.subr.bf16.mxu0 0
      %2222 = vmatpush1.bf16.msra.mxu0 0
      %2223 = vmatprep.subr.bf16.mxu0 0
      %2224 = vmatpush1.bf16.msra.mxu0 0
      %2225 = vmatprep.subr.bf16.mxu0 0
      %2226 = vmatpush1.bf16.msra.mxu0 0
      %2227 = vmatprep.subr.bf16.mxu0 0
      %2228 = vmatpush1.bf16.msra.mxu0 0
      %2229 = vmatprep.subr.bf16.mxu0 0
      %2230 = vmatpush1.bf16.msra.mxu0 0
      %2231 = vmatprep.subr.bf16.mxu0 0
      %2232 = vmatpush1.bf16.msra.mxu0 0
      %2233 = vmatprep.subr.bf16.mxu0 0
      %2234 = vmatpush1.bf16.msra.mxu0 0
      %2235 = vmatprep.subr.bf16.mxu0 0
      %2236 = vmatpush1.bf16.msra.mxu0 0
      %2237 = vmatprep.mubr.bf16.mxu0 0
      %2238 = vmatmul.mubr.bf16.gmra.mrb[0].mxu0 %v2176
      %v2239 = vpop.f32.mrb[0].mxu0
      %v2240 = vadd.f32 0.0, %v2239
      %v2241 = vpop.f32.mrb[0].mxu0
      %v2242 = vpop.f32.mrb[0].mxu0
      %v2243 = vadd.f32 0.0, %v2242
      %v2244 = vpop.f32.mrb[0].mxu0
      %2245 = vmatprep.mubr.bf16.mxu0 0
      %2246 = vmatmul.mubr.bf16.gmra.mrb[0].mxu0 %v2179
      %v2247 = vpop.f32.mrb[0].mxu0
      %v2248 = vadd.f32 0.0, %v2247
      %v2249 = vpop.f32.mrb[0].mxu0
      %v2250 = vpop.f32.mrb[0].mxu0
      %v2251 = vadd.f32 0.0, %v2250
      %v2252 = vpop.f32.mrb[0].mxu0
      %2253 = vmatprep.mubr.bf16.mxu0 0
      %2254 = vmatmul.mubr.bf16.gmra.mrb[0].mxu0 %v2182
      %v2255 = vpop.f32.mrb[0].mxu0
      %v2256 = vadd.f32 0.0, %v2255
      %v2257 = vpop.f32.mrb[0].mxu0
      %v2258 = vpop.f32.mrb[0].mxu0
      %v2259 = vadd.f32 0.0, %v2258
      %v2260 = vpop.f32.mrb[0].mxu0
      %2261 = vmatprep.mubr.bf16.mxu0 0
      %2262 = vmatmul.mubr.bf16.gmra.mrb[0].mxu0 %v2185
      %v2263 = vpop.f32.mrb[0].mxu0
      %v2264 = vadd.f32 0.0, %v2263
      %v2265 = vpop.f32.mrb[0].mxu0
      %v2266 = vpop.f32.mrb[0].mxu0
      %v2267 = vadd.f32 0.0, %v2266
      %v2268 = vpop.f32.mrb[0].mxu0
      %2269 = vmatprep.mubr.bf16.mxu0 0
      %2270 = vmatmul.mubr.bf16.gmra.mrb[0].mxu0 %v2188
      %v2271 = vpop.f32.mrb[0].mxu0
      %v2272 = vadd.f32 0.0, %v2271
      %v2273 = vpop.f32.mrb[0].mxu0
      %v2274 = vpop.f32.mrb[0].mxu0
      %v2275 = vadd.f32 0.0, %v2274
      %v2276 = vpop.f32.mrb[0].mxu0
      %2277 = vmatprep.mubr.bf16.mxu0 0
      %2278 = vmatmul.mubr.bf16.gmra.mrb[0].mxu0 %v2191
      %v2279 = vpop.f32.mrb[0].mxu0
      %v2280 = vadd.f32 0.0, %v2279
      %v2281 = vpop.f32.mrb[0].mxu0
      %v2282 = vpop.f32.mrb[0].mxu0
      %v2283 = vadd.f32 0.0, %v2282
      %v2284 = vpop.f32.mrb[0].mxu0
      %2285 = vmatprep.mubr.bf16.mxu0 0
      %2286 = vmatmul.mubr.bf16.gmra.mrb[0].mxu0 %v2194
      %v2287 = vpop.f32.mrb[0].mxu0
      %v2288 = vadd.f32 0.0, %v2287
      %v2289 = vpop.f32.mrb[0].mxu0
      %v2290 = vpop.f32.mrb[0].mxu0
      %v2291 = vadd.f32 0.0, %v2290
      %v2292 = vpop.f32.mrb[0].mxu0
      %2293 = vmatprep.mubr.bf16.mxu0 0
      %2294 = vmatmul.mubr.bf16.gmra.mrb[0].mxu0 %v2197
      %v2295 = vpop.f32.mrb[0].mxu0
      %v2296 = vadd.f32 0.0, %v2295
      %v2297 = vpop.f32.mrb[0].mxu0
      %v2298 = vpop.f32.mrb[0].mxu0
      %v2299 = vadd.f32 0.0, %v2298
      %v2300 = vpop.f32.mrb[0].mxu0
      %2301 = vmatprep.mubr.bf16.mxu0 0
      %2302 = vmatmul.mubr.bf16.gmra.mrb[0].mxu0 %v2200
      %v2303 = vpop.f32.mrb[0].mxu0
      %v2304 = vadd.f32 0.0, %v2303
      %v2305 = vpop.f32.mrb[0].mxu0
      %v2306 = vpop.f32.mrb[0].mxu0
      %v2307 = vadd.f32 0.0, %v2306
      %v2308 = vpop.f32.mrb[0].mxu0
      %2309 = vdwg.mxu0
      %v2310 = vadd.f32 %v2131, %v2240
      %v2311 = vadd.f32 %v2132, %v2243
      %v2312 = vadd.f32 %v2133, %v2248
      %v2313 = vadd.f32 %v2134, %v2251
      %v2314 = vadd.f32 %v2135, %v2256
      %v2315 = vadd.f32 %v2136, %v2259
      %v2316 = vadd.f32 %v2137, %v2264
      %v2317 = vadd.f32 %v2138, %v2267
      %v2318 = vadd.f32 %v2139, %v2272
      %v2319 = vadd.f32 %v2140, %v2275
      %v2320 = vadd.f32 %v2141, %v2280
      %v2321 = vadd.f32 %v2142, %v2283
      %v2322 = vadd.f32 %v2143, %v2288
      %v2323 = vadd.f32 %v2144, %v2291
      %v2324 = vadd.f32 %v2145, %v2296
      %v2325 = vadd.f32 %v2146, %v2299
      %v2326 = vadd.f32 %v2147, %v2304
      %v2327 = vadd.f32 %v2148, %v2307
      %v2328 = vld [vmem:[#allocation2 + $0x10] sm:$0xc]
      %v2329 = vld [vmem:[#allocation2 + $0x14] sm:$0xf]
      %v2330 = vld [vmem:[#allocation2 + $0x18] sm:$0xf]
      %v2331 = vld [vmem:[#allocation2 + $0x1c] sm:$0xf]
      %v2332 = vld [vmem:[#allocation2 + $0x20] sm:$0xf]
      %v2333 = vld [vmem:[#allocation2 + $0x24] sm:$0xf]
      %v2334 = vld [vmem:[#allocation2 + $0x28] sm:$0xf]
      %v2335 = vld [vmem:[#allocation2 + $0x2c] sm:$0xf]
      %v2336 = vld [vmem:[#allocation2 + $0x30] sm:$0xf]
      %v2337 = vld [vmem:[#allocation2 + $0x34] sm:$0xf]
      %v2338 = vld [vmem:[#allocation2 + $0x38] sm:$0xf]
      %v2339 = vld [vmem:[#allocation2 + $0x3c] sm:$0xf]
      %v2340 = vld [vmem:[#allocation2 + $0x40] sm:$0xf]
      %v2341 = vld [vmem:[#allocation2 + $0x44] sm:$0xf]
      %v2342 = vld [vmem:[#allocation2 + $0x48] sm:$0xf]
      %v2343 = vld [vmem:[#allocation2 + $0x4c] sm:$0xf]
      %v2344 = vld [vmem:[#allocation2 + $0x50] sm:$0xf]
      %v2345 = vld [vmem:[#allocation2 + $0x54] sm:$0xf]
      %v2346 = vld [vmem:[#allocation2 + $0x58] sm:$0x3]
      %s2347 = scalar_lea.vmem %s5, 12
      %v2348 = vld [vmem:[%s2347] sm:$0x3]
      %v2368 = vunpack.c.l.b16 %v2328
      %v2369 = vunpack.c.l.b16 %v2329
      %v2370 = vunpack.c.l.b16 %v2330
      %v2371 = vunpack.c.l.b16 %v2331
      %v2372 = vunpack.c.l.b16 %v2332
      %v2373 = vunpack.c.l.b16 %v2333
      %v2374 = vunpack.c.l.b16 %v2334
      %v2375 = vunpack.c.l.b16 %v2335
      %v2376 = vunpack.c.l.b16 %v2336
      %v2377 = vunpack.c.l.b16 %v2337
      %v2378 = vunpack.c.l.b16 %v2338
      %v2379 = vunpack.c.l.b16 %v2339
      %v2380 = vunpack.c.l.b16 %v2340
      %v2381 = vunpack.c.l.b16 %v2341
      %v2382 = vunpack.c.l.b16 %v2342
      %v2383 = vunpack.c.l.b16 %v2343
      %v2384 = vunpack.c.l.b16 %v2344
      %v2385 = vunpack.c.l.b16 %v2345
      %v2386 = vunpack.c.l.b16 %v2346
      %v2387 = vpack.c.b16 %v2369, %v2368
      %v2388 = vpack.c.b16 %v2371, %v2370
      %v2389 = vpack.c.b16 %v2373, %v2372
      %v2390 = vpack.c.b16 %v2375, %v2374
      %v2391 = vpack.c.b16 %v2377, %v2376
      %v2392 = vpack.c.b16 %v2379, %v2378
      %v2393 = vpack.c.b16 %v2381, %v2380
      %v2394 = vpack.c.b16 %v2383, %v2382
      %v2395 = vpack.c.b16 %v2385, %v2384
      %v2396 = vpack.c.b16 %v2386, %v2386
      %v2397 = vrot.slane %v2387, 2
      %v2398 = vrot.slane %v2388, 2
      %v2399 = vsel %vm2155, %v2397, %v2398
      %v2400 = vrot.slane %v2389, 2
      %v2401 = vsel %vm2155, %v2398, %v2400
      %v2402 = vrot.slane %v2390, 2
      %v2403 = vsel %vm2155, %v2400, %v2402
      %v2404 = vrot.slane %v2391, 2
      %v2405 = vsel %vm2155, %v2402, %v2404
      %v2406 = vrot.slane %v2392, 2
      %v2407 = vsel %vm2155, %v2404, %v2406
      %v2408 = vrot.slane %v2393, 2
      %v2409 = vsel %vm2155, %v2406, %v2408
      %v2410 = vrot.slane %v2394, 2
      %v2411 = vsel %vm2155, %v2408, %v2410
      %v2412 = vrot.slane %v2395, 2
      %v2413 = vsel %vm2155, %v2410, %v2412
      %v2414 = vrot.slane %v2396, 2
      %v2415 = vsel %vm2155, %v2412, %v2414
      %v2417 = vsel %vm1217, %v2399, 0
      %v2420 = vsel %vm1217, %v2401, 0
      %v2423 = vsel %vm1217, %v2403, 0
      %v2426 = vsel %vm1217, %v2405, 0
      %v2429 = vsel %vm1217, %v2407, 0
      %v2432 = vsel %vm1217, %v2409, 0
      %v2435 = vsel %vm1217, %v2411, 0
      %v2438 = vsel %vm1217, %v2413, 0
      %v2441 = vsel %vm1217, %v2415, 0
      %v2444 = vsel %vm1245, %v2348, 0
      %2446 = vmatprep.subr.bf16.mxu0 0
      %2447 = vmatpush1.bf16.msra.mxu0 %v2444
      %2448 = vmatprep.subr.bf16.mxu0 0
      %2449 = vmatpush1.bf16.msra.mxu0 0
      %2450 = vmatprep.subr.bf16.mxu0 0
      %2451 = vmatpush1.bf16.msra.mxu0 0
      %2452 = vmatprep.subr.bf16.mxu0 0
      %2453 = vmatpush1.bf16.msra.mxu0 0
      %2454 = vmatprep.subr.bf16.mxu0 0
      %2455 = vmatpush1.bf16.msra.mxu0 0
      %2456 = vmatprep.subr.bf16.mxu0 0
      %2457 = vmatpush1.bf16.msra.mxu0 0
      %2458 = vmatprep.subr.bf16.mxu0 0
      %2459 = vmatpush1.bf16.msra.mxu0 0
      %2460 = vmatprep.subr.bf16.mxu0 0
      %2461 = vmatpush1.bf16.msra.mxu0 0
      %2462 = vmatprep.subr.bf16.mxu0 0
      %2463 = vmatpush1.bf16.msra.mxu0 0
      %2464 = vmatprep.subr.bf16.mxu0 0
      %2465 = vmatpush1.bf16.msra.mxu0 0
      %2466 = vmatprep.subr.bf16.mxu0 0
      %2467 = vmatpush1.bf16.msra.mxu0 0
      %2468 = vmatprep.subr.bf16.mxu0 0
      %2469 = vmatpush1.bf16.msra.mxu0 0
      %2470 = vmatprep.subr.bf16.mxu0 0
      %2471 = vmatpush1.bf16.msra.mxu0 0
      %2472 = vmatprep.subr.bf16.mxu0 0
      %2473 = vmatpush1.bf16.msra.mxu0 0
      %2474 = vmatprep.subr.bf16.mxu0 0
      %2475 = vmatpush1.bf16.msra.mxu0 0
      %2476 = vmatprep.subr.bf16.mxu0 0
      %2477 = vmatpush1.bf16.msra.mxu0 0
      %2478 = vmatprep.mubr.bf16.mxu0 0
      %2479 = vmatmul.mubr.bf16.gmra.mrb[0].mxu0 %v2417
      %v2480 = vpop.f32.mrb[0].mxu0
      %v2481 = vadd.f32 0.0, %v2480
      %v2482 = vpop.f32.mrb[0].mxu0
      %v2483 = vpop.f32.mrb[0].mxu0
      %v2484 = vadd.f32 0.0, %v2483
      %v2485 = vpop.f32.mrb[0].mxu0
      %2486 = vmatprep.mubr.bf16.mxu0 0
      %2487 = vmatmul.mubr.bf16.gmra.mrb[0].mxu0 %v2420
      %v2488 = vpop.f32.mrb[0].mxu0
      %v2489 = vadd.f32 0.0, %v2488
      %v2490 = vpop.f32.mrb[0].mxu0
      %v2491 = vpop.f32.mrb[0].mxu0
      %v2492 = vadd.f32 0.0, %v2491
      %v2493 = vpop.f32.mrb[0].mxu0
      %2494 = vmatprep.mubr.bf16.mxu0 0
      %2495 = vmatmul.mubr.bf16.gmra.mrb[0].mxu0 %v2423
      %v2496 = vpop.f32.mrb[0].mxu0
      %v2497 = vadd.f32 0.0, %v2496
      %v2498 = vpop.f32.mrb[0].mxu0
      %v2499 = vpop.f32.mrb[0].mxu0
      %v2500 = vadd.f32 0.0, %v2499
      %v2501 = vpop.f32.mrb[0].mxu0
      %2502 = vmatprep.mubr.bf16.mxu0 0
      %2503 = vmatmul.mubr.bf16.gmra.mrb[0].mxu0 %v2426
      %v2504 = vpop.f32.mrb[0].mxu0
      %v2505 = vadd.f32 0.0, %v2504
      %v2506 = vpop.f32.mrb[0].mxu0
      %v2507 = vpop.f32.mrb[0].mxu0
      %v2508 = vadd.f32 0.0, %v2507
      %v2509 = vpop.f32.mrb[0].mxu0
      %2510 = vmatprep.mubr.bf16.mxu0 0
      %2511 = vmatmul.mubr.bf16.gmra.mrb[0].mxu0 %v2429
      %v2512 = vpop.f32.mrb[0].mxu0
      %v2513 = vadd.f32 0.0, %v2512
      %v2514 = vpop.f32.mrb[0].mxu0
      %v2515 = vpop.f32.mrb[0].mxu0
      %v2516 = vadd.f32 0.0, %v2515
      %v2517 = vpop.f32.mrb[0].mxu0
      %2518 = vmatprep.mubr.bf16.mxu0 0
      %2519 = vmatmul.mubr.bf16.gmra.mrb[0].mxu0 %v2432
      %v2520 = vpop.f32.mrb[0].mxu0
      %v2521 = vadd.f32 0.0, %v2520
      %v2522 = vpop.f32.mrb[0].mxu0
      %v2523 = vpop.f32.mrb[0].mxu0
      %v2524 = vadd.f32 0.0, %v2523
      %v2525 = vpop.f32.mrb[0].mxu0
      %2526 = vmatprep.mubr.bf16.mxu0 0
      %2527 = vmatmul.mubr.bf16.gmra.mrb[0].mxu0 %v2435
      %v2528 = vpop.f32.mrb[0].mxu0
      %v2529 = vadd.f32 0.0, %v2528
      %v2530 = vpop.f32.mrb[0].mxu0
      %v2531 = vpop.f32.mrb[0].mxu0
      %v2532 = vadd.f32 0.0, %v2531
      %v2533 = vpop.f32.mrb[0].mxu0
      %2534 = vmatprep.mubr.bf16.mxu0 0
      %2535 = vmatmul.mubr.bf16.gmra.mrb[0].mxu0 %v2438
      %v2536 = vpop.f32.mrb[0].mxu0
      %v2537 = vadd.f32 0.0, %v2536
      %v2538 = vpop.f32.mrb[0].mxu0
      %v2539 = vpop.f32.mrb[0].mxu0
      %v2540 = vadd.f32 0.0, %v2539
      %v2541 = vpop.f32.mrb[0].mxu0
      %2542 = vmatprep.mubr.bf16.mxu0 0
      %2543 = vmatmul.mubr.bf16.gmra.mrb[0].mxu0 %v2441
      %v2544 = vpop.f32.mrb[0].mxu0
      %v2545 = vadd.f32 0.0, %v2544
      %v2546 = vpop.f32.mrb[0].mxu0
      %v2547 = vpop.f32.mrb[0].mxu0
      %v2548 = vadd.f32 0.0, %v2547
      %v2549 = vpop.f32.mrb[0].mxu0
      %2550 = vdwg.mxu0
      %v2551 = vadd.f32 %v2310, %v2481
      %v2552 = vadd.f32 %v2311, %v2484
      %v2553 = vadd.f32 %v2312, %v2489
      %v2554 = vadd.f32 %v2313, %v2492
      %v2555 = vadd.f32 %v2314, %v2497
      %v2556 = vadd.f32 %v2315, %v2500
      %v2557 = vadd.f32 %v2316, %v2505
      %v2558 = vadd.f32 %v2317, %v2508
      %v2559 = vadd.f32 %v2318, %v2513
      %v2560 = vadd.f32 %v2319, %v2516
      %v2561 = vadd.f32 %v2320, %v2521
      %v2562 = vadd.f32 %v2321, %v2524
      %v2563 = vadd.f32 %v2322, %v2529
      %v2564 = vadd.f32 %v2323, %v2532
      %v2565 = vadd.f32 %v2324, %v2537
      %v2566 = vadd.f32 %v2325, %v2540
      %v2567 = vadd.f32 %v2326, %v2545
      %v2568 = vadd.f32 %v2327, %v2548
      %v2569 = vld [vmem:[#allocation2 + $0x58] sm:$0x7]
      %s2570 = scalar_lea.vmem %s5, 14
      %v2571 = vld [vmem:[%s2570] sm:$0x3]
      %v2573 = vunpack.c.l.b16 %v2569
      %v2574 = vpack.c.b16 %v2573, %v2573
      %vm2575 = vsmask.f32 5376
      %v2577 = vshrl.u32 %v2387, 16
      %v2579 = vrot.slane %v2577, 2
      %v2580 = vshll.u32 %v2387, 16
      %v2582 = vrot.slane %v2580, 3
      %v2583 = vor.u32 %v2579, %v2582
      %v2585 = vshrl.u32 %v2388, 16
      %v2587 = vrot.slane %v2585, 2
      %v2588 = vshll.u32 %v2388, 16
      %v2590 = vrot.slane %v2588, 3
      %v2591 = vor.u32 %v2587, %v2590
      %v2592 = vsel %vm2575, %v2583, %v2591
      %v2594 = vshrl.u32 %v2389, 16
      %v2596 = vrot.slane %v2594, 2
      %v2597 = vshll.u32 %v2389, 16
      %v2599 = vrot.slane %v2597, 3
      %v2600 = vor.u32 %v2596, %v2599
      %v2601 = vsel %vm2575, %v2591, %v2600
      %v2603 = vshrl.u32 %v2390, 16
      %v2605 = vrot.slane %v2603, 2
      %v2606 = vshll.u32 %v2390, 16
      %v2608 = vrot.slane %v2606, 3
      %v2609 = vor.u32 %v2605, %v2608
      %v2610 = vsel %vm2575, %v2600, %v2609
      %v2612 = vshrl.u32 %v2391, 16
      %v2614 = vrot.slane %v2612, 2
      %v2615 = vshll.u32 %v2391, 16
      %v2617 = vrot.slane %v2615, 3
      %v2618 = vor.u32 %v2614, %v2617
      %v2619 = vsel %vm2575, %v2609, %v2618
      %v2621 = vshrl.u32 %v2392, 16
      %v2623 = vrot.slane %v2621, 2
      %v2624 = vshll.u32 %v2392, 16
      %v2626 = vrot.slane %v2624, 3
      %v2627 = vor.u32 %v2623, %v2626
      %v2628 = vsel %vm2575, %v2618, %v2627
      %v2630 = vshrl.u32 %v2393, 16
      %v2632 = vrot.slane %v2630, 2
      %v2633 = vshll.u32 %v2393, 16
      %v2635 = vrot.slane %v2633, 3
      %v2636 = vor.u32 %v2632, %v2635
      %v2637 = vsel %vm2575, %v2627, %v2636
      %v2639 = vshrl.u32 %v2394, 16
      %v2641 = vrot.slane %v2639, 2
      %v2642 = vshll.u32 %v2394, 16
      %v2644 = vrot.slane %v2642, 3
      %v2645 = vor.u32 %v2641, %v2644
      %v2646 = vsel %vm2575, %v2636, %v2645
      %v2648 = vshrl.u32 %v2395, 16
      %v2650 = vrot.slane %v2648, 2
      %v2651 = vshll.u32 %v2395, 16
      %v2653 = vrot.slane %v2651, 3
      %v2654 = vor.u32 %v2650, %v2653
      %v2655 = vsel %vm2575, %v2645, %v2654
      %v2657 = vshrl.u32 %v2574, 16
      %v2659 = vrot.slane %v2657, 2
      %v2660 = vshll.u32 %v2574, 16
      %v2662 = vrot.slane %v2660, 3
      %v2663 = vor.u32 %v2659, %v2662
      %v2664 = vsel %vm2575, %v2654, %v2663
      %v2666 = vsel %vm1217, %v2592, 0
      %v2669 = vsel %vm1217, %v2601, 0
      %v2672 = vsel %vm1217, %v2610, 0
      %v2675 = vsel %vm1217, %v2619, 0
      %v2678 = vsel %vm1217, %v2628, 0
      %v2681 = vsel %vm1217, %v2637, 0
      %v2684 = vsel %vm1217, %v2646, 0
      %v2687 = vsel %vm1217, %v2655, 0
      %v2690 = vsel %vm1217, %v2664, 0
      %v2693 = vsel %vm1245, %v2571, 0
      %2695 = vmatprep.subr.bf16.mxu0 0
      %2696 = vmatpush1.bf16.msra.mxu0 %v2693
      %2697 = vmatprep.subr.bf16.mxu0 0
      %2698 = vmatpush1.bf16.msra.mxu0 0
      %2699 = vmatprep.subr.bf16.mxu0 0
      %2700 = vmatpush1.bf16.msra.mxu0 0
      %2701 = vmatprep.subr.bf16.mxu0 0
      %2702 = vmatpush1.bf16.msra.mxu0 0
      %2703 = vmatprep.subr.bf16.mxu0 0
      %2704 = vmatpush1.bf16.msra.mxu0 0
      %2705 = vmatprep.subr.bf16.mxu0 0
      %2706 = vmatpush1.bf16.msra.mxu0 0
      %2707 = vmatprep.subr.bf16.mxu0 0
      %2708 = vmatpush1.bf16.msra.mxu0 0
      %2709 = vmatprep.subr.bf16.mxu0 0
      %2710 = vmatpush1.bf16.msra.mxu0 0
      %2711 = vmatprep.subr.bf16.mxu0 0
      %2712 = vmatpush1.bf16.msra.mxu0 0
      %2713 = vmatprep.subr.bf16.mxu0 0
      %2714 = vmatpush1.bf16.msra.mxu0 0
      %2715 = vmatprep.subr.bf16.mxu0 0
      %2716 = vmatpush1.bf16.msra.mxu0 0
      %2717 = vmatprep.subr.bf16.mxu0 0
      %2718 = vmatpush1.bf16.msra.mxu0 0
      %2719 = vmatprep.subr.bf16.mxu0 0
      %2720 = vmatpush1.bf16.msra.mxu0 0
      %2721 = vmatprep.subr.bf16.mxu0 0
      %2722 = vmatpush1.bf16.msra.mxu0 0
      %2723 = vmatprep.subr.bf16.mxu0 0
      %2724 = vmatpush1.bf16.msra.mxu0 0
      %2725 = vmatprep.subr.bf16.mxu0 0
      %2726 = vmatpush1.bf16.msra.mxu0 0
      %2727 = vmatprep.mubr.bf16.mxu0 0
      %2728 = vmatmul.mubr.bf16.gmra.mrb[0].mxu0 %v2666
      %v2729 = vpop.f32.mrb[0].mxu0
      %v2730 = vadd.f32 0.0, %v2729
      %v2731 = vpop.f32.mrb[0].mxu0
      %v2732 = vpop.f32.mrb[0].mxu0
      %v2733 = vadd.f32 0.0, %v2732
      %v2734 = vpop.f32.mrb[0].mxu0
      %2735 = vmatprep.mubr.bf16.mxu0 0
      %2736 = vmatmul.mubr.bf16.gmra.mrb[0].mxu0 %v2669
      %v2737 = vpop.f32.mrb[0].mxu0
      %v2738 = vadd.f32 0.0, %v2737
      %v2739 = vpop.f32.mrb[0].mxu0
      %v2740 = vpop.f32.mrb[0].mxu0
      %v2741 = vadd.f32 0.0, %v2740
      %v2742 = vpop.f32.mrb[0].mxu0
      %2743 = vmatprep.mubr.bf16.mxu0 0
      %2744 = vmatmul.mubr.bf16.gmra.mrb[0].mxu0 %v2672
      %v2745 = vpop.f32.mrb[0].mxu0
      %v2746 = vadd.f32 0.0, %v2745
      %v2747 = vpop.f32.mrb[0].mxu0
      %v2748 = vpop.f32.mrb[0].mxu0
      %v2749 = vadd.f32 0.0, %v2748
      %v2750 = vpop.f32.mrb[0].mxu0
      %2751 = vmatprep.mubr.bf16.mxu0 0
      %2752 = vmatmul.mubr.bf16.gmra.mrb[0].mxu0 %v2675
      %v2753 = vpop.f32.mrb[0].mxu0
      %v2754 = vadd.f32 0.0, %v2753
      %v2755 = vpop.f32.mrb[0].mxu0
      %v2756 = vpop.f32.mrb[0].mxu0
      %v2757 = vadd.f32 0.0, %v2756
      %v2758 = vpop.f32.mrb[0].mxu0
      %2759 = vmatprep.mubr.bf16.mxu0 0
      %2760 = vmatmul.mubr.bf16.gmra.mrb[0].mxu0 %v2678
      %v2761 = vpop.f32.mrb[0].mxu0
      %v2762 = vadd.f32 0.0, %v2761
      %v2763 = vpop.f32.mrb[0].mxu0
      %v2764 = vpop.f32.mrb[0].mxu0
      %v2765 = vadd.f32 0.0, %v2764
      %v2766 = vpop.f32.mrb[0].mxu0
      %2767 = vmatprep.mubr.bf16.mxu0 0
      %2768 = vmatmul.mubr.bf16.gmra.mrb[0].mxu0 %v2681
      %v2769 = vpop.f32.mrb[0].mxu0
      %v2770 = vadd.f32 0.0, %v2769
      %v2771 = vpop.f32.mrb[0].mxu0
      %v2772 = vpop.f32.mrb[0].mxu0
      %v2773 = vadd.f32 0.0, %v2772
      %v2774 = vpop.f32.mrb[0].mxu0
      %2775 = vmatprep.mubr.bf16.mxu0 0
      %2776 = vmatmul.mubr.bf16.gmra.mrb[0].mxu0 %v2684
      %v2777 = vpop.f32.mrb[0].mxu0
      %v2778 = vadd.f32 0.0, %v2777
      %v2779 = vpop.f32.mrb[0].mxu0
      %v2780 = vpop.f32.mrb[0].mxu0
      %v2781 = vadd.f32 0.0, %v2780
      %v2782 = vpop.f32.mrb[0].mxu0
      %2783 = vmatprep.mubr.bf16.mxu0 0
      %2784 = vmatmul.mubr.bf16.gmra.mrb[0].mxu0 %v2687
      %v2785 = vpop.f32.mrb[0].mxu0
      %v2786 = vadd.f32 0.0, %v2785
      %v2787 = vpop.f32.mrb[0].mxu0
      %v2788 = vpop.f32.mrb[0].mxu0
      %v2789 = vadd.f32 0.0, %v2788
      %v2790 = vpop.f32.mrb[0].mxu0
      %2791 = vmatprep.mubr.bf16.mxu0 0
      %2792 = vmatmul.mubr.bf16.gmra.mrb[0].mxu0 %v2690
      %v2793 = vpop.f32.mrb[0].mxu0
      %v2794 = vadd.f32 0.0, %v2793
      %v2795 = vpop.f32.mrb[0].mxu0
      %v2796 = vpop.f32.mrb[0].mxu0
      %v2797 = vadd.f32 0.0, %v2796
      %v2798 = vpop.f32.mrb[0].mxu0
      %2799 = vdwg.mxu0
      %v2800 = vadd.f32 %v2551, %v2730
      %v2801 = vadd.f32 %v2552, %v2733
      %v2802 = vadd.f32 %v2553, %v2738
      %v2803 = vadd.f32 %v2554, %v2741
      %v2804 = vadd.f32 %v2555, %v2746
      %v2805 = vadd.f32 %v2556, %v2749
      %v2806 = vadd.f32 %v2557, %v2754
      %v2807 = vadd.f32 %v2558, %v2757
      %v2808 = vadd.f32 %v2559, %v2762
      %v2809 = vadd.f32 %v2560, %v2765
      %v2810 = vadd.f32 %v2561, %v2770
      %v2811 = vadd.f32 %v2562, %v2773
      %v2812 = vadd.f32 %v2563, %v2778
      %v2813 = vadd.f32 %v2564, %v2781
      %v2814 = vadd.f32 %v2565, %v2786
      %v2815 = vadd.f32 %v2566, %v2789
      %v2816 = vadd.f32 %v2567, %v2794
      %v2817 = vadd.f32 %v2568, %v2797
      %v2818 = vld [vmem:[#allocation2 + $0x10] sm:$0x8]
      %s2819 = scalar_lea.vmem %s5, 16
      %v2820 = vld [vmem:[%s2819] sm:$0x3]
      %v2822 = vunpack.c.l.b16 %v2818
      %v2823 = vpack.c.b16 %v2369, %v2822
      %vm2824 = vcmask 1044480
      %v2825 = vrot.slane %v2823, 3
      %v2826 = vrot.slane %v2388, 3
      %v2827 = vsel %vm2824, %v2825, %v2826
      %v2828 = vrot.slane %v2389, 3
      %v2829 = vsel %vm2824, %v2826, %v2828
      %v2830 = vrot.slane %v2390, 3
      %v2831 = vsel %vm2824, %v2828, %v2830
      %v2832 = vrot.slane %v2391, 3
      %v2833 = vsel %vm2824, %v2830, %v2832
      %v2834 = vrot.slane %v2392, 3
      %v2835 = vsel %vm2824, %v2832, %v2834
      %v2836 = vrot.slane %v2393, 3
      %v2837 = vsel %vm2824, %v2834, %v2836
      %v2838 = vrot.slane %v2394, 3
      %v2839 = vsel %vm2824, %v2836, %v2838
      %v2840 = vrot.slane %v2395, 3
      %v2841 = vsel %vm2824, %v2838, %v2840
      %v2842 = vrot.slane %v2574, 3
      %v2843 = vsel %vm2824, %v2840, %v2842
      %v2845 = vsel %vm1217, %v2827, 0
      %v2848 = vsel %vm1217, %v2829, 0
      %v2851 = vsel %vm1217, %v2831, 0
      %v2854 = vsel %vm1217, %v2833, 0
      %v2857 = vsel %vm1217, %v2835, 0
      %v2860 = vsel %vm1217, %v2837, 0
      %v2863 = vsel %vm1217, %v2839, 0
      %v2866 = vsel %vm1217, %v2841, 0
      %v2869 = vsel %vm1217, %v2843, 0
      %v2872 = vsel %vm1245, %v2820, 0
      %2874 = vmatprep.subr.bf16.mxu0 0
      %2875 = vmatpush1.bf16.msra.mxu0 %v2872
      %2876 = vmatprep.subr.bf16.mxu0 0
      %2877 = vmatpush1.bf16.msra.mxu0 0
      %2878 = vmatprep.subr.bf16.mxu0 0
      %2879 = vmatpush1.bf16.msra.mxu0 0
      %2880 = vmatprep.subr.bf16.mxu0 0
      %2881 = vmatpush1.bf16.msra.mxu0 0
      %2882 = vmatprep.subr.bf16.mxu0 0
      %2883 = vmatpush1.bf16.msra.mxu0 0
      %2884 = vmatprep.subr.bf16.mxu0 0
      %2885 = vmatpush1.bf16.msra.mxu0 0
      %2886 = vmatprep.subr.bf16.mxu0 0
      %2887 = vmatpush1.bf16.msra.mxu0 0
      %2888 = vmatprep.subr.bf16.mxu0 0
      %2889 = vmatpush1.bf16.msra.mxu0 0
      %2890 = vmatprep.subr.bf16.mxu0 0
      %2891 = vmatpush1.bf16.msra.mxu0 0
      %2892 = vmatprep.subr.bf16.mxu0 0
      %2893 = vmatpush1.bf16.msra.mxu0 0
      %2894 = vmatprep.subr.bf16.mxu0 0
      %2895 = vmatpush1.bf16.msra.mxu0 0
      %2896 = vmatprep.subr.bf16.mxu0 0
      %2897 = vmatpush1.bf16.msra.mxu0 0
      %2898 = vmatprep.subr.bf16.mxu0 0
      %2899 = vmatpush1.bf16.msra.mxu0 0
      %2900 = vmatprep.subr.bf16.mxu0 0
      %2901 = vmatpush1.bf16.msra.mxu0 0
      %2902 = vmatprep.subr.bf16.mxu0 0
      %2903 = vmatpush1.bf16.msra.mxu0 0
      %2904 = vmatprep.subr.bf16.mxu0 0
      %2905 = vmatpush1.bf16.msra.mxu0 0
      %2906 = vmatprep.mubr.bf16.mxu0 0
      %2907 = vmatmul.mubr.bf16.gmra.mrb[0].mxu0 %v2845
      %v2908 = vpop.f32.mrb[0].mxu0
      %v2909 = vadd.f32 0.0, %v2908
      %v2910 = vpop.f32.mrb[0].mxu0
      %v2911 = vpop.f32.mrb[0].mxu0
      %v2912 = vadd.f32 0.0, %v2911
      %v2913 = vpop.f32.mrb[0].mxu0
      %2914 = vmatprep.mubr.bf16.mxu0 0
      %2915 = vmatmul.mubr.bf16.gmra.mrb[0].mxu0 %v2848
      %v2916 = vpop.f32.mrb[0].mxu0
      %v2917 = vadd.f32 0.0, %v2916
      %v2918 = vpop.f32.mrb[0].mxu0
      %v2919 = vpop.f32.mrb[0].mxu0
      %v2920 = vadd.f32 0.0, %v2919
      %v2921 = vpop.f32.mrb[0].mxu0
      %2922 = vmatprep.mubr.bf16.mxu0 0
      %2923 = vmatmul.mubr.bf16.gmra.mrb[0].mxu0 %v2851
      %v2924 = vpop.f32.mrb[0].mxu0
      %v2925 = vadd.f32 0.0, %v2924
      %v2926 = vpop.f32.mrb[0].mxu0
      %v2927 = vpop.f32.mrb[0].mxu0
      %v2928 = vadd.f32 0.0, %v2927
      %v2929 = vpop.f32.mrb[0].mxu0
      %2930 = vmatprep.mubr.bf16.mxu0 0
      %2931 = vmatmul.mubr.bf16.gmra.mrb[0].mxu0 %v2854
      %v2932 = vpop.f32.mrb[0].mxu0
      %v2933 = vadd.f32 0.0, %v2932
      %v2934 = vpop.f32.mrb[0].mxu0
      %v2935 = vpop.f32.mrb[0].mxu0
      %v2936 = vadd.f32 0.0, %v2935
      %v2937 = vpop.f32.mrb[0].mxu0
      %2938 = vmatprep.mubr.bf16.mxu0 0
      %2939 = vmatmul.mubr.bf16.gmra.mrb[0].mxu0 %v2857
      %v2940 = vpop.f32.mrb[0].mxu0
      %v2941 = vadd.f32 0.0, %v2940
      %v2942 = vpop.f32.mrb[0].mxu0
      %v2943 = vpop.f32.mrb[0].mxu0
      %v2944 = vadd.f32 0.0, %v2943
      %v2945 = vpop.f32.mrb[0].mxu0
      %2946 = vmatprep.mubr.bf16.mxu0 0
      %2947 = vmatmul.mubr.bf16.gmra.mrb[0].mxu0 %v2860
      %v2948 = vpop.f32.mrb[0].mxu0
      %v2949 = vadd.f32 0.0, %v2948
      %v2950 = vpop.f32.mrb[0].mxu0
      %v2951 = vpop.f32.mrb[0].mxu0
      %v2952 = vadd.f32 0.0, %v2951
      %v2953 = vpop.f32.mrb[0].mxu0
      %2954 = vmatprep.mubr.bf16.mxu0 0
      %2955 = vmatmul.mubr.bf16.gmra.mrb[0].mxu0 %v2863
      %v2956 = vpop.f32.mrb[0].mxu0
      %v2957 = vadd.f32 0.0, %v2956
      %v2958 = vpop.f32.mrb[0].mxu0
      %v2959 = vpop.f32.mrb[0].mxu0
      %v2960 = vadd.f32 0.0, %v2959
      %v2961 = vpop.f32.mrb[0].mxu0
      %2962 = vmatprep.mubr.bf16.mxu0 0
      %2963 = vmatmul.mubr.bf16.gmra.mrb[0].mxu0 %v2866
      %v2964 = vpop.f32.mrb[0].mxu0
      %v2965 = vadd.f32 0.0, %v2964
      %v2966 = vpop.f32.mrb[0].mxu0
      %v2967 = vpop.f32.mrb[0].mxu0
      %v2968 = vadd.f32 0.0, %v2967
      %v2969 = vpop.f32.mrb[0].mxu0
      %2970 = vmatprep.mubr.bf16.mxu0 0
      %2971 = vmatmul.mubr.bf16.gmra.mrb[0].mxu0 %v2869
      %v2972 = vpop.f32.mrb[0].mxu0
      %v2973 = vadd.f32 0.0, %v2972
      %v2974 = vpop.f32.mrb[0].mxu0
      %v2975 = vpop.f32.mrb[0].mxu0
      %v2976 = vadd.f32 0.0, %v2975
      %v2977 = vpop.f32.mrb[0].mxu0
      %2978 = vdwg.mxu0
      %v2979 = vadd.f32 %v2800, %v2909
      %v2980 = vadd.f32 %v2801, %v2912
      %v2981 = vadd.f32 %v2802, %v2917
      %v2982 = vadd.f32 %v2803, %v2920
      %v2983 = vadd.f32 %v2804, %v2925
      %v2984 = vadd.f32 %v2805, %v2928
      %v2985 = vadd.f32 %v2806, %v2933
      %v2986 = vadd.f32 %v2807, %v2936
      %v2987 = vadd.f32 %v2808, %v2941
      %v2988 = vadd.f32 %v2809, %v2944
      %v2989 = vadd.f32 %v2810, %v2949
      %v2990 = vadd.f32 %v2811, %v2952
      %v2991 = vadd.f32 %v2812, %v2957
      %v2992 = vadd.f32 %v2813, %v2960
      %v2993 = vadd.f32 %v2814, %v2965
      %v2994 = vadd.f32 %v2815, %v2968
      %v2995 = vadd.f32 %v2816, %v2973
      %v2996 = vadd.f32 %v2817, %v2976
      %v2997 = vld [vmem:[%s6] sm:$0x1]
      %v2999 = vlaneseq
      %v3000 = vshrl.u32 %v2999, 7
      %v3001 = vsub.s32 0, %v3000
      %v3002 = vrot.slane %v2997, %v3001
      %v3004 = vadd.f32 %v2979, %v3002
      %v3005 = vadd.f32 %v2980, %v3002
      %v3006 = vpack.c.bf16 %v3005, %v3004
      %v3008 = vunpack.c.l.b16 %v3006
      %v3009 = vunpack.c.h.b16 %v3006
      %v3010 = vpack.c.b16 %v3008, %v3008
      %v3011 = vpack.c.b16 %v3009, %v3009
      %vm3014 = vcmask 60416
      %3015 = vst.msk [vmem:[%s522] sm:$0xf] %vm3014, %v3010
      %3016 = vst.msk [vmem:[%s522 + $0x4] sm:$0xf] %vm3014, %v3011
      %vm3017 = vcmask 64512
      %v3018 = vsel %vm3017, %v3004, 0.0
      %v3019 = vsel %vm3017, %v3005, 0.0
      %v3020 = vadd.f32 %v3018, %v3019
      %v3021 = vrot.slane %v3020, 4
      %v3022 = vadd.f32 %v3020, %v3021
      %v3023 = vrot.slane %v3022, 2
      %v3024 = vadd.f32 %v3022, %v3023
      %v3025 = vrot.slane %v3024, 1
      %v3026 = vadd.f32 %v3024, %v3025
      %v3027 = vadd.f32 %v3026, 0.0
      %v3028 = vmul.f32 %v3004, %v3004
      %v3029 = vmul.f32 %v3005, %v3005
      %v3030 = vsel %vm3017, %v3028, 0.0
      %v3031 = vsel %vm3017, %v3029, 0.0
      %v3032 = vadd.f32 %v3030, %v3031
      %v3033 = vrot.slane %v3032, 4
      %v3034 = vadd.f32 %v3032, %v3033
      %v3035 = vrot.slane %v3034, 2
      %v3036 = vadd.f32 %v3034, %v3035
      %v3037 = vrot.slane %v3036, 1
      %v3038 = vadd.f32 %v3036, %v3037
      %v3039 = vadd.f32 %v3038, 0.0
      %v3040 = vadd.f32 %v2981, %v3002
      %v3041 = vadd.f32 %v2982, %v3002
      %v3042 = vadd.f32 %v2983, %v3002
      %v3043 = vpack.c.bf16 %v3041, %v3040
      %v3044 = vpack.c.bf16 %v3042, %v3042
      %v3047 = vunpack.c.l.b16 %v3043
      %v3048 = vunpack.c.h.b16 %v3043
      %v3049 = vunpack.c.l.b16 %v3044
      %v3050 = vpack.c.b16 %v3047, %v3047
      %v3051 = vpack.c.b16 %v3048, %v3048
      %v3052 = vpack.c.b16 %v3049, %v3049
      %vm3053 = vcmask 1042432
      %vm3054 = vcmask 1046532
      %vm3055 = vmor %vm3053, %vm3054
      %v3056 = vrot.slane %v3050, 5
      %v3057 = vrot.slane %v3056, 4
      %v3058 = vrot.slane %v3051, 5
      %v3059 = vsel %vm3055, %v3057, %v3058
      %v3060 = vrot.slane %v3058, 4
      %v3061 = vrot.slane %v3052, 5
      %v3062 = vsel %vm3055, %v3060, %v3061
      %s3065 = scalar_lea.vmem %s522, 8
      %3066 = vst.msk [vmem:[%s3065] sm:$0xf] %vm3014, %v3059
      %3067 = vst.msk [vmem:[%s3065 + $0x4] sm:$0xf] %vm3014, %v3062
      %vm3071 = vcmask 1045504
      %v3072 = vrot.slane %v3040, 2
      %v3073 = vrot.slane %v3041, 2
      %v3074 = vsel %vm3071, %v3072, %v3073
      %v3075 = vrot.slane %v3042, 2
      %v3076 = vsel %vm3071, %v3073, %v3075
      %v3079 = vsel %vm3017, %v3074, 0.0
      %v3080 = vsel %vm3017, %v3076, 0.0
      %v3081 = vadd.f32 %v3079, %v3080
      %v3082 = vrot.slane %v3081, 4
      %v3083 = vadd.f32 %v3081, %v3082
      %v3084 = vrot.slane %v3083, 2
      %v3085 = vadd.f32 %v3083, %v3084
      %v3086 = vrot.slane %v3085, 1
      %v3087 = vadd.f32 %v3085, %v3086
      %v3088 = vadd.f32 %v3027, %v3087
      %v3089 = vmul.f32 %v3040, %v3040
      %v3090 = vmul.f32 %v3041, %v3041
      %v3091 = vmul.f32 %v3042, %v3042
      %v3095 = vrot.slane %v3089, 2
      %v3096 = vrot.slane %v3090, 2
      %v3097 = vsel %vm3071, %v3095, %v3096
      %v3098 = vrot.slane %v3091, 2
      %v3099 = vsel %vm3071, %v3096, %v3098
      %v3102 = vsel %vm3017, %v3097, 0.0
      %v3103 = vsel %vm3017, %v3099, 0.0
      %v3104 = vadd.f32 %v3102, %v3103
      %v3105 = vrot.slane %v3104, 4
      %v3106 = vadd.f32 %v3104, %v3105
      %v3107 = vrot.slane %v3106, 2
      %v3108 = vadd.f32 %v3106, %v3107
      %v3109 = vrot.slane %v3108, 1
      %v3110 = vadd.f32 %v3108, %v3109
      %v3111 = vadd.f32 %v3039, %v3110
      %v3112 = vadd.f32 %v2984, %v3002
      %v3113 = vadd.f32 %v2985, %v3002
      %v3114 = vpack.c.bf16 %v3112, %v3042
      %v3115 = vpack.c.bf16 %v3113, %v3113
      %v3118 = vunpack.c.l.b16 %v3114
      %v3119 = vunpack.c.h.b16 %v3114
      %v3120 = vunpack.c.l.b16 %v3115
      %v3121 = vpack.c.b16 %v3118, %v3118
      %v3122 = vpack.c.b16 %v3119, %v3119
      %v3123 = vpack.c.b16 %v3120, %v3120
      %vm3124 = vcmask 1041408
      %vm3125 = vcmask 1045508
      %vm3126 = vmor %vm3124, %vm3125
      %v3127 = vrot.slane %v3121, 6
      %v3128 = vrot.slane %v3127, 4
      %v3129 = vrot.slane %v3122, 6
      %v3130 = vsel %vm3126, %v3128, %v3129
      %v3131 = vrot.slane %v3129, 4
      %v3132 = vrot.slane %v3123, 6
      %v3133 = vsel %vm3126, %v3131, %v3132
      %s3136 = scalar_lea.vmem %s522, 16
      %3137 = vst.msk [vmem:[%s3136] sm:$0xf] %vm3014, %v3130
      %3138 = vst.msk [vmem:[%s3136 + $0x4] sm:$0xf] %vm3014, %v3133
      %vm3141 = vcmask 1043456
      %v3142 = vrot.slane %v3042, 4
      %v3143 = vrot.slane %v3112, 4
      %v3144 = vsel %vm3141, %v3142, %v3143
      %v3145 = vrot.slane %v3113, 4
      %v3146 = vsel %vm3141, %v3143, %v3145
      %v3149 = vsel %vm3017, %v3144, 0.0
      %v3150 = vsel %vm3017, %v3146, 0.0
      %v3151 = vadd.f32 %v3149, %v3150
      %v3152 = vrot.slane %v3151, 4
      %v3153 = vadd.f32 %v3151, %v3152
      %v3154 = vrot.slane %v3153, 2
      %v3155 = vadd.f32 %v3153, %v3154
      %v3156 = vrot.slane %v3155, 1
      %v3157 = vadd.f32 %v3155, %v3156
      %v3158 = vadd.f32 %v3088, %v3157
      %v3159 = vmul.f32 %v3112, %v3112
      %v3160 = vmul.f32 %v3113, %v3113
      %v3163 = vrot.slane %v3091, 4
      %v3164 = vrot.slane %v3159, 4
      %v3165 = vsel %vm3141, %v3163, %v3164
      %v3166 = vrot.slane %v3160, 4
      %v3167 = vsel %vm3141, %v3164, %v3166
      %v3170 = vsel %vm3017, %v3165, 0.0
      %v3171 = vsel %vm3017, %v3167, 0.0
      %v3172 = vadd.f32 %v3170, %v3171
      %v3173 = vrot.slane %v3172, 4
      %v3174 = vadd.f32 %v3172, %v3173
      %v3175 = vrot.slane %v3174, 2
      %v3176 = vadd.f32 %v3174, %v3175
      %v3177 = vrot.slane %v3176, 1
      %v3178 = vadd.f32 %v3176, %v3177
      %v3179 = vadd.f32 %v3111, %v3178
      %v3180 = vadd.f32 %v2986, %v3002
      %v3181 = vadd.f32 %v2987, %v3002
      %v3182 = vpack.c.bf16 %v3180, %v3113
      %v3183 = vpack.c.bf16 %v3181, %v3181
      %v3186 = vunpack.c.l.b16 %v3182
      %v3187 = vunpack.c.h.b16 %v3182
      %v3188 = vunpack.c.l.b16 %v3183
      %v3189 = vpack.c.b16 %v3186, %v3186
      %v3190 = vpack.c.b16 %v3187, %v3187
      %v3191 = vpack.c.b16 %v3188, %v3188
      %vm3192 = vcmask 1040384
      %vm3193 = vcmask 1044484
      %vm3194 = vmor %vm3192, %vm3193
      %v3195 = vrot.slane %v3189, 7
      %v3196 = vrot.slane %v3195, 4
      %v3197 = vrot.slane %v3190, 7
      %v3198 = vsel %vm3194, %v3196, %v3197
      %v3199 = vrot.slane %v3197, 4
      %v3200 = vrot.slane %v3191, 7
      %v3201 = vsel %vm3194, %v3199, %v3200
      %s3204 = scalar_lea.vmem %s522, 24
      %3205 = vst.msk [vmem:[%s3204] sm:$0xf] %vm3014, %v3198
      %3206 = vst.msk [vmem:[%s3204 + $0x4] sm:$0xf] %vm3014, %v3201
      %v3209 = vrot.slane %v3113, 6
      %v3210 = vrot.slane %v3180, 6
      %v3211 = vsel %vm1245, %v3209, %v3210
      %v3212 = vrot.slane %v3181, 6
      %v3213 = vsel %vm1245, %v3210, %v3212
      %v3216 = vsel %vm3017, %v3211, 0.0
      %v3217 = vsel %vm3017, %v3213, 0.0
      %v3218 = vadd.f32 %v3216, %v3217
      %v3219 = vrot.slane %v3218, 4
      %v3220 = vadd.f32 %v3218, %v3219
      %v3221 = vrot.slane %v3220, 2
      %v3222 = vadd.f32 %v3220, %v3221
      %v3223 = vrot.slane %v3222, 1
      %v3224 = vadd.f32 %v3222, %v3223
      %v3225 = vadd.f32 %v3158, %v3224
      %v3226 = vmul.f32 %v3180, %v3180
      %v3227 = vmul.f32 %v3181, %v3181
      %v3230 = vrot.slane %v3160, 6
      %v3231 = vrot.slane %v3226, 6
      %v3232 = vsel %vm1245, %v3230, %v3231
      %v3233 = vrot.slane %v3227, 6
      %v3234 = vsel %vm1245, %v3231, %v3233
      %v3237 = vsel %vm3017, %v3232, 0.0
      %v3238 = vsel %vm3017, %v3234, 0.0
      %v3239 = vadd.f32 %v3237, %v3238
      %v3240 = vrot.slane %v3239, 4
      %v3241 = vadd.f32 %v3239, %v3240
      %v3242 = vrot.slane %v3241, 2
      %v3243 = vadd.f32 %v3241, %v3242
      %v3244 = vrot.slane %v3243, 1
      %v3245 = vadd.f32 %v3243, %v3244
      %v3246 = vadd.f32 %v3179, %v3245
      %v3247 = vadd.f32 %v2988, %v3002
      %v3248 = vadd.f32 %v2989, %v3002
      %v3249 = vpack.c.bf16 %v3248, %v3247
      %v3251 = vunpack.c.l.b16 %v3249
      %v3252 = vunpack.c.h.b16 %v3249
      %v3253 = vpack.c.b16 %v3251, %v3251
      %v3254 = vpack.c.b16 %v3252, %v3252
      %s3257 = scalar_lea.vmem %s522, 32
      %3258 = vst.msk [vmem:[%s3257] sm:$0xf] %vm3014, %v3253
      %3259 = vst.msk [vmem:[%s3257 + $0x4] sm:$0xf] %vm3014, %v3254
      %v3260 = vsel %vm3017, %v3247, 0.0
      %v3261 = vsel %vm3017, %v3248, 0.0
      %v3262 = vadd.f32 %v3260, %v3261
      %v3263 = vrot.slane %v3262, 4
      %v3264 = vadd.f32 %v3262, %v3263
      %v3265 = vrot.slane %v3264, 2
      %v3266 = vadd.f32 %v3264, %v3265
      %v3267 = vrot.slane %v3266, 1
      %v3268 = vadd.f32 %v3266, %v3267
      %v3269 = vadd.f32 %v3225, %v3268
      %v3270 = vmul.f32 %v3247, %v3247
      %v3271 = vmul.f32 %v3248, %v3248
      %v3272 = vsel %vm3017, %v3270, 0.0
      %v3273 = vsel %vm3017, %v3271, 0.0
      %v3274 = vadd.f32 %v3272, %v3273
      %v3275 = vrot.slane %v3274, 4
      %v3276 = vadd.f32 %v3274, %v3275
      %v3277 = vrot.slane %v3276, 2
      %v3278 = vadd.f32 %v3276, %v3277
      %v3279 = vrot.slane %v3278, 1
      %v3280 = vadd.f32 %v3278, %v3279
      %v3281 = vadd.f32 %v3246, %v3280
      %v3282 = vadd.f32 %v2990, %v3002
      %v3283 = vadd.f32 %v2991, %v3002
      %v3284 = vadd.f32 %v2992, %v3002
      %v3285 = vpack.c.bf16 %v3283, %v3282
      %v3286 = vpack.c.bf16 %v3284, %v3284
      %v3289 = vunpack.c.l.b16 %v3285
      %v3290 = vunpack.c.h.b16 %v3285
      %v3291 = vunpack.c.l.b16 %v3286
      %v3292 = vpack.c.b16 %v3289, %v3289
      %v3293 = vpack.c.b16 %v3290, %v3290
      %v3294 = vpack.c.b16 %v3291, %v3291
      %v3295 = vrot.slane %v3292, 5
      %v3296 = vrot.slane %v3295, 4
      %v3297 = vrot.slane %v3293, 5
      %v3298 = vsel %vm3055, %v3296, %v3297
      %v3299 = vrot.slane %v3297, 4
      %v3300 = vrot.slane %v3294, 5
      %v3301 = vsel %vm3055, %v3299, %v3300
      %s3304 = scalar_lea.vmem %s522, 40
      %3305 = vst.msk [vmem:[%s3304] sm:$0xf] %vm3014, %v3298
      %3306 = vst.msk [vmem:[%s3304 + $0x4] sm:$0xf] %vm3014, %v3301
      %v3310 = vrot.slane %v3282, 2
      %v3311 = vrot.slane %v3283, 2
      %v3312 = vsel %vm3071, %v3310, %v3311
      %v3313 = vrot.slane %v3284, 2
      %v3314 = vsel %vm3071, %v3311, %v3313
      %v3317 = vsel %vm3017, %v3312, 0.0
      %v3318 = vsel %vm3017, %v3314, 0.0
      %v3319 = vadd.f32 %v3317, %v3318
      %v3320 = vrot.slane %v3319, 4
      %v3321 = vadd.f32 %v3319, %v3320
      %v3322 = vrot.slane %v3321, 2
      %v3323 = vadd.f32 %v3321, %v3322
      %v3324 = vrot.slane %v3323, 1
      %v3325 = vadd.f32 %v3323, %v3324
      %v3326 = vadd.f32 %v3269, %v3325
      %v3327 = vmul.f32 %v3282, %v3282
      %v3328 = vmul.f32 %v3283, %v3283
      %v3329 = vmul.f32 %v3284, %v3284
      %v3333 = vrot.slane %v3327, 2
      %v3334 = vrot.slane %v3328, 2
      %v3335 = vsel %vm3071, %v3333, %v3334
      %v3336 = vrot.slane %v3329, 2
      %v3337 = vsel %vm3071, %v3334, %v3336
      %v3340 = vsel %vm3017, %v3335, 0.0
      %v3341 = vsel %vm3017, %v3337, 0.0
      %v3342 = vadd.f32 %v3340, %v3341
      %v3343 = vrot.slane %v3342, 4
      %v3344 = vadd.f32 %v3342, %v3343
      %v3345 = vrot.slane %v3344, 2
      %v3346 = vadd.f32 %v3344, %v3345
      %v3347 = vrot.slane %v3346, 1
      %v3348 = vadd.f32 %v3346, %v3347
      %v3349 = vadd.f32 %v3281, %v3348
      %v3350 = vadd.f32 %v2993, %v3002
      %v3351 = vadd.f32 %v2994, %v3002
      %v3352 = vpack.c.bf16 %v3350, %v3284
      %v3353 = vpack.c.bf16 %v3351, %v3351
      %v3356 = vunpack.c.l.b16 %v3352
      %v3357 = vunpack.c.h.b16 %v3352
      %v3358 = vunpack.c.l.b16 %v3353
      %v3359 = vpack.c.b16 %v3356, %v3356
      %v3360 = vpack.c.b16 %v3357, %v3357
      %v3361 = vpack.c.b16 %v3358, %v3358
      %v3362 = vrot.slane %v3359, 6
      %v3363 = vrot.slane %v3362, 4
      %v3364 = vrot.slane %v3360, 6
      %v3365 = vsel %vm3126, %v3363, %v3364
      %v3366 = vrot.slane %v3364, 4
      %v3367 = vrot.slane %v3361, 6
      %v3368 = vsel %vm3126, %v3366, %v3367
      %s3371 = scalar_lea.vmem %s522, 48
      %3372 = vst.msk [vmem:[%s3371] sm:$0xf] %vm3014, %v3365
      %3373 = vst.msk [vmem:[%s3371 + $0x4] sm:$0xf] %vm3014, %v3368
      %v3376 = vrot.slane %v3284, 4
      %v3377 = vrot.slane %v3350, 4
      %v3378 = vsel %vm3141, %v3376, %v3377
      %v3379 = vrot.slane %v3351, 4
      %v3380 = vsel %vm3141, %v3377, %v3379
      %v3383 = vsel %vm3017, %v3378, 0.0
      %v3384 = vsel %vm3017, %v3380, 0.0
      %v3385 = vadd.f32 %v3383, %v3384
      %v3386 = vrot.slane %v3385, 4
      %v3387 = vadd.f32 %v3385, %v3386
      %v3388 = vrot.slane %v3387, 2
      %v3389 = vadd.f32 %v3387, %v3388
      %v3390 = vrot.slane %v3389, 1
      %v3391 = vadd.f32 %v3389, %v3390
      %v3392 = vadd.f32 %v3326, %v3391
      %v3393 = vmul.f32 %v3350, %v3350
      %v3394 = vmul.f32 %v3351, %v3351
      %v3397 = vrot.slane %v3329, 4
      %v3398 = vrot.slane %v3393, 4
      %v3399 = vsel %vm3141, %v3397, %v3398
      %v3400 = vrot.slane %v3394, 4
      %v3401 = vsel %vm3141, %v3398, %v3400
      %v3404 = vsel %vm3017, %v3399, 0.0
      %v3405 = vsel %vm3017, %v3401, 0.0
      %v3406 = vadd.f32 %v3404, %v3405
      %v3407 = vrot.slane %v3406, 4
      %v3408 = vadd.f32 %v3406, %v3407
      %v3409 = vrot.slane %v3408, 2
      %v3410 = vadd.f32 %v3408, %v3409
      %v3411 = vrot.slane %v3410, 1
      %v3412 = vadd.f32 %v3410, %v3411
      %v3413 = vadd.f32 %v3349, %v3412
      %v3414 = vadd.f32 %v2995, %v3002
      %v3415 = vadd.f32 %v2996, %v3002
      %v3416 = vpack.c.bf16 %v3414, %v3351
      %v3417 = vpack.c.bf16 %v3415, %v3415
      %v3420 = vunpack.c.l.b16 %v3416
      %v3421 = vunpack.c.h.b16 %v3416
      %v3422 = vunpack.c.l.b16 %v3417
      %v3423 = vpack.c.b16 %v3420, %v3420
      %v3424 = vpack.c.b16 %v3421, %v3421
      %v3425 = vpack.c.b16 %v3422, %v3422
      %v3426 = vrot.slane %v3423, 7
      %v3427 = vrot.slane %v3426, 4
      %v3428 = vrot.slane %v3424, 7
      %v3429 = vsel %vm3194, %v3427, %v3428
      %v3430 = vrot.slane %v3428, 4
      %v3431 = vrot.slane %v3425, 7
      %v3432 = vsel %vm3194, %v3430, %v3431
      %s3435 = scalar_lea.vmem %s522, 56
      %3436 = vst.msk [vmem:[%s3435] sm:$0xf] %vm3014, %v3429
      %3437 = vst.msk [vmem:[%s3435 + $0x4] sm:$0xf] %vm3014, %v3432
      %v3440 = vrot.slane %v3351, 6
      %v3441 = vrot.slane %v3414, 6
      %v3442 = vsel %vm1245, %v3440, %v3441
      %v3443 = vrot.slane %v3415, 6
      %v3444 = vsel %vm1245, %v3441, %v3443
      %v3447 = vsel %vm3017, %v3442, 0.0
      %v3448 = vsel %vm3017, %v3444, 0.0
      %v3449 = vadd.f32 %v3447, %v3448
      %v3450 = vrot.slane %v3449, 4
      %v3451 = vadd.f32 %v3449, %v3450
      %v3452 = vrot.slane %v3451, 2
      %v3453 = vadd.f32 %v3451, %v3452
      %v3454 = vrot.slane %v3453, 1
      %v3455 = vadd.f32 %v3453, %v3454
      %v3456 = vadd.f32 %v3392, %v3455
      %v3457 = vmul.f32 %v3414, %v3414
      %v3458 = vmul.f32 %v3415, %v3415
      %v3461 = vrot.slane %v3394, 6
      %v3462 = vrot.slane %v3457, 6
      %v3463 = vsel %vm1245, %v3461, %v3462
      %v3464 = vrot.slane %v3458, 6
      %v3465 = vsel %vm1245, %v3462, %v3464
      %v3468 = vsel %vm3017, %v3463, 0.0
      %v3469 = vsel %vm3017, %v3465, 0.0
      %v3470 = vadd.f32 %v3468, %v3469
      %v3471 = vrot.slane %v3470, 4
      %v3472 = vadd.f32 %v3470, %v3471
      %v3473 = vrot.slane %v3472, 2
      %v3474 = vadd.f32 %v3472, %v3473
      %v3475 = vrot.slane %v3474, 1
      %v3476 = vadd.f32 %v3474, %v3475
      %v3477 = vadd.f32 %v3413, %v3476
      %vm3478 = vcmask 57344
      %3479 = vst.msk [vmem:[%s530] sm:$0x1] %vm3478, %v3456
      %3480 = vst.msk [vmem:[%s537] sm:$0x1] %vm3478, %v3477
      %s3481 = smul.u32 8, %s26
      %p3482 = scmp.lt.s32.totalorder %s25, 1
      %s3483 = scalar_select %p3482, %s25, 1
      %p3484 = scmp.lt.s32.totalorder %s3481, 15
      %s3485 = scalar_select %p3484, %s3481, 15
      %s3486 = smul.addr %s3485, 2
      %s3487 = smul.addr %s3483, 32
      %s3488 = sadd.s32 %s3486, %s3487
      %s3489 = smul.addr %s3488, 4
      %s3490 = scalar_lea.vmem %s7, %s3489
      %p3491 = scmp.lt.s32.totalorder %s25, 1
      %s3492 = scalar_select %p3491, %s25, 1
      %p3493 = scmp.lt.s32.totalorder %s26, 1
      %s3494 = scalar_select %p3493, %s26, 1
      %s3495 = smul.addr %s3492, 2
      %s3496 = sadd.s32 %s3494, %s3495
      %s3497 = scalar_lea.vmem %s8, %s3496
      %p3498 = scmp.lt.s32.totalorder %s25, 1
      %s3499 = scalar_select %p3498, %s25, 1
      %p3500 = scmp.lt.s32.totalorder %s26, 1
      %s3501 = scalar_select %p3500, %s26, 1
      %s3502 = smul.addr %s3499, 2
      %s3503 = sadd.s32 %s3501, %s3502
      %s3504 = scalar_lea.vmem %s9, %s3503
      // Predicated region
      $region49: #{double_conv_forward.3} parent=47 // pred_check
        %p3505 = pneg %p237
      $region50: #{double_conv_forward.3} parent=47 // pred_check_branch
        %3507 = sbr.rel (%p3505) target = $region52
      $region51: #{double_conv_forward.3} parent=47 // pred_region
        %s3508 = smul.u32 8, %s26
      $region52: #{double_conv_forward.3} parent=47 // pred_fallthru
        _
      // Predicated region
      $region53: #{double_conv_forward.3} parent=47 // pred_check
        %p3509 = pneg %p265
      $region54: #{double_conv_forward.3} parent=47 // pred_check_branch
        %3511 = sbr.rel (%p3509) target = $region56
      $region55: #{double_conv_forward.3} parent=47 // pred_region
        _
      $region56: #{double_conv_forward.3} parent=47 // pred_fallthru
        _
      // Predicated region
      $region57: #{double_conv_forward.3} parent=47 // pred_check
        %p3512 = pneg %p293
      $region58: #{double_conv_forward.3} parent=47 // pred_check_branch
        %3514 = sbr.rel (%p3512) target = $region60
      $region59: #{double_conv_forward.3} parent=47 // pred_region
        _
      $region60: #{double_conv_forward.3} parent=47 // pred_fallthru
        _
    $region48: #{double_conv_forward.3} parent=5 // pred_fallthru
      _
    %p3515 = scmp.le.s32.totalorder 2, %s16
    // Predicated region
    $region61: #{double_conv_forward.3} parent=5 // pred_check
      %p3516 = pneg %p3515
    $region62: #{double_conv_forward.3} parent=5 // pred_check_branch
      %3518 = sbr.rel (%p3516) target = $region64
    $region63: #{double_conv_forward.3} parent=5 // pred_region
      %s3519 = ssub.s32 %s16, 2
      // Predicated region
      $region65: #{double_conv_forward.3} parent=63 // pred_check
        %p3520 = pneg %p243
      $region66: #{double_conv_forward.3} parent=63 // pred_check_branch
        %3522 = sbr.rel (%p3520) target = $region68
      $region67: #{double_conv_forward.3} parent=63 // pred_region
        %s3523 = smul.u32 8, %s28
        %p3524 = scmp.lt.s32.totalorder %s27, 1
        %s3525 = scalar_select %p3524, %s27, 1
        %p3526 = scmp.lt.s32.totalorder %s3523, 15
        %s3527 = scalar_select %p3526, %s3523, 15
        %s3528 = smul.addr %s3527, 2
        %s3529 = smul.addr %s3525, 32
        %s3530 = sadd.s32 %s3528, %s3529
        %s3531 = smul.addr %s3530, 4
        %s3532 = scalar_lea.vmem %s7, %s3531
      $region68: #{double_conv_forward.3} parent=63 // pred_fallthru
        _
      // Predicated region
      $region69: #{double_conv_forward.3} parent=63 // pred_check
        %p3533 = pneg %p271
      $region70: #{double_conv_forward.3} parent=63 // pred_check_branch
        %3535 = sbr.rel (%p3533) target = $region72
      $region71: #{double_conv_forward.3} parent=63 // pred_region
        %p3536 = scmp.lt.s32.totalorder %s27, 1
        %s3537 = scalar_select %p3536, %s27, 1
        %p3538 = scmp.lt.s32.totalorder %s28, 1
        %s3539 = scalar_select %p3538, %s28, 1
        %s3540 = smul.addr %s3537, 2
        %s3541 = sadd.s32 %s3539, %s3540
        %s3542 = scalar_lea.vmem %s8, %s3541
      $region72: #{double_conv_forward.3} parent=63 // pred_fallthru
        _
      // Predicated region
      $region73: #{double_conv_forward.3} parent=63 // pred_check
        %p3543 = pneg %p299
      $region74: #{double_conv_forward.3} parent=63 // pred_check_branch
        %3545 = sbr.rel (%p3543) target = $region76
      $region75: #{double_conv_forward.3} parent=63 // pred_region
        %p3546 = scmp.lt.s32.totalorder %s27, 1
        %s3547 = scalar_select %p3546, %s27, 1
        %p3548 = scmp.lt.s32.totalorder %s28, 1
        %s3549 = scalar_select %p3548, %s28, 1
        %s3550 = smul.addr %s3547, 2
        %s3551 = sadd.s32 %s3549, %s3550
        %s3552 = scalar_lea.vmem %s9, %s3551
      $region76: #{double_conv_forward.3} parent=63 // pred_fallthru
        _
    $region64: #{double_conv_forward.3} parent=5 // pred_fallthru
      _
  $region6: #{double_conv_forward.3} parent=0 // loop_footer
    %s20 = sadd.s32 1, %s16
  $region7: #{double_conv_forward.3} parent=0 // loop_footer_branch
    %15 = sbr.rel target = $region3
  $region8: #{double_conv_forward.3} parent=0 // loop_exit
    _

// kernel: double_conv_forward.4
$region0: #{double_conv_forward.4}
  #allocation0 [shape = 'u32[]', space=smem, size = 0x4, offset = 0x4, fixed_abs, tag = 'smem constant byte address 0x4 - core index']
  #allocation1 [shape = 'u32[144,128]{1,0:T(1,128)}', space=vmem, size = 0x12000, scoped, tag = 'internal scratch']
  #allocation2 [shape = 'bf16[182,8]{1,0:T(8,128)(2,1)}', space=vmem, size = 0xb800, scoped, tag = 'scratch operand']
  %s0 = inlined_call_operand.vmem [shape: bf16[2,16,16,8], index: 0, kind: input, shape index: {}, may-alias: {0,1,2}]
  %s1 = inlined_call_operand.vmem [shape: bf16[2,16,16,8], index: 1, kind: input, shape index: {}, may-alias: {0,1,2}]
  %s2 = inlined_call_operand.vmem [shape: bf16[2,16,16,8], index: 2, kind: input, shape index: {}, may-alias: {0,1,2}]
  %s3 = inlined_call_operand.vmem [shape: f32[1,8], index: 3, kind: input, shape index: {}]
  %s4 = inlined_call_operand.vmem [shape: f32[1,8], index: 4, kind: input, shape index: {}]
  %s5 = inlined_call_operand.vmem [shape: bf16[9,8,8], index: 5, kind: input, shape index: {}]
  %s6 = inlined_call_operand.vmem [shape: f32[1,8], index: 6, kind: input, shape index: {}]
  %s7 = inlined_call_operand.vmem [shape: bf16[2,16,16,8], index: 7, kind: output, shape index: {0}]
  %s8 = inlined_call_operand.vmem [shape: f32[2,2,1,8], index: 8, kind: output, shape index: {1}]
  %s9 = inlined_call_operand.vmem [shape: f32[2,2,1,8], index: 9, kind: output, shape index: {2}]
  %10 = xla_tuple %s7, %s8, %s9
  %s11 = sld [smem:[#allocation0]]
  $region77: #{double_conv_forward.4} parent=0
    _
  %s13 = ssub.s32 1, %s11
  %s14 = scalar_select 0, %s13, %s11
  loop: start=0, step=1, limit=6
  $region2: #{double_conv_forward.4} parent=0 // loop_pre_header
    _
  $region3: #{double_conv_forward.4} parent=0 // loop_header
    %s16 = sphi 0, %s20
    %p17 = scmp.ge.s32.totalorder %s16, 6
    %s23 = sphi 0, %s35
    %s24 = sphi 0, %s31
    %s25 = sphi 0, %s23
    %s26 = sphi 0, %s24
    %s27 = sphi 0, %s25
    %s28 = sphi 0, %s26
    %s40 = sphi 0, %s42
    %s43 = sphi 0, %s40
    %s44 = sphi 0, %s43
    %s60 = sphi 0, %s44
    %s76 = sphi 0, %s78
    %s79 = sphi 0, %s76
    %s80 = sphi 0, %s79
    %s96 = sphi 0, %s80
    %s112 = sphi 0, %s114
    %s115 = sphi 0, %s112
    %s116 = sphi 0, %s115
    %s132 = sphi 0, %s116
    %s136 = sphi 0, %s136
    %s138 = sphi 0, %s136
    %s139 = sphi 0, %s138
    %s153 = sphi 0, %s139
    %s157 = sphi 0, %s157
    %s159 = sphi 0, %s157
    %s160 = sphi 0, %s159
    %s174 = sphi 0, %s160
    %s178 = sphi 0, %s178
    %s180 = sphi 0, %s178
    %s181 = sphi 0, %s180
    %s195 = sphi 0, %s181
    %s199 = sphi 0, %s199
    %s201 = sphi 0, %s199
    %s202 = sphi 0, %s201
    %s216 = sphi 0, %s202
    %s224 = sphi 0, %s226
    %s227 = sphi 0, %s224
    %s228 = sphi 0, %s227
    %s244 = sphi 0, %s228
    %s252 = sphi 0, %s254
    %s255 = sphi 0, %s252
    %s256 = sphi 0, %s255
    %s272 = sphi 0, %s256
    %s280 = sphi 0, %s282
    %s283 = sphi 0, %s280
    %s284 = sphi 0, %s283
    %s300 = sphi 0, %s284
  $region4: #{double_conv_forward.4} parent=0 // loop_header_branch
    %19 = sbr.rel (%p17) target = $region8
  $region5: #{double_conv_forward.4} parent=0 // loop_body
    %s21 = ssub.s32 %s16, 1
    %s22 = ssub.s32 %s16, 2
    %s29 = sadd.s32 1, %s24
    %p30 = scmp.ge.s32.totalorder %s29, 2
    %s31 = scalar_select %p30, 0, %s29
    %s32 = sadd.s32 1, %s23
    %s33 = scalar_select %p30, %s32, %s23
    %p34 = scmp.ge.s32.totalorder %s33, 2
    %s35 = scalar_select %p34, 0, %s33
    %s36 = ssub.s32 %s23, %s35
    %s37 = ssub.s32 %s24, %s31
    %s38 = sor.u32 %s36, %s37
    %p39 = scmp.eq.s32.totalorder %s38, 0
    %s41 = sadd.s32 %s40, 1
    %s42 = scalar_select %p39, %s40, %s41
    %p45 = pneg %p39
    %p46 = scmp.eq.s32.totalorder %s16, 3
    %p47 = por %p45, %p46
    %p48 = scmp.ne.s32.totalorder %s40, %s43
    %p49 = scmp.eq.s32.totalorder %s16, 0
    %p50 = por %p48, %p49
    %p51 = scmp.ne.s32.totalorder %s40, %s43
    %p52 = scmp.eq.s32.totalorder %s21, 3
    %p53 = por %p51, %p52
    %p54 = scmp.ne.s32.totalorder %s43, %s44
    %p55 = scmp.eq.s32.totalorder %s21, 0
    %p56 = por %p54, %p55
    %p57 = scmp.ne.s32.totalorder %s43, %s44
    %p58 = scmp.eq.s32.totalorder %s22, 3
    %p59 = por %p57, %p58
    %p61 = scmp.ne.s32.totalorder %s44, %s60
    %p62 = scmp.eq.s32.totalorder %s22, 0
    %p63 = por %p61, %p62
    %s64 = smul.u32 %s24, 8
    %s65 = ssub.s32 %s64, 1
    %p66 = scmp.gt.s32.totalorder %s65, 0
    %s67 = scalar_select %p66, %s65, 0
    %s68 = smul.u32 %s31, 8
    %s69 = ssub.s32 %s68, 1
    %p70 = scmp.gt.s32.totalorder %s69, 0
    %s71 = scalar_select %p70, %s69, 0
    %s72 = ssub.s32 %s23, %s35
    %s73 = ssub.s32 %s67, %s71
    %s74 = sor.u32 %s72, %s73
    %p75 = scmp.eq.s32.totalorder %s74, 0
    %s77 = sadd.s32 %s76, 1
    %s78 = scalar_select %p75, %s76, %s77
    %p81 = pneg %p75
    %p82 = scmp.eq.s32.totalorder %s16, 3
    %p83 = por %p81, %p82
    %p84 = scmp.ne.s32.totalorder %s76, %s79
    %p85 = scmp.eq.s32.totalorder %s16, 0
    %p86 = por %p84, %p85
    %p87 = scmp.ne.s32.totalorder %s76, %s79
    %p88 = scmp.eq.s32.totalorder %s21, 3
    %p89 = por %p87, %p88
    %p90 = scmp.ne.s32.totalorder %s79, %s80
    %p91 = scmp.eq.s32.totalorder %s21, 0
    %p92 = por %p90, %p91
    %p93 = scmp.ne.s32.totalorder %s79, %s80
    %p94 = scmp.eq.s32.totalorder %s22, 3
    %p95 = por %p93, %p94
    %p97 = scmp.ne.s32.totalorder %s80, %s96
    %p98 = scmp.eq.s32.totalorder %s22, 0
    %p99 = por %p97, %p98
    %s100 = sadd.s32 %s24, 1
    %s101 = smul.u32 %s100, 8
    %p102 = scmp.lt.s32.totalorder %s101, 15
    %s103 = scalar_select %p102, %s101, 15
    %s104 = sadd.s32 %s31, 1
    %s105 = smul.u32 %s104, 8
    %p106 = scmp.lt.s32.totalorder %s105, 15
    %s107 = scalar_select %p106, %s105, 15
    %s108 = ssub.s32 %s23, %s35
    %s109 = ssub.s32 %s103, %s107
    %s110 = sor.u32 %s108, %s109
    %p111 = scmp.eq.s32.totalorder %s110, 0
    %s113 = sadd.s32 %s112, 1
    %s114 = scalar_select %p111, %s112, %s113
    %p117 = pneg %p111
    %p118 = scmp.eq.s32.totalorder %s16, 3
    %p119 = por %p117, %p118
    %p120 = scmp.ne.s32.totalorder %s112, %s115
    %p121 = scmp.eq.s32.totalorder %s16, 0
    %p122 = por %p120, %p121
    %p123 = scmp.ne.s32.totalorder %s112, %s115
    %p124 = scmp.eq.s32.totalorder %s21, 3
    %p125 = por %p123, %p124
    %p126 = scmp.ne.s32.totalorder %s115, %s116
    %p127 = scmp.eq.s32.totalorder %s21, 0
    %p128 = por %p126, %p127
    %p129 = scmp.ne.s32.totalorder %s115, %s116
    %p130 = scmp.eq.s32.totalorder %s22, 3
    %p131 = por %p129, %p130
    %p133 = scmp.ne.s32.totalorder %s116, %s132
    %p134 = scmp.eq.s32.totalorder %s22, 0
    %p135 = por %p133, %p134
    %s137 = sadd.s32 %s136, 1
    %p140 = scmp.eq.s32.totalorder %s16, 3
    %p141 = scmp.ne.s32.totalorder %s136, %s138
    %p142 = scmp.eq.s32.totalorder %s16, 0
    %p143 = por %p141, %p142
    %p144 = scmp.ne.s32.totalorder %s136, %s138
    %p145 = scmp.eq.s32.totalorder %s21, 3
    %p146 = por %p144, %p145
    %p147 = scmp.ne.s32.totalorder %s138, %s139
    %p148 = scmp.eq.s32.totalorder %s21, 0
    %p149 = por %p147, %p148
    %p150 = scmp.ne.s32.totalorder %s138, %s139
    %p151 = scmp.eq.s32.totalorder %s22, 3
    %p152 = por %p150, %p151
    %p154 = scmp.ne.s32.totalorder %s139, %s153
    %p155 = scmp.eq.s32.totalorder %s22, 0
    %p156 = por %p154, %p155
    %s158 = sadd.s32 %s157, 1
    %p161 = scmp.eq.s32.totalorder %s16, 3
    %p162 = scmp.ne.s32.totalorder %s157, %s159
    %p163 = scmp.eq.s32.totalorder %s16, 0
    %p164 = por %p162, %p163
    %p165 = scmp.ne.s32.totalorder %s157, %s159
    %p166 = scmp.eq.s32.totalorder %s21, 3
    %p167 = por %p165, %p166
    %p168 = scmp.ne.s32.totalorder %s159, %s160
    %p169 = scmp.eq.s32.totalorder %s21, 0
    %p170 = por %p168, %p169
    %p171 = scmp.ne.s32.totalorder %s159, %s160
    %p172 = scmp.eq.s32.totalorder %s22, 3
    %p173 = por %p171, %p172
    %p175 = scmp.ne.s32.totalorder %s160, %s174
    %p176 = scmp.eq.s32.totalorder %s22, 0
    %p177 = por %p175, %p176
    %s179 = sadd.s32 %s178, 1
    %p182 = scmp.eq.s32.totalorder %s16, 3
    %p183 = scmp.ne.s32.totalorder %s178, %s180
    %p184 = scmp.eq.s32.totalorder %s16, 0
    %p185 = por %p183, %p184
    %p186 = scmp.ne.s32.totalorder %s178, %s180
    %p187 = scmp.eq.s32.totalorder %s21, 3
    %p188 = por %p186, %p187
    %p189 = scmp.ne.s32.totalorder %s180, %s181
    %p190 = scmp.eq.s32.totalorder %s21, 0
    %p191 = por %p189, %p190
    %p192 = scmp.ne.s32.totalorder %s180, %s181
    %p193 = scmp.eq.s32.totalorder %s22, 3
    %p194 = por %p192, %p193
    %p196 = scmp.ne.s32.totalorder %s181, %s195
    %p197 = scmp.eq.s32.totalorder %s22, 0
    %p198 = por %p196, %p197
    %s200 = sadd.s32 %s199, 1
    %p203 = scmp.eq.s32.totalorder %s16, 3
    %p204 = scmp.ne.s32.totalorder %s199, %s201
    %p205 = scmp.eq.s32.totalorder %s16, 0
    %p206 = por %p204, %p205
    %p207 = scmp.ne.s32.totalorder %s199, %s201
    %p208 = scmp.eq.s32.totalorder %s21, 3
    %p209 = por %p207, %p208
    %p210 = scmp.ne.s32.totalorder %s201, %s202
    %p211 = scmp.eq.s32.totalorder %s21, 0
    %p212 = por %p210, %p211
    %p213 = scmp.ne.s32.totalorder %s201, %s202
    %p214 = scmp.eq.s32.totalorder %s22, 3
    %p215 = por %p213, %p214
    %p217 = scmp.ne.s32.totalorder %s202, %s216
    %p218 = scmp.eq.s32.totalorder %s22, 0
    %p219 = por %p217, %p218
    %s220 = ssub.s32 %s23, %s35
    %s221 = ssub.s32 %s24, %s31
    %s222 = sor.u32 %s220, %s221
    %p223 = scmp.eq.s32.totalorder %s222, 0
    %s225 = sadd.s32 %s224, 1
    %s226 = scalar_select %p223, %s224, %s225
    %p229 = pneg %p223
    %p230 = scmp.eq.s32.totalorder %s16, 3
    %p231 = por %p229, %p230
    %p232 = scmp.ne.s32.totalorder %s224, %s227
    %p233 = scmp.eq.s32.totalorder %s16, 0
    %p234 = por %p232, %p233
    %p235 = scmp.ne.s32.totalorder %s224, %s227
    %p236 = scmp.eq.s32.totalorder %s21, 3
    %p237 = por %p235, %p236
    %p238 = scmp.ne.s32.totalorder %s227, %s228
    %p239 = scmp.eq.s32.totalorder %s21, 0
    %p240 = por %p238, %p239
    %p241 = scmp.ne.s32.totalorder %s227, %s228
    %p242 = scmp.eq.s32.totalorder %s22, 3
    %p243 = por %p241, %p242
    %p245 = scmp.ne.s32.totalorder %s228, %s244
    %p246 = scmp.eq.s32.totalorder %s22, 0
    %p247 = por %p245, %p246
    %s248 = ssub.s32 %s23, %s35
    %s249 = ssub.s32 %s24, %s31
    %s250 = sor.u32 %s248, %s249
    %p251 = scmp.eq.s32.totalorder %s250, 0
    %s253 = sadd.s32 %s252, 1
    %s254 = scalar_select %p251, %s252, %s253
    %p257 = pneg %p251
    %p258 = scmp.eq.s32.totalorder %s16, 3
    %p259 = por %p257, %p258
    %p260 = scmp.ne.s32.totalorder %s252, %s255
    %p261 = scmp.eq.s32.totalorder %s16, 0
    %p262 = por %p260, %p261
    %p263 = scmp.ne.s32.totalorder %s252, %s255
    %p264 = scmp.eq.s32.totalorder %s21, 3
    %p265 = por %p263, %p264
    %p266 = scmp.ne.s32.totalorder %s255, %s256
    %p267 = scmp.eq.s32.totalorder %s21, 0
    %p268 = por %p266, %p267
    %p269 = scmp.ne.s32.totalorder %s255, %s256
    %p270 = scmp.eq.s32.totalorder %s22, 3
    %p271 = por %p269, %p270
    %p273 = scmp.ne.s32.totalorder %s256, %s272
    %p274 = scmp.eq.s32.totalorder %s22, 0
    %p275 = por %p273, %p274
    %s276 = ssub.s32 %s23, %s35
    %s277 = ssub.s32 %s24, %s31
    %s278 = sor.u32 %s276, %s277
    %p279 = scmp.eq.s32.totalorder %s278, 0
    %s281 = sadd.s32 %s280, 1
    %s282 = scalar_select %p279, %s280, %s281
    %p285 = pneg %p279
    %p286 = scmp.eq.s32.totalorder %s16, 3
    %p287 = por %p285, %p286
    %p288 = scmp.ne.s32.totalorder %s280, %s283
    %p289 = scmp.eq.s32.totalorder %s16, 0
    %p290 = por %p288, %p289
    %p291 = scmp.ne.s32.totalorder %s280, %s283
    %p292 = scmp.eq.s32.totalorder %s21, 3
    %p293 = por %p291, %p292
    %p294 = scmp.ne.s32.totalorder %s283, %s284
    %p295 = scmp.eq.s32.totalorder %s21, 0
    %p296 = por %p294, %p295
    %p297 = scmp.ne.s32.totalorder %s283, %s284
    %p298 = scmp.eq.s32.totalorder %s22, 3
    %p299 = por %p297, %p298
    %p301 = scmp.ne.s32.totalorder %s284, %s300
    %p302 = scmp.eq.s32.totalorder %s22, 0
    %p303 = por %p301, %p302
    %p304 = scmp.le.s32.totalorder 1, %s16
    %p305 = scmp.lt.s32.totalorder %s16, 5
    %p306 = pnand %p304, %p305
    %p307 = pneg %p306
    // Predicated region
    $region9: #{double_conv_forward.4} parent=5 // pred_check
      _
    $region10: #{double_conv_forward.4} parent=5 // pred_check_branch
      %309 = sbr.rel (%p306) target = $region12
    $region11: #{double_conv_forward.4} parent=5 // pred_region
      %s310 = ssub.s32 %s16, 1
      // Predicated region
      $region13: #{double_conv_forward.4} parent=11 // pred_check
        %p311 = pneg %p149
      $region14: #{double_conv_forward.4} parent=11 // pred_check_branch
        %313 = sbr.rel (%p311) target = $region16
      $region15: #{double_conv_forward.4} parent=11 // pred_region
        _
      $region16: #{double_conv_forward.4} parent=11 // pred_fallthru
        _
      // Predicated region
      $region17: #{double_conv_forward.4} parent=11 // pred_check
        %p314 = pneg %p170
      $region18: #{double_conv_forward.4} parent=11 // pred_check_branch
        %316 = sbr.rel (%p314) target = $region20
      $region19: #{double_conv_forward.4} parent=11 // pred_region
        _
      $region20: #{double_conv_forward.4} parent=11 // pred_fallthru
        _
      // Predicated region
      $region21: #{double_conv_forward.4} parent=11 // pred_check
        %p317 = pneg %p191
      $region22: #{double_conv_forward.4} parent=11 // pred_check_branch
        %319 = sbr.rel (%p317) target = $region24
      $region23: #{double_conv_forward.4} parent=11 // pred_region
        _
      $region24: #{double_conv_forward.4} parent=11 // pred_fallthru
        _
      // Predicated region
      $region25: #{double_conv_forward.4} parent=11 // pred_check
        %p320 = pneg %p212
      $region26: #{double_conv_forward.4} parent=11 // pred_check_branch
        %322 = sbr.rel (%p320) target = $region28
      $region27: #{double_conv_forward.4} parent=11 // pred_region
        _
      $region28: #{double_conv_forward.4} parent=11 // pred_fallthru
        _
    $region12: #{double_conv_forward.4} parent=5 // pred_fallthru
      _
    %p323 = scmp.lt.s32.totalorder %s16, 4
    // Predicated region
    $region29: #{double_conv_forward.4} parent=5 // pred_check
      %p324 = pneg %p323
    $region30: #{double_conv_forward.4} parent=5 // pred_check_branch
      %326 = sbr.rel (%p324) target = $region32
    $region31: #{double_conv_forward.4} parent=5 // pred_region
      // Predicated region
      $region33: #{double_conv_forward.4} parent=31 // pred_check
        %p327 = pneg %p50
      $region34: #{double_conv_forward.4} parent=31 // pred_check_branch
        %329 = sbr.rel (%p327) target = $region36
      $region35: #{double_conv_forward.4} parent=31 // pred_region
        %s330 = smul.u32 8, %s24
        %p331 = scmp.lt.s32.totalorder %s23, 1
        %s332 = scalar_select %p331, %s23, 1
        %p333 = scmp.lt.s32.totalorder %s330, 15
        %s334 = scalar_select %p333, %s330, 15
        %s335 = smul.addr %s334, 2
        %s336 = smul.addr %s332, 32
        %s337 = sadd.s32 %s335, %s336
        %s338 = smul.addr %s337, 4
        %s339 = scalar_lea.vmem %s0, %s338
        %s340 = smul.u32 8, %s24
      $region36: #{double_conv_forward.4} parent=31 // pred_fallthru
        _
      // Predicated region
      $region37: #{double_conv_forward.4} parent=31 // pred_check
        %p341 = pneg %p86
      $region38: #{double_conv_forward.4} parent=31 // pred_check_branch
        %343 = sbr.rel (%p341) target = $region40
      $region39: #{double_conv_forward.4} parent=31 // pred_region
        %s344 = smul.u32 %s24, 8
        %s345 = ssub.s32 %s344, 1
        %p346 = scmp.gt.s32.totalorder %s345, 0
        %s347 = scalar_select %p346, %s345, 0
        %p348 = scmp.lt.s32.totalorder %s23, 1
        %s349 = scalar_select %p348, %s23, 1
        %p350 = scmp.lt.s32.totalorder %s347, 15
        %s351 = scalar_select %p350, %s347, 15
        %s352 = smul.addr %s351, 2
        %s353 = smul.addr %s349, 32
        %s354 = sadd.s32 %s352, %s353
        %s355 = smul.addr %s354, 4
        %s356 = scalar_lea.vmem %s1, %s355
        %s357 = smul.u32 %s24, 8
        %s358 = ssub.s32 %s357, 1
        %p359 = scmp.gt.s32.totalorder %s358, 0
        %s360 = scalar_select %p359, %s358, 0
      $region40: #{double_conv_forward.4} parent=31 // pred_fallthru
        _
      // Predicated region
      $region41: #{double_conv_forward.4} parent=31 // pred_check
        %p361 = pneg %p122
      $region42: #{double_conv_forward.4} parent=31 // pred_check_branch
        %363 = sbr.rel (%p361) target = $region44
      $region43: #{double_conv_forward.4} parent=31 // pred_region
        %s364 = sadd.s32 %s24, 1
        %s365 = smul.u32 %s364, 8
        %p366 = scmp.lt.s32.totalorder %s365, 15
        %s367 = scalar_select %p366, %s365, 15
        %p368 = scmp.lt.s32.totalorder %s23, 1
        %s369 = scalar_select %p368, %s23, 1
        %p370 = scmp.lt.s32.totalorder %s367, 15
        %s371 = scalar_select %p370, %s367, 15
        %s372 = smul.addr %s371, 2
        %s373 = smul.addr %s369, 32
        %s374 = sadd.s32 %s372, %s373
        %s375 = smul.addr %s374, 4
        %s376 = scalar_lea.vmem %s2, %s375
        %s377 = sadd.s32 %s24, 1
        %s378 = smul.u32 %s377, 8
        %p379 = scmp.lt.s32.totalorder %s378, 15
        %s380 = scalar_select %p379, %s378, 15
      $region44: #{double_conv_forward.4} parent=31 // pred_fallthru
        _
    $region32: #{double_conv_forward.4} parent=5 // pred_fallthru
      _
    %p381 = scmp.le.s32.totalorder 1, %s16
    %p382 = scmp.lt.s32.totalorder %s16, 5
    %p383 = pnand %p381, %p382
    %p384 = pneg %p383
    // Predicated region
    $region45: #{double_conv_forward.4} parent=5 // pred_check
      _
    $region46: #{double_conv_forward.4} parent=5 // pred_check_branch
      %386 = sbr.rel (%p383) target = $region48
    $region47: #{double_conv_forward.4} parent=5 // pred_region
      %s387 = ssub.s32 %s16, 1
      %s388 = smul.u32 8, %s26
      %p389 = scmp.lt.s32.totalorder %s25, 1
      %s390 = scalar_select %p389, %s25, 1
      %p391 = scmp.lt.s32.totalorder %s388, 15
      %s392 = scalar_select %p391, %s388, 15
      %s393 = smul.addr %s392, 2
      %s394 = smul.addr %s390, 32
      %s395 = sadd.s32 %s393, %s394
      %s396 = smul.addr %s395, 4
      %s397 = scalar_lea.vmem %s0, %s396
      %p398 = pneg %p56
      %p399 = pneg %p53
      %s400 = smul.u32 %s26, 8
      %s401 = ssub.s32 %s400, 1
      %p402 = scmp.gt.s32.totalorder %s401, 0
      %s403 = scalar_select %p402, %s401, 0
      %p404 = scmp.lt.s32.totalorder %s25, 1
      %s405 = scalar_select %p404, %s25, 1
      %p406 = scmp.lt.s32.totalorder %s403, 15
      %s407 = scalar_select %p406, %s403, 15
      %s408 = smul.addr %s407, 2
      %s409 = smul.addr %s405, 32
      %s410 = sadd.s32 %s408, %s409
      %s411 = smul.addr %s410, 4
      %s412 = scalar_lea.vmem %s1, %s411
      %p413 = pneg %p92
      %p414 = pneg %p89
      %s415 = sadd.s32 %s26, 1
      %s416 = smul.u32 %s415, 8
      %p417 = scmp.lt.s32.totalorder %s416, 15
      %s418 = scalar_select %p417, %s416, 15
      %p419 = scmp.lt.s32.totalorder %s25, 1
      %s420 = scalar_select %p419, %s25, 1
      %p421 = scmp.lt.s32.totalorder %s418, 15
      %s422 = scalar_select %p421, %s418, 15
      %s423 = smul.addr %s422, 2
      %s424 = smul.addr %s420, 32
      %s425 = sadd.s32 %s423, %s424
      %s426 = smul.addr %s425, 4
      %s427 = scalar_lea.vmem %s2, %s426
      %p428 = pneg %p128
      %p429 = pneg %p125
      %p430 = pneg %p149
      %p431 = pneg %p146
      %p432 = pneg %p170
      %p433 = pneg %p167
      %p434 = pneg %p191
      %p435 = pneg %p188
      %p436 = pneg %p212
      %p437 = pneg %p209
      %p438 = pneg %p240
      %p439 = pneg %p237
      %s440 = smul.u32 8, %s26
      %p441 = scmp.lt.s32.totalorder %s25, 1
      %s442 = scalar_select %p441, %s25, 1
      %p443 = scmp.lt.s32.totalorder %s440, 15
      %s444 = scalar_select %p443, %s440, 15
      %s445 = smul.addr %s444, 2
      %s446 = smul.addr %s442, 32
      %s447 = sadd.s32 %s445, %s446
      %s448 = smul.addr %s447, 4
      %s449 = scalar_lea.vmem %s7, %s448
      %p450 = pneg %p268
      %p451 = pneg %p265
      %p452 = scmp.lt.s32.totalorder %s25, 1
      %s453 = scalar_select %p452, %s25, 1
      %p454 = scmp.lt.s32.totalorder %s26, 1
      %s455 = scalar_select %p454, %s26, 1
      %s456 = smul.addr %s453, 2
      %s457 = sadd.s32 %s455, %s456
      %s458 = scalar_lea.vmem %s8, %s457
      %p459 = pneg %p296
      %p460 = pneg %p293
      %p461 = scmp.lt.s32.totalorder %s25, 1
      %s462 = scalar_select %p461, %s25, 1
      %p463 = scmp.lt.s32.totalorder %s26, 1
      %s464 = scalar_select %p463, %s26, 1
      %s465 = smul.addr %s462, 2
      %s466 = sadd.s32 %s464, %s465
      %s467 = scalar_lea.vmem %s9, %s466
      %s468 = smul.u32 8, %s26
      %p469 = scmp.lt.s32.totalorder %s25, 1
      %s470 = scalar_select %p469, %s25, 1
      %p471 = scmp.lt.s32.totalorder %s468, 15
      %s472 = scalar_select %p471, %s468, 15
      %s473 = smul.addr %s472, 2
      %s474 = smul.addr %s470, 32
      %s475 = sadd.s32 %s473, %s474
      %s476 = smul.addr %s475, 4
      %s477 = scalar_lea.vmem %s0, %s476
      %s478 = smul.u32 8, %s26
      %s479 = smul.u32 %s26, 8
      %s480 = ssub.s32 %s479, 1
      %p481 = scmp.gt.s32.totalorder %s480, 0
      %s482 = scalar_select %p481, %s480, 0
      %p483 = scmp.lt.s32.totalorder %s25, 1
      %s484 = scalar_select %p483, %s25, 1
      %p485 = scmp.lt.s32.totalorder %s482, 15
      %s486 = scalar_select %p485, %s482, 15
      %s487 = smul.addr %s486, 2
      %s488 = smul.addr %s484, 32
      %s489 = sadd.s32 %s487, %s488
      %s490 = smul.addr %s489, 4
      %s491 = scalar_lea.vmem %s1, %s490
      %s492 = smul.u32 %s26, 8
      %s493 = ssub.s32 %s492, 1
      %p494 = scmp.gt.s32.totalorder %s493, 0
      %s495 = scalar_select %p494, %s493, 0
      %s496 = sadd.s32 %s26, 1
      %s497 = smul.u32 %s496, 8
      %p498 = scmp.lt.s32.totalorder %s497, 15
      %s499 = scalar_select %p498, %s497, 15
      %p500 = scmp.lt.s32.totalorder %s25, 1
      %s501 = scalar_select %p500, %s25, 1
      %p502 = scmp.lt.s32.totalorder %s499, 15
      %s503 = scalar_select %p502, %s499, 15
      %s504 = smul.addr %s503, 2
      %s505 = smul.addr %s501, 32
      %s506 = sadd.s32 %s504, %s505
      %s507 = smul.addr %s506, 4
      %s508 = scalar_lea.vmem %s2, %s507
      %s509 = sadd.s32 %s26, 1
      %s510 = smul.u32 %s509, 8
      %p511 = scmp.lt.s32.totalorder %s510, 15
      %s512 = scalar_select %p511, %s510, 15
      %s513 = smul.u32 8, %s26
      %p514 = scmp.lt.s32.totalorder %s25, 1
      %s515 = scalar_select %p514, %s25, 1
      %p516 = scmp.lt.s32.totalorder %s513, 15
      %s517 = scalar_select %p516, %s513, 15
      %s518 = smul.addr %s517, 2
      %s519 = smul.addr %s515, 32
      %s520 = sadd.s32 %s518, %s519
      %s521 = smul.addr %s520, 4
      %s522 = scalar_lea.vmem %s7, %s521
      %s523 = smul.u32 8, %s26
      %p524 = scmp.lt.s32.totalorder %s25, 1
      %s525 = scalar_select %p524, %s25, 1
      %p526 = scmp.lt.s32.totalorder %s26, 1
      %s527 = scalar_select %p526, %s26, 1
      %s528 = smul.addr %s525, 2
      %s529 = sadd.s32 %s527, %s528
      %s530 = scalar_lea.vmem %s8, %s529
      %p531 = scmp.lt.s32.totalorder %s25, 1
      %s532 = scalar_select %p531, %s25, 1
      %p533 = scmp.lt.s32.totalorder %s26, 1
      %s534 = scalar_select %p533, %s26, 1
      %s535 = smul.addr %s532, 2
      %s536 = sadd.s32 %s534, %s535
      %s537 = scalar_lea.vmem %s9, %s536
      %v539 = vld [vmem:[%s3] sm:$0x1]
      %v540 = vld [vmem:[%s4] sm:$0x1]
      %v541 = vld [vmem:[%s477] sm:$0xf]
      %v542 = vld [vmem:[%s477 + $0x4] sm:$0xf]
      %v543 = vld [vmem:[%s477 + $0x8] sm:$0xf]
      %v544 = vld [vmem:[%s477 + $0xc] sm:$0xf]
      %v545 = vld [vmem:[%s477 + $0x10] sm:$0xf]
      %v546 = vld [vmem:[%s477 + $0x14] sm:$0xf]
      %v547 = vld [vmem:[%s477 + $0x18] sm:$0xf]
      %v548 = vld [vmem:[%s477 + $0x1c] sm:$0xf]
      %v549 = vld [vmem:[%s477 + $0x20] sm:$0xf]
      %v550 = vld [vmem:[%s477 + $0x24] sm:$0xf]
      %v551 = vld [vmem:[%s477 + $0x28] sm:$0xf]
      %v552 = vld [vmem:[%s477 + $0x2c] sm:$0xf]
      %v553 = vld [vmem:[%s477 + $0x30] sm:$0xf]
      %v554 = vld [vmem:[%s477 + $0x34] sm:$0xf]
      %v555 = vld [vmem:[%s477 + $0x38] sm:$0xf]
      %v556 = vld [vmem:[%s477 + $0x3c] sm:$0xf]
      %v557 = vunpack.c.l.bf16 %v541
      %v558 = vunpack.c.l.bf16 %v542
      %v559 = vunpack.c.l.bf16 %v543
      %v560 = vunpack.c.l.bf16 %v544
      %v561 = vunpack.c.l.bf16 %v545
      %v562 = vunpack.c.l.bf16 %v546
      %v563 = vunpack.c.l.bf16 %v547
      %v564 = vunpack.c.l.bf16 %v548
      %v565 = vunpack.c.l.bf16 %v549
      %v566 = vunpack.c.l.bf16 %v550
      %v567 = vunpack.c.l.bf16 %v551
      %v568 = vunpack.c.l.bf16 %v552
      %v569 = vunpack.c.l.bf16 %v553
      %v570 = vunpack.c.l.bf16 %v554
      %v571 = vunpack.c.l.bf16 %v555
      %v572 = vunpack.c.l.bf16 %v556
      %v574 = vlaneseq
      %v575 = vshrl.u32 %v574, 7
      %v576 = vsub.s32 0, %v575
      %v577 = vrot.slane %v539, %v576
      %v579 = vmul.f32 %v557, %v577
      %v580 = vmul.f32 %v558, %v577
      %v581 = vmul.f32 %v559, %v577
      %v582 = vmul.f32 %v560, %v577
      %v583 = vmul.f32 %v561, %v577
      %v584 = vmul.f32 %v562, %v577
      %v585 = vmul.f32 %v563, %v577
      %v586 = vmul.f32 %v564, %v577
      %v587 = vmul.f32 %v565, %v577
      %v588 = vmul.f32 %v566, %v577
      %v589 = vmul.f32 %v567, %v577
      %v590 = vmul.f32 %v568, %v577
      %v591 = vmul.f32 %v569, %v577
      %v592 = vmul.f32 %v570, %v577
      %v593 = vmul.f32 %v571, %v577
      %v594 = vmul.f32 %v572, %v577
      %v596 = vlaneseq
      %v597 = vshrl.u32 %v596, 7
      %v598 = vsub.s32 0, %v597
      %v599 = vrot.slane %v540, %v598
      %v601 = vadd.f32 %v579, %v599
      %v602 = vadd.f32 %v580, %v599
      %v603 = vadd.f32 %v581, %v599
      %v604 = vadd.f32 %v582, %v599
      %v605 = vadd.f32 %v583, %v599
      %v606 = vadd.f32 %v584, %v599
      %v607 = vadd.f32 %v585, %v599
      %v608 = vadd.f32 %v586, %v599
      %v609 = vadd.f32 %v587, %v599
      %v610 = vadd.f32 %v588, %v599
      %v611 = vadd.f32 %v589, %v599
      %v612 = vadd.f32 %v590, %v599
      %v613 = vadd.f32 %v591, %v599
      %v614 = vadd.f32 %v592, %v599
      %v615 = vadd.f32 %v593, %v599
      %v616 = vadd.f32 %v594, %v599
      %v617 = vmax.f32 %v601, 0.0
      %v618 = vmax.f32 %v602, 0.0
      %v619 = vmax.f32 %v603, 0.0
      %v620 = vmax.f32 %v604, 0.0
      %v621 = vmax.f32 %v605, 0.0
      %v622 = vmax.f32 %v606, 0.0
      %v623 = vmax.f32 %v607, 0.0
      %v624 = vmax.f32 %v608, 0.0
      %v625 = vmax.f32 %v609, 0.0
      %v626 = vmax.f32 %v610, 0.0
      %v627 = vmax.f32 %v611, 0.0
      %v628 = vmax.f32 %v612, 0.0
      %v629 = vmax.f32 %v613, 0.0
      %v630 = vmax.f32 %v614, 0.0
      %v631 = vmax.f32 %v615, 0.0
      %v632 = vmax.f32 %v616, 0.0
      %v633 = vpack.c.bf16 %v618, %v617
      %v634 = vpack.c.bf16 %v620, %v619
      %v635 = vpack.c.bf16 %v622, %v621
      %v636 = vpack.c.bf16 %v624, %v623
      %v637 = vpack.c.bf16 %v626, %v625
      %v638 = vpack.c.bf16 %v628, %v627
      %v639 = vpack.c.bf16 %v630, %v629
      %v640 = vpack.c.bf16 %v632, %v631
      %v641 = vld [vmem:[%s491] sm:$0xf]
      %v642 = vld [vmem:[%s491 + $0x4] sm:$0xf]
      %v643 = vunpack.c.l.bf16 %v641
      %v644 = vunpack.c.l.bf16 %v642
      %v645 = vmul.f32 %v643, %v577
      %v646 = vmul.f32 %v644, %v577
      %v647 = vadd.f32 %v645, %v599
      %v648 = vadd.f32 %v646, %v599
      %v649 = vmax.f32 %v647, 0.0
      %v650 = vmax.f32 %v648, 0.0
      %v651 = vpack.c.bf16 %v650, %v649
      %v652 = vld [vmem:[%s508] sm:$0xf]
      %v653 = vld [vmem:[%s508 + $0x4] sm:$0xf]
      %v654 = vunpack.c.l.bf16 %v652
      %v655 = vunpack.c.l.bf16 %v653
      %v656 = vmul.f32 %v654, %v577
      %v657 = vmul.f32 %v655, %v577
      %v658 = vadd.f32 %v656, %v599
      %v659 = vadd.f32 %v657, %v599
      %v660 = vmax.f32 %v658, 0.0
      %v661 = vmax.f32 %v659, 0.0
      %v662 = vpack.c.bf16 %v661, %v660
      %p663 = scmp.eq.s32.totalorder %s26, 0
      %s664 = scalar_select %p663, 1, 0
      %v665 = vstv %s664
      %vm666 = vcmp.eq.s32.totalorder %v665, 1
      %v667 = vsel %vm666, 0, %v651
      %p668 = scmp.eq.s32.totalorder %s26, 1
      %s669 = scalar_select %p668, 1, 0
      %v670 = vstv %s669
      %vm671 = vcmp.eq.s32.totalorder %v670, 1
      %v672 = vsel %vm671, 0, %v662
      %vm673 = vcmask 57344
      %vm674 = vsmask.f32 256
      %vm675 = vmand %vm673, %vm674
      %v676 = vld [vmem:[#allocation2] sm:$0x1]
      %v677 = vsel %vm675, 0, %v676
      %678 = vst [vmem:[#allocation2] sm:$0x1] %v677
      %v680 = vunpack.c.l.b16 %v667
      %v681 = vunpack.c.h.b16 %v667
      %v682 = vpack.c.b16 %v680, %v680
      %v683 = vpack.c.b16 %v681, %v681
      %vm684 = vsmask.f32 4368
      %vm685 = vmor %vm674, %vm684
      %v687 = vshrl.u32 %v682, 16
      %v689 = vrot.slane %v687, 7
      %v690 = vshll.u32 %v682, 16
      %v692 = vor.u32 %v689, %v690
      %v693 = vrot.slane %v689, 4
      %v695 = vshrl.u32 %v683, 16
      %v697 = vrot.slane %v695, 7
      %v698 = vshll.u32 %v683, 16
      %v700 = vor.u32 %v697, %v698
      %v701 = vsel %vm685, %v693, %v700
      %v702 = vrot.slane %v697, 4
      %vm706 = vcmask 60416
      %vm707 = vsmask.f32 7938
      %vm708 = vmand %vm706, %vm707
      %v709 = vld [vmem:[#allocation2] sm:$0xf]
      %v710 = vsel %vm708, %v692, %v709
      %711 = vst [vmem:[#allocation2] sm:$0xf] %v710
      %vm712 = vcmask 60416
      %713 = vst.msk [vmem:[#allocation2 + $0x4] sm:$0xf] %vm712, %v701
      %v714 = vld [vmem:[#allocation2 + $0x8] sm:$0x1]
      %v715 = vsel %vm675, %v702, %v714
      %716 = vst [vmem:[#allocation2 + $0x8] sm:$0x1] %v715
      %vm717 = vcmask 58368
      %vm718 = vsmask.f32 1282
      %vm719 = vmand %vm717, %vm718
      %v720 = vld [vmem:[#allocation2 + $0x8] sm:$0x3]
      %v721 = vsel %vm719, 0, %v720
      %722 = vst [vmem:[#allocation2 + $0x8] sm:$0x3] %v721
      %v724 = vunpack.c.l.b16 %v633
      %v725 = vunpack.c.h.b16 %v633
      %v726 = vpack.c.b16 %v724, %v724
      %v727 = vpack.c.b16 %v725, %v725
      %vm728 = vsmask.f32 1280
      %vm729 = vsmask.f32 5392
      %vm730 = vmor %vm728, %vm729
      %v732 = vshrl.u32 %v726, 16
      %v734 = vrot.slane %v732, 6
      %v735 = vshll.u32 %v726, 16
      %v737 = vrot.slane %v735, 7
      %v738 = vor.u32 %v734, %v737
      %v739 = vrot.slane %v738, 4
      %v741 = vshrl.u32 %v727, 16
      %v743 = vrot.slane %v741, 6
      %v744 = vshll.u32 %v727, 16
      %v746 = vrot.slane %v744, 7
      %v747 = vor.u32 %v743, %v746
      %v748 = vsel %vm730, %v739, %v747
      %v749 = vrot.slane %v747, 4
      %vm753 = vcmask 60417
      %vm754 = vsmask.f32 7942
      %vm755 = vmand %vm753, %vm754
      %v756 = vld [vmem:[#allocation2 + $0x8] sm:$0xe]
      %v757 = vsel %vm755, %v738, %v756
      %758 = vst [vmem:[#allocation2 + $0x8] sm:$0xe] %v757
      %759 = vst.msk [vmem:[#allocation2 + $0xc] sm:$0xf] %vm712, %v748
      %vm760 = vmand %vm717, %vm728
      %v761 = vld [vmem:[#allocation2 + $0x10] sm:$0x3]
      %v762 = vsel %vm760, %v749, %v761
      %763 = vst [vmem:[#allocation2 + $0x10] sm:$0x3] %v762
      %vm764 = vcmask 59393
      %vm765 = vsmask.f32 2310
      %vm766 = vmand %vm764, %vm765
      %v767 = vld [vmem:[#allocation2 + $0x10] sm:$0x6]
      %v768 = vsel %vm766, 0, %v767
      %769 = vst [vmem:[#allocation2 + $0x10] sm:$0x6] %v768
      %v771 = vunpack.c.l.b16 %v634
      %v772 = vunpack.c.h.b16 %v634
      %v773 = vpack.c.b16 %v771, %v771
      %v774 = vpack.c.b16 %v772, %v772
      %vm775 = vsmask.f32 2304
      %vm776 = vsmask.f32 6416
      %vm777 = vmor %vm775, %vm776
      %v779 = vshrl.u32 %v773, 16
      %v781 = vrot.slane %v779, 5
      %v782 = vshll.u32 %v773, 16
      %v784 = vrot.slane %v782, 6
      %v785 = vor.u32 %v781, %v784
      %v786 = vrot.slane %v785, 4
      %v788 = vshrl.u32 %v774, 16
      %v790 = vrot.slane %v788, 5
      %v791 = vshll.u32 %v774, 16
      %v793 = vrot.slane %v791, 6
      %v794 = vor.u32 %v790, %v793
      %v795 = vsel %vm777, %v786, %v794
      %v796 = vrot.slane %v794, 4
      %vm800 = vcmask 60418
      %vm801 = vsmask.f32 7946
      %vm802 = vmand %vm800, %vm801
      %v803 = vld [vmem:[#allocation2 + $0x10] sm:$0xc]
      %v804 = vsel %vm802, %v785, %v803
      %805 = vst [vmem:[#allocation2 + $0x10] sm:$0xc] %v804
      %806 = vst.msk [vmem:[#allocation2 + $0x14] sm:$0xf] %vm712, %v795
      %vm807 = vcmask 59392
      %vm808 = vmand %vm807, %vm775
      %v809 = vld [vmem:[#allocation2 + $0x18] sm:$0x7]
      %v810 = vsel %vm808, %v796, %v809
      %811 = vst [vmem:[#allocation2 + $0x18] sm:$0x7] %v810
      %vm812 = vsmask.f32 3338
      %vm813 = vmand %vm800, %vm812
      %v814 = vld [vmem:[#allocation2 + $0x18] sm:$0xc]
      %v815 = vsel %vm813, 0, %v814
      %816 = vst [vmem:[#allocation2 + $0x18] sm:$0xc] %v815
      %v818 = vunpack.c.l.b16 %v635
      %v819 = vunpack.c.h.b16 %v635
      %v820 = vpack.c.b16 %v818, %v818
      %v821 = vpack.c.b16 %v819, %v819
      %vm822 = vsmask.f32 3328
      %vm823 = vsmask.f32 7440
      %vm824 = vmor %vm822, %vm823
      %v826 = vshll.u32 %v820, 16
      %v828 = vrot.slane %v826, 5
      %v829 = vshrl.u32 %v820, 16
      %v831 = vrot.slane %v829, 4
      %v832 = vor.u32 %v831, %v828
      %v833 = vrot.slane %v832, 4
      %v835 = vshll.u32 %v821, 16
      %v837 = vrot.slane %v835, 5
      %v838 = vsel %vm824, %v833, %v837
      %v839 = vshrl.u32 %v821, 16
      %v841 = vrot.slane %v839, 4
      %v842 = vor.u32 %v841, %v837
      %v843 = vrot.slane %v842, 4
      %vm847 = vcmask 60419
      %vm848 = vsmask.f32 7950
      %vm849 = vmand %vm847, %vm848
      %v850 = vld [vmem:[#allocation2 + $0x18] sm:$0x8]
      %v851 = vsel %vm849, %v828, %v850
      %852 = vst [vmem:[#allocation2 + $0x18] sm:$0x8] %v851
      %853 = vst.msk [vmem:[#allocation2 + $0x1c] sm:$0xf] %vm712, %v838
      %vm854 = vmand %vm706, %vm822
      %v855 = vld [vmem:[#allocation2 + $0x20] sm:$0xf]
      %v856 = vsel %vm854, %v843, %v855
      %857 = vst [vmem:[#allocation2 + $0x20] sm:$0xf] %v856
      %v858 = vld [vmem:[#allocation2 + $0x20] sm:$0x8]
      %v859 = vsel %vm849, 0, %v858
      %860 = vst [vmem:[#allocation2 + $0x20] sm:$0x8] %v859
      %v861 = vld [vmem:[#allocation2 + $0x24] sm:$0x1]
      %v862 = vsel %vm675, 0, %v861
      %863 = vst [vmem:[#allocation2 + $0x24] sm:$0x1] %v862
      %v865 = vunpack.c.l.b16 %v636
      %v866 = vunpack.c.h.b16 %v636
      %v867 = vpack.c.b16 %v865, %v865
      %v868 = vpack.c.b16 %v866, %v866
      %v870 = vshrl.u32 %v867, 16
      %v872 = vrot.slane %v870, 7
      %v873 = vshll.u32 %v867, 16
      %v875 = vor.u32 %v872, %v873
      %v876 = vrot.slane %v872, 4
      %v878 = vshrl.u32 %v868, 16
      %v880 = vrot.slane %v878, 7
      %v881 = vshll.u32 %v868, 16
      %v883 = vor.u32 %v880, %v881
      %v884 = vsel %vm685, %v876, %v883
      %v885 = vrot.slane %v880, 4
      %v889 = vld [vmem:[#allocation2 + $0x24] sm:$0xf]
      %v890 = vsel %vm708, %v875, %v889
      %891 = vst [vmem:[#allocation2 + $0x24] sm:$0xf] %v890
      %892 = vst.msk [vmem:[#allocation2 + $0x28] sm:$0xf] %vm712, %v884
      %v893 = vld [vmem:[#allocation2 + $0x2c] sm:$0x1]
      %v894 = vsel %vm675, %v885, %v893
      %895 = vst [vmem:[#allocation2 + $0x2c] sm:$0x1] %v894
      %v896 = vld [vmem:[#allocation2 + $0x2c] sm:$0x3]
      %v897 = vsel %vm719, 0, %v896
      %898 = vst [vmem:[#allocation2 + $0x2c] sm:$0x3] %v897
      %v900 = vunpack.c.l.b16 %v637
      %v901 = vunpack.c.h.b16 %v637
      %v902 = vpack.c.b16 %v900, %v900
      %v903 = vpack.c.b16 %v901, %v901
      %v905 = vshrl.u32 %v902, 16
      %v907 = vrot.slane %v905, 6
      %v908 = vshll.u32 %v902, 16
      %v910 = vrot.slane %v908, 7
      %v911 = vor.u32 %v907, %v910
      %v912 = vrot.slane %v911, 4
      %v914 = vshrl.u32 %v903, 16
      %v916 = vrot.slane %v914, 6
      %v917 = vshll.u32 %v903, 16
      %v919 = vrot.slane %v917, 7
      %v920 = vor.u32 %v916, %v919
      %v921 = vsel %vm730, %v912, %v920
      %v922 = vrot.slane %v920, 4
      %v926 = vld [vmem:[#allocation2 + $0x2c] sm:$0xe]
      %v927 = vsel %vm755, %v911, %v926
      %928 = vst [vmem:[#allocation2 + $0x2c] sm:$0xe] %v927
      %929 = vst.msk [vmem:[#allocation2 + $0x30] sm:$0xf] %vm712, %v921
      %v930 = vld [vmem:[#allocation2 + $0x34] sm:$0x3]
      %v931 = vsel %vm760, %v922, %v930
      %932 = vst [vmem:[#allocation2 + $0x34] sm:$0x3] %v931
      %v933 = vld [vmem:[#allocation2 + $0x34] sm:$0x6]
      %v934 = vsel %vm766, 0, %v933
      %935 = vst [vmem:[#allocation2 + $0x34] sm:$0x6] %v934
      %v937 = vunpack.c.l.b16 %v638
      %v938 = vunpack.c.h.b16 %v638
      %v939 = vpack.c.b16 %v937, %v937
      %v940 = vpack.c.b16 %v938, %v938
      %v942 = vshrl.u32 %v939, 16
      %v944 = vrot.slane %v942, 5
      %v945 = vshll.u32 %v939, 16
      %v947 = vrot.slane %v945, 6
      %v948 = vor.u32 %v944, %v947
      %v949 = vrot.slane %v948, 4
      %v951 = vshrl.u32 %v940, 16
      %v953 = vrot.slane %v951, 5
      %v954 = vshll.u32 %v940, 16
      %v956 = vrot.slane %v954, 6
      %v957 = vor.u32 %v953, %v956
      %v958 = vsel %vm777, %v949, %v957
      %v959 = vrot.slane %v957, 4
      %v963 = vld [vmem:[#allocation2 + $0x34] sm:$0xc]
      %v964 = vsel %vm802, %v948, %v963
      %965 = vst [vmem:[#allocation2 + $0x34] sm:$0xc] %v964
      %966 = vst.msk [vmem:[#allocation2 + $0x38] sm:$0xf] %vm712, %v958
      %v967 = vld [vmem:[#allocation2 + $0x3c] sm:$0x7]
      %v968 = vsel %vm808, %v959, %v967
      %969 = vst [vmem:[#allocation2 + $0x3c] sm:$0x7] %v968
      %v970 = vld [vmem:[#allocation2 + $0x3c] sm:$0xc]
      %v971 = vsel %vm813, 0, %v970
      %972 = vst [vmem:[#allocation2 + $0x3c] sm:$0xc] %v971
      %v974 = vunpack.c.l.b16 %v639
      %v975 = vunpack.c.h.b16 %v639
      %v976 = vpack.c.b16 %v974, %v974
      %v977 = vpack.c.b16 %v975, %v975
      %v979 = vshll.u32 %v976, 16
      %v981 = vrot.slane %v979, 5
      %v982 = vshrl.u32 %v976, 16
      %v984 = vrot.slane %v982, 4
      %v985 = vor.u32 %v984, %v981
      %v986 = vrot.slane %v985, 4
      %v988 = vshll.u32 %v977, 16
      %v990 = vrot.slane %v988, 5
      %v991 = vsel %vm824, %v986, %v990
      %v992 = vshrl.u32 %v977, 16
      %v994 = vrot.slane %v992, 4
      %v995 = vor.u32 %v994, %v990
      %v996 = vrot.slane %v995, 4
      %v1000 = vld [vmem:[#allocation2 + $0x3c] sm:$0x8]
      %v1001 = vsel %vm849, %v981, %v1000
      %1002 = vst [vmem:[#allocation2 + $0x3c] sm:$0x8] %v1001
      %1003 = vst.msk [vmem:[#allocation2 + $0x40] sm:$0xf] %vm712, %v991
      %v1004 = vld [vmem:[#allocation2 + $0x44] sm:$0xf]
      %v1005 = vsel %vm854, %v996, %v1004
      %1006 = vst [vmem:[#allocation2 + $0x44] sm:$0xf] %v1005
      %v1007 = vld [vmem:[#allocation2 + $0x44] sm:$0x8]
      %v1008 = vsel %vm849, 0, %v1007
      %1009 = vst [vmem:[#allocation2 + $0x44] sm:$0x8] %v1008
      %v1010 = vld [vmem:[#allocation2 + $0x48] sm:$0x1]
      %v1011 = vsel %vm675, 0, %v1010
      %1012 = vst [vmem:[#allocation2 + $0x48] sm:$0x1] %v1011
      %v1014 = vunpack.c.l.b16 %v640
      %v1015 = vunpack.c.h.b16 %v640
      %v1016 = vpack.c.b16 %v1014, %v1014
      %v1017 = vpack.c.b16 %v1015, %v1015
      %v1019 = vshrl.u32 %v1016, 16
      %v1021 = vrot.slane %v1019, 7
      %v1022 = vshll.u32 %v1016, 16
      %v1024 = vor.u32 %v1021, %v1022
      %v1025 = vrot.slane %v1021, 4
      %v1027 = vshrl.u32 %v1017, 16
      %v1029 = vrot.slane %v1027, 7
      %v1030 = vshll.u32 %v1017, 16
      %v1032 = vor.u32 %v1029, %v1030
      %v1033 = vsel %vm685, %v1025, %v1032
      %v1034 = vrot.slane %v1029, 4
      %v1038 = vld [vmem:[#allocation2 + $0x48] sm:$0xf]
      %v1039 = vsel %vm708, %v1024, %v1038
      %1040 = vst [vmem:[#allocation2 + $0x48] sm:$0xf] %v1039
      %1041 = vst.msk [vmem:[#allocation2 + $0x4c] sm:$0xf] %vm712, %v1033
      %v1042 = vld [vmem:[#allocation2 + $0x50] sm:$0x1]
      %v1043 = vsel %vm675, %v1034, %v1042
      %1044 = vst [vmem:[#allocation2 + $0x50] sm:$0x1] %v1043
      %v1045 = vld [vmem:[#allocation2 + $0x50] sm:$0x3]
      %v1046 = vsel %vm719, 0, %v1045
      %1047 = vst [vmem:[#allocation2 + $0x50] sm:$0x3] %v1046
      %v1049 = vunpack.c.l.b16 %v672
      %v1050 = vunpack.c.h.b16 %v672
      %v1051 = vpack.c.b16 %v1049, %v1049
      %v1052 = vpack.c.b16 %v1050, %v1050
      %v1054 = vshrl.u32 %v1051, 16
      %v1056 = vrot.slane %v1054, 6
      %v1057 = vshll.u32 %v1051, 16
      %v1059 = vrot.slane %v1057, 7
      %v1060 = vor.u32 %v1056, %v1059
      %v1061 = vrot.slane %v1060, 4
      %v1063 = vshrl.u32 %v1052, 16
      %v1065 = vrot.slane %v1063, 6
      %v1066 = vshll.u32 %v1052, 16
      %v1068 = vrot.slane %v1066, 7
      %v1069 = vor.u32 %v1065, %v1068
      %v1070 = vsel %vm730, %v1061, %v1069
      %v1071 = vrot.slane %v1069, 4
      %v1075 = vld [vmem:[#allocation2 + $0x50] sm:$0xe]
      %v1076 = vsel %vm755, %v1060, %v1075
      %1077 = vst [vmem:[#allocation2 + $0x50] sm:$0xe] %v1076
      %1078 = vst.msk [vmem:[#allocation2 + $0x54] sm:$0xf] %vm712, %v1070
      %v1079 = vld [vmem:[#allocation2 + $0x58] sm:$0x3]
      %v1080 = vsel %vm760, %v1071, %v1079
      %1081 = vst [vmem:[#allocation2 + $0x58] sm:$0x3] %v1080
      %v1082 = vld [vmem:[#allocation2 + $0x58] sm:$0x6]
      %v1083 = vsel %vm766, 0, %v1082
      %1084 = vst [vmem:[#allocation2 + $0x58] sm:$0x6] %v1083
      %vm1085 = vcmask 59394
      %vm1086 = vmand %vm1085, %vm801
      %v1087 = vld [vmem:[#allocation2 + $0x58] sm:$0x4]
      %v1088 = vsel %vm1086, 0, %v1087
      %1089 = vst [vmem:[#allocation2 + $0x58] sm:$0x4] %v1088
      %v1090 = vld [vmem:[#allocation2] sm:$0xf]
      %v1091 = vld [vmem:[#allocation2 + $0x4] sm:$0xf]
      %v1092 = vld [vmem:[#allocation2 + $0x8] sm:$0xf]
      %v1093 = vld [vmem:[#allocation2 + $0xc] sm:$0xf]
      %v1094 = vld [vmem:[#allocation2 + $0x10] sm:$0xf]
      %v1095 = vld [vmem:[#allocation2 + $0x14] sm:$0xf]
      %v1096 = vld [vmem:[#allocation2 + $0x18] sm:$0xf]
      %v1097 = vld [vmem:[#allocation2 + $0x1c] sm:$0xf]
      %v1098 = vld [vmem:[#allocation2 + $0x20] sm:$0xf]
      %v1099 = vld [vmem:[#allocation2 + $0x24] sm:$0xf]
      %v1100 = vld [vmem:[#allocation2 + $0x28] sm:$0xf]
      %v1101 = vld [vmem:[#allocation2 + $0x2c] sm:$0xf]
      %v1102 = vld [vmem:[#allocation2 + $0x30] sm:$0xf]
      %v1103 = vld [vmem:[#allocation2 + $0x34] sm:$0xf]
      %v1104 = vld [vmem:[#allocation2 + $0x38] sm:$0xf]
      %v1105 = vld [vmem:[#allocation2 + $0x3c] sm:$0xf]
      %v1106 = vld [vmem:[#allocation2 + $0x40] sm:$0xf]
      %v1107 = vld [vmem:[#allocation2 + $0x44] sm:$0xf]
      %v1108 = vld [vmem:[%s5] sm:$0xf]
      %v1109 = vld [vmem:[#allocation2 + $0x48] sm:$0x1]
      %s1110 = scalar_lea.vmem %s5, 4
      %v1111 = vld [vmem:[%s1110] sm:$0xf]
      %v1131 = vunpack.c.l.b16 %v1090
      %v1132 = vunpack.c.l.b16 %v1091
      %v1133 = vunpack.c.l.b16 %v1092
      %v1134 = vunpack.c.l.b16 %v1093
      %v1135 = vunpack.c.l.b16 %v1094
      %v1136 = vunpack.c.l.b16 %v1095
      %v1137 = vunpack.c.l.b16 %v1096
      %v1138 = vunpack.c.l.b16 %v1097
      %v1139 = vunpack.c.l.b16 %v1098
      %v1140 = vunpack.c.l.b16 %v1099
      %v1141 = vunpack.c.l.b16 %v1100
      %v1142 = vunpack.c.l.b16 %v1101
      %v1143 = vunpack.c.l.b16 %v1102
      %v1144 = vunpack.c.l.b16 %v1103
      %v1145 = vunpack.c.l.b16 %v1104
      %v1146 = vunpack.c.l.b16 %v1105
      %v1147 = vunpack.c.l.b16 %v1106
      %v1148 = vunpack.c.l.b16 %v1107
      %v1149 = vunpack.c.l.b16 %v1109
      %v1150 = vpack.c.b16 %v1132, %v1131
      %v1151 = vpack.c.b16 %v1134, %v1133
      %v1152 = vpack.c.b16 %v1136, %v1135
      %v1153 = vpack.c.b16 %v1138, %v1137
      %v1154 = vpack.c.b16 %v1140, %v1139
      %v1155 = vpack.c.b16 %v1142, %v1141
      %v1156 = vpack.c.b16 %v1144, %v1143
      %v1157 = vpack.c.b16 %v1146, %v1145
      %v1158 = vpack.c.b16 %v1148, %v1147
      %v1159 = vpack.c.b16 %v1149, %v1149
      %vm1160 = vsmask.f32 7424
      %v1162 = vshrl.u32 %v1150, 16
      %v1164 = vshll.u32 %v1150, 16
      %v1166 = vrot.slane %v1164, 1
      %v1167 = vor.u32 %v1162, %v1166
      %v1169 = vshll.u32 %v1151, 16
      %v1171 = vrot.slane %v1169, 1
      %v1172 = vsel %vm1160, %v1167, %v1171
      %v1173 = vshrl.u32 %v1151, 16
      %v1175 = vor.u32 %v1173, %v1171
      %v1177 = vshll.u32 %v1152, 16
      %v1179 = vrot.slane %v1177, 1
      %v1180 = vsel %vm1160, %v1175, %v1179
      %v1181 = vshrl.u32 %v1152, 16
      %v1183 = vor.u32 %v1181, %v1179
      %v1185 = vshll.u32 %v1153, 16
      %v1187 = vrot.slane %v1185, 1
      %v1188 = vsel %vm1160, %v1183, %v1187
      %v1189 = vshrl.u32 %v1153, 16
      %v1191 = vor.u32 %v1189, %v1187
      %v1193 = vshll.u32 %v1154, 16
      %v1195 = vrot.slane %v1193, 1
      %v1196 = vsel %vm1160, %v1191, %v1195
      %v1197 = vshrl.u32 %v1154, 16
      %v1199 = vor.u32 %v1197, %v1195
      %v1201 = vshll.u32 %v1155, 16
      %v1203 = vrot.slane %v1201, 1
      %v1204 = vsel %vm1160, %v1199, %v1203
      %v1205 = vshrl.u32 %v1155, 16
      %v1207 = vor.u32 %v1205, %v1203
      %v1209 = vshll.u32 %v1156, 16
      %v1211 = vrot.slane %v1209, 1
      %v1212 = vsel %vm1160, %v1207, %v1211
      %v1213 = vshrl.u32 %v1156, 16
      %v1215 = vor.u32 %v1213, %v1211
      %v1217 = vshll.u32 %v1157, 16
      %v1219 = vrot.slane %v1217, 1
      %v1220 = vsel %vm1160, %v1215, %v1219
      %v1221 = vshrl.u32 %v1157, 16
      %v1223 = vor.u32 %v1221, %v1219
      %v1225 = vshll.u32 %v1158, 16
      %v1227 = vrot.slane %v1225, 1
      %v1228 = vsel %vm1160, %v1223, %v1227
      %v1229 = vshrl.u32 %v1158, 16
      %v1231 = vor.u32 %v1229, %v1227
      %v1233 = vshll.u32 %v1159, 16
      %v1235 = vrot.slane %v1233, 1
      %v1236 = vsel %vm1160, %v1231, %v1235
      %vm1237 = vcmask 64512
      %v1239 = vsel %vm1237, %v1172, 0
      %v1242 = vsel %vm1237, %v1180, 0
      %v1245 = vsel %vm1237, %v1188, 0
      %v1248 = vsel %vm1237, %v1196, 0
      %v1251 = vsel %vm1237, %v1204, 0
      %v1254 = vsel %vm1237, %v1212, 0
      %v1257 = vsel %vm1237, %v1220, 0
      %v1260 = vsel %vm1237, %v1228, 0
      %v1263 = vsel %vm1237, %v1236, 0
      %vm1265 = vcmask 1043456
      %v1267 = vsel %vm1265, %v1111, 0
      %1269 = vmatprep.subr.bf16.mxu0 0
      %1270 = vmatpush1.bf16.msra.mxu0 %v1267
      %1271 = vmatprep.subr.bf16.mxu0 0
      %1272 = vmatpush1.bf16.msra.mxu0 0
      %1273 = vmatprep.subr.bf16.mxu0 0
      %1274 = vmatpush1.bf16.msra.mxu0 0
      %1275 = vmatprep.subr.bf16.mxu0 0
      %1276 = vmatpush1.bf16.msra.mxu0 0
      %1277 = vmatprep.subr.bf16.mxu0 0
      %1278 = vmatpush1.bf16.msra.mxu0 0
      %1279 = vmatprep.subr.bf16.mxu0 0
      %1280 = vmatpush1.bf16.msra.mxu0 0
      %1281 = vmatprep.subr.bf16.mxu0 0
      %1282 = vmatpush1.bf16.msra.mxu0 0
      %1283 = vmatprep.subr.bf16.mxu0 0
      %1284 = vmatpush1.bf16.msra.mxu0 0
      %1285 = vmatprep.subr.bf16.mxu0 0
      %1286 = vmatpush1.bf16.msra.mxu0 0
      %1287 = vmatprep.subr.bf16.mxu0 0
      %1288 = vmatpush1.bf16.msra.mxu0 0
      %1289 = vmatprep.subr.bf16.mxu0 0
      %1290 = vmatpush1.bf16.msra.mxu0 0
      %1291 = vmatprep.subr.bf16.mxu0 0
      %1292 = vmatpush1.bf16.msra.mxu0 0
      %1293 = vmatprep.subr.bf16.mxu0 0
      %1294 = vmatpush1.bf16.msra.mxu0 0
      %1295 = vmatprep.subr.bf16.mxu0 0
      %1296 = vmatpush1.bf16.msra.mxu0 0
      %1297 = vmatprep.subr.bf16.mxu0 0
      %1298 = vmatpush1.bf16.msra.mxu0 0
      %1299 = vmatprep.subr.bf16.mxu0 0
      %1300 = vmatpush1.bf16.msra.mxu0 0
      %1301 = vmatprep.mubr.bf16.mxu0 0
      %1302 = vmatmul.mubr.bf16.gmra.mrb[0].mxu0 %v1239
      %v1303 = vpop.f32.mrb[0].mxu0
      %v1304 = vadd.f32 0.0, %v1303
      %v1305 = vpop.f32.mrb[0].mxu0
      %v1306 = vpop.f32.mrb[0].mxu0
      %v1307 = vadd.f32 0.0, %v1306
      %v1308 = vpop.f32.mrb[0].mxu0
      %1309 = vmatprep.mubr.bf16.mxu0 0
      %1310 = vmatmul.mubr.bf16.gmra.mrb[0].mxu0 %v1242
      %v1311 = vpop.f32.mrb[0].mxu0
      %v1312 = vadd.f32 0.0, %v1311
      %v1313 = vpop.f32.mrb[0].mxu0
      %v1314 = vpop.f32.mrb[0].mxu0
      %v1315 = vadd.f32 0.0, %v1314
      %v1316 = vpop.f32.mrb[0].mxu0
      %1317 = vmatprep.mubr.bf16.mxu0 0
      %1318 = vmatmul.mubr.bf16.gmra.mrb[0].mxu0 %v1245
      %v1319 = vpop.f32.mrb[0].mxu0
      %v1320 = vadd.f32 0.0, %v1319
      %v1321 = vpop.f32.mrb[0].mxu0
      %v1322 = vpop.f32.mrb[0].mxu0
      %v1323 = vadd.f32 0.0, %v1322
      %v1324 = vpop.f32.mrb[0].mxu0
      %1325 = vmatprep.mubr.bf16.mxu0 0
      %1326 = vmatmul.mubr.bf16.gmra.mrb[0].mxu0 %v1248
      %v1327 = vpop.f32.mrb[0].mxu0
      %v1328 = vadd.f32 0.0, %v1327
      %v1329 = vpop.f32.mrb[0].mxu0
      %v1330 = vpop.f32.mrb[0].mxu0
      %v1331 = vadd.f32 0.0, %v1330
      %v1332 = vpop.f32.mrb[0].mxu0
      %1333 = vmatprep.mubr.bf16.mxu0 0
      %1334 = vmatmul.mubr.bf16.gmra.mrb[0].mxu0 %v1251
      %v1335 = vpop.f32.mrb[0].mxu0
      %v1336 = vadd.f32 0.0, %v1335
      %v1337 = vpop.f32.mrb[0].mxu0
      %v1338 = vpop.f32.mrb[0].mxu0
      %v1339 = vadd.f32 0.0, %v1338
      %v1340 = vpop.f32.mrb[0].mxu0
      %1341 = vmatprep.mubr.bf16.mxu0 0
      %1342 = vmatmul.mubr.bf16.gmra.mrb[0].mxu0 %v1254
      %v1343 = vpop.f32.mrb[0].mxu0
      %v1344 = vadd.f32 0.0, %v1343
      %v1345 = vpop.f32.mrb[0].mxu0
      %v1346 = vpop.f32.mrb[0].mxu0
      %v1347 = vadd.f32 0.0, %v1346
      %v1348 = vpop.f32.mrb[0].mxu0
      %1349 = vmatprep.mubr.bf16.mxu0 0
      %1350 = vmatmul.mubr.bf16.gmra.mrb[0].mxu0 %v1257
      %v1351 = vpop.f32.mrb[0].mxu0
      %v1352 = vadd.f32 0.0, %v1351
      %v1353 = vpop.f32.mrb[0].mxu0
      %v1354 = vpop.f32.mrb[0].mxu0
      %v1355 = vadd.f32 0.0, %v1354
      %v1356 = vpop.f32.mrb[0].mxu0
      %1357 = vmatprep.mubr.bf16.mxu0 0
      %1358 = vmatmul.mubr.bf16.gmra.mrb[0].mxu0 %v1260
      %v1359 = vpop.f32.mrb[0].mxu0
      %v1360 = vadd.f32 0.0, %v1359
      %v1361 = vpop.f32.mrb[0].mxu0
      %v1362 = vpop.f32.mrb[0].mxu0
      %v1363 = vadd.f32 0.0, %v1362
      %v1364 = vpop.f32.mrb[0].mxu0
      %1365 = vmatprep.mubr.bf16.mxu0 0
      %1366 = vmatmul.mubr.bf16.gmra.mrb[0].mxu0 %v1263
      %v1367 = vpop.f32.mrb[0].mxu0
      %v1368 = vadd.f32 0.0, %v1367
      %v1369 = vpop.f32.mrb[0].mxu0
      %v1370 = vpop.f32.mrb[0].mxu0
      %v1371 = vadd.f32 0.0, %v1370
      %v1372 = vpop.f32.mrb[0].mxu0
      %1373 = vdwg.mxu0
      %v1374 = vsel %vm1237, %v1150, 0
      %v1376 = vsel %vm1237, %v1151, 0
      %v1378 = vsel %vm1237, %v1152, 0
      %v1380 = vsel %vm1237, %v1153, 0
      %v1382 = vsel %vm1237, %v1154, 0
      %v1384 = vsel %vm1237, %v1155, 0
      %v1386 = vsel %vm1237, %v1156, 0
      %v1388 = vsel %vm1237, %v1157, 0
      %v1390 = vsel %vm1237, %v1158, 0
      %v1393 = vsel %vm1265, %v1108, 0
      %1395 = vmatprep.subr.bf16.mxu0 0
      %1396 = vmatpush1.bf16.msra.mxu0 %v1393
      %1397 = vmatprep.subr.bf16.mxu0 0
      %1398 = vmatpush1.bf16.msra.mxu0 0
      %1399 = vmatprep.subr.bf16.mxu0 0
      %1400 = vmatpush1.bf16.msra.mxu0 0
      %1401 = vmatprep.subr.bf16.mxu0 0
      %1402 = vmatpush1.bf16.msra.mxu0 0
      %1403 = vmatprep.subr.bf16.mxu0 0
      %1404 = vmatpush1.bf16.msra.mxu0 0
      %1405 = vmatprep.subr.bf16.mxu0 0
      %1406 = vmatpush1.bf16.msra.mxu0 0
      %1407 = vmatprep.subr.bf16.mxu0 0
      %1408 = vmatpush1.bf16.msra.mxu0 0
      %1409 = vmatprep.subr.bf16.mxu0 0
      %1410 = vmatpush1.bf16.msra.mxu0 0
      %1411 = vmatprep.subr.bf16.mxu0 0
      %1412 = vmatpush1.bf16.msra.mxu0 0
      %1413 = vmatprep.subr.bf16.mxu0 0
      %1414 = vmatpush1.bf16.msra.mxu0 0
      %1415 = vmatprep.subr.bf16.mxu0 0
      %1416 = vmatpush1.bf16.msra.mxu0 0
      %1417 = vmatprep.subr.bf16.mxu0 0
      %1418 = vmatpush1.bf16.msra.mxu0 0
      %1419 = vmatprep.subr.bf16.mxu0 0
      %1420 = vmatpush1.bf16.msra.mxu0 0
      %1421 = vmatprep.subr.bf16.mxu0 0
      %1422 = vmatpush1.bf16.msra.mxu0 0
      %1423 = vmatprep.subr.bf16.mxu0 0
      %1424 = vmatpush1.bf16.msra.mxu0 0
      %1425 = vmatprep.subr.bf16.mxu0 0
      %1426 = vmatpush1.bf16.msra.mxu0 0
      %1427 = vmatprep.mubr.bf16.mxu0 0
      %1428 = vmatmul.mubr.bf16.gmra.mrb[0].mxu0 %v1374
      %v1429 = vpop.f32.mrb[0].mxu0
      %v1430 = vadd.f32 %v1304, %v1429
      %v1431 = vpop.f32.mrb[0].mxu0
      %v1432 = vpop.f32.mrb[0].mxu0
      %v1433 = vadd.f32 %v1307, %v1432
      %v1434 = vpop.f32.mrb[0].mxu0
      %1435 = vmatprep.mubr.bf16.mxu0 0
      %1436 = vmatmul.mubr.bf16.gmra.mrb[0].mxu0 %v1376
      %v1437 = vpop.f32.mrb[0].mxu0
      %v1438 = vadd.f32 %v1312, %v1437
      %v1439 = vpop.f32.mrb[0].mxu0
      %v1440 = vpop.f32.mrb[0].mxu0
      %v1441 = vadd.f32 %v1315, %v1440
      %v1442 = vpop.f32.mrb[0].mxu0
      %1443 = vmatprep.mubr.bf16.mxu0 0
      %1444 = vmatmul.mubr.bf16.gmra.mrb[0].mxu0 %v1378
      %v1445 = vpop.f32.mrb[0].mxu0
      %v1446 = vadd.f32 %v1320, %v1445
      %v1447 = vpop.f32.mrb[0].mxu0
      %v1448 = vpop.f32.mrb[0].mxu0
      %v1449 = vadd.f32 %v1323, %v1448
      %v1450 = vpop.f32.mrb[0].mxu0
      %1451 = vmatprep.mubr.bf16.mxu0 0
      %1452 = vmatmul.mubr.bf16.gmra.mrb[0].mxu0 %v1380
      %v1453 = vpop.f32.mrb[0].mxu0
      %v1454 = vadd.f32 %v1328, %v1453
      %v1455 = vpop.f32.mrb[0].mxu0
      %v1456 = vpop.f32.mrb[0].mxu0
      %v1457 = vadd.f32 %v1331, %v1456
      %v1458 = vpop.f32.mrb[0].mxu0
      %1459 = vmatprep.mubr.bf16.mxu0 0
      %1460 = vmatmul.mubr.bf16.gmra.mrb[0].mxu0 %v1382
      %v1461 = vpop.f32.mrb[0].mxu0
      %v1462 = vadd.f32 %v1336, %v1461
      %v1463 = vpop.f32.mrb[0].mxu0
      %v1464 = vpop.f32.mrb[0].mxu0
      %v1465 = vadd.f32 %v1339, %v1464
      %v1466 = vpop.f32.mrb[0].mxu0
      %1467 = vmatprep.mubr.bf16.mxu0 0
      %1468 = vmatmul.mubr.bf16.gmra.mrb[0].mxu0 %v1384
      %v1469 = vpop.f32.mrb[0].mxu0
      %v1470 = vadd.f32 %v1344, %v1469
      %v1471 = vpop.f32.mrb[0].mxu0
      %v1472 = vpop.f32.mrb[0].mxu0
      %v1473 = vadd.f32 %v1347, %v1472
      %v1474 = vpop.f32.mrb[0].mxu0
      %1475 = vmatprep.mubr.bf16.mxu0 0
      %1476 = vmatmul.mubr.bf16.gmra.mrb[0].mxu0 %v1386
      %v1477 = vpop.f32.mrb[0].mxu0
      %v1478 = vadd.f32 %v1352, %v1477
      %v1479 = vpop.f32.mrb[0].mxu0
      %v1480 = vpop.f32.mrb[0].mxu0
      %v1481 = vadd.f32 %v1355, %v1480
      %v1482 = vpop.f32.mrb[0].mxu0
      %1483 = vmatprep.mubr.bf16.mxu0 0
      %1484 = vmatmul.mubr.bf16.gmra.mrb[0].mxu0 %v1388
      %v1485 = vpop.f32.mrb[0].mxu0
      %v1486 = vadd.f32 %v1360, %v1485
      %v1487 = vpop.f32.mrb[0].mxu0
      %v1488 = vpop.f32.mrb[0].mxu0
      %v1489 = vadd.f32 %v1363, %v1488
      %v1490 = vpop.f32.mrb[0].mxu0
      %1491 = vmatprep.mubr.bf16.mxu0 0
      %1492 = vmatmul.mubr.bf16.gmra.mrb[0].mxu0 %v1390
      %v1493 = vpop.f32.mrb[0].mxu0
      %v1494 = vadd.f32 %v1368, %v1493
      %v1495 = vpop.f32.mrb[0].mxu0
      %v1496 = vpop.f32.mrb[0].mxu0
      %v1497 = vadd.f32 %v1371, %v1496
      %v1498 = vpop.f32.mrb[0].mxu0
      %1499 = vdwg.mxu0
      %v1500 = vld [vmem:[#allocation2] sm:$0xe]
      %s1501 = scalar_lea.vmem %s5, 8
      %v1502 = vld [vmem:[%s1501] sm:$0xf]
      %v1504 = vunpack.c.l.b16 %v1500
      %v1505 = vpack.c.b16 %v1132, %v1504
      %vm1506 = vcmask 1046528
      %v1507 = vrot.slane %v1505, 1
      %v1508 = vrot.slane %v1151, 1
      %v1509 = vsel %vm1506, %v1507, %v1508
      %v1510 = vrot.slane %v1152, 1
      %v1511 = vsel %vm1506, %v1508, %v1510
      %v1512 = vrot.slane %v1153, 1
      %v1513 = vsel %vm1506, %v1510, %v1512
      %v1514 = vrot.slane %v1154, 1
      %v1515 = vsel %vm1506, %v1512, %v1514
      %v1516 = vrot.slane %v1155, 1
      %v1517 = vsel %vm1506, %v1514, %v1516
      %v1518 = vrot.slane %v1156, 1
      %v1519 = vsel %vm1506, %v1516, %v1518
      %v1520 = vrot.slane %v1157, 1
      %v1521 = vsel %vm1506, %v1518, %v1520
      %v1522 = vrot.slane %v1158, 1
      %v1523 = vsel %vm1506, %v1520, %v1522
      %v1524 = vrot.slane %v1159, 1
      %v1525 = vsel %vm1506, %v1522, %v1524
      %v1527 = vsel %vm1237, %v1509, 0
      %v1530 = vsel %vm1237, %v1511, 0
      %v1533 = vsel %vm1237, %v1513, 0
      %v1536 = vsel %vm1237, %v1515, 0
      %v1539 = vsel %vm1237, %v1517, 0
      %v1542 = vsel %vm1237, %v1519, 0
      %v1545 = vsel %vm1237, %v1521, 0
      %v1548 = vsel %vm1237, %v1523, 0
      %v1551 = vsel %vm1237, %v1525, 0
      %v1554 = vsel %vm1265, %v1502, 0
      %1556 = vmatprep.subr.bf16.mxu0 0
      %1557 = vmatpush1.bf16.msra.mxu0 %v1554
      %1558 = vmatprep.subr.bf16.mxu0 0
      %1559 = vmatpush1.bf16.msra.mxu0 0
      %1560 = vmatprep.subr.bf16.mxu0 0
      %1561 = vmatpush1.bf16.msra.mxu0 0
      %1562 = vmatprep.subr.bf16.mxu0 0
      %1563 = vmatpush1.bf16.msra.mxu0 0
      %1564 = vmatprep.subr.bf16.mxu0 0
      %1565 = vmatpush1.bf16.msra.mxu0 0
      %1566 = vmatprep.subr.bf16.mxu0 0
      %1567 = vmatpush1.bf16.msra.mxu0 0
      %1568 = vmatprep.subr.bf16.mxu0 0
      %1569 = vmatpush1.bf16.msra.mxu0 0
      %1570 = vmatprep.subr.bf16.mxu0 0
      %1571 = vmatpush1.bf16.msra.mxu0 0
      %1572 = vmatprep.subr.bf16.mxu0 0
      %1573 = vmatpush1.bf16.msra.mxu0 0
      %1574 = vmatprep.subr.bf16.mxu0 0
      %1575 = vmatpush1.bf16.msra.mxu0 0
      %1576 = vmatprep.subr.bf16.mxu0 0
      %1577 = vmatpush1.bf16.msra.mxu0 0
      %1578 = vmatprep.subr.bf16.mxu0 0
      %1579 = vmatpush1.bf16.msra.mxu0 0
      %1580 = vmatprep.subr.bf16.mxu0 0
      %1581 = vmatpush1.bf16.msra.mxu0 0
      %1582 = vmatprep.subr.bf16.mxu0 0
      %1583 = vmatpush1.bf16.msra.mxu0 0
      %1584 = vmatprep.subr.bf16.mxu0 0
      %1585 = vmatpush1.bf16.msra.mxu0 0
      %1586 = vmatprep.subr.bf16.mxu0 0
      %1587 = vmatpush1.bf16.msra.mxu0 0
      %1588 = vmatprep.mubr.bf16.mxu0 0
      %1589 = vmatmul.mubr.bf16.gmra.mrb[0].mxu0 %v1527
      %v1590 = vpop.f32.mrb[0].mxu0
      %v1591 = vadd.f32 0.0, %v1590
      %v1592 = vpop.f32.mrb[0].mxu0
      %v1593 = vpop.f32.mrb[0].mxu0
      %v1594 = vadd.f32 0.0, %v1593
      %v1595 = vpop.f32.mrb[0].mxu0
      %1596 = vmatprep.mubr.bf16.mxu0 0
      %1597 = vmatmul.mubr.bf16.gmra.mrb[0].mxu0 %v1530
      %v1598 = vpop.f32.mrb[0].mxu0
      %v1599 = vadd.f32 0.0, %v1598
      %v1600 = vpop.f32.mrb[0].mxu0
      %v1601 = vpop.f32.mrb[0].mxu0
      %v1602 = vadd.f32 0.0, %v1601
      %v1603 = vpop.f32.mrb[0].mxu0
      %1604 = vmatprep.mubr.bf16.mxu0 0
      %1605 = vmatmul.mubr.bf16.gmra.mrb[0].mxu0 %v1533
      %v1606 = vpop.f32.mrb[0].mxu0
      %v1607 = vadd.f32 0.0, %v1606
      %v1608 = vpop.f32.mrb[0].mxu0
      %v1609 = vpop.f32.mrb[0].mxu0
      %v1610 = vadd.f32 0.0, %v1609
      %v1611 = vpop.f32.mrb[0].mxu0
      %1612 = vmatprep.mubr.bf16.mxu0 0
      %1613 = vmatmul.mubr.bf16.gmra.mrb[0].mxu0 %v1536
      %v1614 = vpop.f32.mrb[0].mxu0
      %v1615 = vadd.f32 0.0, %v1614
      %v1616 = vpop.f32.mrb[0].mxu0
      %v1617 = vpop.f32.mrb[0].mxu0
      %v1618 = vadd.f32 0.0, %v1617
      %v1619 = vpop.f32.mrb[0].mxu0
      %1620 = vmatprep.mubr.bf16.mxu0 0
      %1621 = vmatmul.mubr.bf16.gmra.mrb[0].mxu0 %v1539
      %v1622 = vpop.f32.mrb[0].mxu0
      %v1623 = vadd.f32 0.0, %v1622
      %v1624 = vpop.f32.mrb[0].mxu0
      %v1625 = vpop.f32.mrb[0].mxu0
      %v1626 = vadd.f32 0.0, %v1625
      %v1627 = vpop.f32.mrb[0].mxu0
      %1628 = vmatprep.mubr.bf16.mxu0 0
      %1629 = vmatmul.mubr.bf16.gmra.mrb[0].mxu0 %v1542
      %v1630 = vpop.f32.mrb[0].mxu0
      %v1631 = vadd.f32 0.0, %v1630
      %v1632 = vpop.f32.mrb[0].mxu0
      %v1633 = vpop.f32.mrb[0].mxu0
      %v1634 = vadd.f32 0.0, %v1633
      %v1635 = vpop.f32.mrb[0].mxu0
      %1636 = vmatprep.mubr.bf16.mxu0 0
      %1637 = vmatmul.mubr.bf16.gmra.mrb[0].mxu0 %v1545
      %v1638 = vpop.f32.mrb[0].mxu0
      %v1639 = vadd.f32 0.0, %v1638
      %v1640 = vpop.f32.mrb[0].mxu0
      %v1641 = vpop.f32.mrb[0].mxu0
      %v1642 = vadd.f32 0.0, %v1641
      %v1643 = vpop.f32.mrb[0].mxu0
      %1644 = vmatprep.mubr.bf16.mxu0 0
      %1645 = vmatmul.mubr.bf16.gmra.mrb[0].mxu0 %v1548
      %v1646 = vpop.f32.mrb[0].mxu0
      %v1647 = vadd.f32 0.0, %v1646
      %v1648 = vpop.f32.mrb[0].mxu0
      %v1649 = vpop.f32.mrb[0].mxu0
      %v1650 = vadd.f32 0.0, %v1649
      %v1651 = vpop.f32.mrb[0].mxu0
      %1652 = vmatprep.mubr.bf16.mxu0 0
      %1653 = vmatmul.mubr.bf16.gmra.mrb[0].mxu0 %v1551
      %v1654 = vpop.f32.mrb[0].mxu0
      %v1655 = vadd.f32 0.0, %v1654
      %v1656 = vpop.f32.mrb[0].mxu0
      %v1657 = vpop.f32.mrb[0].mxu0
      %v1658 = vadd.f32 0.0, %v1657
      %v1659 = vpop.f32.mrb[0].mxu0
      %1660 = vdwg.mxu0
      %v1661 = vadd.f32 %v1430, %v1591
      %v1662 = vadd.f32 %v1433, %v1594
      %v1663 = vadd.f32 %v1438, %v1599
      %v1664 = vadd.f32 %v1441, %v1602
      %v1665 = vadd.f32 %v1446, %v1607
      %v1666 = vadd.f32 %v1449, %v1610
      %v1667 = vadd.f32 %v1454, %v1615
      %v1668 = vadd.f32 %v1457, %v1618
      %v1669 = vadd.f32 %v1462, %v1623
      %v1670 = vadd.f32 %v1465, %v1626
      %v1671 = vadd.f32 %v1470, %v1631
      %v1672 = vadd.f32 %v1473, %v1634
      %v1673 = vadd.f32 %v1478, %v1639
      %v1674 = vadd.f32 %v1481, %v1642
      %v1675 = vadd.f32 %v1486, %v1647
      %v1676 = vadd.f32 %v1489, %v1650
      %v1677 = vadd.f32 %v1494, %v1655
      %v1678 = vadd.f32 %v1497, %v1658
      %v1679 = vld [vmem:[#allocation2 + $0x8] sm:$0xe]
      %v1680 = vld [vmem:[#allocation2 + $0xc] sm:$0xf]
      %v1681 = vld [vmem:[#allocation2 + $0x10] sm:$0xf]
      %v1682 = vld [vmem:[#allocation2 + $0x14] sm:$0xf]
      %v1683 = vld [vmem:[#allocation2 + $0x18] sm:$0xf]
      %v1684 = vld [vmem:[#allocation2 + $0x1c] sm:$0xf]
      %v1685 = vld [vmem:[#allocation2 + $0x20] sm:$0xf]
      %v1686 = vld [vmem:[#allocation2 + $0x24] sm:$0xf]
      %v1687 = vld [vmem:[#allocation2 + $0x28] sm:$0xf]
      %v1688 = vld [vmem:[#allocation2 + $0x2c] sm:$0xf]
      %v1689 = vld [vmem:[#allocation2 + $0x30] sm:$0xf]
      %v1690 = vld [vmem:[#allocation2 + $0x34] sm:$0xf]
      %v1691 = vld [vmem:[#allocation2 + $0x38] sm:$0xf]
      %v1692 = vld [vmem:[#allocation2 + $0x3c] sm:$0xf]
      %v1693 = vld [vmem:[#allocation2 + $0x40] sm:$0xf]
      %v1694 = vld [vmem:[#allocation2 + $0x44] sm:$0xf]
      %v1695 = vld [vmem:[#allocation2 + $0x48] sm:$0xf]
      %v1696 = vld [vmem:[#allocation2 + $0x4c] sm:$0xf]
      %v1697 = vld [vmem:[#allocation2 + $0x50] sm:$0x1]
      %s1698 = scalar_lea.vmem %s5, 12
      %v1699 = vld [vmem:[%s1698] sm:$0xf]
      %v1719 = vunpack.c.l.b16 %v1679
      %v1720 = vunpack.c.l.b16 %v1680
      %v1721 = vunpack.c.l.b16 %v1681
      %v1722 = vunpack.c.l.b16 %v1682
      %v1723 = vunpack.c.l.b16 %v1683
      %v1724 = vunpack.c.l.b16 %v1684
      %v1725 = vunpack.c.l.b16 %v1685
      %v1726 = vunpack.c.l.b16 %v1686
      %v1727 = vunpack.c.l.b16 %v1687
      %v1728 = vunpack.c.l.b16 %v1688
      %v1729 = vunpack.c.l.b16 %v1689
      %v1730 = vunpack.c.l.b16 %v1690
      %v1731 = vunpack.c.l.b16 %v1691
      %v1732 = vunpack.c.l.b16 %v1692
      %v1733 = vunpack.c.l.b16 %v1693
      %v1734 = vunpack.c.l.b16 %v1694
      %v1735 = vunpack.c.l.b16 %v1695
      %v1736 = vunpack.c.l.b16 %v1696
      %v1737 = vunpack.c.l.b16 %v1697
      %v1738 = vpack.c.b16 %v1720, %v1719
      %v1739 = vpack.c.b16 %v1722, %v1721
      %v1740 = vpack.c.b16 %v1724, %v1723
      %v1741 = vpack.c.b16 %v1726, %v1725
      %v1742 = vpack.c.b16 %v1728, %v1727
      %v1743 = vpack.c.b16 %v1730, %v1729
      %v1744 = vpack.c.b16 %v1732, %v1731
      %v1745 = vpack.c.b16 %v1734, %v1733
      %v1746 = vpack.c.b16 %v1736, %v1735
      %v1747 = vpack.c.b16 %v1737, %v1737
      %v1748 = vrot.slane %v1738, 1
      %v1749 = vrot.slane %v1739, 1
      %v1750 = vsel %vm1506, %v1748, %v1749
      %v1751 = vrot.slane %v1740, 1
      %v1752 = vsel %vm1506, %v1749, %v1751
      %v1753 = vrot.slane %v1741, 1
      %v1754 = vsel %vm1506, %v1751, %v1753
      %v1755 = vrot.slane %v1742, 1
      %v1756 = vsel %vm1506, %v1753, %v1755
      %v1757 = vrot.slane %v1743, 1
      %v1758 = vsel %vm1506, %v1755, %v1757
      %v1759 = vrot.slane %v1744, 1
      %v1760 = vsel %vm1506, %v1757, %v1759
      %v1761 = vrot.slane %v1745, 1
      %v1762 = vsel %vm1506, %v1759, %v1761
      %v1763 = vrot.slane %v1746, 1
      %v1764 = vsel %vm1506, %v1761, %v1763
      %v1765 = vrot.slane %v1747, 1
      %v1766 = vsel %vm1506, %v1763, %v1765
      %v1768 = vsel %vm1237, %v1750, 0
      %v1771 = vsel %vm1237, %v1752, 0
      %v1774 = vsel %vm1237, %v1754, 0
      %v1777 = vsel %vm1237, %v1756, 0
      %v1780 = vsel %vm1237, %v1758, 0
      %v1783 = vsel %vm1237, %v1760, 0
      %v1786 = vsel %vm1237, %v1762, 0
      %v1789 = vsel %vm1237, %v1764, 0
      %v1792 = vsel %vm1237, %v1766, 0
      %v1795 = vsel %vm1265, %v1699, 0
      %1797 = vmatprep.subr.bf16.mxu0 0
      %1798 = vmatpush1.bf16.msra.mxu0 %v1795
      %1799 = vmatprep.subr.bf16.mxu0 0
      %1800 = vmatpush1.bf16.msra.mxu0 0
      %1801 = vmatprep.subr.bf16.mxu0 0
      %1802 = vmatpush1.bf16.msra.mxu0 0
      %1803 = vmatprep.subr.bf16.mxu0 0
      %1804 = vmatpush1.bf16.msra.mxu0 0
      %1805 = vmatprep.subr.bf16.mxu0 0
      %1806 = vmatpush1.bf16.msra.mxu0 0
      %1807 = vmatprep.subr.bf16.mxu0 0
      %1808 = vmatpush1.bf16.msra.mxu0 0
      %1809 = vmatprep.subr.bf16.mxu0 0
      %1810 = vmatpush1.bf16.msra.mxu0 0
      %1811 = vmatprep.subr.bf16.mxu0 0
      %1812 = vmatpush1.bf16.msra.mxu0 0
      %1813 = vmatprep.subr.bf16.mxu0 0
      %1814 = vmatpush1.bf16.msra.mxu0 0
      %1815 = vmatprep.subr.bf16.mxu0 0
      %1816 = vmatpush1.bf16.msra.mxu0 0
      %1817 = vmatprep.subr.bf16.mxu0 0
      %1818 = vmatpush1.bf16.msra.mxu0 0
      %1819 = vmatprep.subr.bf16.mxu0 0
      %1820 = vmatpush1.bf16.msra.mxu0 0
      %1821 = vmatprep.subr.bf16.mxu0 0
      %1822 = vmatpush1.bf16.msra.mxu0 0
      %1823 = vmatprep.subr.bf16.mxu0 0
      %1824 = vmatpush1.bf16.msra.mxu0 0
      %1825 = vmatprep.subr.bf16.mxu0 0
      %1826 = vmatpush1.bf16.msra.mxu0 0
      %1827 = vmatprep.subr.bf16.mxu0 0
      %1828 = vmatpush1.bf16.msra.mxu0 0
      %1829 = vmatprep.mubr.bf16.mxu0 0
      %1830 = vmatmul.mubr.bf16.gmra.mrb[0].mxu0 %v1768
      %v1831 = vpop.f32.mrb[0].mxu0
      %v1832 = vadd.f32 0.0, %v1831
      %v1833 = vpop.f32.mrb[0].mxu0
      %v1834 = vpop.f32.mrb[0].mxu0
      %v1835 = vadd.f32 0.0, %v1834
      %v1836 = vpop.f32.mrb[0].mxu0
      %1837 = vmatprep.mubr.bf16.mxu0 0
      %1838 = vmatmul.mubr.bf16.gmra.mrb[0].mxu0 %v1771
      %v1839 = vpop.f32.mrb[0].mxu0
      %v1840 = vadd.f32 0.0, %v1839
      %v1841 = vpop.f32.mrb[0].mxu0
      %v1842 = vpop.f32.mrb[0].mxu0
      %v1843 = vadd.f32 0.0, %v1842
      %v1844 = vpop.f32.mrb[0].mxu0
      %1845 = vmatprep.mubr.bf16.mxu0 0
      %1846 = vmatmul.mubr.bf16.gmra.mrb[0].mxu0 %v1774
      %v1847 = vpop.f32.mrb[0].mxu0
      %v1848 = vadd.f32 0.0, %v1847
      %v1849 = vpop.f32.mrb[0].mxu0
      %v1850 = vpop.f32.mrb[0].mxu0
      %v1851 = vadd.f32 0.0, %v1850
      %v1852 = vpop.f32.mrb[0].mxu0
      %1853 = vmatprep.mubr.bf16.mxu0 0
      %1854 = vmatmul.mubr.bf16.gmra.mrb[0].mxu0 %v1777
      %v1855 = vpop.f32.mrb[0].mxu0
      %v1856 = vadd.f32 0.0, %v1855
      %v1857 = vpop.f32.mrb[0].mxu0
      %v1858 = vpop.f32.mrb[0].mxu0
      %v1859 = vadd.f32 0.0, %v1858
      %v1860 = vpop.f32.mrb[0].mxu0
      %1861 = vmatprep.mubr.bf16.mxu0 0
      %1862 = vmatmul.mubr.bf16.gmra.mrb[0].mxu0 %v1780
      %v1863 = vpop.f32.mrb[0].mxu0
      %v1864 = vadd.f32 0.0, %v1863
      %v1865 = vpop.f32.mrb[0].mxu0
      %v1866 = vpop.f32.mrb[0].mxu0
      %v1867 = vadd.f32 0.0, %v1866
      %v1868 = vpop.f32.mrb[0].mxu0
      %1869 = vmatprep.mubr.bf16.mxu0 0
      %1870 = vmatmul.mubr.bf16.gmra.mrb[0].mxu0 %v1783
      %v1871 = vpop.f32.mrb[0].mxu0
      %v1872 = vadd.f32 0.0, %v1871
      %v1873 = vpop.f32.mrb[0].mxu0
      %v1874 = vpop.f32.mrb[0].mxu0
      %v1875 = vadd.f32 0.0, %v1874
      %v1876 = vpop.f32.mrb[0].mxu0
      %1877 = vmatprep.mubr.bf16.mxu0 0
      %1878 = vmatmul.mubr.bf16.gmra.mrb[0].mxu0 %v1786
      %v1879 = vpop.f32.mrb[0].mxu0
      %v1880 = vadd.f32 0.0, %v1879
      %v1881 = vpop.f32.mrb[0].mxu0
      %v1882 = vpop.f32.mrb[0].mxu0
      %v1883 = vadd.f32 0.0, %v1882
      %v1884 = vpop.f32.mrb[0].mxu0
      %1885 = vmatprep.mubr.bf16.mxu0 0
      %1886 = vmatmul.mubr.bf16.gmra.mrb[0].mxu0 %v1789
      %v1887 = vpop.f32.mrb[0].mxu0
      %v1888 = vadd.f32 0.0, %v1887
      %v1889 = vpop.f32.mrb[0].mxu0
      %v1890 = vpop.f32.mrb[0].mxu0
      %v1891 = vadd.f32 0.0, %v1890
      %v1892 = vpop.f32.mrb[0].mxu0
      %1893 = vmatprep.mubr.bf16.mxu0 0
      %1894 = vmatmul.mubr.bf16.gmra.mrb[0].mxu0 %v1792
      %v1895 = vpop.f32.mrb[0].mxu0
      %v1896 = vadd.f32 0.0, %v1895
      %v1897 = vpop.f32.mrb[0].mxu0
      %v1898 = vpop.f32.mrb[0].mxu0
      %v1899 = vadd.f32 0.0, %v1898
      %v1900 = vpop.f32.mrb[0].mxu0
      %1901 = vdwg.mxu0
      %v1902 = vadd.f32 %v1661, %v1832
      %v1903 = vadd.f32 %v1662, %v1835
      %v1904 = vadd.f32 %v1663, %v1840
      %v1905 = vadd.f32 %v1664, %v1843
      %v1906 = vadd.f32 %v1665, %v1848
      %v1907 = vadd.f32 %v1666, %v1851
      %v1908 = vadd.f32 %v1667, %v1856
      %v1909 = vadd.f32 %v1668, %v1859
      %v1910 = vadd.f32 %v1669, %v1864
      %v1911 = vadd.f32 %v1670, %v1867
      %v1912 = vadd.f32 %v1671, %v1872
      %v1913 = vadd.f32 %v1672, %v1875
      %v1914 = vadd.f32 %v1673, %v1880
      %v1915 = vadd.f32 %v1674, %v1883
      %v1916 = vadd.f32 %v1675, %v1888
      %v1917 = vadd.f32 %v1676, %v1891
      %v1918 = vadd.f32 %v1677, %v1896
      %v1919 = vadd.f32 %v1678, %v1899
      %v1920 = vld [vmem:[#allocation2 + $0x50] sm:$0x3]
      %s1921 = scalar_lea.vmem %s5, 16
      %v1922 = vld [vmem:[%s1921] sm:$0xf]
      %v1924 = vunpack.c.l.b16 %v1920
      %v1925 = vpack.c.b16 %v1924, %v1924
      %vm1926 = vsmask.f32 6400
      %v1928 = vshrl.u32 %v1738, 16
      %v1930 = vrot.slane %v1928, 1
      %v1931 = vshll.u32 %v1738, 16
      %v1933 = vrot.slane %v1931, 2
      %v1934 = vor.u32 %v1930, %v1933
      %v1936 = vshrl.u32 %v1739, 16
      %v1938 = vrot.slane %v1936, 1
      %v1939 = vshll.u32 %v1739, 16
      %v1941 = vrot.slane %v1939, 2
      %v1942 = vor.u32 %v1938, %v1941
      %v1943 = vsel %vm1926, %v1934, %v1942
      %v1945 = vshrl.u32 %v1740, 16
      %v1947 = vrot.slane %v1945, 1
      %v1948 = vshll.u32 %v1740, 16
      %v1950 = vrot.slane %v1948, 2
      %v1951 = vor.u32 %v1947, %v1950
      %v1952 = vsel %vm1926, %v1942, %v1951
      %v1954 = vshrl.u32 %v1741, 16
      %v1956 = vrot.slane %v1954, 1
      %v1957 = vshll.u32 %v1741, 16
      %v1959 = vrot.slane %v1957, 2
      %v1960 = vor.u32 %v1956, %v1959
      %v1961 = vsel %vm1926, %v1951, %v1960
      %v1963 = vshrl.u32 %v1742, 16
      %v1965 = vrot.slane %v1963, 1
      %v1966 = vshll.u32 %v1742, 16
      %v1968 = vrot.slane %v1966, 2
      %v1969 = vor.u32 %v1965, %v1968
      %v1970 = vsel %vm1926, %v1960, %v1969
      %v1972 = vshrl.u32 %v1743, 16
      %v1974 = vrot.slane %v1972, 1
      %v1975 = vshll.u32 %v1743, 16
      %v1977 = vrot.slane %v1975, 2
      %v1978 = vor.u32 %v1974, %v1977
      %v1979 = vsel %vm1926, %v1969, %v1978
      %v1981 = vshrl.u32 %v1744, 16
      %v1983 = vrot.slane %v1981, 1
      %v1984 = vshll.u32 %v1744, 16
      %v1986 = vrot.slane %v1984, 2
      %v1987 = vor.u32 %v1983, %v1986
      %v1988 = vsel %vm1926, %v1978, %v1987
      %v1990 = vshrl.u32 %v1745, 16
      %v1992 = vrot.slane %v1990, 1
      %v1993 = vshll.u32 %v1745, 16
      %v1995 = vrot.slane %v1993, 2
      %v1996 = vor.u32 %v1992, %v1995
      %v1997 = vsel %vm1926, %v1987, %v1996
      %v1999 = vshrl.u32 %v1746, 16
      %v2001 = vrot.slane %v1999, 1
      %v2002 = vshll.u32 %v1746, 16
      %v2004 = vrot.slane %v2002, 2
      %v2005 = vor.u32 %v2001, %v2004
      %v2006 = vsel %vm1926, %v1996, %v2005
      %v2008 = vshrl.u32 %v1925, 16
      %v2010 = vrot.slane %v2008, 1
      %v2011 = vshll.u32 %v1925, 16
      %v2013 = vrot.slane %v2011, 2
      %v2014 = vor.u32 %v2010, %v2013
      %v2015 = vsel %vm1926, %v2005, %v2014
      %v2017 = vsel %vm1237, %v1943, 0
      %v2020 = vsel %vm1237, %v1952, 0
      %v2023 = vsel %vm1237, %v1961, 0
      %v2026 = vsel %vm1237, %v1970, 0
      %v2029 = vsel %vm1237, %v1979, 0
      %v2032 = vsel %vm1237, %v1988, 0
      %v2035 = vsel %vm1237, %v1997, 0
      %v2038 = vsel %vm1237, %v2006, 0
      %v2041 = vsel %vm1237, %v2015, 0
      %v2044 = vsel %vm1265, %v1922, 0
      %2046 = vmatprep.subr.bf16.mxu0 0
      %2047 = vmatpush1.bf16.msra.mxu0 %v2044
      %2048 = vmatprep.subr.bf16.mxu0 0
      %2049 = vmatpush1.bf16.msra.mxu0 0
      %2050 = vmatprep.subr.bf16.mxu0 0
      %2051 = vmatpush1.bf16.msra.mxu0 0
      %2052 = vmatprep.subr.bf16.mxu0 0
      %2053 = vmatpush1.bf16.msra.mxu0 0
      %2054 = vmatprep.subr.bf16.mxu0 0
      %2055 = vmatpush1.bf16.msra.mxu0 0
      %2056 = vmatprep.subr.bf16.mxu0 0
      %2057 = vmatpush1.bf16.msra.mxu0 0
      %2058 = vmatprep.subr.bf16.mxu0 0
      %2059 = vmatpush1.bf16.msra.mxu0 0
      %2060 = vmatprep.subr.bf16.mxu0 0
      %2061 = vmatpush1.bf16.msra.mxu0 0
      %2062 = vmatprep.subr.bf16.mxu0 0
      %2063 = vmatpush1.bf16.msra.mxu0 0
      %2064 = vmatprep.subr.bf16.mxu0 0
      %2065 = vmatpush1.bf16.msra.mxu0 0
      %2066 = vmatprep.subr.bf16.mxu0 0
      %2067 = vmatpush1.bf16.msra.mxu0 0
      %2068 = vmatprep.subr.bf16.mxu0 0
      %2069 = vmatpush1.bf16.msra.mxu0 0
      %2070 = vmatprep.subr.bf16.mxu0 0
      %2071 = vmatpush1.bf16.msra.mxu0 0
      %2072 = vmatprep.subr.bf16.mxu0 0
      %2073 = vmatpush1.bf16.msra.mxu0 0
      %2074 = vmatprep.subr.bf16.mxu0 0
      %2075 = vmatpush1.bf16.msra.mxu0 0
      %2076 = vmatprep.subr.bf16.mxu0 0
      %2077 = vmatpush1.bf16.msra.mxu0 0
      %2078 = vmatprep.mubr.bf16.mxu0 0
      %2079 = vmatmul.mubr.bf16.gmra.mrb[0].mxu0 %v2017
      %v2080 = vpop.f32.mrb[0].mxu0
      %v2081 = vadd.f32 0.0, %v2080
      %v2082 = vpop.f32.mrb[0].mxu0
      %v2083 = vpop.f32.mrb[0].mxu0
      %v2084 = vadd.f32 0.0, %v2083
      %v2085 = vpop.f32.mrb[0].mxu0
      %2086 = vmatprep.mubr.bf16.mxu0 0
      %2087 = vmatmul.mubr.bf16.gmra.mrb[0].mxu0 %v2020
      %v2088 = vpop.f32.mrb[0].mxu0
      %v2089 = vadd.f32 0.0, %v2088
      %v2090 = vpop.f32.mrb[0].mxu0
      %v2091 = vpop.f32.mrb[0].mxu0
      %v2092 = vadd.f32 0.0, %v2091
      %v2093 = vpop.f32.mrb[0].mxu0
      %2094 = vmatprep.mubr.bf16.mxu0 0
      %2095 = vmatmul.mubr.bf16.gmra.mrb[0].mxu0 %v2023
      %v2096 = vpop.f32.mrb[0].mxu0
      %v2097 = vadd.f32 0.0, %v2096
      %v2098 = vpop.f32.mrb[0].mxu0
      %v2099 = vpop.f32.mrb[0].mxu0
      %v2100 = vadd.f32 0.0, %v2099
      %v2101 = vpop.f32.mrb[0].mxu0
      %2102 = vmatprep.mubr.bf16.mxu0 0
      %2103 = vmatmul.mubr.bf16.gmra.mrb[0].mxu0 %v2026
      %v2104 = vpop.f32.mrb[0].mxu0
      %v2105 = vadd.f32 0.0, %v2104
      %v2106 = vpop.f32.mrb[0].mxu0
      %v2107 = vpop.f32.mrb[0].mxu0
      %v2108 = vadd.f32 0.0, %v2107
      %v2109 = vpop.f32.mrb[0].mxu0
      %2110 = vmatprep.mubr.bf16.mxu0 0
      %2111 = vmatmul.mubr.bf16.gmra.mrb[0].mxu0 %v2029
      %v2112 = vpop.f32.mrb[0].mxu0
      %v2113 = vadd.f32 0.0, %v2112
      %v2114 = vpop.f32.mrb[0].mxu0
      %v2115 = vpop.f32.mrb[0].mxu0
      %v2116 = vadd.f32 0.0, %v2115
      %v2117 = vpop.f32.mrb[0].mxu0
      %2118 = vmatprep.mubr.bf16.mxu0 0
      %2119 = vmatmul.mubr.bf16.gmra.mrb[0].mxu0 %v2032
      %v2120 = vpop.f32.mrb[0].mxu0
      %v2121 = vadd.f32 0.0, %v2120
      %v2122 = vpop.f32.mrb[0].mxu0
      %v2123 = vpop.f32.mrb[0].mxu0
      %v2124 = vadd.f32 0.0, %v2123
      %v2125 = vpop.f32.mrb[0].mxu0
      %2126 = vmatprep.mubr.bf16.mxu0 0
      %2127 = vmatmul.mubr.bf16.gmra.mrb[0].mxu0 %v2035
      %v2128 = vpop.f32.mrb[0].mxu0
      %v2129 = vadd.f32 0.0, %v2128
      %v2130 = vpop.f32.mrb[0].mxu0
      %v2131 = vpop.f32.mrb[0].mxu0
      %v2132 = vadd.f32 0.0, %v2131
      %v2133 = vpop.f32.mrb[0].mxu0
      %2134 = vmatprep.mubr.bf16.mxu0 0
      %2135 = vmatmul.mubr.bf16.gmra.mrb[0].mxu0 %v2038
      %v2136 = vpop.f32.mrb[0].mxu0
      %v2137 = vadd.f32 0.0, %v2136
      %v2138 = vpop.f32.mrb[0].mxu0
      %v2139 = vpop.f32.mrb[0].mxu0
      %v2140 = vadd.f32 0.0, %v2139
      %v2141 = vpop.f32.mrb[0].mxu0
      %2142 = vmatprep.mubr.bf16.mxu0 0
      %2143 = vmatmul.mubr.bf16.gmra.mrb[0].mxu0 %v2041
      %v2144 = vpop.f32.mrb[0].mxu0
      %v2145 = vadd.f32 0.0, %v2144
      %v2146 = vpop.f32.mrb[0].mxu0
      %v2147 = vpop.f32.mrb[0].mxu0
      %v2148 = vadd.f32 0.0, %v2147
      %v2149 = vpop.f32.mrb[0].mxu0
      %2150 = vdwg.mxu0
      %v2151 = vadd.f32 %v1902, %v2081
      %v2152 = vadd.f32 %v1903, %v2084
      %v2153 = vadd.f32 %v1904, %v2089
      %v2154 = vadd.f32 %v1905, %v2092
      %v2155 = vadd.f32 %v1906, %v2097
      %v2156 = vadd.f32 %v1907, %v2100
      %v2157 = vadd.f32 %v1908, %v2105
      %v2158 = vadd.f32 %v1909, %v2108
      %v2159 = vadd.f32 %v1910, %v2113
      %v2160 = vadd.f32 %v1911, %v2116
      %v2161 = vadd.f32 %v1912, %v2121
      %v2162 = vadd.f32 %v1913, %v2124
      %v2163 = vadd.f32 %v1914, %v2129
      %v2164 = vadd.f32 %v1915, %v2132
      %v2165 = vadd.f32 %v1916, %v2137
      %v2166 = vadd.f32 %v1917, %v2140
      %v2167 = vadd.f32 %v1918, %v2145
      %v2168 = vadd.f32 %v1919, %v2148
      %v2169 = vld [vmem:[#allocation2 + $0x8] sm:$0xc]
      %s2170 = scalar_lea.vmem %s5, 20
      %v2171 = vld [vmem:[%s2170] sm:$0xf]
      %v2173 = vunpack.c.l.b16 %v2169
      %v2174 = vpack.c.b16 %v1720, %v2173
      %vm2175 = vcmask 1045504
      %v2176 = vrot.slane %v2174, 2
      %v2177 = vrot.slane %v1739, 2
      %v2178 = vsel %vm2175, %v2176, %v2177
      %v2179 = vrot.slane %v1740, 2
      %v2180 = vsel %vm2175, %v2177, %v2179
      %v2181 = vrot.slane %v1741, 2
      %v2182 = vsel %vm2175, %v2179, %v2181
      %v2183 = vrot.slane %v1742, 2
      %v2184 = vsel %vm2175, %v2181, %v2183
      %v2185 = vrot.slane %v1743, 2
      %v2186 = vsel %vm2175, %v2183, %v2185
      %v2187 = vrot.slane %v1744, 2
      %v2188 = vsel %vm2175, %v2185, %v2187
      %v2189 = vrot.slane %v1745, 2
      %v2190 = vsel %vm2175, %v2187, %v2189
      %v2191 = vrot.slane %v1746, 2
      %v2192 = vsel %vm2175, %v2189, %v2191
      %v2193 = vrot.slane %v1925, 2
      %v2194 = vsel %vm2175, %v2191, %v2193
      %v2196 = vsel %vm1237, %v2178, 0
      %v2199 = vsel %vm1237, %v2180, 0
      %v2202 = vsel %vm1237, %v2182, 0
      %v2205 = vsel %vm1237, %v2184, 0
      %v2208 = vsel %vm1237, %v2186, 0
      %v2211 = vsel %vm1237, %v2188, 0
      %v2214 = vsel %vm1237, %v2190, 0
      %v2217 = vsel %vm1237, %v2192, 0
      %v2220 = vsel %vm1237, %v2194, 0
      %v2223 = vsel %vm1265, %v2171, 0
      %2225 = vmatprep.subr.bf16.mxu0 0
      %2226 = vmatpush1.bf16.msra.mxu0 %v2223
      %2227 = vmatprep.subr.bf16.mxu0 0
      %2228 = vmatpush1.bf16.msra.mxu0 0
      %2229 = vmatprep.subr.bf16.mxu0 0
      %2230 = vmatpush1.bf16.msra.mxu0 0
      %2231 = vmatprep.subr.bf16.mxu0 0
      %2232 = vmatpush1.bf16.msra.mxu0 0
      %2233 = vmatprep.subr.bf16.mxu0 0
      %2234 = vmatpush1.bf16.msra.mxu0 0
      %2235 = vmatprep.subr.bf16.mxu0 0
      %2236 = vmatpush1.bf16.msra.mxu0 0
      %2237 = vmatprep.subr.bf16.mxu0 0
      %2238 = vmatpush1.bf16.msra.mxu0 0
      %2239 = vmatprep.subr.bf16.mxu0 0
      %2240 = vmatpush1.bf16.msra.mxu0 0
      %2241 = vmatprep.subr.bf16.mxu0 0
      %2242 = vmatpush1.bf16.msra.mxu0 0
      %2243 = vmatprep.subr.bf16.mxu0 0
      %2244 = vmatpush1.bf16.msra.mxu0 0
      %2245 = vmatprep.subr.bf16.mxu0 0
      %2246 = vmatpush1.bf16.msra.mxu0 0
      %2247 = vmatprep.subr.bf16.mxu0 0
      %2248 = vmatpush1.bf16.msra.mxu0 0
      %2249 = vmatprep.subr.bf16.mxu0 0
      %2250 = vmatpush1.bf16.msra.mxu0 0
      %2251 = vmatprep.subr.bf16.mxu0 0
      %2252 = vmatpush1.bf16.msra.mxu0 0
      %2253 = vmatprep.subr.bf16.mxu0 0
      %2254 = vmatpush1.bf16.msra.mxu0 0
      %2255 = vmatprep.subr.bf16.mxu0 0
      %2256 = vmatpush1.bf16.msra.mxu0 0
      %2257 = vmatprep.mubr.bf16.mxu0 0
      %2258 = vmatmul.mubr.bf16.gmra.mrb[0].mxu0 %v2196
      %v2259 = vpop.f32.mrb[0].mxu0
      %v2260 = vadd.f32 0.0, %v2259
      %v2261 = vpop.f32.mrb[0].mxu0
      %v2262 = vpop.f32.mrb[0].mxu0
      %v2263 = vadd.f32 0.0, %v2262
      %v2264 = vpop.f32.mrb[0].mxu0
      %2265 = vmatprep.mubr.bf16.mxu0 0
      %2266 = vmatmul.mubr.bf16.gmra.mrb[0].mxu0 %v2199
      %v2267 = vpop.f32.mrb[0].mxu0
      %v2268 = vadd.f32 0.0, %v2267
      %v2269 = vpop.f32.mrb[0].mxu0
      %v2270 = vpop.f32.mrb[0].mxu0
      %v2271 = vadd.f32 0.0, %v2270
      %v2272 = vpop.f32.mrb[0].mxu0
      %2273 = vmatprep.mubr.bf16.mxu0 0
      %2274 = vmatmul.mubr.bf16.gmra.mrb[0].mxu0 %v2202
      %v2275 = vpop.f32.mrb[0].mxu0
      %v2276 = vadd.f32 0.0, %v2275
      %v2277 = vpop.f32.mrb[0].mxu0
      %v2278 = vpop.f32.mrb[0].mxu0
      %v2279 = vadd.f32 0.0, %v2278
      %v2280 = vpop.f32.mrb[0].mxu0
      %2281 = vmatprep.mubr.bf16.mxu0 0
      %2282 = vmatmul.mubr.bf16.gmra.mrb[0].mxu0 %v2205
      %v2283 = vpop.f32.mrb[0].mxu0
      %v2284 = vadd.f32 0.0, %v2283
      %v2285 = vpop.f32.mrb[0].mxu0
      %v2286 = vpop.f32.mrb[0].mxu0
      %v2287 = vadd.f32 0.0, %v2286
      %v2288 = vpop.f32.mrb[0].mxu0
      %2289 = vmatprep.mubr.bf16.mxu0 0
      %2290 = vmatmul.mubr.bf16.gmra.mrb[0].mxu0 %v2208
      %v2291 = vpop.f32.mrb[0].mxu0
      %v2292 = vadd.f32 0.0, %v2291
      %v2293 = vpop.f32.mrb[0].mxu0
      %v2294 = vpop.f32.mrb[0].mxu0
      %v2295 = vadd.f32 0.0, %v2294
      %v2296 = vpop.f32.mrb[0].mxu0
      %2297 = vmatprep.mubr.bf16.mxu0 0
      %2298 = vmatmul.mubr.bf16.gmra.mrb[0].mxu0 %v2211
      %v2299 = vpop.f32.mrb[0].mxu0
      %v2300 = vadd.f32 0.0, %v2299
      %v2301 = vpop.f32.mrb[0].mxu0
      %v2302 = vpop.f32.mrb[0].mxu0
      %v2303 = vadd.f32 0.0, %v2302
      %v2304 = vpop.f32.mrb[0].mxu0
      %2305 = vmatprep.mubr.bf16.mxu0 0
      %2306 = vmatmul.mubr.bf16.gmra.mrb[0].mxu0 %v2214
      %v2307 = vpop.f32.mrb[0].mxu0
      %v2308 = vadd.f32 0.0, %v2307
      %v2309 = vpop.f32.mrb[0].mxu0
      %v2310 = vpop.f32.mrb[0].mxu0
      %v2311 = vadd.f32 0.0, %v2310
      %v2312 = vpop.f32.mrb[0].mxu0
      %2313 = vmatprep.mubr.bf16.mxu0 0
      %2314 = vmatmul.mubr.bf16.gmra.mrb[0].mxu0 %v2217
      %v2315 = vpop.f32.mrb[0].mxu0
      %v2316 = vadd.f32 0.0, %v2315
      %v2317 = vpop.f32.mrb[0].mxu0
      %v2318 = vpop.f32.mrb[0].mxu0
      %v2319 = vadd.f32 0.0, %v2318
      %v2320 = vpop.f32.mrb[0].mxu0
      %2321 = vmatprep.mubr.bf16.mxu0 0
      %2322 = vmatmul.mubr.bf16.gmra.mrb[0].mxu0 %v2220
      %v2323 = vpop.f32.mrb[0].mxu0
      %v2324 = vadd.f32 0.0, %v2323
      %v2325 = vpop.f32.mrb[0].mxu0
      %v2326 = vpop.f32.mrb[0].mxu0
      %v2327 = vadd.f32 0.0, %v2326
      %v2328 = vpop.f32.mrb[0].mxu0
      %2329 = vdwg.mxu0
      %v2330 = vadd.f32 %v2151, %v2260
      %v2331 = vadd.f32 %v2152, %v2263
      %v2332 = vadd.f32 %v2153, %v2268
      %v2333 = vadd.f32 %v2154, %v2271
      %v2334 = vadd.f32 %v2155, %v2276
      %v2335 = vadd.f32 %v2156, %v2279
      %v2336 = vadd.f32 %v2157, %v2284
      %v2337 = vadd.f32 %v2158, %v2287
      %v2338 = vadd.f32 %v2159, %v2292
      %v2339 = vadd.f32 %v2160, %v2295
      %v2340 = vadd.f32 %v2161, %v2300
      %v2341 = vadd.f32 %v2162, %v2303
      %v2342 = vadd.f32 %v2163, %v2308
      %v2343 = vadd.f32 %v2164, %v2311
      %v2344 = vadd.f32 %v2165, %v2316
      %v2345 = vadd.f32 %v2166, %v2319
      %v2346 = vadd.f32 %v2167, %v2324
      %v2347 = vadd.f32 %v2168, %v2327
      %v2348 = vld [vmem:[#allocation2 + $0x10] sm:$0xc]
      %v2349 = vld [vmem:[#allocation2 + $0x14] sm:$0xf]
      %v2350 = vld [vmem:[#allocation2 + $0x18] sm:$0xf]
      %v2351 = vld [vmem:[#allocation2 + $0x1c] sm:$0xf]
      %v2352 = vld [vmem:[#allocation2 + $0x20] sm:$0xf]
      %v2353 = vld [vmem:[#allocation2 + $0x24] sm:$0xf]
      %v2354 = vld [vmem:[#allocation2 + $0x28] sm:$0xf]
      %v2355 = vld [vmem:[#allocation2 + $0x2c] sm:$0xf]
      %v2356 = vld [vmem:[#allocation2 + $0x30] sm:$0xf]
      %v2357 = vld [vmem:[#allocation2 + $0x34] sm:$0xf]
      %v2358 = vld [vmem:[#allocation2 + $0x38] sm:$0xf]
      %v2359 = vld [vmem:[#allocation2 + $0x3c] sm:$0xf]
      %v2360 = vld [vmem:[#allocation2 + $0x40] sm:$0xf]
      %v2361 = vld [vmem:[#allocation2 + $0x44] sm:$0xf]
      %v2362 = vld [vmem:[#allocation2 + $0x48] sm:$0xf]
      %v2363 = vld [vmem:[#allocation2 + $0x4c] sm:$0xf]
      %v2364 = vld [vmem:[#allocation2 + $0x50] sm:$0xf]
      %v2365 = vld [vmem:[#allocation2 + $0x54] sm:$0xf]
      %v2366 = vld [vmem:[#allocation2 + $0x58] sm:$0x3]
      %s2367 = scalar_lea.vmem %s5, 24
      %v2368 = vld [vmem:[%s2367] sm:$0xf]
      %v2388 = vunpack.c.l.b16 %v2348
      %v2389 = vunpack.c.l.b16 %v2349
      %v2390 = vunpack.c.l.b16 %v2350
      %v2391 = vunpack.c.l.b16 %v2351
      %v2392 = vunpack.c.l.b16 %v2352
      %v2393 = vunpack.c.l.b16 %v2353
      %v2394 = vunpack.c.l.b16 %v2354
      %v2395 = vunpack.c.l.b16 %v2355
      %v2396 = vunpack.c.l.b16 %v2356
      %v2397 = vunpack.c.l.b16 %v2357
      %v2398 = vunpack.c.l.b16 %v2358
      %v2399 = vunpack.c.l.b16 %v2359
      %v2400 = vunpack.c.l.b16 %v2360
      %v2401 = vunpack.c.l.b16 %v2361
      %v2402 = vunpack.c.l.b16 %v2362
      %v2403 = vunpack.c.l.b16 %v2363
      %v2404 = vunpack.c.l.b16 %v2364
      %v2405 = vunpack.c.l.b16 %v2365
      %v2406 = vunpack.c.l.b16 %v2366
      %v2407 = vpack.c.b16 %v2389, %v2388
      %v2408 = vpack.c.b16 %v2391, %v2390
      %v2409 = vpack.c.b16 %v2393, %v2392
      %v2410 = vpack.c.b16 %v2395, %v2394
      %v2411 = vpack.c.b16 %v2397, %v2396
      %v2412 = vpack.c.b16 %v2399, %v2398
      %v2413 = vpack.c.b16 %v2401, %v2400
      %v2414 = vpack.c.b16 %v2403, %v2402
      %v2415 = vpack.c.b16 %v2405, %v2404
      %v2416 = vpack.c.b16 %v2406, %v2406
      %v2417 = vrot.slane %v2407, 2
      %v2418 = vrot.slane %v2408, 2
      %v2419 = vsel %vm2175, %v2417, %v2418
      %v2420 = vrot.slane %v2409, 2
      %v2421 = vsel %vm2175, %v2418, %v2420
      %v2422 = vrot.slane %v2410, 2
      %v2423 = vsel %vm2175, %v2420, %v2422
      %v2424 = vrot.slane %v2411, 2
      %v2425 = vsel %vm2175, %v2422, %v2424
      %v2426 = vrot.slane %v2412, 2
      %v2427 = vsel %vm2175, %v2424, %v2426
      %v2428 = vrot.slane %v2413, 2
      %v2429 = vsel %vm2175, %v2426, %v2428
      %v2430 = vrot.slane %v2414, 2
      %v2431 = vsel %vm2175, %v2428, %v2430
      %v2432 = vrot.slane %v2415, 2
      %v2433 = vsel %vm2175, %v2430, %v2432
      %v2434 = vrot.slane %v2416, 2
      %v2435 = vsel %vm2175, %v2432, %v2434
      %v2437 = vsel %vm1237, %v2419, 0
      %v2440 = vsel %vm1237, %v2421, 0
      %v2443 = vsel %vm1237, %v2423, 0
      %v2446 = vsel %vm1237, %v2425, 0
      %v2449 = vsel %vm1237, %v2427, 0
      %v2452 = vsel %vm1237, %v2429, 0
      %v2455 = vsel %vm1237, %v2431, 0
      %v2458 = vsel %vm1237, %v2433, 0
      %v2461 = vsel %vm1237, %v2435, 0
      %v2464 = vsel %vm1265, %v2368, 0
      %2466 = vmatprep.subr.bf16.mxu0 0
      %2467 = vmatpush1.bf16.msra.mxu0 %v2464
      %2468 = vmatprep.subr.bf16.mxu0 0
      %2469 = vmatpush1.bf16.msra.mxu0 0
      %2470 = vmatprep.subr.bf16.mxu0 0
      %2471 = vmatpush1.bf16.msra.mxu0 0
      %2472 = vmatprep.subr.bf16.mxu0 0
      %2473 = vmatpush1.bf16.msra.mxu0 0
      %2474 = vmatprep.subr.bf16.mxu0 0
      %2475 = vmatpush1.bf16.msra.mxu0 0
      %2476 = vmatprep.subr.bf16.mxu0 0
      %2477 = vmatpush1.bf16.msra.mxu0 0
      %2478 = vmatprep.subr.bf16.mxu0 0
      %2479 = vmatpush1.bf16.msra.mxu0 0
      %2480 = vmatprep.subr.bf16.mxu0 0
      %2481 = vmatpush1.bf16.msra.mxu0 0
      %2482 = vmatprep.subr.bf16.mxu0 0
      %2483 = vmatpush1.bf16.msra.mxu0 0
      %2484 = vmatprep.subr.bf16.mxu0 0
      %2485 = vmatpush1.bf16.msra.mxu0 0
      %2486 = vmatprep.subr.bf16.mxu0 0
      %2487 = vmatpush1.bf16.msra.mxu0 0
      %2488 = vmatprep.subr.bf16.mxu0 0
      %2489 = vmatpush1.bf16.msra.mxu0 0
      %2490 = vmatprep.subr.bf16.mxu0 0
      %2491 = vmatpush1.bf16.msra.mxu0 0
      %2492 = vmatprep.subr.bf16.mxu0 0
      %2493 = vmatpush1.bf16.msra.mxu0 0
      %2494 = vmatprep.subr.bf16.mxu0 0
      %2495 = vmatpush1.bf16.msra.mxu0 0
      %2496 = vmatprep.subr.bf16.mxu0 0
      %2497 = vmatpush1.bf16.msra.mxu0 0
      %2498 = vmatprep.mubr.bf16.mxu0 0
      %2499 = vmatmul.mubr.bf16.gmra.mrb[0].mxu0 %v2437
      %v2500 = vpop.f32.mrb[0].mxu0
      %v2501 = vadd.f32 0.0, %v2500
      %v2502 = vpop.f32.mrb[0].mxu0
      %v2503 = vpop.f32.mrb[0].mxu0
      %v2504 = vadd.f32 0.0, %v2503
      %v2505 = vpop.f32.mrb[0].mxu0
      %2506 = vmatprep.mubr.bf16.mxu0 0
      %2507 = vmatmul.mubr.bf16.gmra.mrb[0].mxu0 %v2440
      %v2508 = vpop.f32.mrb[0].mxu0
      %v2509 = vadd.f32 0.0, %v2508
      %v2510 = vpop.f32.mrb[0].mxu0
      %v2511 = vpop.f32.mrb[0].mxu0
      %v2512 = vadd.f32 0.0, %v2511
      %v2513 = vpop.f32.mrb[0].mxu0
      %2514 = vmatprep.mubr.bf16.mxu0 0
      %2515 = vmatmul.mubr.bf16.gmra.mrb[0].mxu0 %v2443
      %v2516 = vpop.f32.mrb[0].mxu0
      %v2517 = vadd.f32 0.0, %v2516
      %v2518 = vpop.f32.mrb[0].mxu0
      %v2519 = vpop.f32.mrb[0].mxu0
      %v2520 = vadd.f32 0.0, %v2519
      %v2521 = vpop.f32.mrb[0].mxu0
      %2522 = vmatprep.mubr.bf16.mxu0 0
      %2523 = vmatmul.mubr.bf16.gmra.mrb[0].mxu0 %v2446
      %v2524 = vpop.f32.mrb[0].mxu0
      %v2525 = vadd.f32 0.0, %v2524
      %v2526 = vpop.f32.mrb[0].mxu0
      %v2527 = vpop.f32.mrb[0].mxu0
      %v2528 = vadd.f32 0.0, %v2527
      %v2529 = vpop.f32.mrb[0].mxu0
      %2530 = vmatprep.mubr.bf16.mxu0 0
      %2531 = vmatmul.mubr.bf16.gmra.mrb[0].mxu0 %v2449
      %v2532 = vpop.f32.mrb[0].mxu0
      %v2533 = vadd.f32 0.0, %v2532
      %v2534 = vpop.f32.mrb[0].mxu0
      %v2535 = vpop.f32.mrb[0].mxu0
      %v2536 = vadd.f32 0.0, %v2535
      %v2537 = vpop.f32.mrb[0].mxu0
      %2538 = vmatprep.mubr.bf16.mxu0 0
      %2539 = vmatmul.mubr.bf16.gmra.mrb[0].mxu0 %v2452
      %v2540 = vpop.f32.mrb[0].mxu0
      %v2541 = vadd.f32 0.0, %v2540
      %v2542 = vpop.f32.mrb[0].mxu0
      %v2543 = vpop.f32.mrb[0].mxu0
      %v2544 = vadd.f32 0.0, %v2543
      %v2545 = vpop.f32.mrb[0].mxu0
      %2546 = vmatprep.mubr.bf16.mxu0 0
      %2547 = vmatmul.mubr.bf16.gmra.mrb[0].mxu0 %v2455
      %v2548 = vpop.f32.mrb[0].mxu0
      %v2549 = vadd.f32 0.0, %v2548
      %v2550 = vpop.f32.mrb[0].mxu0
      %v2551 = vpop.f32.mrb[0].mxu0
      %v2552 = vadd.f32 0.0, %v2551
      %v2553 = vpop.f32.mrb[0].mxu0
      %2554 = vmatprep.mubr.bf16.mxu0 0
      %2555 = vmatmul.mubr.bf16.gmra.mrb[0].mxu0 %v2458
      %v2556 = vpop.f32.mrb[0].mxu0
      %v2557 = vadd.f32 0.0, %v2556
      %v2558 = vpop.f32.mrb[0].mxu0
      %v2559 = vpop.f32.mrb[0].mxu0
      %v2560 = vadd.f32 0.0, %v2559
      %v2561 = vpop.f32.mrb[0].mxu0
      %2562 = vmatprep.mubr.bf16.mxu0 0
      %2563 = vmatmul.mubr.bf16.gmra.mrb[0].mxu0 %v2461
      %v2564 = vpop.f32.mrb[0].mxu0
      %v2565 = vadd.f32 0.0, %v2564
      %v2566 = vpop.f32.mrb[0].mxu0
      %v2567 = vpop.f32.mrb[0].mxu0
      %v2568 = vadd.f32 0.0, %v2567
      %v2569 = vpop.f32.mrb[0].mxu0
      %2570 = vdwg.mxu0
      %v2571 = vadd.f32 %v2330, %v2501
      %v2572 = vadd.f32 %v2331, %v2504
      %v2573 = vadd.f32 %v2332, %v2509
      %v2574 = vadd.f32 %v2333, %v2512
      %v2575 = vadd.f32 %v2334, %v2517
      %v2576 = vadd.f32 %v2335, %v2520
      %v2577 = vadd.f32 %v2336, %v2525
      %v2578 = vadd.f32 %v2337, %v2528
      %v2579 = vadd.f32 %v2338, %v2533
      %v2580 = vadd.f32 %v2339, %v2536
      %v2581 = vadd.f32 %v2340, %v2541
      %v2582 = vadd.f32 %v2341, %v2544
      %v2583 = vadd.f32 %v2342, %v2549
      %v2584 = vadd.f32 %v2343, %v2552
      %v2585 = vadd.f32 %v2344, %v2557
      %v2586 = vadd.f32 %v2345, %v2560
      %v2587 = vadd.f32 %v2346, %v2565
      %v2588 = vadd.f32 %v2347, %v2568
      %v2589 = vld [vmem:[#allocation2 + $0x58] sm:$0x7]
      %s2590 = scalar_lea.vmem %s5, 28
      %v2591 = vld [vmem:[%s2590] sm:$0xf]
      %v2593 = vunpack.c.l.b16 %v2589
      %v2594 = vpack.c.b16 %v2593, %v2593
      %vm2595 = vsmask.f32 5376
      %v2597 = vshrl.u32 %v2407, 16
      %v2599 = vrot.slane %v2597, 2
      %v2600 = vshll.u32 %v2407, 16
      %v2602 = vrot.slane %v2600, 3
      %v2603 = vor.u32 %v2599, %v2602
      %v2605 = vshrl.u32 %v2408, 16
      %v2607 = vrot.slane %v2605, 2
      %v2608 = vshll.u32 %v2408, 16
      %v2610 = vrot.slane %v2608, 3
      %v2611 = vor.u32 %v2607, %v2610
      %v2612 = vsel %vm2595, %v2603, %v2611
      %v2614 = vshrl.u32 %v2409, 16
      %v2616 = vrot.slane %v2614, 2
      %v2617 = vshll.u32 %v2409, 16
      %v2619 = vrot.slane %v2617, 3
      %v2620 = vor.u32 %v2616, %v2619
      %v2621 = vsel %vm2595, %v2611, %v2620
      %v2623 = vshrl.u32 %v2410, 16
      %v2625 = vrot.slane %v2623, 2
      %v2626 = vshll.u32 %v2410, 16
      %v2628 = vrot.slane %v2626, 3
      %v2629 = vor.u32 %v2625, %v2628
      %v2630 = vsel %vm2595, %v2620, %v2629
      %v2632 = vshrl.u32 %v2411, 16
      %v2634 = vrot.slane %v2632, 2
      %v2635 = vshll.u32 %v2411, 16
      %v2637 = vrot.slane %v2635, 3
      %v2638 = vor.u32 %v2634, %v2637
      %v2639 = vsel %vm2595, %v2629, %v2638
      %v2641 = vshrl.u32 %v2412, 16
      %v2643 = vrot.slane %v2641, 2
      %v2644 = vshll.u32 %v2412, 16
      %v2646 = vrot.slane %v2644, 3
      %v2647 = vor.u32 %v2643, %v2646
      %v2648 = vsel %vm2595, %v2638, %v2647
      %v2650 = vshrl.u32 %v2413, 16
      %v2652 = vrot.slane %v2650, 2
      %v2653 = vshll.u32 %v2413, 16
      %v2655 = vrot.slane %v2653, 3
      %v2656 = vor.u32 %v2652, %v2655
      %v2657 = vsel %vm2595, %v2647, %v2656
      %v2659 = vshrl.u32 %v2414, 16
      %v2661 = vrot.slane %v2659, 2
      %v2662 = vshll.u32 %v2414, 16
      %v2664 = vrot.slane %v2662, 3
      %v2665 = vor.u32 %v2661, %v2664
      %v2666 = vsel %vm2595, %v2656, %v2665
      %v2668 = vshrl.u32 %v2415, 16
      %v2670 = vrot.slane %v2668, 2
      %v2671 = vshll.u32 %v2415, 16
      %v2673 = vrot.slane %v2671, 3
      %v2674 = vor.u32 %v2670, %v2673
      %v2675 = vsel %vm2595, %v2665, %v2674
      %v2677 = vshrl.u32 %v2594, 16
      %v2679 = vrot.slane %v2677, 2
      %v2680 = vshll.u32 %v2594, 16
      %v2682 = vrot.slane %v2680, 3
      %v2683 = vor.u32 %v2679, %v2682
      %v2684 = vsel %vm2595, %v2674, %v2683
      %v2686 = vsel %vm1237, %v2612, 0
      %v2689 = vsel %vm1237, %v2621, 0
      %v2692 = vsel %vm1237, %v2630, 0
      %v2695 = vsel %vm1237, %v2639, 0
      %v2698 = vsel %vm1237, %v2648, 0
      %v2701 = vsel %vm1237, %v2657, 0
      %v2704 = vsel %vm1237, %v2666, 0
      %v2707 = vsel %vm1237, %v2675, 0
      %v2710 = vsel %vm1237, %v2684, 0
      %v2713 = vsel %vm1265, %v2591, 0
      %2715 = vmatprep.subr.bf16.mxu0 0
      %2716 = vmatpush1.bf16.msra.mxu0 %v2713
      %2717 = vmatprep.subr.bf16.mxu0 0
      %2718 = vmatpush1.bf16.msra.mxu0 0
      %2719 = vmatprep.subr.bf16.mxu0 0
      %2720 = vmatpush1.bf16.msra.mxu0 0
      %2721 = vmatprep.subr.bf16.mxu0 0
      %2722 = vmatpush1.bf16.msra.mxu0 0
      %2723 = vmatprep.subr.bf16.mxu0 0
      %2724 = vmatpush1.bf16.msra.mxu0 0
      %2725 = vmatprep.subr.bf16.mxu0 0
      %2726 = vmatpush1.bf16.msra.mxu0 0
      %2727 = vmatprep.subr.bf16.mxu0 0
      %2728 = vmatpush1.bf16.msra.mxu0 0
      %2729 = vmatprep.subr.bf16.mxu0 0
      %2730 = vmatpush1.bf16.msra.mxu0 0
      %2731 = vmatprep.subr.bf16.mxu0 0
      %2732 = vmatpush1.bf16.msra.mxu0 0
      %2733 = vmatprep.subr.bf16.mxu0 0
      %2734 = vmatpush1.bf16.msra.mxu0 0
      %2735 = vmatprep.subr.bf16.mxu0 0
      %2736 = vmatpush1.bf16.msra.mxu0 0
      %2737 = vmatprep.subr.bf16.mxu0 0
      %2738 = vmatpush1.bf16.msra.mxu0 0
      %2739 = vmatprep.subr.bf16.mxu0 0
      %2740 = vmatpush1.bf16.msra.mxu0 0
      %2741 = vmatprep.subr.bf16.mxu0 0
      %2742 = vmatpush1.bf16.msra.mxu0 0
      %2743 = vmatprep.subr.bf16.mxu0 0
      %2744 = vmatpush1.bf16.msra.mxu0 0
      %2745 = vmatprep.subr.bf16.mxu0 0
      %2746 = vmatpush1.bf16.msra.mxu0 0
      %2747 = vmatprep.mubr.bf16.mxu0 0
      %2748 = vmatmul.mubr.bf16.gmra.mrb[0].mxu0 %v2686
      %v2749 = vpop.f32.mrb[0].mxu0
      %v2750 = vadd.f32 0.0, %v2749
      %v2751 = vpop.f32.mrb[0].mxu0
      %v2752 = vpop.f32.mrb[0].mxu0
      %v2753 = vadd.f32 0.0, %v2752
      %v2754 = vpop.f32.mrb[0].mxu0
      %2755 = vmatprep.mubr.bf16.mxu0 0
      %2756 = vmatmul.mubr.bf16.gmra.mrb[0].mxu0 %v2689
      %v2757 = vpop.f32.mrb[0].mxu0
      %v2758 = vadd.f32 0.0, %v2757
      %v2759 = vpop.f32.mrb[0].mxu0
      %v2760 = vpop.f32.mrb[0].mxu0
      %v2761 = vadd.f32 0.0, %v2760
      %v2762 = vpop.f32.mrb[0].mxu0
      %2763 = vmatprep.mubr.bf16.mxu0 0
      %2764 = vmatmul.mubr.bf16.gmra.mrb[0].mxu0 %v2692
      %v2765 = vpop.f32.mrb[0].mxu0
      %v2766 = vadd.f32 0.0, %v2765
      %v2767 = vpop.f32.mrb[0].mxu0
      %v2768 = vpop.f32.mrb[0].mxu0
      %v2769 = vadd.f32 0.0, %v2768
      %v2770 = vpop.f32.mrb[0].mxu0
      %2771 = vmatprep.mubr.bf16.mxu0 0
      %2772 = vmatmul.mubr.bf16.gmra.mrb[0].mxu0 %v2695
      %v2773 = vpop.f32.mrb[0].mxu0
      %v2774 = vadd.f32 0.0, %v2773
      %v2775 = vpop.f32.mrb[0].mxu0
      %v2776 = vpop.f32.mrb[0].mxu0
      %v2777 = vadd.f32 0.0, %v2776
      %v2778 = vpop.f32.mrb[0].mxu0
      %2779 = vmatprep.mubr.bf16.mxu0 0
      %2780 = vmatmul.mubr.bf16.gmra.mrb[0].mxu0 %v2698
      %v2781 = vpop.f32.mrb[0].mxu0
      %v2782 = vadd.f32 0.0, %v2781
      %v2783 = vpop.f32.mrb[0].mxu0
      %v2784 = vpop.f32.mrb[0].mxu0
      %v2785 = vadd.f32 0.0, %v2784
      %v2786 = vpop.f32.mrb[0].mxu0
      %2787 = vmatprep.mubr.bf16.mxu0 0
      %2788 = vmatmul.mubr.bf16.gmra.mrb[0].mxu0 %v2701
      %v2789 = vpop.f32.mrb[0].mxu0
      %v2790 = vadd.f32 0.0, %v2789
      %v2791 = vpop.f32.mrb[0].mxu0
      %v2792 = vpop.f32.mrb[0].mxu0
      %v2793 = vadd.f32 0.0, %v2792
      %v2794 = vpop.f32.mrb[0].mxu0
      %2795 = vmatprep.mubr.bf16.mxu0 0
      %2796 = vmatmul.mubr.bf16.gmra.mrb[0].mxu0 %v2704
      %v2797 = vpop.f32.mrb[0].mxu0
      %v2798 = vadd.f32 0.0, %v2797
      %v2799 = vpop.f32.mrb[0].mxu0
      %v2800 = vpop.f32.mrb[0].mxu0
      %v2801 = vadd.f32 0.0, %v2800
      %v2802 = vpop.f32.mrb[0].mxu0
      %2803 = vmatprep.mubr.bf16.mxu0 0
      %2804 = vmatmul.mubr.bf16.gmra.mrb[0].mxu0 %v2707
      %v2805 = vpop.f32.mrb[0].mxu0
      %v2806 = vadd.f32 0.0, %v2805
      %v2807 = vpop.f32.mrb[0].mxu0
      %v2808 = vpop.f32.mrb[0].mxu0
      %v2809 = vadd.f32 0.0, %v2808
      %v2810 = vpop.f32.mrb[0].mxu0
      %2811 = vmatprep.mubr.bf16.mxu0 0
      %2812 = vmatmul.mubr.bf16.gmra.mrb[0].mxu0 %v2710
      %v2813 = vpop.f32.mrb[0].mxu0
      %v2814 = vadd.f32 0.0, %v2813
      %v2815 = vpop.f32.mrb[0].mxu0
      %v2816 = vpop.f32.mrb[0].mxu0
      %v2817 = vadd.f32 0.0, %v2816
      %v2818 = vpop.f32.mrb[0].mxu0
      %2819 = vdwg.mxu0
      %v2820 = vadd.f32 %v2571, %v2750
      %v2821 = vadd.f32 %v2572, %v2753
      %v2822 = vadd.f32 %v2573, %v2758
      %v2823 = vadd.f32 %v2574, %v2761
      %v2824 = vadd.f32 %v2575, %v2766
      %v2825 = vadd.f32 %v2576, %v2769
      %v2826 = vadd.f32 %v2577, %v2774
      %v2827 = vadd.f32 %v2578, %v2777
      %v2828 = vadd.f32 %v2579, %v2782
      %v2829 = vadd.f32 %v2580, %v2785
      %v2830 = vadd.f32 %v2581, %v2790
      %v2831 = vadd.f32 %v2582, %v2793
      %v2832 = vadd.f32 %v2583, %v2798
      %v2833 = vadd.f32 %v2584, %v2801
      %v2834 = vadd.f32 %v2585, %v2806
      %v2835 = vadd.f32 %v2586, %v2809
      %v2836 = vadd.f32 %v2587, %v2814
      %v2837 = vadd.f32 %v2588, %v2817
      %v2838 = vld [vmem:[#allocation2 + $0x10] sm:$0x8]
      %s2839 = scalar_lea.vmem %s5, 32
      %v2840 = vld [vmem:[%s2839] sm:$0xf]
      %v2842 = vunpack.c.l.b16 %v2838
      %v2843 = vpack.c.b16 %v2389, %v2842
      %vm2844 = vcmask 1044480
      %v2845 = vrot.slane %v2843, 3
      %v2846 = vrot.slane %v2408, 3
      %v2847 = vsel %vm2844, %v2845, %v2846
      %v2848 = vrot.slane %v2409, 3
      %v2849 = vsel %vm2844, %v2846, %v2848
      %v2850 = vrot.slane %v2410, 3
      %v2851 = vsel %vm2844, %v2848, %v2850
      %v2852 = vrot.slane %v2411, 3
      %v2853 = vsel %vm2844, %v2850, %v2852
      %v2854 = vrot.slane %v2412, 3
      %v2855 = vsel %vm2844, %v2852, %v2854
      %v2856 = vrot.slane %v2413, 3
      %v2857 = vsel %vm2844, %v2854, %v2856
      %v2858 = vrot.slane %v2414, 3
      %v2859 = vsel %vm2844, %v2856, %v2858
      %v2860 = vrot.slane %v2415, 3
      %v2861 = vsel %vm2844, %v2858, %v2860
      %v2862 = vrot.slane %v2594, 3
      %v2863 = vsel %vm2844, %v2860, %v2862
      %v2865 = vsel %vm1237, %v2847, 0
      %v2868 = vsel %vm1237, %v2849, 0
      %v2871 = vsel %vm1237, %v2851, 0
      %v2874 = vsel %vm1237, %v2853, 0
      %v2877 = vsel %vm1237, %v2855, 0
      %v2880 = vsel %vm1237, %v2857, 0
      %v2883 = vsel %vm1237, %v2859, 0
      %v2886 = vsel %vm1237, %v2861, 0
      %v2889 = vsel %vm1237, %v2863, 0
      %v2892 = vsel %vm1265, %v2840, 0
      %2894 = vmatprep.subr.bf16.mxu0 0
      %2895 = vmatpush1.bf16.msra.mxu0 %v2892
      %2896 = vmatprep.subr.bf16.mxu0 0
      %2897 = vmatpush1.bf16.msra.mxu0 0
      %2898 = vmatprep.subr.bf16.mxu0 0
      %2899 = vmatpush1.bf16.msra.mxu0 0
      %2900 = vmatprep.subr.bf16.mxu0 0
      %2901 = vmatpush1.bf16.msra.mxu0 0
      %2902 = vmatprep.subr.bf16.mxu0 0
      %2903 = vmatpush1.bf16.msra.mxu0 0
      %2904 = vmatprep.subr.bf16.mxu0 0
      %2905 = vmatpush1.bf16.msra.mxu0 0
      %2906 = vmatprep.subr.bf16.mxu0 0
      %2907 = vmatpush1.bf16.msra.mxu0 0
      %2908 = vmatprep.subr.bf16.mxu0 0
      %2909 = vmatpush1.bf16.msra.mxu0 0
      %2910 = vmatprep.subr.bf16.mxu0 0
      %2911 = vmatpush1.bf16.msra.mxu0 0
      %2912 = vmatprep.subr.bf16.mxu0 0
      %2913 = vmatpush1.bf16.msra.mxu0 0
      %2914 = vmatprep.subr.bf16.mxu0 0
      %2915 = vmatpush1.bf16.msra.mxu0 0
      %2916 = vmatprep.subr.bf16.mxu0 0
      %2917 = vmatpush1.bf16.msra.mxu0 0
      %2918 = vmatprep.subr.bf16.mxu0 0
      %2919 = vmatpush1.bf16.msra.mxu0 0
      %2920 = vmatprep.subr.bf16.mxu0 0
      %2921 = vmatpush1.bf16.msra.mxu0 0
      %2922 = vmatprep.subr.bf16.mxu0 0
      %2923 = vmatpush1.bf16.msra.mxu0 0
      %2924 = vmatprep.subr.bf16.mxu0 0
      %2925 = vmatpush1.bf16.msra.mxu0 0
      %2926 = vmatprep.mubr.bf16.mxu0 0
      %2927 = vmatmul.mubr.bf16.gmra.mrb[0].mxu0 %v2865
      %v2928 = vpop.f32.mrb[0].mxu0
      %v2929 = vadd.f32 0.0, %v2928
      %v2930 = vpop.f32.mrb[0].mxu0
      %v2931 = vpop.f32.mrb[0].mxu0
      %v2932 = vadd.f32 0.0, %v2931
      %v2933 = vpop.f32.mrb[0].mxu0
      %2934 = vmatprep.mubr.bf16.mxu0 0
      %2935 = vmatmul.mubr.bf16.gmra.mrb[0].mxu0 %v2868
      %v2936 = vpop.f32.mrb[0].mxu0
      %v2937 = vadd.f32 0.0, %v2936
      %v2938 = vpop.f32.mrb[0].mxu0
      %v2939 = vpop.f32.mrb[0].mxu0
      %v2940 = vadd.f32 0.0, %v2939
      %v2941 = vpop.f32.mrb[0].mxu0
      %2942 = vmatprep.mubr.bf16.mxu0 0
      %2943 = vmatmul.mubr.bf16.gmra.mrb[0].mxu0 %v2871
      %v2944 = vpop.f32.mrb[0].mxu0
      %v2945 = vadd.f32 0.0, %v2944
      %v2946 = vpop.f32.mrb[0].mxu0
      %v2947 = vpop.f32.mrb[0].mxu0
      %v2948 = vadd.f32 0.0, %v2947
      %v2949 = vpop.f32.mrb[0].mxu0
      %2950 = vmatprep.mubr.bf16.mxu0 0
      %2951 = vmatmul.mubr.bf16.gmra.mrb[0].mxu0 %v2874
      %v2952 = vpop.f32.mrb[0].mxu0
      %v2953 = vadd.f32 0.0, %v2952
      %v2954 = vpop.f32.mrb[0].mxu0
      %v2955 = vpop.f32.mrb[0].mxu0
      %v2956 = vadd.f32 0.0, %v2955
      %v2957 = vpop.f32.mrb[0].mxu0
      %2958 = vmatprep.mubr.bf16.mxu0 0
      %2959 = vmatmul.mubr.bf16.gmra.mrb[0].mxu0 %v2877
      %v2960 = vpop.f32.mrb[0].mxu0
      %v2961 = vadd.f32 0.0, %v2960
      %v2962 = vpop.f32.mrb[0].mxu0
      %v2963 = vpop.f32.mrb[0].mxu0
      %v2964 = vadd.f32 0.0, %v2963
      %v2965 = vpop.f32.mrb[0].mxu0
      %2966 = vmatprep.mubr.bf16.mxu0 0
      %2967 = vmatmul.mubr.bf16.gmra.mrb[0].mxu0 %v2880
      %v2968 = vpop.f32.mrb[0].mxu0
      %v2969 = vadd.f32 0.0, %v2968
      %v2970 = vpop.f32.mrb[0].mxu0
      %v2971 = vpop.f32.mrb[0].mxu0
      %v2972 = vadd.f32 0.0, %v2971
      %v2973 = vpop.f32.mrb[0].mxu0
      %2974 = vmatprep.mubr.bf16.mxu0 0
      %2975 = vmatmul.mubr.bf16.gmra.mrb[0].mxu0 %v2883
      %v2976 = vpop.f32.mrb[0].mxu0
      %v2977 = vadd.f32 0.0, %v2976
      %v2978 = vpop.f32.mrb[0].mxu0
      %v2979 = vpop.f32.mrb[0].mxu0
      %v2980 = vadd.f32 0.0, %v2979
      %v2981 = vpop.f32.mrb[0].mxu0
      %2982 = vmatprep.mubr.bf16.mxu0 0
      %2983 = vmatmul.mubr.bf16.gmra.mrb[0].mxu0 %v2886
      %v2984 = vpop.f32.mrb[0].mxu0
      %v2985 = vadd.f32 0.0, %v2984
      %v2986 = vpop.f32.mrb[0].mxu0
      %v2987 = vpop.f32.mrb[0].mxu0
      %v2988 = vadd.f32 0.0, %v2987
      %v2989 = vpop.f32.mrb[0].mxu0
      %2990 = vmatprep.mubr.bf16.mxu0 0
      %2991 = vmatmul.mubr.bf16.gmra.mrb[0].mxu0 %v2889
      %v2992 = vpop.f32.mrb[0].mxu0
      %v2993 = vadd.f32 0.0, %v2992
      %v2994 = vpop.f32.mrb[0].mxu0
      %v2995 = vpop.f32.mrb[0].mxu0
      %v2996 = vadd.f32 0.0, %v2995
      %v2997 = vpop.f32.mrb[0].mxu0
      %2998 = vdwg.mxu0
      %v2999 = vadd.f32 %v2820, %v2929
      %v3000 = vadd.f32 %v2821, %v2932
      %v3001 = vadd.f32 %v2822, %v2937
      %v3002 = vadd.f32 %v2823, %v2940
      %v3003 = vadd.f32 %v2824, %v2945
      %v3004 = vadd.f32 %v2825, %v2948
      %v3005 = vadd.f32 %v2826, %v2953
      %v3006 = vadd.f32 %v2827, %v2956
      %v3007 = vadd.f32 %v2828, %v2961
      %v3008 = vadd.f32 %v2829, %v2964
      %v3009 = vadd.f32 %v2830, %v2969
      %v3010 = vadd.f32 %v2831, %v2972
      %v3011 = vadd.f32 %v2832, %v2977
      %v3012 = vadd.f32 %v2833, %v2980
      %v3013 = vadd.f32 %v2834, %v2985
      %v3014 = vadd.f32 %v2835, %v2988
      %v3015 = vadd.f32 %v2836, %v2993
      %v3016 = vadd.f32 %v2837, %v2996
      %v3017 = vld [vmem:[%s6] sm:$0x1]
      %v3019 = vlaneseq
      %v3020 = vshrl.u32 %v3019, 7
      %v3021 = vsub.s32 0, %v3020
      %v3022 = vrot.slane %v3017, %v3021
      %v3024 = vadd.f32 %v2999, %v3022
      %v3025 = vadd.f32 %v3000, %v3022
      %v3026 = vpack.c.bf16 %v3025, %v3024
      %v3028 = vunpack.c.l.b16 %v3026
      %v3029 = vunpack.c.h.b16 %v3026
      %v3030 = vpack.c.b16 %v3028, %v3028
      %v3031 = vpack.c.b16 %v3029, %v3029
      %3034 = vst.msk [vmem:[%s522] sm:$0xf] %vm712, %v3030
      %3035 = vst.msk [vmem:[%s522 + $0x4] sm:$0xf] %vm712, %v3031
      %v3036 = vsel %vm1237, %v3024, 0.0
      %v3037 = vsel %vm1237, %v3025, 0.0
      %v3038 = vadd.f32 %v3036, %v3037
      %v3039 = vrot.slane %v3038, 4
      %v3040 = vadd.f32 %v3038, %v3039
      %v3041 = vrot.slane %v3040, 2
      %v3042 = vadd.f32 %v3040, %v3041
      %v3043 = vrot.slane %v3042, 1
      %v3044 = vadd.f32 %v3042, %v3043
      %v3045 = vadd.f32 %v3044, 0.0
      %v3046 = vmul.f32 %v3024, %v3024
      %v3047 = vmul.f32 %v3025, %v3025
      %v3048 = vsel %vm1237, %v3046, 0.0
      %v3049 = vsel %vm1237, %v3047, 0.0
      %v3050 = vadd.f32 %v3048, %v3049
      %v3051 = vrot.slane %v3050, 4
      %v3052 = vadd.f32 %v3050, %v3051
      %v3053 = vrot.slane %v3052, 2
      %v3054 = vadd.f32 %v3052, %v3053
      %v3055 = vrot.slane %v3054, 1
      %v3056 = vadd.f32 %v3054, %v3055
      %v3057 = vadd.f32 %v3056, 0.0
      %v3058 = vadd.f32 %v3001, %v3022
      %v3059 = vadd.f32 %v3002, %v3022
      %v3060 = vadd.f32 %v3003, %v3022
      %v3061 = vpack.c.bf16 %v3059, %v3058
      %v3062 = vpack.c.bf16 %v3060, %v3060
      %v3065 = vunpack.c.l.b16 %v3061
      %v3066 = vunpack.c.h.b16 %v3061
      %v3067 = vunpack.c.l.b16 %v3062
      %v3068 = vpack.c.b16 %v3065, %v3065
      %v3069 = vpack.c.b16 %v3066, %v3066
      %v3070 = vpack.c.b16 %v3067, %v3067
      %vm3071 = vcmask 1042432
      %vm3072 = vcmask 1046532
      %vm3073 = vmor %vm3071, %vm3072
      %v3074 = vrot.slane %v3068, 5
      %v3075 = vrot.slane %v3074, 4
      %v3076 = vrot.slane %v3069, 5
      %v3077 = vsel %vm3073, %v3075, %v3076
      %v3078 = vrot.slane %v3076, 4
      %v3079 = vrot.slane %v3070, 5
      %v3080 = vsel %vm3073, %v3078, %v3079
      %s3083 = scalar_lea.vmem %s522, 8
      %3084 = vst.msk [vmem:[%s3083] sm:$0xf] %vm712, %v3077
      %3085 = vst.msk [vmem:[%s3083 + $0x4] sm:$0xf] %vm712, %v3080
      %vm3089 = vcmask 1045504
      %v3090 = vrot.slane %v3058, 2
      %v3091 = vrot.slane %v3059, 2
      %v3092 = vsel %vm3089, %v3090, %v3091
      %v3093 = vrot.slane %v3060, 2
      %v3094 = vsel %vm3089, %v3091, %v3093
      %v3097 = vsel %vm1237, %v3092, 0.0
      %v3098 = vsel %vm1237, %v3094, 0.0
      %v3099 = vadd.f32 %v3097, %v3098
      %v3100 = vrot.slane %v3099, 4
      %v3101 = vadd.f32 %v3099, %v3100
      %v3102 = vrot.slane %v3101, 2
      %v3103 = vadd.f32 %v3101, %v3102
      %v3104 = vrot.slane %v3103, 1
      %v3105 = vadd.f32 %v3103, %v3104
      %v3106 = vadd.f32 %v3045, %v3105
      %v3107 = vmul.f32 %v3058, %v3058
      %v3108 = vmul.f32 %v3059, %v3059
      %v3109 = vmul.f32 %v3060, %v3060
      %v3113 = vrot.slane %v3107, 2
      %v3114 = vrot.slane %v3108, 2
      %v3115 = vsel %vm3089, %v3113, %v3114
      %v3116 = vrot.slane %v3109, 2
      %v3117 = vsel %vm3089, %v3114, %v3116
      %v3120 = vsel %vm1237, %v3115, 0.0
      %v3121 = vsel %vm1237, %v3117, 0.0
      %v3122 = vadd.f32 %v3120, %v3121
      %v3123 = vrot.slane %v3122, 4
      %v3124 = vadd.f32 %v3122, %v3123
      %v3125 = vrot.slane %v3124, 2
      %v3126 = vadd.f32 %v3124, %v3125
      %v3127 = vrot.slane %v3126, 1
      %v3128 = vadd.f32 %v3126, %v3127
      %v3129 = vadd.f32 %v3057, %v3128
      %v3130 = vadd.f32 %v3004, %v3022
      %v3131 = vadd.f32 %v3005, %v3022
      %v3132 = vpack.c.bf16 %v3130, %v3060
      %v3133 = vpack.c.bf16 %v3131, %v3131
      %v3136 = vunpack.c.l.b16 %v3132
      %v3137 = vunpack.c.h.b16 %v3132
      %v3138 = vunpack.c.l.b16 %v3133
      %v3139 = vpack.c.b16 %v3136, %v3136
      %v3140 = vpack.c.b16 %v3137, %v3137
      %v3141 = vpack.c.b16 %v3138, %v3138
      %vm3142 = vcmask 1041408
      %vm3143 = vcmask 1045508
      %vm3144 = vmor %vm3142, %vm3143
      %v3145 = vrot.slane %v3139, 6
      %v3146 = vrot.slane %v3145, 4
      %v3147 = vrot.slane %v3140, 6
      %v3148 = vsel %vm3144, %v3146, %v3147
      %v3149 = vrot.slane %v3147, 4
      %v3150 = vrot.slane %v3141, 6
      %v3151 = vsel %vm3144, %v3149, %v3150
      %s3154 = scalar_lea.vmem %s522, 16
      %3155 = vst.msk [vmem:[%s3154] sm:$0xf] %vm712, %v3148
      %3156 = vst.msk [vmem:[%s3154 + $0x4] sm:$0xf] %vm712, %v3151
      %v3159 = vrot.slane %v3060, 4
      %v3160 = vrot.slane %v3130, 4
      %v3161 = vsel %vm1265, %v3159, %v3160
      %v3162 = vrot.slane %v3131, 4
      %v3163 = vsel %vm1265, %v3160, %v3162
      %v3166 = vsel %vm1237, %v3161, 0.0
      %v3167 = vsel %vm1237, %v3163, 0.0
      %v3168 = vadd.f32 %v3166, %v3167
      %v3169 = vrot.slane %v3168, 4
      %v3170 = vadd.f32 %v3168, %v3169
      %v3171 = vrot.slane %v3170, 2
      %v3172 = vadd.f32 %v3170, %v3171
      %v3173 = vrot.slane %v3172, 1
      %v3174 = vadd.f32 %v3172, %v3173
      %v3175 = vadd.f32 %v3106, %v3174
      %v3176 = vmul.f32 %v3130, %v3130
      %v3177 = vmul.f32 %v3131, %v3131
      %v3180 = vrot.slane %v3109, 4
      %v3181 = vrot.slane %v3176, 4
      %v3182 = vsel %vm1265, %v3180, %v3181
      %v3183 = vrot.slane %v3177, 4
      %v3184 = vsel %vm1265, %v3181, %v3183
      %v3187 = vsel %vm1237, %v3182, 0.0
      %v3188 = vsel %vm1237, %v3184, 0.0
      %v3189 = vadd.f32 %v3187, %v3188
      %v3190 = vrot.slane %v3189, 4
      %v3191 = vadd.f32 %v3189, %v3190
      %v3192 = vrot.slane %v3191, 2
      %v3193 = vadd.f32 %v3191, %v3192
      %v3194 = vrot.slane %v3193, 1
      %v3195 = vadd.f32 %v3193, %v3194
      %v3196 = vadd.f32 %v3129, %v3195
      %v3197 = vadd.f32 %v3006, %v3022
      %v3198 = vadd.f32 %v3007, %v3022
      %v3199 = vpack.c.bf16 %v3197, %v3131
      %v3200 = vpack.c.bf16 %v3198, %v3198
      %v3203 = vunpack.c.l.b16 %v3199
      %v3204 = vunpack.c.h.b16 %v3199
      %v3205 = vunpack.c.l.b16 %v3200
      %v3206 = vpack.c.b16 %v3203, %v3203
      %v3207 = vpack.c.b16 %v3204, %v3204
      %v3208 = vpack.c.b16 %v3205, %v3205
      %vm3209 = vcmask 1040384
      %vm3210 = vcmask 1044484
      %vm3211 = vmor %vm3209, %vm3210
      %v3212 = vrot.slane %v3206, 7
      %v3213 = vrot.slane %v3212, 4
      %v3214 = vrot.slane %v3207, 7
      %v3215 = vsel %vm3211, %v3213, %v3214
      %v3216 = vrot.slane %v3214, 4
      %v3217 = vrot.slane %v3208, 7
      %v3218 = vsel %vm3211, %v3216, %v3217
      %s3221 = scalar_lea.vmem %s522, 24
      %3222 = vst.msk [vmem:[%s3221] sm:$0xf] %vm712, %v3215
      %3223 = vst.msk [vmem:[%s3221 + $0x4] sm:$0xf] %vm712, %v3218
      %vm3226 = vcmask 1041408
      %v3227 = vrot.slane %v3131, 6
      %v3228 = vrot.slane %v3197, 6
      %v3229 = vsel %vm3226, %v3227, %v3228
      %v3230 = vrot.slane %v3198, 6
      %v3231 = vsel %vm3226, %v3228, %v3230
      %v3234 = vsel %vm1237, %v3229, 0.0
      %v3235 = vsel %vm1237, %v3231, 0.0
      %v3236 = vadd.f32 %v3234, %v3235
      %v3237 = vrot.slane %v3236, 4
      %v3238 = vadd.f32 %v3236, %v3237
      %v3239 = vrot.slane %v3238, 2
      %v3240 = vadd.f32 %v3238, %v3239
      %v3241 = vrot.slane %v3240, 1
      %v3242 = vadd.f32 %v3240, %v3241
      %v3243 = vadd.f32 %v3175, %v3242
      %v3244 = vmul.f32 %v3197, %v3197
      %v3245 = vmul.f32 %v3198, %v3198
      %v3248 = vrot.slane %v3177, 6
      %v3249 = vrot.slane %v3244, 6
      %v3250 = vsel %vm3226, %v3248, %v3249
      %v3251 = vrot.slane %v3245, 6
      %v3252 = vsel %vm3226, %v3249, %v3251
      %v3255 = vsel %vm1237, %v3250, 0.0
      %v3256 = vsel %vm1237, %v3252, 0.0
      %v3257 = vadd.f32 %v3255, %v3256
      %v3258 = vrot.slane %v3257, 4
      %v3259 = vadd.f32 %v3257, %v3258
      %v3260 = vrot.slane %v3259, 2
      %v3261 = vadd.f32 %v3259, %v3260
      %v3262 = vrot.slane %v3261, 1
      %v3263 = vadd.f32 %v3261, %v3262
      %v3264 = vadd.f32 %v3196, %v3263
      %v3265 = vadd.f32 %v3008, %v3022
      %v3266 = vadd.f32 %v3009, %v3022
      %v3267 = vpack.c.bf16 %v3266, %v3265
      %v3269 = vunpack.c.l.b16 %v3267
      %v3270 = vunpack.c.h.b16 %v3267
      %v3271 = vpack.c.b16 %v3269, %v3269
      %v3272 = vpack.c.b16 %v3270, %v3270
      %s3275 = scalar_lea.vmem %s522, 32
      %3276 = vst.msk [vmem:[%s3275] sm:$0xf] %vm712, %v3271
      %3277 = vst.msk [vmem:[%s3275 + $0x4] sm:$0xf] %vm712, %v3272
      %v3278 = vsel %vm1237, %v3265, 0.0
      %v3279 = vsel %vm1237, %v3266, 0.0
      %v3280 = vadd.f32 %v3278, %v3279
      %v3281 = vrot.slane %v3280, 4
      %v3282 = vadd.f32 %v3280, %v3281
      %v3283 = vrot.slane %v3282, 2
      %v3284 = vadd.f32 %v3282, %v3283
      %v3285 = vrot.slane %v3284, 1
      %v3286 = vadd.f32 %v3284, %v3285
      %v3287 = vadd.f32 %v3243, %v3286
      %v3288 = vmul.f32 %v3265, %v3265
      %v3289 = vmul.f32 %v3266, %v3266
      %v3290 = vsel %vm1237, %v3288, 0.0
      %v3291 = vsel %vm1237, %v3289, 0.0
      %v3292 = vadd.f32 %v3290, %v3291
      %v3293 = vrot.slane %v3292, 4
      %v3294 = vadd.f32 %v3292, %v3293
      %v3295 = vrot.slane %v3294, 2
      %v3296 = vadd.f32 %v3294, %v3295
      %v3297 = vrot.slane %v3296, 1
      %v3298 = vadd.f32 %v3296, %v3297
      %v3299 = vadd.f32 %v3264, %v3298
      %v3300 = vadd.f32 %v3010, %v3022
      %v3301 = vadd.f32 %v3011, %v3022
      %v3302 = vadd.f32 %v3012, %v3022
      %v3303 = vpack.c.bf16 %v3301, %v3300
      %v3304 = vpack.c.bf16 %v3302, %v3302
      %v3307 = vunpack.c.l.b16 %v3303
      %v3308 = vunpack.c.h.b16 %v3303
      %v3309 = vunpack.c.l.b16 %v3304
      %v3310 = vpack.c.b16 %v3307, %v3307
      %v3311 = vpack.c.b16 %v3308, %v3308
      %v3312 = vpack.c.b16 %v3309, %v3309
      %v3313 = vrot.slane %v3310, 5
      %v3314 = vrot.slane %v3313, 4
      %v3315 = vrot.slane %v3311, 5
      %v3316 = vsel %vm3073, %v3314, %v3315
      %v3317 = vrot.slane %v3315, 4
      %v3318 = vrot.slane %v3312, 5
      %v3319 = vsel %vm3073, %v3317, %v3318
      %s3322 = scalar_lea.vmem %s522, 40
      %3323 = vst.msk [vmem:[%s3322] sm:$0xf] %vm712, %v3316
      %3324 = vst.msk [vmem:[%s3322 + $0x4] sm:$0xf] %vm712, %v3319
      %v3328 = vrot.slane %v3300, 2
      %v3329 = vrot.slane %v3301, 2
      %v3330 = vsel %vm3089, %v3328, %v3329
      %v3331 = vrot.slane %v3302, 2
      %v3332 = vsel %vm3089, %v3329, %v3331
      %v3335 = vsel %vm1237, %v3330, 0.0
      %v3336 = vsel %vm1237, %v3332, 0.0
      %v3337 = vadd.f32 %v3335, %v3336
      %v3338 = vrot.slane %v3337, 4
      %v3339 = vadd.f32 %v3337, %v3338
      %v3340 = vrot.slane %v3339, 2
      %v3341 = vadd.f32 %v3339, %v3340
      %v3342 = vrot.slane %v3341, 1
      %v3343 = vadd.f32 %v3341, %v3342
      %v3344 = vadd.f32 %v3287, %v3343
      %v3345 = vmul.f32 %v3300, %v3300
      %v3346 = vmul.f32 %v3301, %v3301
      %v3347 = vmul.f32 %v3302, %v3302
      %v3351 = vrot.slane %v3345, 2
      %v3352 = vrot.slane %v3346, 2
      %v3353 = vsel %vm3089, %v3351, %v3352
      %v3354 = vrot.slane %v3347, 2
      %v3355 = vsel %vm3089, %v3352, %v3354
      %v3358 = vsel %vm1237, %v3353, 0.0
      %v3359 = vsel %vm1237, %v3355, 0.0
      %v3360 = vadd.f32 %v3358, %v3359
      %v3361 = vrot.slane %v3360, 4
      %v3362 = vadd.f32 %v3360, %v3361
      %v3363 = vrot.slane %v3362, 2
      %v3364 = vadd.f32 %v3362, %v3363
      %v3365 = vrot.slane %v3364, 1
      %v3366 = vadd.f32 %v3364, %v3365
      %v3367 = vadd.f32 %v3299, %v3366
      %v3368 = vadd.f32 %v3013, %v3022
      %v3369 = vadd.f32 %v3014, %v3022
      %v3370 = vpack.c.bf16 %v3368, %v3302
      %v3371 = vpack.c.bf16 %v3369, %v3369
      %v3374 = vunpack.c.l.b16 %v3370
      %v3375 = vunpack.c.h.b16 %v3370
      %v3376 = vunpack.c.l.b16 %v3371
      %v3377 = vpack.c.b16 %v3374, %v3374
      %v3378 = vpack.c.b16 %v3375, %v3375
      %v3379 = vpack.c.b16 %v3376, %v3376
      %v3380 = vrot.slane %v3377, 6
      %v3381 = vrot.slane %v3380, 4
      %v3382 = vrot.slane %v3378, 6
      %v3383 = vsel %vm3144, %v3381, %v3382
      %v3384 = vrot.slane %v3382, 4
      %v3385 = vrot.slane %v3379, 6
      %v3386 = vsel %vm3144, %v3384, %v3385
      %s3389 = scalar_lea.vmem %s522, 48
      %3390 = vst.msk [vmem:[%s3389] sm:$0xf] %vm712, %v3383
      %3391 = vst.msk [vmem:[%s3389 + $0x4] sm:$0xf] %vm712, %v3386
      %v3394 = vrot.slane %v3302, 4
      %v3395 = vrot.slane %v3368, 4
      %v3396 = vsel %vm1265, %v3394, %v3395
      %v3397 = vrot.slane %v3369, 4
      %v3398 = vsel %vm1265, %v3395, %v3397
      %v3401 = vsel %vm1237, %v3396, 0.0
      %v3402 = vsel %vm1237, %v3398, 0.0
      %v3403 = vadd.f32 %v3401, %v3402
      %v3404 = vrot.slane %v3403, 4
      %v3405 = vadd.f32 %v3403, %v3404
      %v3406 = vrot.slane %v3405, 2
      %v3407 = vadd.f32 %v3405, %v3406
      %v3408 = vrot.slane %v3407, 1
      %v3409 = vadd.f32 %v3407, %v3408
      %v3410 = vadd.f32 %v3344, %v3409
      %v3411 = vmul.f32 %v3368, %v3368
      %v3412 = vmul.f32 %v3369, %v3369
      %v3415 = vrot.slane %v3347, 4
      %v3416 = vrot.slane %v3411, 4
      %v3417 = vsel %vm1265, %v3415, %v3416
      %v3418 = vrot.slane %v3412, 4
      %v3419 = vsel %vm1265, %v3416, %v3418
      %v3422 = vsel %vm1237, %v3417, 0.0
      %v3423 = vsel %vm1237, %v3419, 0.0
      %v3424 = vadd.f32 %v3422, %v3423
      %v3425 = vrot.slane %v3424, 4
      %v3426 = vadd.f32 %v3424, %v3425
      %v3427 = vrot.slane %v3426, 2
      %v3428 = vadd.f32 %v3426, %v3427
      %v3429 = vrot.slane %v3428, 1
      %v3430 = vadd.f32 %v3428, %v3429
      %v3431 = vadd.f32 %v3367, %v3430
      %v3432 = vadd.f32 %v3015, %v3022
      %v3433 = vadd.f32 %v3016, %v3022
      %v3434 = vpack.c.bf16 %v3432, %v3369
      %v3435 = vpack.c.bf16 %v3433, %v3433
      %v3438 = vunpack.c.l.b16 %v3434
      %v3439 = vunpack.c.h.b16 %v3434
      %v3440 = vunpack.c.l.b16 %v3435
      %v3441 = vpack.c.b16 %v3438, %v3438
      %v3442 = vpack.c.b16 %v3439, %v3439
      %v3443 = vpack.c.b16 %v3440, %v3440
      %v3444 = vrot.slane %v3441, 7
      %v3445 = vrot.slane %v3444, 4
      %v3446 = vrot.slane %v3442, 7
      %v3447 = vsel %vm3211, %v3445, %v3446
      %v3448 = vrot.slane %v3446, 4
      %v3449 = vrot.slane %v3443, 7
      %v3450 = vsel %vm3211, %v3448, %v3449
      %s3453 = scalar_lea.vmem %s522, 56
      %3454 = vst.msk [vmem:[%s3453] sm:$0xf] %vm712, %v3447
      %3455 = vst.msk [vmem:[%s3453 + $0x4] sm:$0xf] %vm712, %v3450
      %v3458 = vrot.slane %v3369, 6
      %v3459 = vrot.slane %v3432, 6
      %v3460 = vsel %vm3226, %v3458, %v3459
      %v3461 = vrot.slane %v3433, 6
      %v3462 = vsel %vm3226, %v3459, %v3461
      %v3465 = vsel %vm1237, %v3460, 0.0
      %v3466 = vsel %vm1237, %v3462, 0.0
      %v3467 = vadd.f32 %v3465, %v3466
      %v3468 = vrot.slane %v3467, 4
      %v3469 = vadd.f32 %v3467, %v3468
      %v3470 = vrot.slane %v3469, 2
      %v3471 = vadd.f32 %v3469, %v3470
      %v3472 = vrot.slane %v3471, 1
      %v3473 = vadd.f32 %v3471, %v3472
      %v3474 = vadd.f32 %v3410, %v3473
      %v3475 = vmul.f32 %v3432, %v3432
      %v3476 = vmul.f32 %v3433, %v3433
      %v3479 = vrot.slane %v3412, 6
      %v3480 = vrot.slane %v3475, 6
      %v3481 = vsel %vm3226, %v3479, %v3480
      %v3482 = vrot.slane %v3476, 6
      %v3483 = vsel %vm3226, %v3480, %v3482
      %v3486 = vsel %vm1237, %v3481, 0.0
      %v3487 = vsel %vm1237, %v3483, 0.0
      %v3488 = vadd.f32 %v3486, %v3487
      %v3489 = vrot.slane %v3488, 4
      %v3490 = vadd.f32 %v3488, %v3489
      %v3491 = vrot.slane %v3490, 2
      %v3492 = vadd.f32 %v3490, %v3491
      %v3493 = vrot.slane %v3492, 1
      %v3494 = vadd.f32 %v3492, %v3493
      %v3495 = vadd.f32 %v3431, %v3494
      %vm3496 = vcmask 57344
      %3497 = vst.msk [vmem:[%s530] sm:$0x1] %vm3496, %v3474
      %3498 = vst.msk [vmem:[%s537] sm:$0x1] %vm3496, %v3495
      %s3499 = smul.u32 8, %s26
      %p3500 = scmp.lt.s32.totalorder %s25, 1
      %s3501 = scalar_select %p3500, %s25, 1
      %p3502 = scmp.lt.s32.totalorder %s3499, 15
      %s3503 = scalar_select %p3502, %s3499, 15
      %s3504 = smul.addr %s3503, 2
      %s3505 = smul.addr %s3501, 32
      %s3506 = sadd.s32 %s3504, %s3505
      %s3507 = smul.addr %s3506, 4
      %s3508 = scalar_lea.vmem %s7, %s3507
      %p3509 = scmp.lt.s32.totalorder %s25, 1
      %s3510 = scalar_select %p3509, %s25, 1
      %p3511 = scmp.lt.s32.totalorder %s26, 1
      %s3512 = scalar_select %p3511, %s26, 1
      %s3513 = smul.addr %s3510, 2
      %s3514 = sadd.s32 %s3512, %s3513
      %s3515 = scalar_lea.vmem %s8, %s3514
      %p3516 = scmp.lt.s32.totalorder %s25, 1
      %s3517 = scalar_select %p3516, %s25, 1
      %p3518 = scmp.lt.s32.totalorder %s26, 1
      %s3519 = scalar_select %p3518, %s26, 1
      %s3520 = smul.addr %s3517, 2
      %s3521 = sadd.s32 %s3519, %s3520
      %s3522 = scalar_lea.vmem %s9, %s3521
      // Predicated region
      $region49: #{double_conv_forward.4} parent=47 // pred_check
        %p3523 = pneg %p237
      $region50: #{double_conv_forward.4} parent=47 // pred_check_branch
        %3525 = sbr.rel (%p3523) target = $region52
      $region51: #{double_conv_forward.4} parent=47 // pred_region
        %s3526 = smul.u32 8, %s26
      $region52: #{double_conv_forward.4} parent=47 // pred_fallthru
        _
      // Predicated region
      $region53: #{double_conv_forward.4} parent=47 // pred_check
        %p3527 = pneg %p265
      $region54: #{double_conv_forward.4} parent=47 // pred_check_branch
        %3529 = sbr.rel (%p3527) target = $region56
      $region55: #{double_conv_forward.4} parent=47 // pred_region
        _
      $region56: #{double_conv_forward.4} parent=47 // pred_fallthru
        _
      // Predicated region
      $region57: #{double_conv_forward.4} parent=47 // pred_check
        %p3530 = pneg %p293
      $region58: #{double_conv_forward.4} parent=47 // pred_check_branch
        %3532 = sbr.rel (%p3530) target = $region60
      $region59: #{double_conv_forward.4} parent=47 // pred_region
        _
      $region60: #{double_conv_forward.4} parent=47 // pred_fallthru
        _
    $region48: #{double_conv_forward.4} parent=5 // pred_fallthru
      _
    %p3533 = scmp.le.s32.totalorder 2, %s16
    // Predicated region
    $region61: #{double_conv_forward.4} parent=5 // pred_check
      %p3534 = pneg %p3533
    $region62: #{double_conv_forward.4} parent=5 // pred_check_branch
      %3536 = sbr.rel (%p3534) target = $region64
    $region63: #{double_conv_forward.4} parent=5 // pred_region
      %s3537 = ssub.s32 %s16, 2
      // Predicated region
      $region65: #{double_conv_forward.4} parent=63 // pred_check
        %p3538 = pneg %p243
      $region66: #{double_conv_forward.4} parent=63 // pred_check_branch
        %3540 = sbr.rel (%p3538) target = $region68
      $region67: #{double_conv_forward.4} parent=63 // pred_region
        %s3541 = smul.u32 8, %s28
        %p3542 = scmp.lt.s32.totalorder %s27, 1
        %s3543 = scalar_select %p3542, %s27, 1
        %p3544 = scmp.lt.s32.totalorder %s3541, 15
        %s3545 = scalar_select %p3544, %s3541, 15
        %s3546 = smul.addr %s3545, 2
        %s3547 = smul.addr %s3543, 32
        %s3548 = sadd.s32 %s3546, %s3547
        %s3549 = smul.addr %s3548, 4
        %s3550 = scalar_lea.vmem %s7, %s3549
      $region68: #{double_conv_forward.4} parent=63 // pred_fallthru
        _
      // Predicated region
      $region69: #{double_conv_forward.4} parent=63 // pred_check
        %p3551 = pneg %p271
      $region70: #{double_conv_forward.4} parent=63 // pred_check_branch
        %3553 = sbr.rel (%p3551) target = $region72
      $region71: #{double_conv_forward.4} parent=63 // pred_region
        %p3554 = scmp.lt.s32.totalorder %s27, 1
        %s3555 = scalar_select %p3554, %s27, 1
        %p3556 = scmp.lt.s32.totalorder %s28, 1
        %s3557 = scalar_select %p3556, %s28, 1
        %s3558 = smul.addr %s3555, 2
        %s3559 = sadd.s32 %s3557, %s3558
        %s3560 = scalar_lea.vmem %s8, %s3559
      $region72: #{double_conv_forward.4} parent=63 // pred_fallthru
        _
      // Predicated region
      $region73: #{double_conv_forward.4} parent=63 // pred_check
        %p3561 = pneg %p299
      $region74: #{double_conv_forward.4} parent=63 // pred_check_branch
        %3563 = sbr.rel (%p3561) target = $region76
      $region75: #{double_conv_forward.4} parent=63 // pred_region
        %p3564 = scmp.lt.s32.totalorder %s27, 1
        %s3565 = scalar_select %p3564, %s27, 1
        %p3566 = scmp.lt.s32.totalorder %s28, 1
        %s3567 = scalar_select %p3566, %s28, 1
        %s3568 = smul.addr %s3565, 2
        %s3569 = sadd.s32 %s3567, %s3568
        %s3570 = scalar_lea.vmem %s9, %s3569
      $region76: #{double_conv_forward.4} parent=63 // pred_fallthru
        _
    $region64: #{double_conv_forward.4} parent=5 // pred_fallthru
      _
  $region6: #{double_conv_forward.4} parent=0 // loop_footer
    %s20 = sadd.s32 1, %s16
  $region7: #{double_conv_forward.4} parent=0 // loop_footer_branch
    %15 = sbr.rel target = $region3
  $region8: #{double_conv_forward.4} parent=0 // loop_exit
    _

</llo_original>
